<compile_context>
chip_gen: v5e
topology: v5e:2x2
jax: 0.10.0
libtpu: 0.0.40
codegen_flags: <defaults>
</compile_context>

<pallas_src>
import functools

import jax
import jax.numpy as jnp
from jax.experimental import pallas as pl
from jax.experimental.pallas import tpu as pltpu

BN_EPS = 1e-5
EXPANSION = 1
PRE_CIN = 32          # network input channels (3) zero-padded to 32 for the first conv
LANE_MIN = 128        # minimum channel width kept lane-dense


def _round_up(v, m):
    return (v + m - 1) // m * m


# ---------------------------------------------------------------------------
# Pallas kernels
# ---------------------------------------------------------------------------
def _conv3x3_kernel(x_ref, w_ref, b_ref, o_ref, *, offsets, m):
    # x_ref: (R, Cin)   flattened spatially-padded image (one image per grid step)
    # w_ref: (9, Cin, Cout) bf16, BN scale folded in
    # b_ref: (1, Cout)  f32
    # o_ref: (M, Cout)  bf16 output canvas (M = Hout*Wp; 2 junk columns per row
    #                   are sliced away in XLA)
    acc = jnp.dot(x_ref[pl.ds(offsets[0], m), :], w_ref[0],
                  preferred_element_type=jnp.float32)
    for t in range(1, len(offsets)):
        acc = acc + jnp.dot(x_ref[pl.ds(offsets[t], m), :], w_ref[t],
                            preferred_element_type=jnp.float32)
    o_ref[...] = jnp.maximum(acc + b_ref[...], 0.0).astype(o_ref.dtype)


def _conv3x3_res_kernel(x_ref, w_ref, b_ref, r_ref, wr_ref, o_ref, *, offsets, m):
    # Same as above plus a fused residual path:  out = relu(conv(x) + r @ wr + b).
    # r@wr is either the 1x1 shortcut conv (BN folded) or an identity matmul
    # implementing the plain residual add.
    acc = jnp.dot(r_ref[...], wr_ref[...], preferred_element_type=jnp.float32)
    for t in range(len(offsets)):
        acc = acc + jnp.dot(x_ref[pl.ds(offsets[t], m), :], w_ref[t],
                            preferred_element_type=jnp.float32)
    o_ref[...] = jnp.maximum(acc + b_ref[...], 0.0).astype(o_ref.dtype)


def _head_kernel(x_ref, w_ref, b_ref, o_ref):
    # x_ref: (N, 16, 512) bf16 -- AvgPool2d(4) == mean over axis 1.
    pooled = jnp.mean(x_ref[...].astype(jnp.float32), axis=1)          # (N, 512)
    logits = jnp.dot(pooled, w_ref[...],
                     preferred_element_type=jnp.float32) + b_ref[...]
    mx = jnp.max(logits, axis=-1, keepdims=True)
    e = jnp.exp(logits - mx)
    o_ref[...] = (e / jnp.sum(e, axis=-1, keepdims=True)).astype(o_ref.dtype)


# ---------------------------------------------------------------------------
# Conv wrapper: pad + flatten in XLA, fused 9-tap conv kernel on the MXU
# ---------------------------------------------------------------------------
def _conv3x3_call(x_nhwc, w9, bias, xs_nhwc=None, wsc=None):
    """Fused conv3x3(stride1) -> BN(folded) -> [+ residual matmul] -> ReLU."""
    N, H, W, Cin = x_nhwc.shape
    Cout = w9.shape[-1]
    Hp, Wp = H + 2, W + 2
    R = _round_up(Hp * Wp + 2, 8)          # +2: largest tap reads 2 rows past the image
    M = H * Wp                             # output canvas rows per image
    offsets = tuple(kh * Wp + kw for kh in range(3) for kw in range(3))

    xp = jnp.pad(x_nhwc.astype(jnp.bfloat16), ((0, 0), (1, 1), (1, 1), (0, 0)))
    x2 = jnp.pad(xp.reshape(N, Hp * Wp, Cin), ((0, 0), (0, R - Hp * Wp), (0, 0)))
    x2 = x2.reshape(N * R, Cin)

    in_specs = [pl.BlockSpec((R, Cin), lambda n: (n, 0)),
                pl.BlockSpec(w9.shape, lambda n: (0, 0, 0)),
                pl.BlockSpec((1, Cout), lambda n: (0, 0))]
    args = [x2, w9, bias]

    if xs_nhwc is None:
        kern = functools.partial(_conv3x3_kernel, offsets=offsets, m=M)
    else:
        Csc = wsc.shape[0]
        # Residual presented in the same (H, Wp) canvas layout (2 junk columns).
        r2 = jnp.pad(xs_nhwc.astype(jnp.bfloat16), ((0, 0), (0, 0), (0, 2), (0, 0)))
        r2 = r2.reshape(N * M, Csc)
        in_specs += [pl.BlockSpec((M, Csc), lambda n: (n, 0)),
                     pl.BlockSpec(wsc.shape, lambda n: (0, 0))]
        args += [r2, wsc]
        kern = functools.partial(_conv3x3_res_kernel, offsets=offsets, m=M)

    out = pl.pallas_call(
        kern,
        out_shape=jax.ShapeDtypeStruct((N * M, Cout), jnp.bfloat16),
        grid=(N,),
        in_specs=in_specs,
        out_specs=pl.BlockSpec((M, Cout), lambda n: (n, 0)),
        compiler_params=pltpu.CompilerParams(
            dimension_semantics=("parallel",),
            vmem_limit_bytes=32 << 20),
    )(*args)
    # Drop the 2 junk columns of the canvas -> (N, H, W, Cout)
    return out.reshape(N, H, Wp, Cout)[:, :, :W, :]


def head(x_nhwc, lin_w, lin_b):
    """AvgPool2d(4) -> flatten -> Linear -> Softmax, fused in one kernel."""
    N, H, W, C = x_nhwc.shape                    # (N, 4, 4, 512)
    nc = lin_w.shape[1]
    x_flat = x_nhwc.reshape(N, H * W, C)
    return pl.pallas_call(
        _head_kernel,
        out_shape=jax.ShapeDtypeStruct((N, nc), jnp.float32),
        grid=(1,),
        in_specs=[pl.BlockSpec((N, H * W, C), lambda i: (0, 0, 0)),
                  pl.BlockSpec((C, nc), lambda i: (0, 0)),
                  pl.BlockSpec((1, nc), lambda i: (0, 0))],
        out_specs=pl.BlockSpec((N, nc), lambda i: (0, 0)),
        compiler_params=pltpu.CompilerParams(vmem_limit_bytes=32 << 20),
    )(x_flat, lin_w, lin_b)


# ---------------------------------------------------------------------------
# Parameters (deterministic, synthetic) -- BasicBlock, expansion = 1
# ---------------------------------------------------------------------------
def _conv_init(key, cout, cin, k):
    return jax.random.normal(key, (cout, cin, k, k), jnp.float32) * 0.05


def _bn_init(key, c):
    kg, kb = jax.random.split(key)
    gamma = 1.0 + 0.01 * jax.random.normal(kg, (c,), jnp.float32)
    beta = 0.01 * jax.random.normal(kb, (c,), jnp.float32)
    return gamma, beta


def init_params(key, convX_numLst=(1, 1, 1, 1), num_classes=10):
    params = {}
    keys = jax.random.split(key, 8)
    params["preconv_w"] = _conv_init(keys[0], 64, 3, 3)
    params["preconv_g"], params["preconv_b"] = _bn_init(keys[1], 64)

    cur_in = 64
    stages = []
    stage_planes = (64, 128, 256, 512)
    stage_first_stride = (1, 2, 2, 2)
    kidx = jax.random.split(keys[2], 256)
    ki = 0
    for planes, nblk, st1 in zip(stage_planes, convX_numLst, stage_first_stride):
        strides = [st1] + [1] * (nblk - 1)
        blocks = []
        for s in strides:
            blk = {
                "conv1_w": _conv_init(kidx[ki], planes, cur_in, 3),
                "conv2_w": _conv_init(kidx[ki + 1], planes, planes, 3),
                "stride": s,
            }
            blk["bn1_g"], blk["bn1_b"] = _bn_init(kidx[ki + 2], planes)
            blk["bn2_g"], blk["bn2_b"] = _bn_init(kidx[ki + 3], planes)
            ki += 4
            if s != 1 or cur_in != planes * EXPANSION:
                blk["sc_w"] = _conv_init(kidx[ki], planes * EXPANSION, cur_in, 1)
                blk["sc_g"], blk["sc_b"] = _bn_init(kidx[ki + 1], planes * EXPANSION)
                ki += 2
            blocks.append(blk)
            cur_in = planes * EXPANSION
        stages.append(blocks)
    params["stages"] = stages

    params["lin_w"] = jax.random.normal(
        keys[3], (num_classes, 512 * EXPANSION), jnp.float32) * 0.05
    params["lin_b"] = 0.01 * jax.random.normal(keys[4], (num_classes,), jnp.float32)
    return params


# ---------------------------------------------------------------------------
# One-time weight preparation: fold BN, transpose, pad channels, cast to bf16
# ---------------------------------------------------------------------------
def _cpad(c):
    return max(c, LANE_MIN)


def _fold_conv3x3(w_oihw, gamma, beta, *, cin_pad, cout_pad):
    cout, cin, kh, kw = w_oihw.shape
    # inference BN with running_mean=0, running_var=1 folded into weights/bias
    scale = gamma / jnp.sqrt(1.0 + BN_EPS)
    w = jnp.transpose(w_oihw, (2, 3, 1, 0)).reshape(kh * kw, cin, cout)
    w = w * scale[None, None, :]
    w = jnp.pad(w, ((0, 0), (0, cin_pad - cin), (0, cout_pad - cout)))
    b = jnp.pad(beta, (0, cout_pad - cout)).reshape(1, cout_pad).astype(jnp.float32)
    return w.astype(jnp.bfloat16), b


def _fold_conv1x1(w_oihw, gamma, beta, *, cin_pad, cout_pad):
    cout, cin = w_oihw.shape[:2]
    scale = gamma / jnp.sqrt(1.0 + BN_EPS)
    w = w_oihw.reshape(cout, cin).T * scale[None, :]
    w = jnp.pad(w, ((0, cin_pad - cin), (0, cout_pad - cout)))
    b = jnp.pad(beta, (0, cout_pad - cout)).reshape(1, cout_pad).astype(jnp.float32)
    return w.astype(jnp.bfloat16), b


def prepare_params(params):
    prep = {}
    prep["pre_w"], prep["pre_b"] = _fold_conv3x3(
        params["preconv_w"], params["preconv_g"], params["preconv_b"],
        cin_pad=PRE_CIN, cout_pad=_cpad(64))

    blocks = []
    cur_pad = _cpad(64)
    for stage in params["stages"]:
        for blk in stage:
            planes = blk["conv1_w"].shape[0]
            cout_pad = _cpad(planes * EXPANSION)
            w1, b1 = _fold_conv3x3(blk["conv1_w"], blk["bn1_g"], blk["bn1_b"],
                                   cin_pad=cur_pad, cout_pad=cout_pad)
            w2, b2 = _fold_conv3x3(blk["conv2_w"], blk["bn2_g"], blk["bn2_b"],
                                   cin_pad=cout_pad, cout_pad=cout_pad)
            entry = {"stride": blk["stride"], "w1": w1, "b1": b1, "w2": w2}
            if "sc_w" in blk:
                wsc, bsc = _fold_conv1x1(blk["sc_w"], blk["sc_g"], blk["sc_b"],
                                         cin_pad=cur_pad, cout_pad=cout_pad)
                entry["wsc"] = wsc
                entry["eye"] = None
                entry["b2"] = b2 + bsc          # shortcut BN bias merged
            else:
                entry["wsc"] = None
                entry["eye"] = jnp.eye(cout_pad, dtype=jnp.bfloat16)
                entry["b2"] = b2
            blocks.append(entry)
            cur_pad = cout_pad
    prep["blocks"] = blocks

    prep["lin_w"] = params["lin_w"].T.astype(jnp.float32)          # (512, num_classes)
    prep["lin_b"] = params["lin_b"].reshape(1, -1).astype(jnp.float32)
    return prep


# ---------------------------------------------------------------------------
# Forward pass
# ---------------------------------------------------------------------------
def basic_block_forward(x, blk):
    s = blk["stride"]
    # conv1 + bn1 + relu  (stride-2 handled by computing at stride 1 and subsampling)
    h = _conv3x3_call(x, blk["w1"], blk["b1"])
    if s != 1:
        h = h[:, ::s, ::s, :]
    # conv2 + bn2 + residual (+1x1 shortcut conv or identity) + relu, fully fused
    if blk["wsc"] is not None:
        xs = x[:, ::s, ::s, :] if s != 1 else x
        wr = blk["wsc"]
    else:
        xs, wr = x, blk["eye"]
    return _conv3x3_call(h, blk["w2"], blk["b2"], xs_nhwc=xs, wsc=wr)


def mini_resnet_forward(prep, x_nchw):
    x = jnp.transpose(x_nchw, (0, 2, 3, 1))                       # NCHW -> NHWC
    x = jnp.pad(x, ((0, 0), (0, 0), (0, 0), (0, PRE_CIN - x.shape[-1])))
    x = _conv3x3_call(x, prep["pre_w"], prep["pre_b"])            # preconv
    for blk in prep["blocks"]:
        x = basic_block_forward(x, blk)
    return head(x, prep["lin_w"], prep["lin_b"])                  # (N, num_classes)


# ---------------------------------------------------------------------------
if __name__ == "__main__":
    key = jax.random.PRNGKey(0)
    kp, kx = jax.random.split(key)
    params = init_params(kp, convX_numLst=(1, 1, 1, 1), num_classes=10)
    prep = prepare_params(params)

    # CIFAR-like input: the architecture (3x stride-2 stages + AvgPool2d(4))
    # requires 32x32 spatial input.  Small batch of 2.
    x = jax.random.normal(kx, (2, 3, 32, 32), jnp.float32)

    out = mini_resnet_forward(prep, x)
    out = jax.block_until_ready(out)

    assert out.shape == (2, 10)
    # softmax rows sum to 1
    assert bool(jnp.all(jnp.abs(jnp.sum(out, axis=-1) - 1.0) < 1e-4))
    print("KERNEL_OK")
</pallas_src>

<mosaic_0001>
module attributes {stable_mosaic.version = 11 : i64} {
  func.func @_conv3x3_kernel(%arg0: i32, %arg1: memref<1160x32xbf16, #tpu.memory_space<vmem>>, %arg2: memref<9x32x128xbf16, #tpu.memory_space<vmem>>, %arg3: memref<1x128xf32, #tpu.memory_space<vmem>>, %arg4: memref<1088x128xbf16, #tpu.memory_space<vmem>>) attributes {dimension_semantics = [#tpu.dimension_semantics<parallel>], iteration_bounds = array<i64: 2>, scalar_prefetch = 0 : i64, scratch_operands = 0 : i64, tpu.core_type = #tpu.core_type<tc>, window_params = [{transform_indices = @transform_0, window_bounds = array<i64: 1160, 32>}, {pipeline_mode = #tpu.pipeline_mode<synchronous>, transform_indices = @transform_1, window_bounds = array<i64: 9, 32, 128>}, {pipeline_mode = #tpu.pipeline_mode<synchronous>, transform_indices = @transform_2, window_bounds = array<i64: 1, 128>}, {transform_indices = @transform_3, window_bounds = array<i64: 1088, 128>}]} {
    %c0 = arith.constant 0 : index
    %c0_0 = arith.constant 0 : index
    %0 = vector.load %arg1[%c0, %c0_0] : memref<1160x32xbf16, #tpu.memory_space<vmem>>, vector<1088x32xbf16>
    %c0_1 = arith.constant 0 : index
    %c0_2 = arith.constant 0 : index
    %c0_3 = arith.constant 0 : index
    %1 = vector.load %arg2[%c0_1, %c0_2, %c0_3] : memref<9x32x128xbf16, #tpu.memory_space<vmem>>, vector<1x32x128xbf16>
    %2 = vector.shape_cast %1 : vector<1x32x128xbf16> to vector<32x128xbf16>
    %cst = arith.constant dense<0.000000e+00> : vector<1088x128xf32>
    %3 = tpu.matmul %0, %2, %cst {dimension_numbers = #tpu.dot_dimension_numbers<[1], [0], [0], [1], [0, 0, 1, 1], [], []>} : vector<1088x32xbf16>, vector<32x128xbf16>, vector<1088x128xf32> -> vector<1088x128xf32>
    %c1 = arith.constant 1 : index
    %c0_4 = arith.constant 0 : index
    %4 = vector.load %arg1[%c1, %c0_4] : memref<1160x32xbf16, #tpu.memory_space<vmem>>, vector<1088x32xbf16>
    %c1_5 = arith.constant 1 : index
    %c0_6 = arith.constant 0 : index
    %c0_7 = arith.constant 0 : index
    %5 = vector.load %arg2[%c1_5, %c0_6, %c0_7] : memref<9x32x128xbf16, #tpu.memory_space<vmem>>, vector<1x32x128xbf16>
    %6 = vector.shape_cast %5 : vector<1x32x128xbf16> to vector<32x128xbf16>
    %cst_8 = arith.constant dense<0.000000e+00> : vector<1088x128xf32>
    %7 = tpu.matmul %4, %6, %cst_8 {dimension_numbers = #tpu.dot_dimension_numbers<[1], [0], [0], [1], [0, 0, 1, 1], [], []>} : vector<1088x32xbf16>, vector<32x128xbf16>, vector<1088x128xf32> -> vector<1088x128xf32>
    %8 = arith.addf %3, %7 : vector<1088x128xf32>
    %c2 = arith.constant 2 : index
    %c0_9 = arith.constant 0 : index
    %9 = vector.load %arg1[%c2, %c0_9] : memref<1160x32xbf16, #tpu.memory_space<vmem>>, vector<1088x32xbf16>
    %c2_10 = arith.constant 2 : index
    %c0_11 = arith.constant 0 : index
    %c0_12 = arith.constant 0 : index
    %10 = vector.load %arg2[%c2_10, %c0_11, %c0_12] : memref<9x32x128xbf16, #tpu.memory_space<vmem>>, vector<1x32x128xbf16>
    %11 = vector.shape_cast %10 : vector<1x32x128xbf16> to vector<32x128xbf16>
    %cst_13 = arith.constant dense<0.000000e+00> : vector<1088x128xf32>
    %12 = tpu.matmul %9, %11, %cst_13 {dimension_numbers = #tpu.dot_dimension_numbers<[1], [0], [0], [1], [0, 0, 1, 1], [], []>} : vector<1088x32xbf16>, vector<32x128xbf16>, vector<1088x128xf32> -> vector<1088x128xf32>
    %13 = arith.addf %8, %12 : vector<1088x128xf32>
    %c34 = arith.constant 34 : index
    %c0_14 = arith.constant 0 : index
    %14 = vector.load %arg1[%c34, %c0_14] : memref<1160x32xbf16, #tpu.memory_space<vmem>>, vector<1088x32xbf16>
    %c3 = arith.constant 3 : index
    %c0_15 = arith.constant 0 : index
    %c0_16 = arith.constant 0 : index
    %15 = vector.load %arg2[%c3, %c0_15, %c0_16] : memref<9x32x128xbf16, #tpu.memory_space<vmem>>, vector<1x32x128xbf16>
    %16 = vector.shape_cast %15 : vector<1x32x128xbf16> to vector<32x128xbf16>
    %cst_17 = arith.constant dense<0.000000e+00> : vector<1088x128xf32>
    %17 = tpu.matmul %14, %16, %cst_17 {dimension_numbers = #tpu.dot_dimension_numbers<[1], [0], [0], [1], [0, 0, 1, 1], [], []>} : vector<1088x32xbf16>, vector<32x128xbf16>, vector<1088x128xf32> -> vector<1088x128xf32>
    %18 = arith.addf %13, %17 : vector<1088x128xf32>
    %c35 = arith.constant 35 : index
    %c0_18 = arith.constant 0 : index
    %19 = vector.load %arg1[%c35, %c0_18] : memref<1160x32xbf16, #tpu.memory_space<vmem>>, vector<1088x32xbf16>
    %c4 = arith.constant 4 : index
    %c0_19 = arith.constant 0 : index
    %c0_20 = arith.constant 0 : index
    %20 = vector.load %arg2[%c4, %c0_19, %c0_20] : memref<9x32x128xbf16, #tpu.memory_space<vmem>>, vector<1x32x128xbf16>
    %21 = vector.shape_cast %20 : vector<1x32x128xbf16> to vector<32x128xbf16>
    %cst_21 = arith.constant dense<0.000000e+00> : vector<1088x128xf32>
    %22 = tpu.matmul %19, %21, %cst_21 {dimension_numbers = #tpu.dot_dimension_numbers<[1], [0], [0], [1], [0, 0, 1, 1], [], []>} : vector<1088x32xbf16>, vector<32x128xbf16>, vector<1088x128xf32> -> vector<1088x128xf32>
    %23 = arith.addf %18, %22 : vector<1088x128xf32>
    %c36 = arith.constant 36 : index
    %c0_22 = arith.constant 0 : index
    %24 = vector.load %arg1[%c36, %c0_22] : memref<1160x32xbf16, #tpu.memory_space<vmem>>, vector<1088x32xbf16>
    %c5 = arith.constant 5 : index
    %c0_23 = arith.constant 0 : index
    %c0_24 = arith.constant 0 : index
    %25 = vector.load %arg2[%c5, %c0_23, %c0_24] : memref<9x32x128xbf16, #tpu.memory_space<vmem>>, vector<1x32x128xbf16>
    %26 = vector.shape_cast %25 : vector<1x32x128xbf16> to vector<32x128xbf16>
    %cst_25 = arith.constant dense<0.000000e+00> : vector<1088x128xf32>
    %27 = tpu.matmul %24, %26, %cst_25 {dimension_numbers = #tpu.dot_dimension_numbers<[1], [0], [0], [1], [0, 0, 1, 1], [], []>} : vector<1088x32xbf16>, vector<32x128xbf16>, vector<1088x128xf32> -> vector<1088x128xf32>
    %28 = arith.addf %23, %27 : vector<1088x128xf32>
    %c68 = arith.constant 68 : index
    %c0_26 = arith.constant 0 : index
    %29 = vector.load %arg1[%c68, %c0_26] : memref<1160x32xbf16, #tpu.memory_space<vmem>>, vector<1088x32xbf16>
    %c6 = arith.constant 6 : index
    %c0_27 = arith.constant 0 : index
    %c0_28 = arith.constant 0 : index
    %30 = vector.load %arg2[%c6, %c0_27, %c0_28] : memref<9x32x128xbf16, #tpu.memory_space<vmem>>, vector<1x32x128xbf16>
    %31 = vector.shape_cast %30 : vector<1x32x128xbf16> to vector<32x128xbf16>
    %cst_29 = arith.constant dense<0.000000e+00> : vector<1088x128xf32>
    %32 = tpu.matmul %29, %31, %cst_29 {dimension_numbers = #tpu.dot_dimension_numbers<[1], [0], [0], [1], [0, 0, 1, 1], [], []>} : vector<1088x32xbf16>, vector<32x128xbf16>, vector<1088x128xf32> -> vector<1088x128xf32>
    %33 = arith.addf %28, %32 : vector<1088x128xf32>
    %c69 = arith.constant 69 : index
    %c0_30 = arith.constant 0 : index
    %34 = vector.load %arg1[%c69, %c0_30] : memref<1160x32xbf16, #tpu.memory_space<vmem>>, vector<1088x32xbf16>
    %c7 = arith.constant 7 : index
    %c0_31 = arith.constant 0 : index
    %c0_32 = arith.constant 0 : index
    %35 = vector.load %arg2[%c7, %c0_31, %c0_32] : memref<9x32x128xbf16, #tpu.memory_space<vmem>>, vector<1x32x128xbf16>
    %36 = vector.shape_cast %35 : vector<1x32x128xbf16> to vector<32x128xbf16>
    %cst_33 = arith.constant dense<0.000000e+00> : vector<1088x128xf32>
    %37 = tpu.matmul %34, %36, %cst_33 {dimension_numbers = #tpu.dot_dimension_numbers<[1], [0], [0], [1], [0, 0, 1, 1], [], []>} : vector<1088x32xbf16>, vector<32x128xbf16>, vector<1088x128xf32> -> vector<1088x128xf32>
    %38 = arith.addf %33, %37 : vector<1088x128xf32>
    %c70 = arith.constant 70 : index
    %c0_34 = arith.constant 0 : index
    %39 = vector.load %arg1[%c70, %c0_34] : memref<1160x32xbf16, #tpu.memory_space<vmem>>, vector<1088x32xbf16>
    %c8 = arith.constant 8 : index
    %c0_35 = arith.constant 0 : index
    %c0_36 = arith.constant 0 : index
    %40 = vector.load %arg2[%c8, %c0_35, %c0_36] : memref<9x32x128xbf16, #tpu.memory_space<vmem>>, vector<1x32x128xbf16>
    %41 = vector.shape_cast %40 : vector<1x32x128xbf16> to vector<32x128xbf16>
    %cst_37 = arith.constant dense<0.000000e+00> : vector<1088x128xf32>
    %42 = tpu.matmul %39, %41, %cst_37 {dimension_numbers = #tpu.dot_dimension_numbers<[1], [0], [0], [1], [0, 0, 1, 1], [], []>} : vector<1088x32xbf16>, vector<32x128xbf16>, vector<1088x128xf32> -> vector<1088x128xf32>
    %43 = arith.addf %38, %42 : vector<1088x128xf32>
    %c0_38 = arith.constant 0 : index
    %c0_39 = arith.constant 0 : index
    %44 = vector.load %arg3[%c0_38, %c0_39] : memref<1x128xf32, #tpu.memory_space<vmem>>, vector<1x128xf32>
    %45 = vector.broadcast %44 : vector<1x128xf32> to vector<1088x128xf32>
    %46 = arith.addf %43, %45 : vector<1088x128xf32>
    %cst_40 = arith.constant 0.000000e+00 : f32
    %47 = vector.broadcast %cst_40 : f32 to vector<1088x128xf32>
    %48 = arith.maximumf %46, %47 : vector<1088x128xf32>
    %49 = arith.truncf %48 : vector<1088x128xf32> to vector<1088x128xbf16>
    %c0_41 = arith.constant 0 : index
    %c0_42 = arith.constant 0 : index
    %50 = vector.load %arg4[%c0_41, %c0_42] : memref<1088x128xbf16, #tpu.memory_space<vmem>>, vector<1088x128xbf16>
    tpu.vector_store %arg4[%c0_41, %c0_42], %49 {strides = array<i32>} : memref<1088x128xbf16, #tpu.memory_space<vmem>>, vector<1088x128xbf16>,
    return
  }
  func.func @transform_0(%arg0: i32) -> (i32, i32) {
    %c0_i32 = arith.constant 0 : i32
    %c0_i32_0 = arith.constant 0 : i32
    return %arg0, %c0_i32 : i32, i32
  }
  func.func @transform_1(%arg0: i32) -> (i32, i32, i32) {
    %c0_i32 = arith.constant 0 : i32
    %c0_i32_0 = arith.constant 0 : i32
    %c0_i32_1 = arith.constant 0 : i32
    %c0_i32_2 = arith.constant 0 : i32
    return %c0_i32, %c0_i32_0, %c0_i32_1 : i32, i32, i32
  }
  func.func @transform_2(%arg0: i32) -> (i32, i32) {
    %c0_i32 = arith.constant 0 : i32
    %c0_i32_0 = arith.constant 0 : i32
    %c0_i32_1 = arith.constant 0 : i32
    return %c0_i32, %c0_i32_0 : i32, i32
  }
  func.func @transform_3(%arg0: i32) -> (i32, i32) {
    %c0_i32 = arith.constant 0 : i32
    %c0_i32_0 = arith.constant 0 : i32
    return %arg0, %c0_i32 : i32, i32
  }
}

</mosaic_0001>

<llo_original>
// kernel: tpu_custom_call.1
$region0: #{tpu_custom_call.1}
  #allocation0 [shape = 'u32[]', space=smem, size = 0x4, offset = 0x4, fixed_abs, tag = 'smem constant byte address 0x4 - core index']
  #allocation1 [shape = 'u32[72,128]{1,0:T(1,128)}', space=vmem, size = 0x9000, scoped, tag = 'internal scratch']
  %s0 = inlined_call_operand.vmem [shape: bf16[2320,32], index: 0, kind: input, shape index: {}]
  %s1 = inlined_call_operand.vmem [shape: bf16[9,32,128], index: 1, kind: input, shape index: {}]
  %s2 = inlined_call_operand.vmem [shape: f32[1,128], index: 2, kind: input, shape index: {}]
  %s3 = inlined_call_operand.hbm [shape: bf16[2176,128], index: 3, kind: output, shape index: {}]
  %s4 = sld [smem:[#allocation0]]
  $region45: #{tpu_custom_call.1} parent=0
    _
  %s6 = ssub.s32 1, %s4
  %s7 = scalar_select 0, %s6, %s4
  $region1: #{tpu_custom_call.1} parent=0
    #allocation2 [shape = 'u8[557056]{0}', space=vmem, size = 0x88000, scoped, tag = 'output window, operand 0']
    #allocation3 [shape = 's32[2]{0}', space=sflag, size = 0x8, scoped, tag = 'scoped memory for tpu_custom_call.1']
    %8 = vsyncpa [#allocation3], 0
    %s9 = scalar_lea.sflag [#allocation3], 1
    %10 = vsyncpa %s9, 0
    loop: start=0, step=1, limit=4
    $region2: #{tpu_custom_call.1} parent=1 // loop_pre_header
      _
    $region3: #{tpu_custom_call.1} parent=1 // loop_header
      %s12 = sphi 0, %s16
      %p13 = scmp.ge.s32.totalorder %s12, 4
      %s22 = sphi 0, %s24
      %s25 = sphi 0, %s22
      %s26 = sphi 0, %s25
      %s42 = sphi 0, %s26
      %s46 = sphi 0, %s46
      %s48 = sphi 0, %s46
      %s49 = sphi 0, %s48
      %s63 = sphi 0, %s49
      %s67 = sphi 0, %s67
      %s69 = sphi 0, %s67
      %s70 = sphi 0, %s69
      %s84 = sphi 0, %s70
      %s90 = sphi 0, %s92
      %s93 = sphi 0, %s90
      %s94 = sphi 0, %s93
      %s110 = sphi 0, %s94
    $region4: #{tpu_custom_call.1} parent=1 // loop_header_branch
      %15 = sbr.rel (%p13) target = $region8
    $region5: #{tpu_custom_call.1} parent=1 // loop_body
      %s17 = ssub.s32 %s12, 1
      %s18 = ssub.s32 %s12, 2
      %s19 = sadd.s32 %s12, 1
      %s20 = ssub.s32 %s12, %s19
      %p21 = scmp.eq.s32.totalorder %s20, 0
      %s23 = sadd.s32 %s22, 1
      %s24 = scalar_select %p21, %s22, %s23
      %p27 = pneg %p21
      %p28 = scmp.eq.s32.totalorder %s12, 1
      %p29 = por %p27, %p28
      %p30 = scmp.ne.s32.totalorder %s22, %s25
      %p31 = scmp.eq.s32.totalorder %s12, 0
      %p32 = por %p30, %p31
      %p33 = scmp.ne.s32.totalorder %s22, %s25
      %p34 = scmp.eq.s32.totalorder %s17, 1
      %p35 = por %p33, %p34
      %p36 = scmp.ne.s32.totalorder %s25, %s26
      %p37 = scmp.eq.s32.totalorder %s17, 0
      %p38 = por %p36, %p37
      %p39 = scmp.ne.s32.totalorder %s25, %s26
      %p40 = scmp.eq.s32.totalorder %s18, 1
      %p41 = por %p39, %p40
      %p43 = scmp.ne.s32.totalorder %s26, %s42
      %p44 = scmp.eq.s32.totalorder %s18, 0
      %p45 = por %p43, %p44
      %s47 = sadd.s32 %s46, 1
      %p50 = scmp.eq.s32.totalorder %s12, 1
      %p51 = scmp.ne.s32.totalorder %s46, %s48
      %p52 = scmp.eq.s32.totalorder %s12, 0
      %p53 = por %p51, %p52
      %p54 = scmp.ne.s32.totalorder %s46, %s48
      %p55 = scmp.eq.s32.totalorder %s17, 1
      %p56 = por %p54, %p55
      %p57 = scmp.ne.s32.totalorder %s48, %s49
      %p58 = scmp.eq.s32.totalorder %s17, 0
      %p59 = por %p57, %p58
      %p60 = scmp.ne.s32.totalorder %s48, %s49
      %p61 = scmp.eq.s32.totalorder %s18, 1
      %p62 = por %p60, %p61
      %p64 = scmp.ne.s32.totalorder %s49, %s63
      %p65 = scmp.eq.s32.totalorder %s18, 0
      %p66 = por %p64, %p65
      %s68 = sadd.s32 %s67, 1
      %p71 = scmp.eq.s32.totalorder %s12, 1
      %p72 = scmp.ne.s32.totalorder %s67, %s69
      %p73 = scmp.eq.s32.totalorder %s12, 0
      %p74 = por %p72, %p73
      %p75 = scmp.ne.s32.totalorder %s67, %s69
      %p76 = scmp.eq.s32.totalorder %s17, 1
      %p77 = por %p75, %p76
      %p78 = scmp.ne.s32.totalorder %s69, %s70
      %p79 = scmp.eq.s32.totalorder %s17, 0
      %p80 = por %p78, %p79
      %p81 = scmp.ne.s32.totalorder %s69, %s70
      %p82 = scmp.eq.s32.totalorder %s18, 1
      %p83 = por %p81, %p82
      %p85 = scmp.ne.s32.totalorder %s70, %s84
      %p86 = scmp.eq.s32.totalorder %s18, 0
      %p87 = por %p85, %p86
      %s88 = ssub.s32 %s12, %s19
      %p89 = scmp.eq.s32.totalorder %s88, 0
      %s91 = sadd.s32 %s90, 1
      %s92 = scalar_select %p89, %s90, %s91
      %p95 = pneg %p89
      %p96 = scmp.eq.s32.totalorder %s12, 1
      %p97 = por %p95, %p96
      %p98 = scmp.ne.s32.totalorder %s90, %s93
      %p99 = scmp.eq.s32.totalorder %s12, 0
      %p100 = por %p98, %p99
      %p101 = scmp.ne.s32.totalorder %s90, %s93
      %p102 = scmp.eq.s32.totalorder %s17, 1
      %p103 = por %p101, %p102
      %p104 = scmp.ne.s32.totalorder %s93, %s94
      %p105 = scmp.eq.s32.totalorder %s17, 0
      %p106 = por %p104, %p105
      %p107 = scmp.ne.s32.totalorder %s93, %s94
      %p108 = scmp.eq.s32.totalorder %s18, 1
      %p109 = por %p107, %p108
      %p111 = scmp.ne.s32.totalorder %s94, %s110
      %p112 = scmp.eq.s32.totalorder %s18, 0
      %p113 = por %p111, %p112
      %p114 = scmp.le.s32.totalorder 1, %s12
      %p115 = scmp.lt.s32.totalorder %s12, 3
      %p116 = pnand %p114, %p115
      %p117 = pneg %p116
      // Predicated region
      $region9: #{tpu_custom_call.1} parent=5 // pred_check
        _
      $region10: #{tpu_custom_call.1} parent=5 // pred_check_branch
        %119 = sbr.rel (%p116) target = $region12
      $region11: #{tpu_custom_call.1} parent=5 // pred_region
        %s120 = ssub.s32 %s12, 1
        // Predicated region
        $region13: #{tpu_custom_call.1} parent=11 // pred_check
          %p121 = pneg %p59
        $region14: #{tpu_custom_call.1} parent=11 // pred_check_branch
          %123 = sbr.rel (%p121) target = $region16
        $region15: #{tpu_custom_call.1} parent=11 // pred_region
          _
        $region16: #{tpu_custom_call.1} parent=11 // pred_fallthru
          _
        // Predicated region
        $region17: #{tpu_custom_call.1} parent=11 // pred_check
          %p124 = pneg %p80
        $region18: #{tpu_custom_call.1} parent=11 // pred_check_branch
          %126 = sbr.rel (%p124) target = $region20
        $region19: #{tpu_custom_call.1} parent=11 // pred_region
          _
        $region20: #{tpu_custom_call.1} parent=11 // pred_fallthru
          _
      $region12: #{tpu_custom_call.1} parent=5 // pred_fallthru
        _
      %p127 = scmp.lt.s32.totalorder %s12, 2
      // Predicated region
      $region21: #{tpu_custom_call.1} parent=5 // pred_check
        %p128 = pneg %p127
      $region22: #{tpu_custom_call.1} parent=5 // pred_check_branch
        %130 = sbr.rel (%p128) target = $region24
      $region23: #{tpu_custom_call.1} parent=5 // pred_region
        // Predicated region
        $region25: #{tpu_custom_call.1} parent=23 // pred_check
          %p131 = pneg %p32
        $region26: #{tpu_custom_call.1} parent=23 // pred_check_branch
          %133 = sbr.rel (%p131) target = $region28
        $region27: #{tpu_custom_call.1} parent=23 // pred_region
          %s134 = smul.u32 145, %s12
          %p135 = scmp.lt.s32.totalorder %s134, 289
          %s136 = scalar_select %p135, %s134, 289
          %s137 = smul.addr %s136, 4
          %s138 = scalar_lea.vmem %s0, %s137
          %s139 = smul.u32 145, %s12
        $region28: #{tpu_custom_call.1} parent=23 // pred_fallthru
          _
      $region24: #{tpu_custom_call.1} parent=5 // pred_fallthru
        _
      %p140 = scmp.le.s32.totalorder 1, %s12
      %p141 = scmp.lt.s32.totalorder %s12, 3
      %p142 = pnand %p140, %p141
      %p143 = pneg %p142
      // Predicated region
      $region29: #{tpu_custom_call.1} parent=5 // pred_check
        _
      $region30: #{tpu_custom_call.1} parent=5 // pred_check_branch
        %145 = sbr.rel (%p142) target = $region32
      $region31: #{tpu_custom_call.1} parent=5 // pred_region
        %s146 = ssub.s32 %s12, 1
        %s147 = smul.u32 145, %s17
        %p148 = scmp.lt.s32.totalorder %s147, 289
        %s149 = scalar_select %p148, %s147, 289
        %s150 = smul.addr %s149, 4
        %s151 = scalar_lea.vmem %s0, %s150
        %p152 = pneg %p38
        %p153 = pneg %p35
        %p154 = pneg %p59
        %p155 = pneg %p56
        %p156 = pneg %p80
        %p157 = pneg %p77
        %p158 = pneg %p106
        %p159 = pneg %p103
        %s160 = sand.u32 %s93, 1
        %s161 = scalar_lea.sflag [#allocation3], %s160
        %s162 = sand.u32 %s93, 1
        %s163 = smul.addr %s162, 544
        %s164 = scalar_lea.vmem [#allocation2], %s163
        %s165 = smul.u32 145, %s17
        %p166 = scmp.lt.s32.totalorder %s165, 289
        %s167 = scalar_select %p166, %s165, 289
        %s168 = smul.addr %s167, 4
        %s169 = scalar_lea.vmem %s0, %s168
        %s170 = smul.u32 145, %s17
        %s171 = smul.u32 136, %s17
        %v173 = vld [vmem:[%s169] sm:$0xf]
        %v174 = vld [vmem:[%s169 + $0x4] sm:$0xf]
        %v175 = vld [vmem:[%s169 + $0x8] sm:$0xf]
        %v176 = vld [vmem:[%s169 + $0xc] sm:$0xf]
        %v177 = vld [vmem:[%s169 + $0x10] sm:$0xf]
        %v178 = vld [vmem:[%s169 + $0x14] sm:$0xf]
        %v179 = vld [vmem:[%s169 + $0x18] sm:$0xf]
        %v180 = vld [vmem:[%s169 + $0x1c] sm:$0xf]
        %v181 = vld [vmem:[%s169 + $0x20] sm:$0xf]
        %v182 = vld [vmem:[%s169 + $0x24] sm:$0xf]
        %v183 = vld [vmem:[%s169 + $0x28] sm:$0xf]
        %v184 = vld [vmem:[%s169 + $0x2c] sm:$0xf]
        %v185 = vld [vmem:[%s169 + $0x30] sm:$0xf]
        %v186 = vld [vmem:[%s169 + $0x34] sm:$0xf]
        %v187 = vld [vmem:[%s169 + $0x38] sm:$0xf]
        %v188 = vld [vmem:[%s169 + $0x3c] sm:$0xf]
        %v189 = vld [vmem:[%s169 + $0x40] sm:$0xf]
        %v190 = vld [vmem:[%s169 + $0x44] sm:$0xf]
        %v191 = vld [vmem:[%s169 + $0x48] sm:$0xf]
        %v192 = vld [vmem:[%s169 + $0x4c] sm:$0xf]
        %v193 = vld [vmem:[%s169 + $0x50] sm:$0xf]
        %v194 = vld [vmem:[%s169 + $0x54] sm:$0xf]
        %v195 = vld [vmem:[%s169 + $0x58] sm:$0xf]
        %v196 = vld [vmem:[%s169 + $0x5c] sm:$0xf]
        %v197 = vld [vmem:[%s169 + $0x60] sm:$0xf]
        %v198 = vld [vmem:[%s169 + $0x64] sm:$0xf]
        %v199 = vld [vmem:[%s169 + $0x68] sm:$0xf]
        %v200 = vld [vmem:[%s169 + $0x6c] sm:$0xf]
        %v201 = vld [vmem:[%s169 + $0x70] sm:$0xf]
        %v202 = vld [vmem:[%s169 + $0x74] sm:$0xf]
        %v203 = vld [vmem:[%s169 + $0x78] sm:$0xf]
        %v204 = vld [vmem:[%s169 + $0x7c] sm:$0xf]
        %v205 = vld [vmem:[%s169 + $0x80] sm:$0xf]
        %v206 = vld [vmem:[%s169 + $0x84] sm:$0xf]
        %v207 = vld [vmem:[%s169 + $0x88] sm:$0xf]
        %v208 = vld [vmem:[%s169 + $0x8c] sm:$0xf]
        %v209 = vld [vmem:[%s169 + $0x90] sm:$0xf]
        %v210 = vld [vmem:[%s169 + $0x94] sm:$0xf]
        %v211 = vld [vmem:[%s169 + $0x98] sm:$0xf]
        %v212 = vld [vmem:[%s169 + $0x9c] sm:$0xf]
        %v213 = vld [vmem:[%s169 + $0xa0] sm:$0xf]
        %v214 = vld [vmem:[%s169 + $0xa4] sm:$0xf]
        %v215 = vld [vmem:[%s169 + $0xa8] sm:$0xf]
        %v216 = vld [vmem:[%s169 + $0xac] sm:$0xf]
        %v217 = vld [vmem:[%s169 + $0xb0] sm:$0xf]
        %v218 = vld [vmem:[%s169 + $0xb4] sm:$0xf]
        %v219 = vld [vmem:[%s169 + $0xb8] sm:$0xf]
        %v220 = vld [vmem:[%s169 + $0xbc] sm:$0xf]
        %v221 = vld [vmem:[%s169 + $0xc0] sm:$0xf]
        %v222 = vld [vmem:[%s169 + $0xc4] sm:$0xf]
        %v223 = vld [vmem:[%s169 + $0xc8] sm:$0xf]
        %v224 = vld [vmem:[%s169 + $0xcc] sm:$0xf]
        %v225 = vld [vmem:[%s169 + $0xd0] sm:$0xf]
        %v226 = vld [vmem:[%s169 + $0xd4] sm:$0xf]
        %v227 = vld [vmem:[%s169 + $0xd8] sm:$0xf]
        %v228 = vld [vmem:[%s169 + $0xdc] sm:$0xf]
        %v229 = vld [vmem:[%s169 + $0xe0] sm:$0xf]
        %v230 = vld [vmem:[%s169 + $0xe4] sm:$0xf]
        %v231 = vld [vmem:[%s169 + $0xe8] sm:$0xf]
        %v232 = vld [vmem:[%s169 + $0xec] sm:$0xf]
        %v233 = vld [vmem:[%s169 + $0xf0] sm:$0xf]
        %v234 = vld [vmem:[%s169 + $0xf4] sm:$0xf]
        %v235 = vld [vmem:[%s169 + $0xf8] sm:$0xf]
        %v236 = vld [vmem:[%s169 + $0xfc] sm:$0xf]
        %v237 = vld [vmem:[%s169 + $0x100] sm:$0xf]
        %v238 = vld [vmem:[%s169 + $0x104] sm:$0xf]
        %v239 = vld [vmem:[%s169 + $0x108] sm:$0xf]
        %v240 = vld [vmem:[%s169 + $0x10c] sm:$0xf]
        %v241 = vld [vmem:[%s169 + $0x110] sm:$0xf]
        %v242 = vld [vmem:[%s169 + $0x114] sm:$0xf]
        %v243 = vld [vmem:[%s169 + $0x118] sm:$0xf]
        %v244 = vld [vmem:[%s169 + $0x11c] sm:$0xf]
        %v245 = vld [vmem:[%s169 + $0x120] sm:$0xf]
        %v246 = vld [vmem:[%s169 + $0x124] sm:$0xf]
        %v247 = vld [vmem:[%s169 + $0x128] sm:$0xf]
        %v248 = vld [vmem:[%s169 + $0x12c] sm:$0xf]
        %v249 = vld [vmem:[%s169 + $0x130] sm:$0xf]
        %v250 = vld [vmem:[%s169 + $0x134] sm:$0xf]
        %v251 = vld [vmem:[%s169 + $0x138] sm:$0xf]
        %v252 = vld [vmem:[%s169 + $0x13c] sm:$0xf]
        %v253 = vld [vmem:[%s169 + $0x140] sm:$0xf]
        %v254 = vld [vmem:[%s169 + $0x144] sm:$0xf]
        %v255 = vld [vmem:[%s169 + $0x148] sm:$0xf]
        %v256 = vld [vmem:[%s169 + $0x14c] sm:$0xf]
        %v257 = vld [vmem:[%s169 + $0x150] sm:$0xf]
        %v258 = vld [vmem:[%s169 + $0x154] sm:$0xf]
        %v259 = vld [vmem:[%s169 + $0x158] sm:$0xf]
        %v260 = vld [vmem:[%s169 + $0x15c] sm:$0xf]
        %v261 = vld [vmem:[%s169 + $0x160] sm:$0xf]
        %v262 = vld [vmem:[%s169 + $0x164] sm:$0xf]
        %v263 = vld [vmem:[%s169 + $0x168] sm:$0xf]
        %v264 = vld [vmem:[%s169 + $0x16c] sm:$0xf]
        %v265 = vld [vmem:[%s169 + $0x170] sm:$0xf]
        %v266 = vld [vmem:[%s169 + $0x174] sm:$0xf]
        %v267 = vld [vmem:[%s169 + $0x178] sm:$0xf]
        %v268 = vld [vmem:[%s169 + $0x17c] sm:$0xf]
        %v269 = vld [vmem:[%s169 + $0x180] sm:$0xf]
        %v270 = vld [vmem:[%s169 + $0x184] sm:$0xf]
        %v271 = vld [vmem:[%s169 + $0x188] sm:$0xf]
        %v272 = vld [vmem:[%s169 + $0x18c] sm:$0xf]
        %v273 = vld [vmem:[%s169 + $0x190] sm:$0xf]
        %v274 = vld [vmem:[%s169 + $0x194] sm:$0xf]
        %v275 = vld [vmem:[%s169 + $0x198] sm:$0xf]
        %v276 = vld [vmem:[%s169 + $0x19c] sm:$0xf]
        %v277 = vld [vmem:[%s169 + $0x1a0] sm:$0xf]
        %v278 = vld [vmem:[%s169 + $0x1a4] sm:$0xf]
        %v279 = vld [vmem:[%s169 + $0x1a8] sm:$0xf]
        %v280 = vld [vmem:[%s169 + $0x1ac] sm:$0xf]
        %v281 = vld [vmem:[%s169 + $0x1b0] sm:$0xf]
        %v282 = vld [vmem:[%s169 + $0x1b4] sm:$0xf]
        %v283 = vld [vmem:[%s169 + $0x1b8] sm:$0xf]
        %v284 = vld [vmem:[%s169 + $0x1bc] sm:$0xf]
        %v285 = vld [vmem:[%s169 + $0x1c0] sm:$0xf]
        %v286 = vld [vmem:[%s169 + $0x1c4] sm:$0xf]
        %v287 = vld [vmem:[%s169 + $0x1c8] sm:$0xf]
        %v288 = vld [vmem:[%s169 + $0x1cc] sm:$0xf]
        %v289 = vld [vmem:[%s169 + $0x1d0] sm:$0xf]
        %v290 = vld [vmem:[%s169 + $0x1d4] sm:$0xf]
        %v291 = vld [vmem:[%s169 + $0x1d8] sm:$0xf]
        %v292 = vld [vmem:[%s169 + $0x1dc] sm:$0xf]
        %v293 = vld [vmem:[%s169 + $0x1e0] sm:$0xf]
        %v294 = vld [vmem:[%s169 + $0x1e4] sm:$0xf]
        %v295 = vld [vmem:[%s169 + $0x1e8] sm:$0xf]
        %v296 = vld [vmem:[%s169 + $0x1ec] sm:$0xf]
        %v297 = vld [vmem:[%s169 + $0x1f0] sm:$0xf]
        %v298 = vld [vmem:[%s169 + $0x1f4] sm:$0xf]
        %v299 = vld [vmem:[%s169 + $0x1f8] sm:$0xf]
        %v300 = vld [vmem:[%s169 + $0x1fc] sm:$0xf]
        %v301 = vld [vmem:[%s169 + $0x200] sm:$0xf]
        %v302 = vld [vmem:[%s169 + $0x204] sm:$0xf]
        %v303 = vld [vmem:[%s169 + $0x208] sm:$0xf]
        %v304 = vld [vmem:[%s169 + $0x20c] sm:$0xf]
        %v305 = vld [vmem:[%s169 + $0x210] sm:$0xf]
        %v306 = vld [vmem:[%s169 + $0x214] sm:$0xf]
        %v307 = vld [vmem:[%s169 + $0x218] sm:$0xf]
        %v308 = vld [vmem:[%s169 + $0x21c] sm:$0xf]
        %v309 = vld [vmem:[%s1] sm:$0xf]
        %v310 = vld [vmem:[%s1 + $0x4] sm:$0xf]
        %v311 = vld [vmem:[%s1 + $0x8] sm:$0xf]
        %v312 = vld [vmem:[%s1 + $0xc] sm:$0xf]
        %v313 = vld [vmem:[%s169 + $0x220] sm:$0x1]
        %s314 = scalar_lea.vmem %s1, 16
        %v315 = vld [vmem:[%s314] sm:$0xf]
        %v316 = vld [vmem:[%s314 + $0x4] sm:$0xf]
        %v317 = vld [vmem:[%s314 + $0x8] sm:$0xf]
        %v318 = vld [vmem:[%s314 + $0xc] sm:$0xf]
        %v456 = vunpack.c.l.b16 %v173
        %v457 = vunpack.c.l.b16 %v174
        %v458 = vunpack.c.l.b16 %v175
        %v459 = vunpack.c.l.b16 %v176
        %v460 = vunpack.c.l.b16 %v177
        %v461 = vunpack.c.l.b16 %v178
        %v462 = vunpack.c.l.b16 %v179
        %v463 = vunpack.c.l.b16 %v180
        %v464 = vunpack.c.l.b16 %v181
        %v465 = vunpack.c.l.b16 %v182
        %v466 = vunpack.c.l.b16 %v183
        %v467 = vunpack.c.l.b16 %v184
        %v468 = vunpack.c.l.b16 %v185
        %v469 = vunpack.c.l.b16 %v186
        %v470 = vunpack.c.l.b16 %v187
        %v471 = vunpack.c.l.b16 %v188
        %v472 = vunpack.c.l.b16 %v189
        %v473 = vunpack.c.l.b16 %v190
        %v474 = vunpack.c.l.b16 %v191
        %v475 = vunpack.c.l.b16 %v192
        %v476 = vunpack.c.l.b16 %v193
        %v477 = vunpack.c.l.b16 %v194
        %v478 = vunpack.c.l.b16 %v195
        %v479 = vunpack.c.l.b16 %v196
        %v480 = vunpack.c.l.b16 %v197
        %v481 = vunpack.c.l.b16 %v198
        %v482 = vunpack.c.l.b16 %v199
        %v483 = vunpack.c.l.b16 %v200
        %v484 = vunpack.c.l.b16 %v201
        %v485 = vunpack.c.l.b16 %v202
        %v486 = vunpack.c.l.b16 %v203
        %v487 = vunpack.c.l.b16 %v204
        %v488 = vunpack.c.l.b16 %v205
        %v489 = vunpack.c.l.b16 %v206
        %v490 = vunpack.c.l.b16 %v207
        %v491 = vunpack.c.l.b16 %v208
        %v492 = vunpack.c.l.b16 %v209
        %v493 = vunpack.c.l.b16 %v210
        %v494 = vunpack.c.l.b16 %v211
        %v495 = vunpack.c.l.b16 %v212
        %v496 = vunpack.c.l.b16 %v213
        %v497 = vunpack.c.l.b16 %v214
        %v498 = vunpack.c.l.b16 %v215
        %v499 = vunpack.c.l.b16 %v216
        %v500 = vunpack.c.l.b16 %v217
        %v501 = vunpack.c.l.b16 %v218
        %v502 = vunpack.c.l.b16 %v219
        %v503 = vunpack.c.l.b16 %v220
        %v504 = vunpack.c.l.b16 %v221
        %v505 = vunpack.c.l.b16 %v222
        %v506 = vunpack.c.l.b16 %v223
        %v507 = vunpack.c.l.b16 %v224
        %v508 = vunpack.c.l.b16 %v225
        %v509 = vunpack.c.l.b16 %v226
        %v510 = vunpack.c.l.b16 %v227
        %v511 = vunpack.c.l.b16 %v228
        %v512 = vunpack.c.l.b16 %v229
        %v513 = vunpack.c.l.b16 %v230
        %v514 = vunpack.c.l.b16 %v231
        %v515 = vunpack.c.l.b16 %v232
        %v516 = vunpack.c.l.b16 %v233
        %v517 = vunpack.c.l.b16 %v234
        %v518 = vunpack.c.l.b16 %v235
        %v519 = vunpack.c.l.b16 %v236
        %v520 = vunpack.c.l.b16 %v237
        %v521 = vunpack.c.l.b16 %v238
        %v522 = vunpack.c.l.b16 %v239
        %v523 = vunpack.c.l.b16 %v240
        %v524 = vunpack.c.l.b16 %v241
        %v525 = vunpack.c.l.b16 %v242
        %v526 = vunpack.c.l.b16 %v243
        %v527 = vunpack.c.l.b16 %v244
        %v528 = vunpack.c.l.b16 %v245
        %v529 = vunpack.c.l.b16 %v246
        %v530 = vunpack.c.l.b16 %v247
        %v531 = vunpack.c.l.b16 %v248
        %v532 = vunpack.c.l.b16 %v249
        %v533 = vunpack.c.l.b16 %v250
        %v534 = vunpack.c.l.b16 %v251
        %v535 = vunpack.c.l.b16 %v252
        %v536 = vunpack.c.l.b16 %v253
        %v537 = vunpack.c.l.b16 %v254
        %v538 = vunpack.c.l.b16 %v255
        %v539 = vunpack.c.l.b16 %v256
        %v540 = vunpack.c.l.b16 %v257
        %v541 = vunpack.c.l.b16 %v258
        %v542 = vunpack.c.l.b16 %v259
        %v543 = vunpack.c.l.b16 %v260
        %v544 = vunpack.c.l.b16 %v261
        %v545 = vunpack.c.l.b16 %v262
        %v546 = vunpack.c.l.b16 %v263
        %v547 = vunpack.c.l.b16 %v264
        %v548 = vunpack.c.l.b16 %v265
        %v549 = vunpack.c.l.b16 %v266
        %v550 = vunpack.c.l.b16 %v267
        %v551 = vunpack.c.l.b16 %v268
        %v552 = vunpack.c.l.b16 %v269
        %v553 = vunpack.c.l.b16 %v270
        %v554 = vunpack.c.l.b16 %v271
        %v555 = vunpack.c.l.b16 %v272
        %v556 = vunpack.c.l.b16 %v273
        %v557 = vunpack.c.l.b16 %v274
        %v558 = vunpack.c.l.b16 %v275
        %v559 = vunpack.c.l.b16 %v276
        %v560 = vunpack.c.l.b16 %v277
        %v561 = vunpack.c.l.b16 %v278
        %v562 = vunpack.c.l.b16 %v279
        %v563 = vunpack.c.l.b16 %v280
        %v564 = vunpack.c.l.b16 %v281
        %v565 = vunpack.c.l.b16 %v282
        %v566 = vunpack.c.l.b16 %v283
        %v567 = vunpack.c.l.b16 %v284
        %v568 = vunpack.c.l.b16 %v285
        %v569 = vunpack.c.l.b16 %v286
        %v570 = vunpack.c.l.b16 %v287
        %v571 = vunpack.c.l.b16 %v288
        %v572 = vunpack.c.l.b16 %v289
        %v573 = vunpack.c.l.b16 %v290
        %v574 = vunpack.c.l.b16 %v291
        %v575 = vunpack.c.l.b16 %v292
        %v576 = vunpack.c.l.b16 %v293
        %v577 = vunpack.c.l.b16 %v294
        %v578 = vunpack.c.l.b16 %v295
        %v579 = vunpack.c.l.b16 %v296
        %v580 = vunpack.c.l.b16 %v297
        %v581 = vunpack.c.l.b16 %v298
        %v582 = vunpack.c.l.b16 %v299
        %v583 = vunpack.c.l.b16 %v300
        %v584 = vunpack.c.l.b16 %v301
        %v585 = vunpack.c.l.b16 %v302
        %v586 = vunpack.c.l.b16 %v303
        %v587 = vunpack.c.l.b16 %v304
        %v588 = vunpack.c.l.b16 %v305
        %v589 = vunpack.c.l.b16 %v306
        %v590 = vunpack.c.l.b16 %v307
        %v591 = vunpack.c.l.b16 %v308
        %v592 = vunpack.c.l.b16 %v313
        %v593 = vpack.c.b16 %v457, %v456
        %v594 = vpack.c.b16 %v459, %v458
        %v595 = vpack.c.b16 %v461, %v460
        %v596 = vpack.c.b16 %v463, %v462
        %v597 = vpack.c.b16 %v465, %v464
        %v598 = vpack.c.b16 %v467, %v466
        %v599 = vpack.c.b16 %v469, %v468
        %v600 = vpack.c.b16 %v471, %v470
        %v601 = vpack.c.b16 %v473, %v472
        %v602 = vpack.c.b16 %v475, %v474
        %v603 = vpack.c.b16 %v477, %v476
        %v604 = vpack.c.b16 %v479, %v478
        %v605 = vpack.c.b16 %v481, %v480
        %v606 = vpack.c.b16 %v483, %v482
        %v607 = vpack.c.b16 %v485, %v484
        %v608 = vpack.c.b16 %v487, %v486
        %v609 = vpack.c.b16 %v489, %v488
        %v610 = vpack.c.b16 %v491, %v490
        %v611 = vpack.c.b16 %v493, %v492
        %v612 = vpack.c.b16 %v495, %v494
        %v613 = vpack.c.b16 %v497, %v496
        %v614 = vpack.c.b16 %v499, %v498
        %v615 = vpack.c.b16 %v501, %v500
        %v616 = vpack.c.b16 %v503, %v502
        %v617 = vpack.c.b16 %v505, %v504
        %v618 = vpack.c.b16 %v507, %v506
        %v619 = vpack.c.b16 %v509, %v508
        %v620 = vpack.c.b16 %v511, %v510
        %v621 = vpack.c.b16 %v513, %v512
        %v622 = vpack.c.b16 %v515, %v514
        %v623 = vpack.c.b16 %v517, %v516
        %v624 = vpack.c.b16 %v519, %v518
        %v625 = vpack.c.b16 %v521, %v520
        %v626 = vpack.c.b16 %v523, %v522
        %v627 = vpack.c.b16 %v525, %v524
        %v628 = vpack.c.b16 %v527, %v526
        %v629 = vpack.c.b16 %v529, %v528
        %v630 = vpack.c.b16 %v531, %v530
        %v631 = vpack.c.b16 %v533, %v532
        %v632 = vpack.c.b16 %v535, %v534
        %v633 = vpack.c.b16 %v537, %v536
        %v634 = vpack.c.b16 %v539, %v538
        %v635 = vpack.c.b16 %v541, %v540
        %v636 = vpack.c.b16 %v543, %v542
        %v637 = vpack.c.b16 %v545, %v544
        %v638 = vpack.c.b16 %v547, %v546
        %v639 = vpack.c.b16 %v549, %v548
        %v640 = vpack.c.b16 %v551, %v550
        %v641 = vpack.c.b16 %v553, %v552
        %v642 = vpack.c.b16 %v555, %v554
        %v643 = vpack.c.b16 %v557, %v556
        %v644 = vpack.c.b16 %v559, %v558
        %v645 = vpack.c.b16 %v561, %v560
        %v646 = vpack.c.b16 %v563, %v562
        %v647 = vpack.c.b16 %v565, %v564
        %v648 = vpack.c.b16 %v567, %v566
        %v649 = vpack.c.b16 %v569, %v568
        %v650 = vpack.c.b16 %v571, %v570
        %v651 = vpack.c.b16 %v573, %v572
        %v652 = vpack.c.b16 %v575, %v574
        %v653 = vpack.c.b16 %v577, %v576
        %v654 = vpack.c.b16 %v579, %v578
        %v655 = vpack.c.b16 %v581, %v580
        %v656 = vpack.c.b16 %v583, %v582
        %v657 = vpack.c.b16 %v585, %v584
        %v658 = vpack.c.b16 %v587, %v586
        %v659 = vpack.c.b16 %v589, %v588
        %v660 = vpack.c.b16 %v591, %v590
        %v661 = vpack.c.b16 %v592, %v592
        %vm662 = vsmask.f32 7424
        %v664 = vshrl.u32 %v593, 16
        %v666 = vshll.u32 %v593, 16
        %v668 = vrot.slane %v666, 1
        %v669 = vor.u32 %v664, %v668
        %v671 = vshll.u32 %v594, 16
        %v673 = vrot.slane %v671, 1
        %v674 = vsel %vm662, %v669, %v673
        %v675 = vshrl.u32 %v594, 16
        %v677 = vor.u32 %v675, %v673
        %v679 = vshll.u32 %v595, 16
        %v681 = vrot.slane %v679, 1
        %v682 = vsel %vm662, %v677, %v681
        %v683 = vshrl.u32 %v595, 16
        %v685 = vor.u32 %v683, %v681
        %v687 = vshll.u32 %v596, 16
        %v689 = vrot.slane %v687, 1
        %v690 = vsel %vm662, %v685, %v689
        %v691 = vshrl.u32 %v596, 16
        %v693 = vor.u32 %v691, %v689
        %v695 = vshll.u32 %v597, 16
        %v697 = vrot.slane %v695, 1
        %v698 = vsel %vm662, %v693, %v697
        %v699 = vshrl.u32 %v597, 16
        %v701 = vor.u32 %v699, %v697
        %v703 = vshll.u32 %v598, 16
        %v705 = vrot.slane %v703, 1
        %v706 = vsel %vm662, %v701, %v705
        %v707 = vshrl.u32 %v598, 16
        %v709 = vor.u32 %v707, %v705
        %v711 = vshll.u32 %v599, 16
        %v713 = vrot.slane %v711, 1
        %v714 = vsel %vm662, %v709, %v713
        %v715 = vshrl.u32 %v599, 16
        %v717 = vor.u32 %v715, %v713
        %v719 = vshll.u32 %v600, 16
        %v721 = vrot.slane %v719, 1
        %v722 = vsel %vm662, %v717, %v721
        %v723 = vshrl.u32 %v600, 16
        %v725 = vor.u32 %v723, %v721
        %v727 = vshll.u32 %v601, 16
        %v729 = vrot.slane %v727, 1
        %v730 = vsel %vm662, %v725, %v729
        %v731 = vshrl.u32 %v601, 16
        %v733 = vor.u32 %v731, %v729
        %v735 = vshll.u32 %v602, 16
        %v737 = vrot.slane %v735, 1
        %v738 = vsel %vm662, %v733, %v737
        %v739 = vshrl.u32 %v602, 16
        %v741 = vor.u32 %v739, %v737
        %v743 = vshll.u32 %v603, 16
        %v745 = vrot.slane %v743, 1
        %v746 = vsel %vm662, %v741, %v745
        %v747 = vshrl.u32 %v603, 16
        %v749 = vor.u32 %v747, %v745
        %v751 = vshll.u32 %v604, 16
        %v753 = vrot.slane %v751, 1
        %v754 = vsel %vm662, %v749, %v753
        %v755 = vshrl.u32 %v604, 16
        %v757 = vor.u32 %v755, %v753
        %v759 = vshll.u32 %v605, 16
        %v761 = vrot.slane %v759, 1
        %v762 = vsel %vm662, %v757, %v761
        %v763 = vshrl.u32 %v605, 16
        %v765 = vor.u32 %v763, %v761
        %v767 = vshll.u32 %v606, 16
        %v769 = vrot.slane %v767, 1
        %v770 = vsel %vm662, %v765, %v769
        %v771 = vshrl.u32 %v606, 16
        %v773 = vor.u32 %v771, %v769
        %v775 = vshll.u32 %v607, 16
        %v777 = vrot.slane %v775, 1
        %v778 = vsel %vm662, %v773, %v777
        %v779 = vshrl.u32 %v607, 16
        %v781 = vor.u32 %v779, %v777
        %v783 = vshll.u32 %v608, 16
        %v785 = vrot.slane %v783, 1
        %v786 = vsel %vm662, %v781, %v785
        %v787 = vshrl.u32 %v608, 16
        %v789 = vor.u32 %v787, %v785
        %v791 = vshll.u32 %v609, 16
        %v793 = vrot.slane %v791, 1
        %v794 = vsel %vm662, %v789, %v793
        %v795 = vshrl.u32 %v609, 16
        %v797 = vor.u32 %v795, %v793
        %v799 = vshll.u32 %v610, 16
        %v801 = vrot.slane %v799, 1
        %v802 = vsel %vm662, %v797, %v801
        %v803 = vshrl.u32 %v610, 16
        %v805 = vor.u32 %v803, %v801
        %v807 = vshll.u32 %v611, 16
        %v809 = vrot.slane %v807, 1
        %v810 = vsel %vm662, %v805, %v809
        %v811 = vshrl.u32 %v611, 16
        %v813 = vor.u32 %v811, %v809
        %v815 = vshll.u32 %v612, 16
        %v817 = vrot.slane %v815, 1
        %v818 = vsel %vm662, %v813, %v817
        %v819 = vshrl.u32 %v612, 16
        %v821 = vor.u32 %v819, %v817
        %v823 = vshll.u32 %v613, 16
        %v825 = vrot.slane %v823, 1
        %v826 = vsel %vm662, %v821, %v825
        %v827 = vshrl.u32 %v613, 16
        %v829 = vor.u32 %v827, %v825
        %v831 = vshll.u32 %v614, 16
        %v833 = vrot.slane %v831, 1
        %v834 = vsel %vm662, %v829, %v833
        %v835 = vshrl.u32 %v614, 16
        %v837 = vor.u32 %v835, %v833
        %v839 = vshll.u32 %v615, 16
        %v841 = vrot.slane %v839, 1
        %v842 = vsel %vm662, %v837, %v841
        %v843 = vshrl.u32 %v615, 16
        %v845 = vor.u32 %v843, %v841
        %v847 = vshll.u32 %v616, 16
        %v849 = vrot.slane %v847, 1
        %v850 = vsel %vm662, %v845, %v849
        %v851 = vshrl.u32 %v616, 16
        %v853 = vor.u32 %v851, %v849
        %v855 = vshll.u32 %v617, 16
        %v857 = vrot.slane %v855, 1
        %v858 = vsel %vm662, %v853, %v857
        %v859 = vshrl.u32 %v617, 16
        %v861 = vor.u32 %v859, %v857
        %v863 = vshll.u32 %v618, 16
        %v865 = vrot.slane %v863, 1
        %v866 = vsel %vm662, %v861, %v865
        %v867 = vshrl.u32 %v618, 16
        %v869 = vor.u32 %v867, %v865
        %v871 = vshll.u32 %v619, 16
        %v873 = vrot.slane %v871, 1
        %v874 = vsel %vm662, %v869, %v873
        %v875 = vshrl.u32 %v619, 16
        %v877 = vor.u32 %v875, %v873
        %v879 = vshll.u32 %v620, 16
        %v881 = vrot.slane %v879, 1
        %v882 = vsel %vm662, %v877, %v881
        %v883 = vshrl.u32 %v620, 16
        %v885 = vor.u32 %v883, %v881
        %v887 = vshll.u32 %v621, 16
        %v889 = vrot.slane %v887, 1
        %v890 = vsel %vm662, %v885, %v889
        %v891 = vshrl.u32 %v621, 16
        %v893 = vor.u32 %v891, %v889
        %v895 = vshll.u32 %v622, 16
        %v897 = vrot.slane %v895, 1
        %v898 = vsel %vm662, %v893, %v897
        %v899 = vshrl.u32 %v622, 16
        %v901 = vor.u32 %v899, %v897
        %v903 = vshll.u32 %v623, 16
        %v905 = vrot.slane %v903, 1
        %v906 = vsel %vm662, %v901, %v905
        %v907 = vshrl.u32 %v623, 16
        %v909 = vor.u32 %v907, %v905
        %v911 = vshll.u32 %v624, 16
        %v913 = vrot.slane %v911, 1
        %v914 = vsel %vm662, %v909, %v913
        %v915 = vshrl.u32 %v624, 16
        %v917 = vor.u32 %v915, %v913
        %v919 = vshll.u32 %v625, 16
        %v921 = vrot.slane %v919, 1
        %v922 = vsel %vm662, %v917, %v921
        %v923 = vshrl.u32 %v625, 16
        %v925 = vor.u32 %v923, %v921
        %v927 = vshll.u32 %v626, 16
        %v929 = vrot.slane %v927, 1
        %v930 = vsel %vm662, %v925, %v929
        %v931 = vshrl.u32 %v626, 16
        %v933 = vor.u32 %v931, %v929
        %v935 = vshll.u32 %v627, 16
        %v937 = vrot.slane %v935, 1
        %v938 = vsel %vm662, %v933, %v937
        %v939 = vshrl.u32 %v627, 16
        %v941 = vor.u32 %v939, %v937
        %v943 = vshll.u32 %v628, 16
        %v945 = vrot.slane %v943, 1
        %v946 = vsel %vm662, %v941, %v945
        %v947 = vshrl.u32 %v628, 16
        %v949 = vor.u32 %v947, %v945
        %v951 = vshll.u32 %v629, 16
        %v953 = vrot.slane %v951, 1
        %v954 = vsel %vm662, %v949, %v953
        %v955 = vshrl.u32 %v629, 16
        %v957 = vor.u32 %v955, %v953
        %v959 = vshll.u32 %v630, 16
        %v961 = vrot.slane %v959, 1
        %v962 = vsel %vm662, %v957, %v961
        %v963 = vshrl.u32 %v630, 16
        %v965 = vor.u32 %v963, %v961
        %v967 = vshll.u32 %v631, 16
        %v969 = vrot.slane %v967, 1
        %v970 = vsel %vm662, %v965, %v969
        %v971 = vshrl.u32 %v631, 16
        %v973 = vor.u32 %v971, %v969
        %v975 = vshll.u32 %v632, 16
        %v977 = vrot.slane %v975, 1
        %v978 = vsel %vm662, %v973, %v977
        %v979 = vshrl.u32 %v632, 16
        %v981 = vor.u32 %v979, %v977
        %v983 = vshll.u32 %v633, 16
        %v985 = vrot.slane %v983, 1
        %v986 = vsel %vm662, %v981, %v985
        %v987 = vshrl.u32 %v633, 16
        %v989 = vor.u32 %v987, %v985
        %v991 = vshll.u32 %v634, 16
        %v993 = vrot.slane %v991, 1
        %v994 = vsel %vm662, %v989, %v993
        %v995 = vshrl.u32 %v634, 16
        %v997 = vor.u32 %v995, %v993
        %v999 = vshll.u32 %v635, 16
        %v1001 = vrot.slane %v999, 1
        %v1002 = vsel %vm662, %v997, %v1001
        %v1003 = vshrl.u32 %v635, 16
        %v1005 = vor.u32 %v1003, %v1001
        %v1007 = vshll.u32 %v636, 16
        %v1009 = vrot.slane %v1007, 1
        %v1010 = vsel %vm662, %v1005, %v1009
        %v1011 = vshrl.u32 %v636, 16
        %v1013 = vor.u32 %v1011, %v1009
        %v1015 = vshll.u32 %v637, 16
        %v1017 = vrot.slane %v1015, 1
        %v1018 = vsel %vm662, %v1013, %v1017
        %v1019 = vshrl.u32 %v637, 16
        %v1021 = vor.u32 %v1019, %v1017
        %v1023 = vshll.u32 %v638, 16
        %v1025 = vrot.slane %v1023, 1
        %v1026 = vsel %vm662, %v1021, %v1025
        %v1027 = vshrl.u32 %v638, 16
        %v1029 = vor.u32 %v1027, %v1025
        %v1031 = vshll.u32 %v639, 16
        %v1033 = vrot.slane %v1031, 1
        %v1034 = vsel %vm662, %v1029, %v1033
        %v1035 = vshrl.u32 %v639, 16
        %v1037 = vor.u32 %v1035, %v1033
        %v1039 = vshll.u32 %v640, 16
        %v1041 = vrot.slane %v1039, 1
        %v1042 = vsel %vm662, %v1037, %v1041
        %v1043 = vshrl.u32 %v640, 16
        %v1045 = vor.u32 %v1043, %v1041
        %v1047 = vshll.u32 %v641, 16
        %v1049 = vrot.slane %v1047, 1
        %v1050 = vsel %vm662, %v1045, %v1049
        %v1051 = vshrl.u32 %v641, 16
        %v1053 = vor.u32 %v1051, %v1049
        %v1055 = vshll.u32 %v642, 16
        %v1057 = vrot.slane %v1055, 1
        %v1058 = vsel %vm662, %v1053, %v1057
        %v1059 = vshrl.u32 %v642, 16
        %v1061 = vor.u32 %v1059, %v1057
        %v1063 = vshll.u32 %v643, 16
        %v1065 = vrot.slane %v1063, 1
        %v1066 = vsel %vm662, %v1061, %v1065
        %v1067 = vshrl.u32 %v643, 16
        %v1069 = vor.u32 %v1067, %v1065
        %v1071 = vshll.u32 %v644, 16
        %v1073 = vrot.slane %v1071, 1
        %v1074 = vsel %vm662, %v1069, %v1073
        %v1075 = vshrl.u32 %v644, 16
        %v1077 = vor.u32 %v1075, %v1073
        %v1079 = vshll.u32 %v645, 16
        %v1081 = vrot.slane %v1079, 1
        %v1082 = vsel %vm662, %v1077, %v1081
        %v1083 = vshrl.u32 %v645, 16
        %v1085 = vor.u32 %v1083, %v1081
        %v1087 = vshll.u32 %v646, 16
        %v1089 = vrot.slane %v1087, 1
        %v1090 = vsel %vm662, %v1085, %v1089
        %v1091 = vshrl.u32 %v646, 16
        %v1093 = vor.u32 %v1091, %v1089
        %v1095 = vshll.u32 %v647, 16
        %v1097 = vrot.slane %v1095, 1
        %v1098 = vsel %vm662, %v1093, %v1097
        %v1099 = vshrl.u32 %v647, 16
        %v1101 = vor.u32 %v1099, %v1097
        %v1103 = vshll.u32 %v648, 16
        %v1105 = vrot.slane %v1103, 1
        %v1106 = vsel %vm662, %v1101, %v1105
        %v1107 = vshrl.u32 %v648, 16
        %v1109 = vor.u32 %v1107, %v1105
        %v1111 = vshll.u32 %v649, 16
        %v1113 = vrot.slane %v1111, 1
        %v1114 = vsel %vm662, %v1109, %v1113
        %v1115 = vshrl.u32 %v649, 16
        %v1117 = vor.u32 %v1115, %v1113
        %v1119 = vshll.u32 %v650, 16
        %v1121 = vrot.slane %v1119, 1
        %v1122 = vsel %vm662, %v1117, %v1121
        %v1123 = vshrl.u32 %v650, 16
        %v1125 = vor.u32 %v1123, %v1121
        %v1127 = vshll.u32 %v651, 16
        %v1129 = vrot.slane %v1127, 1
        %v1130 = vsel %vm662, %v1125, %v1129
        %v1131 = vshrl.u32 %v651, 16
        %v1133 = vor.u32 %v1131, %v1129
        %v1135 = vshll.u32 %v652, 16
        %v1137 = vrot.slane %v1135, 1
        %v1138 = vsel %vm662, %v1133, %v1137
        %v1139 = vshrl.u32 %v652, 16
        %v1141 = vor.u32 %v1139, %v1137
        %v1143 = vshll.u32 %v653, 16
        %v1145 = vrot.slane %v1143, 1
        %v1146 = vsel %vm662, %v1141, %v1145
        %v1147 = vshrl.u32 %v653, 16
        %v1149 = vor.u32 %v1147, %v1145
        %v1151 = vshll.u32 %v654, 16
        %v1153 = vrot.slane %v1151, 1
        %v1154 = vsel %vm662, %v1149, %v1153
        %v1155 = vshrl.u32 %v654, 16
        %v1157 = vor.u32 %v1155, %v1153
        %v1159 = vshll.u32 %v655, 16
        %v1161 = vrot.slane %v1159, 1
        %v1162 = vsel %vm662, %v1157, %v1161
        %v1163 = vshrl.u32 %v655, 16
        %v1165 = vor.u32 %v1163, %v1161
        %v1167 = vshll.u32 %v656, 16
        %v1169 = vrot.slane %v1167, 1
        %v1170 = vsel %vm662, %v1165, %v1169
        %v1171 = vshrl.u32 %v656, 16
        %v1173 = vor.u32 %v1171, %v1169
        %v1175 = vshll.u32 %v657, 16
        %v1177 = vrot.slane %v1175, 1
        %v1178 = vsel %vm662, %v1173, %v1177
        %v1179 = vshrl.u32 %v657, 16
        %v1181 = vor.u32 %v1179, %v1177
        %v1183 = vshll.u32 %v658, 16
        %v1185 = vrot.slane %v1183, 1
        %v1186 = vsel %vm662, %v1181, %v1185
        %v1187 = vshrl.u32 %v658, 16
        %v1189 = vor.u32 %v1187, %v1185
        %v1191 = vshll.u32 %v659, 16
        %v1193 = vrot.slane %v1191, 1
        %v1194 = vsel %vm662, %v1189, %v1193
        %v1195 = vshrl.u32 %v659, 16
        %v1197 = vor.u32 %v1195, %v1193
        %v1199 = vshll.u32 %v660, 16
        %v1201 = vrot.slane %v1199, 1
        %v1202 = vsel %vm662, %v1197, %v1201
        %v1203 = vshrl.u32 %v660, 16
        %v1205 = vor.u32 %v1203, %v1201
        %v1207 = vshll.u32 %v661, 16
        %v1209 = vrot.slane %v1207, 1
        %v1210 = vsel %vm662, %v1205, %v1209
        %v1215 = vunpack.c.l.b16 %v315
        %v1216 = vunpack.c.l.b16 %v316
        %v1217 = vunpack.c.l.b16 %v317
        %v1218 = vunpack.c.l.b16 %v318
        %v1219 = vpack.c.b16 %v1216, %v1215
        %v1220 = vpack.c.b16 %v1218, %v1217
        %vm1223 = vcmask 261120
        %v1225 = vsel %vm1223, %v674, 0
        %v1228 = vsel %vm1223, %v682, 0
        %v1231 = vsel %vm1223, %v690, 0
        %v1234 = vsel %vm1223, %v698, 0
        %v1237 = vsel %vm1223, %v706, 0
        %v1240 = vsel %vm1223, %v714, 0
        %v1243 = vsel %vm1223, %v722, 0
        %v1246 = vsel %vm1223, %v730, 0
        %v1249 = vsel %vm1223, %v738, 0
        %v1252 = vsel %vm1223, %v746, 0
        %v1255 = vsel %vm1223, %v754, 0
        %v1258 = vsel %vm1223, %v762, 0
        %v1261 = vsel %vm1223, %v770, 0
        %v1264 = vsel %vm1223, %v778, 0
        %v1267 = vsel %vm1223, %v786, 0
        %v1270 = vsel %vm1223, %v794, 0
        %v1273 = vsel %vm1223, %v802, 0
        %v1276 = vsel %vm1223, %v810, 0
        %v1279 = vsel %vm1223, %v818, 0
        %v1282 = vsel %vm1223, %v826, 0
        %v1285 = vsel %vm1223, %v834, 0
        %v1288 = vsel %vm1223, %v842, 0
        %v1291 = vsel %vm1223, %v850, 0
        %v1294 = vsel %vm1223, %v858, 0
        %v1297 = vsel %vm1223, %v866, 0
        %v1300 = vsel %vm1223, %v874, 0
        %v1303 = vsel %vm1223, %v882, 0
        %v1306 = vsel %vm1223, %v890, 0
        %v1309 = vsel %vm1223, %v898, 0
        %v1312 = vsel %vm1223, %v906, 0
        %v1315 = vsel %vm1223, %v914, 0
        %v1318 = vsel %vm1223, %v922, 0
        %v1321 = vsel %vm1223, %v930, 0
        %v1324 = vsel %vm1223, %v938, 0
        %v1327 = vsel %vm1223, %v946, 0
        %v1330 = vsel %vm1223, %v954, 0
        %v1333 = vsel %vm1223, %v962, 0
        %v1336 = vsel %vm1223, %v970, 0
        %v1339 = vsel %vm1223, %v978, 0
        %v1342 = vsel %vm1223, %v986, 0
        %v1345 = vsel %vm1223, %v994, 0
        %v1348 = vsel %vm1223, %v1002, 0
        %v1351 = vsel %vm1223, %v1010, 0
        %v1354 = vsel %vm1223, %v1018, 0
        %v1357 = vsel %vm1223, %v1026, 0
        %v1360 = vsel %vm1223, %v1034, 0
        %v1363 = vsel %vm1223, %v1042, 0
        %v1366 = vsel %vm1223, %v1050, 0
        %v1369 = vsel %vm1223, %v1058, 0
        %v1372 = vsel %vm1223, %v1066, 0
        %v1375 = vsel %vm1223, %v1074, 0
        %v1378 = vsel %vm1223, %v1082, 0
        %v1381 = vsel %vm1223, %v1090, 0
        %v1384 = vsel %vm1223, %v1098, 0
        %v1387 = vsel %vm1223, %v1106, 0
        %v1390 = vsel %vm1223, %v1114, 0
        %v1393 = vsel %vm1223, %v1122, 0
        %v1396 = vsel %vm1223, %v1130, 0
        %v1399 = vsel %vm1223, %v1138, 0
        %v1402 = vsel %vm1223, %v1146, 0
        %v1405 = vsel %vm1223, %v1154, 0
        %v1408 = vsel %vm1223, %v1162, 0
        %v1411 = vsel %vm1223, %v1170, 0
        %v1414 = vsel %vm1223, %v1178, 0
        %v1417 = vsel %vm1223, %v1186, 0
        %v1420 = vsel %vm1223, %v1194, 0
        %v1423 = vsel %vm1223, %v1202, 0
        %v1426 = vsel %vm1223, %v1210, 0
        %1428 = vmatpush.bf16.msra.mxu0 0
        %1429 = vmatpush.bf16.msra.mxu0 0
        %1430 = vmatpush.bf16.msra.mxu0 0
        %1431 = vmatpush.bf16.msra.mxu0 0
        %1432 = vmatpush.bf16.msra.mxu0 0
        %1433 = vmatpush.bf16.msra.mxu0 0
        %1434 = vmatpush.bf16.msra.mxu0 %v1220
        %1435 = vmatpush.bf16.msra.mxu0 %v1219
        %1436 = vmatmul.bf16.gmra.mxu0 %v1225
        %v1437 = vpop.f32.mrf.mxu0
        %v1438 = vadd.f32 0.0, %v1437
        %v1439 = vpop.f32.mrf.mxu0
        %v1440 = vadd.f32 0.0, %v1439
        %1441 = vmatmul.bf16.gmra.mxu0 %v1228
        %v1442 = vpop.f32.mrf.mxu0
        %v1443 = vadd.f32 0.0, %v1442
        %v1444 = vpop.f32.mrf.mxu0
        %v1445 = vadd.f32 0.0, %v1444
        %1446 = vmatmul.bf16.gmra.mxu0 %v1231
        %v1447 = vpop.f32.mrf.mxu0
        %v1448 = vadd.f32 0.0, %v1447
        %v1449 = vpop.f32.mrf.mxu0
        %v1450 = vadd.f32 0.0, %v1449
        %1451 = vmatmul.bf16.gmra.mxu0 %v1234
        %v1452 = vpop.f32.mrf.mxu0
        %v1453 = vadd.f32 0.0, %v1452
        %v1454 = vpop.f32.mrf.mxu0
        %v1455 = vadd.f32 0.0, %v1454
        %1456 = vmatmul.bf16.gmra.mxu0 %v1237
        %v1457 = vpop.f32.mrf.mxu0
        %v1458 = vadd.f32 0.0, %v1457
        %v1459 = vpop.f32.mrf.mxu0
        %v1460 = vadd.f32 0.0, %v1459
        %1461 = vmatmul.bf16.gmra.mxu0 %v1240
        %v1462 = vpop.f32.mrf.mxu0
        %v1463 = vadd.f32 0.0, %v1462
        %v1464 = vpop.f32.mrf.mxu0
        %v1465 = vadd.f32 0.0, %v1464
        %1466 = vmatmul.bf16.gmra.mxu0 %v1243
        %v1467 = vpop.f32.mrf.mxu0
        %v1468 = vadd.f32 0.0, %v1467
        %v1469 = vpop.f32.mrf.mxu0
        %v1470 = vadd.f32 0.0, %v1469
        %1471 = vmatmul.bf16.gmra.mxu0 %v1246
        %v1472 = vpop.f32.mrf.mxu0
        %v1473 = vadd.f32 0.0, %v1472
        %v1474 = vpop.f32.mrf.mxu0
        %v1475 = vadd.f32 0.0, %v1474
        %1476 = vmatmul.bf16.gmra.mxu0 %v1249
        %v1477 = vpop.f32.mrf.mxu0
        %v1478 = vadd.f32 0.0, %v1477
        %v1479 = vpop.f32.mrf.mxu0
        %v1480 = vadd.f32 0.0, %v1479
        %1481 = vmatmul.bf16.gmra.mxu0 %v1252
        %v1482 = vpop.f32.mrf.mxu0
        %v1483 = vadd.f32 0.0, %v1482
        %v1484 = vpop.f32.mrf.mxu0
        %v1485 = vadd.f32 0.0, %v1484
        %1486 = vmatmul.bf16.gmra.mxu0 %v1255
        %v1487 = vpop.f32.mrf.mxu0
        %v1488 = vadd.f32 0.0, %v1487
        %v1489 = vpop.f32.mrf.mxu0
        %v1490 = vadd.f32 0.0, %v1489
        %1491 = vmatmul.bf16.gmra.mxu0 %v1258
        %v1492 = vpop.f32.mrf.mxu0
        %v1493 = vadd.f32 0.0, %v1492
        %v1494 = vpop.f32.mrf.mxu0
        %v1495 = vadd.f32 0.0, %v1494
        %1496 = vmatmul.bf16.gmra.mxu0 %v1261
        %v1497 = vpop.f32.mrf.mxu0
        %v1498 = vadd.f32 0.0, %v1497
        %v1499 = vpop.f32.mrf.mxu0
        %v1500 = vadd.f32 0.0, %v1499
        %1501 = vmatmul.bf16.gmra.mxu0 %v1264
        %v1502 = vpop.f32.mrf.mxu0
        %v1503 = vadd.f32 0.0, %v1502
        %v1504 = vpop.f32.mrf.mxu0
        %v1505 = vadd.f32 0.0, %v1504
        %1506 = vmatmul.bf16.gmra.mxu0 %v1267
        %v1507 = vpop.f32.mrf.mxu0
        %v1508 = vadd.f32 0.0, %v1507
        %v1509 = vpop.f32.mrf.mxu0
        %v1510 = vadd.f32 0.0, %v1509
        %1511 = vmatmul.bf16.gmra.mxu0 %v1270
        %v1512 = vpop.f32.mrf.mxu0
        %v1513 = vadd.f32 0.0, %v1512
        %v1514 = vpop.f32.mrf.mxu0
        %v1515 = vadd.f32 0.0, %v1514
        %1516 = vmatmul.bf16.gmra.mxu0 %v1273
        %v1517 = vpop.f32.mrf.mxu0
        %v1518 = vadd.f32 0.0, %v1517
        %v1519 = vpop.f32.mrf.mxu0
        %v1520 = vadd.f32 0.0, %v1519
        %1521 = vmatmul.bf16.gmra.mxu0 %v1276
        %v1522 = vpop.f32.mrf.mxu0
        %v1523 = vadd.f32 0.0, %v1522
        %v1524 = vpop.f32.mrf.mxu0
        %v1525 = vadd.f32 0.0, %v1524
        %1526 = vmatmul.bf16.gmra.mxu0 %v1279
        %v1527 = vpop.f32.mrf.mxu0
        %v1528 = vadd.f32 0.0, %v1527
        %v1529 = vpop.f32.mrf.mxu0
        %v1530 = vadd.f32 0.0, %v1529
        %1531 = vmatmul.bf16.gmra.mxu0 %v1282
        %v1532 = vpop.f32.mrf.mxu0
        %v1533 = vadd.f32 0.0, %v1532
        %v1534 = vpop.f32.mrf.mxu0
        %v1535 = vadd.f32 0.0, %v1534
        %1536 = vmatmul.bf16.gmra.mxu0 %v1285
        %v1537 = vpop.f32.mrf.mxu0
        %v1538 = vadd.f32 0.0, %v1537
        %v1539 = vpop.f32.mrf.mxu0
        %v1540 = vadd.f32 0.0, %v1539
        %1541 = vmatmul.bf16.gmra.mxu0 %v1288
        %v1542 = vpop.f32.mrf.mxu0
        %v1543 = vadd.f32 0.0, %v1542
        %v1544 = vpop.f32.mrf.mxu0
        %v1545 = vadd.f32 0.0, %v1544
        %1546 = vmatmul.bf16.gmra.mxu0 %v1291
        %v1547 = vpop.f32.mrf.mxu0
        %v1548 = vadd.f32 0.0, %v1547
        %v1549 = vpop.f32.mrf.mxu0
        %v1550 = vadd.f32 0.0, %v1549
        %1551 = vmatmul.bf16.gmra.mxu0 %v1294
        %v1552 = vpop.f32.mrf.mxu0
        %v1553 = vadd.f32 0.0, %v1552
        %v1554 = vpop.f32.mrf.mxu0
        %v1555 = vadd.f32 0.0, %v1554
        %1556 = vmatmul.bf16.gmra.mxu0 %v1297
        %v1557 = vpop.f32.mrf.mxu0
        %v1558 = vadd.f32 0.0, %v1557
        %v1559 = vpop.f32.mrf.mxu0
        %v1560 = vadd.f32 0.0, %v1559
        %1561 = vmatmul.bf16.gmra.mxu0 %v1300
        %v1562 = vpop.f32.mrf.mxu0
        %v1563 = vadd.f32 0.0, %v1562
        %v1564 = vpop.f32.mrf.mxu0
        %v1565 = vadd.f32 0.0, %v1564
        %1566 = vmatmul.bf16.gmra.mxu0 %v1303
        %v1567 = vpop.f32.mrf.mxu0
        %v1568 = vadd.f32 0.0, %v1567
        %v1569 = vpop.f32.mrf.mxu0
        %v1570 = vadd.f32 0.0, %v1569
        %1571 = vmatmul.bf16.gmra.mxu0 %v1306
        %v1572 = vpop.f32.mrf.mxu0
        %v1573 = vadd.f32 0.0, %v1572
        %v1574 = vpop.f32.mrf.mxu0
        %v1575 = vadd.f32 0.0, %v1574
        %1576 = vmatmul.bf16.gmra.mxu0 %v1309
        %v1577 = vpop.f32.mrf.mxu0
        %v1578 = vadd.f32 0.0, %v1577
        %v1579 = vpop.f32.mrf.mxu0
        %v1580 = vadd.f32 0.0, %v1579
        %1581 = vmatmul.bf16.gmra.mxu0 %v1312
        %v1582 = vpop.f32.mrf.mxu0
        %v1583 = vadd.f32 0.0, %v1582
        %v1584 = vpop.f32.mrf.mxu0
        %v1585 = vadd.f32 0.0, %v1584
        %1586 = vmatmul.bf16.gmra.mxu0 %v1315
        %v1587 = vpop.f32.mrf.mxu0
        %v1588 = vadd.f32 0.0, %v1587
        %v1589 = vpop.f32.mrf.mxu0
        %v1590 = vadd.f32 0.0, %v1589
        %1591 = vmatmul.bf16.gmra.mxu0 %v1318
        %v1592 = vpop.f32.mrf.mxu0
        %v1593 = vadd.f32 0.0, %v1592
        %v1594 = vpop.f32.mrf.mxu0
        %v1595 = vadd.f32 0.0, %v1594
        %1596 = vmatmul.bf16.gmra.mxu0 %v1321
        %v1597 = vpop.f32.mrf.mxu0
        %v1598 = vadd.f32 0.0, %v1597
        %v1599 = vpop.f32.mrf.mxu0
        %v1600 = vadd.f32 0.0, %v1599
        %1601 = vmatmul.bf16.gmra.mxu0 %v1324
        %v1602 = vpop.f32.mrf.mxu0
        %v1603 = vadd.f32 0.0, %v1602
        %v1604 = vpop.f32.mrf.mxu0
        %v1605 = vadd.f32 0.0, %v1604
        %1606 = vmatmul.bf16.gmra.mxu0 %v1327
        %v1607 = vpop.f32.mrf.mxu0
        %v1608 = vadd.f32 0.0, %v1607
        %v1609 = vpop.f32.mrf.mxu0
        %v1610 = vadd.f32 0.0, %v1609
        %1611 = vmatmul.bf16.gmra.mxu0 %v1330
        %v1612 = vpop.f32.mrf.mxu0
        %v1613 = vadd.f32 0.0, %v1612
        %v1614 = vpop.f32.mrf.mxu0
        %v1615 = vadd.f32 0.0, %v1614
        %1616 = vmatmul.bf16.gmra.mxu0 %v1333
        %v1617 = vpop.f32.mrf.mxu0
        %v1618 = vadd.f32 0.0, %v1617
        %v1619 = vpop.f32.mrf.mxu0
        %v1620 = vadd.f32 0.0, %v1619
        %1621 = vmatmul.bf16.gmra.mxu0 %v1336
        %v1622 = vpop.f32.mrf.mxu0
        %v1623 = vadd.f32 0.0, %v1622
        %v1624 = vpop.f32.mrf.mxu0
        %v1625 = vadd.f32 0.0, %v1624
        %1626 = vmatmul.bf16.gmra.mxu0 %v1339
        %v1627 = vpop.f32.mrf.mxu0
        %v1628 = vadd.f32 0.0, %v1627
        %v1629 = vpop.f32.mrf.mxu0
        %v1630 = vadd.f32 0.0, %v1629
        %1631 = vmatmul.bf16.gmra.mxu0 %v1342
        %v1632 = vpop.f32.mrf.mxu0
        %v1633 = vadd.f32 0.0, %v1632
        %v1634 = vpop.f32.mrf.mxu0
        %v1635 = vadd.f32 0.0, %v1634
        %1636 = vmatmul.bf16.gmra.mxu0 %v1345
        %v1637 = vpop.f32.mrf.mxu0
        %v1638 = vadd.f32 0.0, %v1637
        %v1639 = vpop.f32.mrf.mxu0
        %v1640 = vadd.f32 0.0, %v1639
        %1641 = vmatmul.bf16.gmra.mxu0 %v1348
        %v1642 = vpop.f32.mrf.mxu0
        %v1643 = vadd.f32 0.0, %v1642
        %v1644 = vpop.f32.mrf.mxu0
        %v1645 = vadd.f32 0.0, %v1644
        %1646 = vmatmul.bf16.gmra.mxu0 %v1351
        %v1647 = vpop.f32.mrf.mxu0
        %v1648 = vadd.f32 0.0, %v1647
        %v1649 = vpop.f32.mrf.mxu0
        %v1650 = vadd.f32 0.0, %v1649
        %1651 = vmatmul.bf16.gmra.mxu0 %v1354
        %v1652 = vpop.f32.mrf.mxu0
        %v1653 = vadd.f32 0.0, %v1652
        %v1654 = vpop.f32.mrf.mxu0
        %v1655 = vadd.f32 0.0, %v1654
        %1656 = vmatmul.bf16.gmra.mxu0 %v1357
        %v1657 = vpop.f32.mrf.mxu0
        %v1658 = vadd.f32 0.0, %v1657
        %v1659 = vpop.f32.mrf.mxu0
        %v1660 = vadd.f32 0.0, %v1659
        %1661 = vmatmul.bf16.gmra.mxu0 %v1360
        %v1662 = vpop.f32.mrf.mxu0
        %v1663 = vadd.f32 0.0, %v1662
        %v1664 = vpop.f32.mrf.mxu0
        %v1665 = vadd.f32 0.0, %v1664
        %1666 = vmatmul.bf16.gmra.mxu0 %v1363
        %v1667 = vpop.f32.mrf.mxu0
        %v1668 = vadd.f32 0.0, %v1667
        %v1669 = vpop.f32.mrf.mxu0
        %v1670 = vadd.f32 0.0, %v1669
        %1671 = vmatmul.bf16.gmra.mxu0 %v1366
        %v1672 = vpop.f32.mrf.mxu0
        %v1673 = vadd.f32 0.0, %v1672
        %v1674 = vpop.f32.mrf.mxu0
        %v1675 = vadd.f32 0.0, %v1674
        %1676 = vmatmul.bf16.gmra.mxu0 %v1369
        %v1677 = vpop.f32.mrf.mxu0
        %v1678 = vadd.f32 0.0, %v1677
        %v1679 = vpop.f32.mrf.mxu0
        %v1680 = vadd.f32 0.0, %v1679
        %1681 = vmatmul.bf16.gmra.mxu0 %v1372
        %v1682 = vpop.f32.mrf.mxu0
        %v1683 = vadd.f32 0.0, %v1682
        %v1684 = vpop.f32.mrf.mxu0
        %v1685 = vadd.f32 0.0, %v1684
        %1686 = vmatmul.bf16.gmra.mxu0 %v1375
        %v1687 = vpop.f32.mrf.mxu0
        %v1688 = vadd.f32 0.0, %v1687
        %v1689 = vpop.f32.mrf.mxu0
        %v1690 = vadd.f32 0.0, %v1689
        %1691 = vmatmul.bf16.gmra.mxu0 %v1378
        %v1692 = vpop.f32.mrf.mxu0
        %v1693 = vadd.f32 0.0, %v1692
        %v1694 = vpop.f32.mrf.mxu0
        %v1695 = vadd.f32 0.0, %v1694
        %1696 = vmatmul.bf16.gmra.mxu0 %v1381
        %v1697 = vpop.f32.mrf.mxu0
        %v1698 = vadd.f32 0.0, %v1697
        %v1699 = vpop.f32.mrf.mxu0
        %v1700 = vadd.f32 0.0, %v1699
        %1701 = vmatmul.bf16.gmra.mxu0 %v1384
        %v1702 = vpop.f32.mrf.mxu0
        %v1703 = vadd.f32 0.0, %v1702
        %v1704 = vpop.f32.mrf.mxu0
        %v1705 = vadd.f32 0.0, %v1704
        %1706 = vmatmul.bf16.gmra.mxu0 %v1387
        %v1707 = vpop.f32.mrf.mxu0
        %v1708 = vadd.f32 0.0, %v1707
        %v1709 = vpop.f32.mrf.mxu0
        %v1710 = vadd.f32 0.0, %v1709
        %1711 = vmatmul.bf16.gmra.mxu0 %v1390
        %v1712 = vpop.f32.mrf.mxu0
        %v1713 = vadd.f32 0.0, %v1712
        %v1714 = vpop.f32.mrf.mxu0
        %v1715 = vadd.f32 0.0, %v1714
        %1716 = vmatmul.bf16.gmra.mxu0 %v1393
        %v1717 = vpop.f32.mrf.mxu0
        %v1718 = vadd.f32 0.0, %v1717
        %v1719 = vpop.f32.mrf.mxu0
        %v1720 = vadd.f32 0.0, %v1719
        %1721 = vmatmul.bf16.gmra.mxu0 %v1396
        %v1722 = vpop.f32.mrf.mxu0
        %v1723 = vadd.f32 0.0, %v1722
        %v1724 = vpop.f32.mrf.mxu0
        %v1725 = vadd.f32 0.0, %v1724
        %1726 = vmatmul.bf16.gmra.mxu0 %v1399
        %v1727 = vpop.f32.mrf.mxu0
        %v1728 = vadd.f32 0.0, %v1727
        %v1729 = vpop.f32.mrf.mxu0
        %v1730 = vadd.f32 0.0, %v1729
        %1731 = vmatmul.bf16.gmra.mxu0 %v1402
        %v1732 = vpop.f32.mrf.mxu0
        %v1733 = vadd.f32 0.0, %v1732
        %v1734 = vpop.f32.mrf.mxu0
        %v1735 = vadd.f32 0.0, %v1734
        %1736 = vmatmul.bf16.gmra.mxu0 %v1405
        %v1737 = vpop.f32.mrf.mxu0
        %v1738 = vadd.f32 0.0, %v1737
        %v1739 = vpop.f32.mrf.mxu0
        %v1740 = vadd.f32 0.0, %v1739
        %1741 = vmatmul.bf16.gmra.mxu0 %v1408
        %v1742 = vpop.f32.mrf.mxu0
        %v1743 = vadd.f32 0.0, %v1742
        %v1744 = vpop.f32.mrf.mxu0
        %v1745 = vadd.f32 0.0, %v1744
        %1746 = vmatmul.bf16.gmra.mxu0 %v1411
        %v1747 = vpop.f32.mrf.mxu0
        %v1748 = vadd.f32 0.0, %v1747
        %v1749 = vpop.f32.mrf.mxu0
        %v1750 = vadd.f32 0.0, %v1749
        %1751 = vmatmul.bf16.gmra.mxu0 %v1414
        %v1752 = vpop.f32.mrf.mxu0
        %v1753 = vadd.f32 0.0, %v1752
        %v1754 = vpop.f32.mrf.mxu0
        %v1755 = vadd.f32 0.0, %v1754
        %1756 = vmatmul.bf16.gmra.mxu0 %v1417
        %v1757 = vpop.f32.mrf.mxu0
        %v1758 = vadd.f32 0.0, %v1757
        %v1759 = vpop.f32.mrf.mxu0
        %v1760 = vadd.f32 0.0, %v1759
        %1761 = vmatmul.bf16.gmra.mxu0 %v1420
        %v1762 = vpop.f32.mrf.mxu0
        %v1763 = vadd.f32 0.0, %v1762
        %v1764 = vpop.f32.mrf.mxu0
        %v1765 = vadd.f32 0.0, %v1764
        %1766 = vmatmul.bf16.gmra.mxu0 %v1423
        %v1767 = vpop.f32.mrf.mxu0
        %v1768 = vadd.f32 0.0, %v1767
        %v1769 = vpop.f32.mrf.mxu0
        %v1770 = vadd.f32 0.0, %v1769
        %1771 = vmatmul.bf16.gmra.mxu0 %v1426
        %v1772 = vpop.f32.mrf.mxu0
        %v1773 = vadd.f32 0.0, %v1772
        %v1774 = vpop.f32.mrf.mxu0
        %v1775 = vadd.f32 0.0, %v1774
        %1776 = vdwg.mxu0
        %v1781 = vunpack.c.l.b16 %v309
        %v1782 = vunpack.c.l.b16 %v310
        %v1783 = vunpack.c.l.b16 %v311
        %v1784 = vunpack.c.l.b16 %v312
        %v1785 = vpack.c.b16 %v1782, %v1781
        %v1786 = vpack.c.b16 %v1784, %v1783
        %v1789 = vsel %vm1223, %v593, 0
        %v1791 = vsel %vm1223, %v594, 0
        %v1793 = vsel %vm1223, %v595, 0
        %v1795 = vsel %vm1223, %v596, 0
        %v1797 = vsel %vm1223, %v597, 0
        %v1799 = vsel %vm1223, %v598, 0
        %v1801 = vsel %vm1223, %v599, 0
        %v1803 = vsel %vm1223, %v600, 0
        %v1805 = vsel %vm1223, %v601, 0
        %v1807 = vsel %vm1223, %v602, 0
        %v1809 = vsel %vm1223, %v603, 0
        %v1811 = vsel %vm1223, %v604, 0
        %v1813 = vsel %vm1223, %v605, 0
        %v1815 = vsel %vm1223, %v606, 0
        %v1817 = vsel %vm1223, %v607, 0
        %v1819 = vsel %vm1223, %v608, 0
        %v1821 = vsel %vm1223, %v609, 0
        %v1823 = vsel %vm1223, %v610, 0
        %v1825 = vsel %vm1223, %v611, 0
        %v1827 = vsel %vm1223, %v612, 0
        %v1829 = vsel %vm1223, %v613, 0
        %v1831 = vsel %vm1223, %v614, 0
        %v1833 = vsel %vm1223, %v615, 0
        %v1835 = vsel %vm1223, %v616, 0
        %v1837 = vsel %vm1223, %v617, 0
        %v1839 = vsel %vm1223, %v618, 0
        %v1841 = vsel %vm1223, %v619, 0
        %v1843 = vsel %vm1223, %v620, 0
        %v1845 = vsel %vm1223, %v621, 0
        %v1847 = vsel %vm1223, %v622, 0
        %v1849 = vsel %vm1223, %v623, 0
        %v1851 = vsel %vm1223, %v624, 0
        %v1853 = vsel %vm1223, %v625, 0
        %v1855 = vsel %vm1223, %v626, 0
        %v1857 = vsel %vm1223, %v627, 0
        %v1859 = vsel %vm1223, %v628, 0
        %v1861 = vsel %vm1223, %v629, 0
        %v1863 = vsel %vm1223, %v630, 0
        %v1865 = vsel %vm1223, %v631, 0
        %v1867 = vsel %vm1223, %v632, 0
        %v1869 = vsel %vm1223, %v633, 0
        %v1871 = vsel %vm1223, %v634, 0
        %v1873 = vsel %vm1223, %v635, 0
        %v1875 = vsel %vm1223, %v636, 0
        %v1877 = vsel %vm1223, %v637, 0
        %v1879 = vsel %vm1223, %v638, 0
        %v1881 = vsel %vm1223, %v639, 0
        %v1883 = vsel %vm1223, %v640, 0
        %v1885 = vsel %vm1223, %v641, 0
        %v1887 = vsel %vm1223, %v642, 0
        %v1889 = vsel %vm1223, %v643, 0
        %v1891 = vsel %vm1223, %v644, 0
        %v1893 = vsel %vm1223, %v645, 0
        %v1895 = vsel %vm1223, %v646, 0
        %v1897 = vsel %vm1223, %v647, 0
        %v1899 = vsel %vm1223, %v648, 0
        %v1901 = vsel %vm1223, %v649, 0
        %v1903 = vsel %vm1223, %v650, 0
        %v1905 = vsel %vm1223, %v651, 0
        %v1907 = vsel %vm1223, %v652, 0
        %v1909 = vsel %vm1223, %v653, 0
        %v1911 = vsel %vm1223, %v654, 0
        %v1913 = vsel %vm1223, %v655, 0
        %v1915 = vsel %vm1223, %v656, 0
        %v1917 = vsel %vm1223, %v657, 0
        %v1919 = vsel %vm1223, %v658, 0
        %v1921 = vsel %vm1223, %v659, 0
        %v1923 = vsel %vm1223, %v660, 0
        %1925 = vmatpush.bf16.msra.mxu0 0
        %1926 = vmatpush.bf16.msra.mxu0 0
        %1927 = vmatpush.bf16.msra.mxu0 0
        %1928 = vmatpush.bf16.msra.mxu0 0
        %1929 = vmatpush.bf16.msra.mxu0 0
        %1930 = vmatpush.bf16.msra.mxu0 0
        %1931 = vmatpush.bf16.msra.mxu0 %v1786
        %1932 = vmatpush.bf16.msra.mxu0 %v1785
        %1933 = vmatmul.bf16.gmra.mxu0 %v1789
        %v1934 = vpop.f32.mrf.mxu0
        %v1935 = vadd.f32 %v1438, %v1934
        %v1936 = vpop.f32.mrf.mxu0
        %v1937 = vadd.f32 %v1440, %v1936
        %1938 = vmatmul.bf16.gmra.mxu0 %v1791
        %v1939 = vpop.f32.mrf.mxu0
        %v1940 = vadd.f32 %v1443, %v1939
        %v1941 = vpop.f32.mrf.mxu0
        %v1942 = vadd.f32 %v1445, %v1941
        %1943 = vmatmul.bf16.gmra.mxu0 %v1793
        %v1944 = vpop.f32.mrf.mxu0
        %v1945 = vadd.f32 %v1448, %v1944
        %v1946 = vpop.f32.mrf.mxu0
        %v1947 = vadd.f32 %v1450, %v1946
        %1948 = vmatmul.bf16.gmra.mxu0 %v1795
        %v1949 = vpop.f32.mrf.mxu0
        %v1950 = vadd.f32 %v1453, %v1949
        %v1951 = vpop.f32.mrf.mxu0
        %v1952 = vadd.f32 %v1455, %v1951
        %1953 = vmatmul.bf16.gmra.mxu0 %v1797
        %v1954 = vpop.f32.mrf.mxu0
        %v1955 = vadd.f32 %v1458, %v1954
        %v1956 = vpop.f32.mrf.mxu0
        %v1957 = vadd.f32 %v1460, %v1956
        %1958 = vmatmul.bf16.gmra.mxu0 %v1799
        %v1959 = vpop.f32.mrf.mxu0
        %v1960 = vadd.f32 %v1463, %v1959
        %v1961 = vpop.f32.mrf.mxu0
        %v1962 = vadd.f32 %v1465, %v1961
        %1963 = vmatmul.bf16.gmra.mxu0 %v1801
        %v1964 = vpop.f32.mrf.mxu0
        %v1965 = vadd.f32 %v1468, %v1964
        %v1966 = vpop.f32.mrf.mxu0
        %v1967 = vadd.f32 %v1470, %v1966
        %1968 = vmatmul.bf16.gmra.mxu0 %v1803
        %v1969 = vpop.f32.mrf.mxu0
        %v1970 = vadd.f32 %v1473, %v1969
        %v1971 = vpop.f32.mrf.mxu0
        %v1972 = vadd.f32 %v1475, %v1971
        %1973 = vmatmul.bf16.gmra.mxu0 %v1805
        %v1974 = vpop.f32.mrf.mxu0
        %v1975 = vadd.f32 %v1478, %v1974
        %v1976 = vpop.f32.mrf.mxu0
        %v1977 = vadd.f32 %v1480, %v1976
        %1978 = vmatmul.bf16.gmra.mxu0 %v1807
        %v1979 = vpop.f32.mrf.mxu0
        %v1980 = vadd.f32 %v1483, %v1979
        %v1981 = vpop.f32.mrf.mxu0
        %v1982 = vadd.f32 %v1485, %v1981
        %1983 = vmatmul.bf16.gmra.mxu0 %v1809
        %v1984 = vpop.f32.mrf.mxu0
        %v1985 = vadd.f32 %v1488, %v1984
        %v1986 = vpop.f32.mrf.mxu0
        %v1987 = vadd.f32 %v1490, %v1986
        %1988 = vmatmul.bf16.gmra.mxu0 %v1811
        %v1989 = vpop.f32.mrf.mxu0
        %v1990 = vadd.f32 %v1493, %v1989
        %v1991 = vpop.f32.mrf.mxu0
        %v1992 = vadd.f32 %v1495, %v1991
        %1993 = vmatmul.bf16.gmra.mxu0 %v1813
        %v1994 = vpop.f32.mrf.mxu0
        %v1995 = vadd.f32 %v1498, %v1994
        %v1996 = vpop.f32.mrf.mxu0
        %v1997 = vadd.f32 %v1500, %v1996
        %1998 = vmatmul.bf16.gmra.mxu0 %v1815
        %v1999 = vpop.f32.mrf.mxu0
        %v2000 = vadd.f32 %v1503, %v1999
        %v2001 = vpop.f32.mrf.mxu0
        %v2002 = vadd.f32 %v1505, %v2001
        %2003 = vmatmul.bf16.gmra.mxu0 %v1817
        %v2004 = vpop.f32.mrf.mxu0
        %v2005 = vadd.f32 %v1508, %v2004
        %v2006 = vpop.f32.mrf.mxu0
        %v2007 = vadd.f32 %v1510, %v2006
        %2008 = vmatmul.bf16.gmra.mxu0 %v1819
        %v2009 = vpop.f32.mrf.mxu0
        %v2010 = vadd.f32 %v1513, %v2009
        %v2011 = vpop.f32.mrf.mxu0
        %v2012 = vadd.f32 %v1515, %v2011
        %2013 = vmatmul.bf16.gmra.mxu0 %v1821
        %v2014 = vpop.f32.mrf.mxu0
        %v2015 = vadd.f32 %v1518, %v2014
        %v2016 = vpop.f32.mrf.mxu0
        %v2017 = vadd.f32 %v1520, %v2016
        %2018 = vmatmul.bf16.gmra.mxu0 %v1823
        %v2019 = vpop.f32.mrf.mxu0
        %v2020 = vadd.f32 %v1523, %v2019
        %v2021 = vpop.f32.mrf.mxu0
        %v2022 = vadd.f32 %v1525, %v2021
        %2023 = vmatmul.bf16.gmra.mxu0 %v1825
        %v2024 = vpop.f32.mrf.mxu0
        %v2025 = vadd.f32 %v1528, %v2024
        %v2026 = vpop.f32.mrf.mxu0
        %v2027 = vadd.f32 %v1530, %v2026
        %2028 = vmatmul.bf16.gmra.mxu0 %v1827
        %v2029 = vpop.f32.mrf.mxu0
        %v2030 = vadd.f32 %v1533, %v2029
        %v2031 = vpop.f32.mrf.mxu0
        %v2032 = vadd.f32 %v1535, %v2031
        %2033 = vmatmul.bf16.gmra.mxu0 %v1829
        %v2034 = vpop.f32.mrf.mxu0
        %v2035 = vadd.f32 %v1538, %v2034
        %v2036 = vpop.f32.mrf.mxu0
        %v2037 = vadd.f32 %v1540, %v2036
        %2038 = vmatmul.bf16.gmra.mxu0 %v1831
        %v2039 = vpop.f32.mrf.mxu0
        %v2040 = vadd.f32 %v1543, %v2039
        %v2041 = vpop.f32.mrf.mxu0
        %v2042 = vadd.f32 %v1545, %v2041
        %2043 = vmatmul.bf16.gmra.mxu0 %v1833
        %v2044 = vpop.f32.mrf.mxu0
        %v2045 = vadd.f32 %v1548, %v2044
        %v2046 = vpop.f32.mrf.mxu0
        %v2047 = vadd.f32 %v1550, %v2046
        %2048 = vmatmul.bf16.gmra.mxu0 %v1835
        %v2049 = vpop.f32.mrf.mxu0
        %v2050 = vadd.f32 %v1553, %v2049
        %v2051 = vpop.f32.mrf.mxu0
        %v2052 = vadd.f32 %v1555, %v2051
        %2053 = vmatmul.bf16.gmra.mxu0 %v1837
        %v2054 = vpop.f32.mrf.mxu0
        %v2055 = vadd.f32 %v1558, %v2054
        %v2056 = vpop.f32.mrf.mxu0
        %v2057 = vadd.f32 %v1560, %v2056
        %2058 = vmatmul.bf16.gmra.mxu0 %v1839
        %v2059 = vpop.f32.mrf.mxu0
        %v2060 = vadd.f32 %v1563, %v2059
        %v2061 = vpop.f32.mrf.mxu0
        %v2062 = vadd.f32 %v1565, %v2061
        %2063 = vmatmul.bf16.gmra.mxu0 %v1841
        %v2064 = vpop.f32.mrf.mxu0
        %v2065 = vadd.f32 %v1568, %v2064
        %v2066 = vpop.f32.mrf.mxu0
        %v2067 = vadd.f32 %v1570, %v2066
        %2068 = vmatmul.bf16.gmra.mxu0 %v1843
        %v2069 = vpop.f32.mrf.mxu0
        %v2070 = vadd.f32 %v1573, %v2069
        %v2071 = vpop.f32.mrf.mxu0
        %v2072 = vadd.f32 %v1575, %v2071
        %2073 = vmatmul.bf16.gmra.mxu0 %v1845
        %v2074 = vpop.f32.mrf.mxu0
        %v2075 = vadd.f32 %v1578, %v2074
        %v2076 = vpop.f32.mrf.mxu0
        %v2077 = vadd.f32 %v1580, %v2076
        %2078 = vmatmul.bf16.gmra.mxu0 %v1847
        %v2079 = vpop.f32.mrf.mxu0
        %v2080 = vadd.f32 %v1583, %v2079
        %v2081 = vpop.f32.mrf.mxu0
        %v2082 = vadd.f32 %v1585, %v2081
        %2083 = vmatmul.bf16.gmra.mxu0 %v1849
        %v2084 = vpop.f32.mrf.mxu0
        %v2085 = vadd.f32 %v1588, %v2084
        %v2086 = vpop.f32.mrf.mxu0
        %v2087 = vadd.f32 %v1590, %v2086
        %2088 = vmatmul.bf16.gmra.mxu0 %v1851
        %v2089 = vpop.f32.mrf.mxu0
        %v2090 = vadd.f32 %v1593, %v2089
        %v2091 = vpop.f32.mrf.mxu0
        %v2092 = vadd.f32 %v1595, %v2091
        %2093 = vmatmul.bf16.gmra.mxu0 %v1853
        %v2094 = vpop.f32.mrf.mxu0
        %v2095 = vadd.f32 %v1598, %v2094
        %v2096 = vpop.f32.mrf.mxu0
        %v2097 = vadd.f32 %v1600, %v2096
        %2098 = vmatmul.bf16.gmra.mxu0 %v1855
        %v2099 = vpop.f32.mrf.mxu0
        %v2100 = vadd.f32 %v1603, %v2099
        %v2101 = vpop.f32.mrf.mxu0
        %v2102 = vadd.f32 %v1605, %v2101
        %2103 = vmatmul.bf16.gmra.mxu0 %v1857
        %v2104 = vpop.f32.mrf.mxu0
        %v2105 = vadd.f32 %v1608, %v2104
        %v2106 = vpop.f32.mrf.mxu0
        %v2107 = vadd.f32 %v1610, %v2106
        %2108 = vmatmul.bf16.gmra.mxu0 %v1859
        %v2109 = vpop.f32.mrf.mxu0
        %v2110 = vadd.f32 %v1613, %v2109
        %v2111 = vpop.f32.mrf.mxu0
        %v2112 = vadd.f32 %v1615, %v2111
        %2113 = vmatmul.bf16.gmra.mxu0 %v1861
        %v2114 = vpop.f32.mrf.mxu0
        %v2115 = vadd.f32 %v1618, %v2114
        %v2116 = vpop.f32.mrf.mxu0
        %v2117 = vadd.f32 %v1620, %v2116
        %2118 = vmatmul.bf16.gmra.mxu0 %v1863
        %v2119 = vpop.f32.mrf.mxu0
        %v2120 = vadd.f32 %v1623, %v2119
        %v2121 = vpop.f32.mrf.mxu0
        %v2122 = vadd.f32 %v1625, %v2121
        %2123 = vmatmul.bf16.gmra.mxu0 %v1865
        %v2124 = vpop.f32.mrf.mxu0
        %v2125 = vadd.f32 %v1628, %v2124
        %v2126 = vpop.f32.mrf.mxu0
        %v2127 = vadd.f32 %v1630, %v2126
        %2128 = vmatmul.bf16.gmra.mxu0 %v1867
        %v2129 = vpop.f32.mrf.mxu0
        %v2130 = vadd.f32 %v1633, %v2129
        %v2131 = vpop.f32.mrf.mxu0
        %v2132 = vadd.f32 %v1635, %v2131
        %2133 = vmatmul.bf16.gmra.mxu0 %v1869
        %v2134 = vpop.f32.mrf.mxu0
        %v2135 = vadd.f32 %v1638, %v2134
        %v2136 = vpop.f32.mrf.mxu0
        %v2137 = vadd.f32 %v1640, %v2136
        %2138 = vmatmul.bf16.gmra.mxu0 %v1871
        %v2139 = vpop.f32.mrf.mxu0
        %v2140 = vadd.f32 %v1643, %v2139
        %v2141 = vpop.f32.mrf.mxu0
        %v2142 = vadd.f32 %v1645, %v2141
        %2143 = vmatmul.bf16.gmra.mxu0 %v1873
        %v2144 = vpop.f32.mrf.mxu0
        %v2145 = vadd.f32 %v1648, %v2144
        %v2146 = vpop.f32.mrf.mxu0
        %v2147 = vadd.f32 %v1650, %v2146
        %2148 = vmatmul.bf16.gmra.mxu0 %v1875
        %v2149 = vpop.f32.mrf.mxu0
        %v2150 = vadd.f32 %v1653, %v2149
        %v2151 = vpop.f32.mrf.mxu0
        %v2152 = vadd.f32 %v1655, %v2151
        %2153 = vmatmul.bf16.gmra.mxu0 %v1877
        %v2154 = vpop.f32.mrf.mxu0
        %v2155 = vadd.f32 %v1658, %v2154
        %v2156 = vpop.f32.mrf.mxu0
        %v2157 = vadd.f32 %v1660, %v2156
        %2158 = vmatmul.bf16.gmra.mxu0 %v1879
        %v2159 = vpop.f32.mrf.mxu0
        %v2160 = vadd.f32 %v1663, %v2159
        %v2161 = vpop.f32.mrf.mxu0
        %v2162 = vadd.f32 %v1665, %v2161
        %2163 = vmatmul.bf16.gmra.mxu0 %v1881
        %v2164 = vpop.f32.mrf.mxu0
        %v2165 = vadd.f32 %v1668, %v2164
        %v2166 = vpop.f32.mrf.mxu0
        %v2167 = vadd.f32 %v1670, %v2166
        %2168 = vmatmul.bf16.gmra.mxu0 %v1883
        %v2169 = vpop.f32.mrf.mxu0
        %v2170 = vadd.f32 %v1673, %v2169
        %v2171 = vpop.f32.mrf.mxu0
        %v2172 = vadd.f32 %v1675, %v2171
        %2173 = vmatmul.bf16.gmra.mxu0 %v1885
        %v2174 = vpop.f32.mrf.mxu0
        %v2175 = vadd.f32 %v1678, %v2174
        %v2176 = vpop.f32.mrf.mxu0
        %v2177 = vadd.f32 %v1680, %v2176
        %2178 = vmatmul.bf16.gmra.mxu0 %v1887
        %v2179 = vpop.f32.mrf.mxu0
        %v2180 = vadd.f32 %v1683, %v2179
        %v2181 = vpop.f32.mrf.mxu0
        %v2182 = vadd.f32 %v1685, %v2181
        %2183 = vmatmul.bf16.gmra.mxu0 %v1889
        %v2184 = vpop.f32.mrf.mxu0
        %v2185 = vadd.f32 %v1688, %v2184
        %v2186 = vpop.f32.mrf.mxu0
        %v2187 = vadd.f32 %v1690, %v2186
        %2188 = vmatmul.bf16.gmra.mxu0 %v1891
        %v2189 = vpop.f32.mrf.mxu0
        %v2190 = vadd.f32 %v1693, %v2189
        %v2191 = vpop.f32.mrf.mxu0
        %v2192 = vadd.f32 %v1695, %v2191
        %2193 = vmatmul.bf16.gmra.mxu0 %v1893
        %v2194 = vpop.f32.mrf.mxu0
        %v2195 = vadd.f32 %v1698, %v2194
        %v2196 = vpop.f32.mrf.mxu0
        %v2197 = vadd.f32 %v1700, %v2196
        %2198 = vmatmul.bf16.gmra.mxu0 %v1895
        %v2199 = vpop.f32.mrf.mxu0
        %v2200 = vadd.f32 %v1703, %v2199
        %v2201 = vpop.f32.mrf.mxu0
        %v2202 = vadd.f32 %v1705, %v2201
        %2203 = vmatmul.bf16.gmra.mxu0 %v1897
        %v2204 = vpop.f32.mrf.mxu0
        %v2205 = vadd.f32 %v1708, %v2204
        %v2206 = vpop.f32.mrf.mxu0
        %v2207 = vadd.f32 %v1710, %v2206
        %2208 = vmatmul.bf16.gmra.mxu0 %v1899
        %v2209 = vpop.f32.mrf.mxu0
        %v2210 = vadd.f32 %v1713, %v2209
        %v2211 = vpop.f32.mrf.mxu0
        %v2212 = vadd.f32 %v1715, %v2211
        %2213 = vmatmul.bf16.gmra.mxu0 %v1901
        %v2214 = vpop.f32.mrf.mxu0
        %v2215 = vadd.f32 %v1718, %v2214
        %v2216 = vpop.f32.mrf.mxu0
        %v2217 = vadd.f32 %v1720, %v2216
        %2218 = vmatmul.bf16.gmra.mxu0 %v1903
        %v2219 = vpop.f32.mrf.mxu0
        %v2220 = vadd.f32 %v1723, %v2219
        %v2221 = vpop.f32.mrf.mxu0
        %v2222 = vadd.f32 %v1725, %v2221
        %2223 = vmatmul.bf16.gmra.mxu0 %v1905
        %v2224 = vpop.f32.mrf.mxu0
        %v2225 = vadd.f32 %v1728, %v2224
        %v2226 = vpop.f32.mrf.mxu0
        %v2227 = vadd.f32 %v1730, %v2226
        %2228 = vmatmul.bf16.gmra.mxu0 %v1907
        %v2229 = vpop.f32.mrf.mxu0
        %v2230 = vadd.f32 %v1733, %v2229
        %v2231 = vpop.f32.mrf.mxu0
        %v2232 = vadd.f32 %v1735, %v2231
        %2233 = vmatmul.bf16.gmra.mxu0 %v1909
        %v2234 = vpop.f32.mrf.mxu0
        %v2235 = vadd.f32 %v1738, %v2234
        %v2236 = vpop.f32.mrf.mxu0
        %v2237 = vadd.f32 %v1740, %v2236
        %2238 = vmatmul.bf16.gmra.mxu0 %v1911
        %v2239 = vpop.f32.mrf.mxu0
        %v2240 = vadd.f32 %v1743, %v2239
        %v2241 = vpop.f32.mrf.mxu0
        %v2242 = vadd.f32 %v1745, %v2241
        %2243 = vmatmul.bf16.gmra.mxu0 %v1913
        %v2244 = vpop.f32.mrf.mxu0
        %v2245 = vadd.f32 %v1748, %v2244
        %v2246 = vpop.f32.mrf.mxu0
        %v2247 = vadd.f32 %v1750, %v2246
        %2248 = vmatmul.bf16.gmra.mxu0 %v1915
        %v2249 = vpop.f32.mrf.mxu0
        %v2250 = vadd.f32 %v1753, %v2249
        %v2251 = vpop.f32.mrf.mxu0
        %v2252 = vadd.f32 %v1755, %v2251
        %2253 = vmatmul.bf16.gmra.mxu0 %v1917
        %v2254 = vpop.f32.mrf.mxu0
        %v2255 = vadd.f32 %v1758, %v2254
        %v2256 = vpop.f32.mrf.mxu0
        %v2257 = vadd.f32 %v1760, %v2256
        %2258 = vmatmul.bf16.gmra.mxu0 %v1919
        %v2259 = vpop.f32.mrf.mxu0
        %v2260 = vadd.f32 %v1763, %v2259
        %v2261 = vpop.f32.mrf.mxu0
        %v2262 = vadd.f32 %v1765, %v2261
        %2263 = vmatmul.bf16.gmra.mxu0 %v1921
        %v2264 = vpop.f32.mrf.mxu0
        %v2265 = vadd.f32 %v1768, %v2264
        %v2266 = vpop.f32.mrf.mxu0
        %v2267 = vadd.f32 %v1770, %v2266
        %2268 = vmatmul.bf16.gmra.mxu0 %v1923
        %v2269 = vpop.f32.mrf.mxu0
        %v2270 = vadd.f32 %v1773, %v2269
        %v2271 = vpop.f32.mrf.mxu0
        %v2272 = vadd.f32 %v1775, %v2271
        %2273 = vdwg.mxu0
        %v2274 = vld [vmem:[%s169] sm:$0xe]
        %s2275 = scalar_lea.vmem %s1, 32
        %v2276 = vld [vmem:[%s2275] sm:$0xf]
        %v2277 = vld [vmem:[%s2275 + $0x4] sm:$0xf]
        %v2278 = vld [vmem:[%s2275 + $0x8] sm:$0xf]
        %v2279 = vld [vmem:[%s2275 + $0xc] sm:$0xf]
        %v2281 = vunpack.c.l.b16 %v2274
        %v2282 = vpack.c.b16 %v457, %v2281
        %vm2283 = vcmask 1046528
        %v2284 = vrot.slane %v2282, 1
        %v2285 = vrot.slane %v594, 1
        %v2286 = vsel %vm2283, %v2284, %v2285
        %v2287 = vrot.slane %v595, 1
        %v2288 = vsel %vm2283, %v2285, %v2287
        %v2289 = vrot.slane %v596, 1
        %v2290 = vsel %vm2283, %v2287, %v2289
        %v2291 = vrot.slane %v597, 1
        %v2292 = vsel %vm2283, %v2289, %v2291
        %v2293 = vrot.slane %v598, 1
        %v2294 = vsel %vm2283, %v2291, %v2293
        %v2295 = vrot.slane %v599, 1
        %v2296 = vsel %vm2283, %v2293, %v2295
        %v2297 = vrot.slane %v600, 1
        %v2298 = vsel %vm2283, %v2295, %v2297
        %v2299 = vrot.slane %v601, 1
        %v2300 = vsel %vm2283, %v2297, %v2299
        %v2301 = vrot.slane %v602, 1
        %v2302 = vsel %vm2283, %v2299, %v2301
        %v2303 = vrot.slane %v603, 1
        %v2304 = vsel %vm2283, %v2301, %v2303
        %v2305 = vrot.slane %v604, 1
        %v2306 = vsel %vm2283, %v2303, %v2305
        %v2307 = vrot.slane %v605, 1
        %v2308 = vsel %vm2283, %v2305, %v2307
        %v2309 = vrot.slane %v606, 1
        %v2310 = vsel %vm2283, %v2307, %v2309
        %v2311 = vrot.slane %v607, 1
        %v2312 = vsel %vm2283, %v2309, %v2311
        %v2313 = vrot.slane %v608, 1
        %v2314 = vsel %vm2283, %v2311, %v2313
        %v2315 = vrot.slane %v609, 1
        %v2316 = vsel %vm2283, %v2313, %v2315
        %v2317 = vrot.slane %v610, 1
        %v2318 = vsel %vm2283, %v2315, %v2317
        %v2319 = vrot.slane %v611, 1
        %v2320 = vsel %vm2283, %v2317, %v2319
        %v2321 = vrot.slane %v612, 1
        %v2322 = vsel %vm2283, %v2319, %v2321
        %v2323 = vrot.slane %v613, 1
        %v2324 = vsel %vm2283, %v2321, %v2323
        %v2325 = vrot.slane %v614, 1
        %v2326 = vsel %vm2283, %v2323, %v2325
        %v2327 = vrot.slane %v615, 1
        %v2328 = vsel %vm2283, %v2325, %v2327
        %v2329 = vrot.slane %v616, 1
        %v2330 = vsel %vm2283, %v2327, %v2329
        %v2331 = vrot.slane %v617, 1
        %v2332 = vsel %vm2283, %v2329, %v2331
        %v2333 = vrot.slane %v618, 1
        %v2334 = vsel %vm2283, %v2331, %v2333
        %v2335 = vrot.slane %v619, 1
        %v2336 = vsel %vm2283, %v2333, %v2335
        %v2337 = vrot.slane %v620, 1
        %v2338 = vsel %vm2283, %v2335, %v2337
        %v2339 = vrot.slane %v621, 1
        %v2340 = vsel %vm2283, %v2337, %v2339
        %v2341 = vrot.slane %v622, 1
        %v2342 = vsel %vm2283, %v2339, %v2341
        %v2343 = vrot.slane %v623, 1
        %v2344 = vsel %vm2283, %v2341, %v2343
        %v2345 = vrot.slane %v624, 1
        %v2346 = vsel %vm2283, %v2343, %v2345
        %v2347 = vrot.slane %v625, 1
        %v2348 = vsel %vm2283, %v2345, %v2347
        %v2349 = vrot.slane %v626, 1
        %v2350 = vsel %vm2283, %v2347, %v2349
        %v2351 = vrot.slane %v627, 1
        %v2352 = vsel %vm2283, %v2349, %v2351
        %v2353 = vrot.slane %v628, 1
        %v2354 = vsel %vm2283, %v2351, %v2353
        %v2355 = vrot.slane %v629, 1
        %v2356 = vsel %vm2283, %v2353, %v2355
        %v2357 = vrot.slane %v630, 1
        %v2358 = vsel %vm2283, %v2355, %v2357
        %v2359 = vrot.slane %v631, 1
        %v2360 = vsel %vm2283, %v2357, %v2359
        %v2361 = vrot.slane %v632, 1
        %v2362 = vsel %vm2283, %v2359, %v2361
        %v2363 = vrot.slane %v633, 1
        %v2364 = vsel %vm2283, %v2361, %v2363
        %v2365 = vrot.slane %v634, 1
        %v2366 = vsel %vm2283, %v2363, %v2365
        %v2367 = vrot.slane %v635, 1
        %v2368 = vsel %vm2283, %v2365, %v2367
        %v2369 = vrot.slane %v636, 1
        %v2370 = vsel %vm2283, %v2367, %v2369
        %v2371 = vrot.slane %v637, 1
        %v2372 = vsel %vm2283, %v2369, %v2371
        %v2373 = vrot.slane %v638, 1
        %v2374 = vsel %vm2283, %v2371, %v2373
        %v2375 = vrot.slane %v639, 1
        %v2376 = vsel %vm2283, %v2373, %v2375
        %v2377 = vrot.slane %v640, 1
        %v2378 = vsel %vm2283, %v2375, %v2377
        %v2379 = vrot.slane %v641, 1
        %v2380 = vsel %vm2283, %v2377, %v2379
        %v2381 = vrot.slane %v642, 1
        %v2382 = vsel %vm2283, %v2379, %v2381
        %v2383 = vrot.slane %v643, 1
        %v2384 = vsel %vm2283, %v2381, %v2383
        %v2385 = vrot.slane %v644, 1
        %v2386 = vsel %vm2283, %v2383, %v2385
        %v2387 = vrot.slane %v645, 1
        %v2388 = vsel %vm2283, %v2385, %v2387
        %v2389 = vrot.slane %v646, 1
        %v2390 = vsel %vm2283, %v2387, %v2389
        %v2391 = vrot.slane %v647, 1
        %v2392 = vsel %vm2283, %v2389, %v2391
        %v2393 = vrot.slane %v648, 1
        %v2394 = vsel %vm2283, %v2391, %v2393
        %v2395 = vrot.slane %v649, 1
        %v2396 = vsel %vm2283, %v2393, %v2395
        %v2397 = vrot.slane %v650, 1
        %v2398 = vsel %vm2283, %v2395, %v2397
        %v2399 = vrot.slane %v651, 1
        %v2400 = vsel %vm2283, %v2397, %v2399
        %v2401 = vrot.slane %v652, 1
        %v2402 = vsel %vm2283, %v2399, %v2401
        %v2403 = vrot.slane %v653, 1
        %v2404 = vsel %vm2283, %v2401, %v2403
        %v2405 = vrot.slane %v654, 1
        %v2406 = vsel %vm2283, %v2403, %v2405
        %v2407 = vrot.slane %v655, 1
        %v2408 = vsel %vm2283, %v2405, %v2407
        %v2409 = vrot.slane %v656, 1
        %v2410 = vsel %vm2283, %v2407, %v2409
        %v2411 = vrot.slane %v657, 1
        %v2412 = vsel %vm2283, %v2409, %v2411
        %v2413 = vrot.slane %v658, 1
        %v2414 = vsel %vm2283, %v2411, %v2413
        %v2415 = vrot.slane %v659, 1
        %v2416 = vsel %vm2283, %v2413, %v2415
        %v2417 = vrot.slane %v660, 1
        %v2418 = vsel %vm2283, %v2415, %v2417
        %v2419 = vrot.slane %v661, 1
        %v2420 = vsel %vm2283, %v2417, %v2419
        %v2425 = vunpack.c.l.b16 %v2276
        %v2426 = vunpack.c.l.b16 %v2277
        %v2427 = vunpack.c.l.b16 %v2278
        %v2428 = vunpack.c.l.b16 %v2279
        %v2429 = vpack.c.b16 %v2426, %v2425
        %v2430 = vpack.c.b16 %v2428, %v2427
        %v2434 = vsel %vm1223, %v2286, 0
        %v2437 = vsel %vm1223, %v2288, 0
        %v2440 = vsel %vm1223, %v2290, 0
        %v2443 = vsel %vm1223, %v2292, 0
        %v2446 = vsel %vm1223, %v2294, 0
        %v2449 = vsel %vm1223, %v2296, 0
        %v2452 = vsel %vm1223, %v2298, 0
        %v2455 = vsel %vm1223, %v2300, 0
        %v2458 = vsel %vm1223, %v2302, 0
        %v2461 = vsel %vm1223, %v2304, 0
        %v2464 = vsel %vm1223, %v2306, 0
        %v2467 = vsel %vm1223, %v2308, 0
        %v2470 = vsel %vm1223, %v2310, 0
        %v2473 = vsel %vm1223, %v2312, 0
        %v2476 = vsel %vm1223, %v2314, 0
        %v2479 = vsel %vm1223, %v2316, 0
        %v2482 = vsel %vm1223, %v2318, 0
        %v2485 = vsel %vm1223, %v2320, 0
        %v2488 = vsel %vm1223, %v2322, 0
        %v2491 = vsel %vm1223, %v2324, 0
        %v2494 = vsel %vm1223, %v2326, 0
        %v2497 = vsel %vm1223, %v2328, 0
        %v2500 = vsel %vm1223, %v2330, 0
        %v2503 = vsel %vm1223, %v2332, 0
        %v2506 = vsel %vm1223, %v2334, 0
        %v2509 = vsel %vm1223, %v2336, 0
        %v2512 = vsel %vm1223, %v2338, 0
        %v2515 = vsel %vm1223, %v2340, 0
        %v2518 = vsel %vm1223, %v2342, 0
        %v2521 = vsel %vm1223, %v2344, 0
        %v2524 = vsel %vm1223, %v2346, 0
        %v2527 = vsel %vm1223, %v2348, 0
        %v2530 = vsel %vm1223, %v2350, 0
        %v2533 = vsel %vm1223, %v2352, 0
        %v2536 = vsel %vm1223, %v2354, 0
        %v2539 = vsel %vm1223, %v2356, 0
        %v2542 = vsel %vm1223, %v2358, 0
        %v2545 = vsel %vm1223, %v2360, 0
        %v2548 = vsel %vm1223, %v2362, 0
        %v2551 = vsel %vm1223, %v2364, 0
        %v2554 = vsel %vm1223, %v2366, 0
        %v2557 = vsel %vm1223, %v2368, 0
        %v2560 = vsel %vm1223, %v2370, 0
        %v2563 = vsel %vm1223, %v2372, 0
        %v2566 = vsel %vm1223, %v2374, 0
        %v2569 = vsel %vm1223, %v2376, 0
        %v2572 = vsel %vm1223, %v2378, 0
        %v2575 = vsel %vm1223, %v2380, 0
        %v2578 = vsel %vm1223, %v2382, 0
        %v2581 = vsel %vm1223, %v2384, 0
        %v2584 = vsel %vm1223, %v2386, 0
        %v2587 = vsel %vm1223, %v2388, 0
        %v2590 = vsel %vm1223, %v2390, 0
        %v2593 = vsel %vm1223, %v2392, 0
        %v2596 = vsel %vm1223, %v2394, 0
        %v2599 = vsel %vm1223, %v2396, 0
        %v2602 = vsel %vm1223, %v2398, 0
        %v2605 = vsel %vm1223, %v2400, 0
        %v2608 = vsel %vm1223, %v2402, 0
        %v2611 = vsel %vm1223, %v2404, 0
        %v2614 = vsel %vm1223, %v2406, 0
        %v2617 = vsel %vm1223, %v2408, 0
        %v2620 = vsel %vm1223, %v2410, 0
        %v2623 = vsel %vm1223, %v2412, 0
        %v2626 = vsel %vm1223, %v2414, 0
        %v2629 = vsel %vm1223, %v2416, 0
        %v2632 = vsel %vm1223, %v2418, 0
        %v2635 = vsel %vm1223, %v2420, 0
        %2637 = vmatpush.bf16.msra.mxu0 0
        %2638 = vmatpush.bf16.msra.mxu0 0
        %2639 = vmatpush.bf16.msra.mxu0 0
        %2640 = vmatpush.bf16.msra.mxu0 0
        %2641 = vmatpush.bf16.msra.mxu0 0
        %2642 = vmatpush.bf16.msra.mxu0 0
        %2643 = vmatpush.bf16.msra.mxu0 %v2430
        %2644 = vmatpush.bf16.msra.mxu0 %v2429
        %2645 = vmatmul.bf16.gmra.mxu0 %v2434
        %v2646 = vpop.f32.mrf.mxu0
        %v2647 = vadd.f32 0.0, %v2646
        %v2648 = vpop.f32.mrf.mxu0
        %v2649 = vadd.f32 0.0, %v2648
        %2650 = vmatmul.bf16.gmra.mxu0 %v2437
        %v2651 = vpop.f32.mrf.mxu0
        %v2652 = vadd.f32 0.0, %v2651
        %v2653 = vpop.f32.mrf.mxu0
        %v2654 = vadd.f32 0.0, %v2653
        %2655 = vmatmul.bf16.gmra.mxu0 %v2440
        %v2656 = vpop.f32.mrf.mxu0
        %v2657 = vadd.f32 0.0, %v2656
        %v2658 = vpop.f32.mrf.mxu0
        %v2659 = vadd.f32 0.0, %v2658
        %2660 = vmatmul.bf16.gmra.mxu0 %v2443
        %v2661 = vpop.f32.mrf.mxu0
        %v2662 = vadd.f32 0.0, %v2661
        %v2663 = vpop.f32.mrf.mxu0
        %v2664 = vadd.f32 0.0, %v2663
        %2665 = vmatmul.bf16.gmra.mxu0 %v2446
        %v2666 = vpop.f32.mrf.mxu0
        %v2667 = vadd.f32 0.0, %v2666
        %v2668 = vpop.f32.mrf.mxu0
        %v2669 = vadd.f32 0.0, %v2668
        %2670 = vmatmul.bf16.gmra.mxu0 %v2449
        %v2671 = vpop.f32.mrf.mxu0
        %v2672 = vadd.f32 0.0, %v2671
        %v2673 = vpop.f32.mrf.mxu0
        %v2674 = vadd.f32 0.0, %v2673
        %2675 = vmatmul.bf16.gmra.mxu0 %v2452
        %v2676 = vpop.f32.mrf.mxu0
        %v2677 = vadd.f32 0.0, %v2676
        %v2678 = vpop.f32.mrf.mxu0
        %v2679 = vadd.f32 0.0, %v2678
        %2680 = vmatmul.bf16.gmra.mxu0 %v2455
        %v2681 = vpop.f32.mrf.mxu0
        %v2682 = vadd.f32 0.0, %v2681
        %v2683 = vpop.f32.mrf.mxu0
        %v2684 = vadd.f32 0.0, %v2683
        %2685 = vmatmul.bf16.gmra.mxu0 %v2458
        %v2686 = vpop.f32.mrf.mxu0
        %v2687 = vadd.f32 0.0, %v2686
        %v2688 = vpop.f32.mrf.mxu0
        %v2689 = vadd.f32 0.0, %v2688
        %2690 = vmatmul.bf16.gmra.mxu0 %v2461
        %v2691 = vpop.f32.mrf.mxu0
        %v2692 = vadd.f32 0.0, %v2691
        %v2693 = vpop.f32.mrf.mxu0
        %v2694 = vadd.f32 0.0, %v2693
        %2695 = vmatmul.bf16.gmra.mxu0 %v2464
        %v2696 = vpop.f32.mrf.mxu0
        %v2697 = vadd.f32 0.0, %v2696
        %v2698 = vpop.f32.mrf.mxu0
        %v2699 = vadd.f32 0.0, %v2698
        %2700 = vmatmul.bf16.gmra.mxu0 %v2467
        %v2701 = vpop.f32.mrf.mxu0
        %v2702 = vadd.f32 0.0, %v2701
        %v2703 = vpop.f32.mrf.mxu0
        %v2704 = vadd.f32 0.0, %v2703
        %2705 = vmatmul.bf16.gmra.mxu0 %v2470
        %v2706 = vpop.f32.mrf.mxu0
        %v2707 = vadd.f32 0.0, %v2706
        %v2708 = vpop.f32.mrf.mxu0
        %v2709 = vadd.f32 0.0, %v2708
        %2710 = vmatmul.bf16.gmra.mxu0 %v2473
        %v2711 = vpop.f32.mrf.mxu0
        %v2712 = vadd.f32 0.0, %v2711
        %v2713 = vpop.f32.mrf.mxu0
        %v2714 = vadd.f32 0.0, %v2713
        %2715 = vmatmul.bf16.gmra.mxu0 %v2476
        %v2716 = vpop.f32.mrf.mxu0
        %v2717 = vadd.f32 0.0, %v2716
        %v2718 = vpop.f32.mrf.mxu0
        %v2719 = vadd.f32 0.0, %v2718
        %2720 = vmatmul.bf16.gmra.mxu0 %v2479
        %v2721 = vpop.f32.mrf.mxu0
        %v2722 = vadd.f32 0.0, %v2721
        %v2723 = vpop.f32.mrf.mxu0
        %v2724 = vadd.f32 0.0, %v2723
        %2725 = vmatmul.bf16.gmra.mxu0 %v2482
        %v2726 = vpop.f32.mrf.mxu0
        %v2727 = vadd.f32 0.0, %v2726
        %v2728 = vpop.f32.mrf.mxu0
        %v2729 = vadd.f32 0.0, %v2728
        %2730 = vmatmul.bf16.gmra.mxu0 %v2485
        %v2731 = vpop.f32.mrf.mxu0
        %v2732 = vadd.f32 0.0, %v2731
        %v2733 = vpop.f32.mrf.mxu0
        %v2734 = vadd.f32 0.0, %v2733
        %2735 = vmatmul.bf16.gmra.mxu0 %v2488
        %v2736 = vpop.f32.mrf.mxu0
        %v2737 = vadd.f32 0.0, %v2736
        %v2738 = vpop.f32.mrf.mxu0
        %v2739 = vadd.f32 0.0, %v2738
        %2740 = vmatmul.bf16.gmra.mxu0 %v2491
        %v2741 = vpop.f32.mrf.mxu0
        %v2742 = vadd.f32 0.0, %v2741
        %v2743 = vpop.f32.mrf.mxu0
        %v2744 = vadd.f32 0.0, %v2743
        %2745 = vmatmul.bf16.gmra.mxu0 %v2494
        %v2746 = vpop.f32.mrf.mxu0
        %v2747 = vadd.f32 0.0, %v2746
        %v2748 = vpop.f32.mrf.mxu0
        %v2749 = vadd.f32 0.0, %v2748
        %2750 = vmatmul.bf16.gmra.mxu0 %v2497
        %v2751 = vpop.f32.mrf.mxu0
        %v2752 = vadd.f32 0.0, %v2751
        %v2753 = vpop.f32.mrf.mxu0
        %v2754 = vadd.f32 0.0, %v2753
        %2755 = vmatmul.bf16.gmra.mxu0 %v2500
        %v2756 = vpop.f32.mrf.mxu0
        %v2757 = vadd.f32 0.0, %v2756
        %v2758 = vpop.f32.mrf.mxu0
        %v2759 = vadd.f32 0.0, %v2758
        %2760 = vmatmul.bf16.gmra.mxu0 %v2503
        %v2761 = vpop.f32.mrf.mxu0
        %v2762 = vadd.f32 0.0, %v2761
        %v2763 = vpop.f32.mrf.mxu0
        %v2764 = vadd.f32 0.0, %v2763
        %2765 = vmatmul.bf16.gmra.mxu0 %v2506
        %v2766 = vpop.f32.mrf.mxu0
        %v2767 = vadd.f32 0.0, %v2766
        %v2768 = vpop.f32.mrf.mxu0
        %v2769 = vadd.f32 0.0, %v2768
        %2770 = vmatmul.bf16.gmra.mxu0 %v2509
        %v2771 = vpop.f32.mrf.mxu0
        %v2772 = vadd.f32 0.0, %v2771
        %v2773 = vpop.f32.mrf.mxu0
        %v2774 = vadd.f32 0.0, %v2773
        %2775 = vmatmul.bf16.gmra.mxu0 %v2512
        %v2776 = vpop.f32.mrf.mxu0
        %v2777 = vadd.f32 0.0, %v2776
        %v2778 = vpop.f32.mrf.mxu0
        %v2779 = vadd.f32 0.0, %v2778
        %2780 = vmatmul.bf16.gmra.mxu0 %v2515
        %v2781 = vpop.f32.mrf.mxu0
        %v2782 = vadd.f32 0.0, %v2781
        %v2783 = vpop.f32.mrf.mxu0
        %v2784 = vadd.f32 0.0, %v2783
        %2785 = vmatmul.bf16.gmra.mxu0 %v2518
        %v2786 = vpop.f32.mrf.mxu0
        %v2787 = vadd.f32 0.0, %v2786
        %v2788 = vpop.f32.mrf.mxu0
        %v2789 = vadd.f32 0.0, %v2788
        %2790 = vmatmul.bf16.gmra.mxu0 %v2521
        %v2791 = vpop.f32.mrf.mxu0
        %v2792 = vadd.f32 0.0, %v2791
        %v2793 = vpop.f32.mrf.mxu0
        %v2794 = vadd.f32 0.0, %v2793
        %2795 = vmatmul.bf16.gmra.mxu0 %v2524
        %v2796 = vpop.f32.mrf.mxu0
        %v2797 = vadd.f32 0.0, %v2796
        %v2798 = vpop.f32.mrf.mxu0
        %v2799 = vadd.f32 0.0, %v2798
        %2800 = vmatmul.bf16.gmra.mxu0 %v2527
        %v2801 = vpop.f32.mrf.mxu0
        %v2802 = vadd.f32 0.0, %v2801
        %v2803 = vpop.f32.mrf.mxu0
        %v2804 = vadd.f32 0.0, %v2803
        %2805 = vmatmul.bf16.gmra.mxu0 %v2530
        %v2806 = vpop.f32.mrf.mxu0
        %v2807 = vadd.f32 0.0, %v2806
        %v2808 = vpop.f32.mrf.mxu0
        %v2809 = vadd.f32 0.0, %v2808
        %2810 = vmatmul.bf16.gmra.mxu0 %v2533
        %v2811 = vpop.f32.mrf.mxu0
        %v2812 = vadd.f32 0.0, %v2811
        %v2813 = vpop.f32.mrf.mxu0
        %v2814 = vadd.f32 0.0, %v2813
        %2815 = vmatmul.bf16.gmra.mxu0 %v2536
        %v2816 = vpop.f32.mrf.mxu0
        %v2817 = vadd.f32 0.0, %v2816
        %v2818 = vpop.f32.mrf.mxu0
        %v2819 = vadd.f32 0.0, %v2818
        %2820 = vmatmul.bf16.gmra.mxu0 %v2539
        %v2821 = vpop.f32.mrf.mxu0
        %v2822 = vadd.f32 0.0, %v2821
        %v2823 = vpop.f32.mrf.mxu0
        %v2824 = vadd.f32 0.0, %v2823
        %2825 = vmatmul.bf16.gmra.mxu0 %v2542
        %v2826 = vpop.f32.mrf.mxu0
        %v2827 = vadd.f32 0.0, %v2826
        %v2828 = vpop.f32.mrf.mxu0
        %v2829 = vadd.f32 0.0, %v2828
        %2830 = vmatmul.bf16.gmra.mxu0 %v2545
        %v2831 = vpop.f32.mrf.mxu0
        %v2832 = vadd.f32 0.0, %v2831
        %v2833 = vpop.f32.mrf.mxu0
        %v2834 = vadd.f32 0.0, %v2833
        %2835 = vmatmul.bf16.gmra.mxu0 %v2548
        %v2836 = vpop.f32.mrf.mxu0
        %v2837 = vadd.f32 0.0, %v2836
        %v2838 = vpop.f32.mrf.mxu0
        %v2839 = vadd.f32 0.0, %v2838
        %2840 = vmatmul.bf16.gmra.mxu0 %v2551
        %v2841 = vpop.f32.mrf.mxu0
        %v2842 = vadd.f32 0.0, %v2841
        %v2843 = vpop.f32.mrf.mxu0
        %v2844 = vadd.f32 0.0, %v2843
        %2845 = vmatmul.bf16.gmra.mxu0 %v2554
        %v2846 = vpop.f32.mrf.mxu0
        %v2847 = vadd.f32 0.0, %v2846
        %v2848 = vpop.f32.mrf.mxu0
        %v2849 = vadd.f32 0.0, %v2848
        %2850 = vmatmul.bf16.gmra.mxu0 %v2557
        %v2851 = vpop.f32.mrf.mxu0
        %v2852 = vadd.f32 0.0, %v2851
        %v2853 = vpop.f32.mrf.mxu0
        %v2854 = vadd.f32 0.0, %v2853
        %2855 = vmatmul.bf16.gmra.mxu0 %v2560
        %v2856 = vpop.f32.mrf.mxu0
        %v2857 = vadd.f32 0.0, %v2856
        %v2858 = vpop.f32.mrf.mxu0
        %v2859 = vadd.f32 0.0, %v2858
        %2860 = vmatmul.bf16.gmra.mxu0 %v2563
        %v2861 = vpop.f32.mrf.mxu0
        %v2862 = vadd.f32 0.0, %v2861
        %v2863 = vpop.f32.mrf.mxu0
        %v2864 = vadd.f32 0.0, %v2863
        %2865 = vmatmul.bf16.gmra.mxu0 %v2566
        %v2866 = vpop.f32.mrf.mxu0
        %v2867 = vadd.f32 0.0, %v2866
        %v2868 = vpop.f32.mrf.mxu0
        %v2869 = vadd.f32 0.0, %v2868
        %2870 = vmatmul.bf16.gmra.mxu0 %v2569
        %v2871 = vpop.f32.mrf.mxu0
        %v2872 = vadd.f32 0.0, %v2871
        %v2873 = vpop.f32.mrf.mxu0
        %v2874 = vadd.f32 0.0, %v2873
        %2875 = vmatmul.bf16.gmra.mxu0 %v2572
        %v2876 = vpop.f32.mrf.mxu0
        %v2877 = vadd.f32 0.0, %v2876
        %v2878 = vpop.f32.mrf.mxu0
        %v2879 = vadd.f32 0.0, %v2878
        %2880 = vmatmul.bf16.gmra.mxu0 %v2575
        %v2881 = vpop.f32.mrf.mxu0
        %v2882 = vadd.f32 0.0, %v2881
        %v2883 = vpop.f32.mrf.mxu0
        %v2884 = vadd.f32 0.0, %v2883
        %2885 = vmatmul.bf16.gmra.mxu0 %v2578
        %v2886 = vpop.f32.mrf.mxu0
        %v2887 = vadd.f32 0.0, %v2886
        %v2888 = vpop.f32.mrf.mxu0
        %v2889 = vadd.f32 0.0, %v2888
        %2890 = vmatmul.bf16.gmra.mxu0 %v2581
        %v2891 = vpop.f32.mrf.mxu0
        %v2892 = vadd.f32 0.0, %v2891
        %v2893 = vpop.f32.mrf.mxu0
        %v2894 = vadd.f32 0.0, %v2893
        %2895 = vmatmul.bf16.gmra.mxu0 %v2584
        %v2896 = vpop.f32.mrf.mxu0
        %v2897 = vadd.f32 0.0, %v2896
        %v2898 = vpop.f32.mrf.mxu0
        %v2899 = vadd.f32 0.0, %v2898
        %2900 = vmatmul.bf16.gmra.mxu0 %v2587
        %v2901 = vpop.f32.mrf.mxu0
        %v2902 = vadd.f32 0.0, %v2901
        %v2903 = vpop.f32.mrf.mxu0
        %v2904 = vadd.f32 0.0, %v2903
        %2905 = vmatmul.bf16.gmra.mxu0 %v2590
        %v2906 = vpop.f32.mrf.mxu0
        %v2907 = vadd.f32 0.0, %v2906
        %v2908 = vpop.f32.mrf.mxu0
        %v2909 = vadd.f32 0.0, %v2908
        %2910 = vmatmul.bf16.gmra.mxu0 %v2593
        %v2911 = vpop.f32.mrf.mxu0
        %v2912 = vadd.f32 0.0, %v2911
        %v2913 = vpop.f32.mrf.mxu0
        %v2914 = vadd.f32 0.0, %v2913
        %2915 = vmatmul.bf16.gmra.mxu0 %v2596
        %v2916 = vpop.f32.mrf.mxu0
        %v2917 = vadd.f32 0.0, %v2916
        %v2918 = vpop.f32.mrf.mxu0
        %v2919 = vadd.f32 0.0, %v2918
        %2920 = vmatmul.bf16.gmra.mxu0 %v2599
        %v2921 = vpop.f32.mrf.mxu0
        %v2922 = vadd.f32 0.0, %v2921
        %v2923 = vpop.f32.mrf.mxu0
        %v2924 = vadd.f32 0.0, %v2923
        %2925 = vmatmul.bf16.gmra.mxu0 %v2602
        %v2926 = vpop.f32.mrf.mxu0
        %v2927 = vadd.f32 0.0, %v2926
        %v2928 = vpop.f32.mrf.mxu0
        %v2929 = vadd.f32 0.0, %v2928
        %2930 = vmatmul.bf16.gmra.mxu0 %v2605
        %v2931 = vpop.f32.mrf.mxu0
        %v2932 = vadd.f32 0.0, %v2931
        %v2933 = vpop.f32.mrf.mxu0
        %v2934 = vadd.f32 0.0, %v2933
        %2935 = vmatmul.bf16.gmra.mxu0 %v2608
        %v2936 = vpop.f32.mrf.mxu0
        %v2937 = vadd.f32 0.0, %v2936
        %v2938 = vpop.f32.mrf.mxu0
        %v2939 = vadd.f32 0.0, %v2938
        %2940 = vmatmul.bf16.gmra.mxu0 %v2611
        %v2941 = vpop.f32.mrf.mxu0
        %v2942 = vadd.f32 0.0, %v2941
        %v2943 = vpop.f32.mrf.mxu0
        %v2944 = vadd.f32 0.0, %v2943
        %2945 = vmatmul.bf16.gmra.mxu0 %v2614
        %v2946 = vpop.f32.mrf.mxu0
        %v2947 = vadd.f32 0.0, %v2946
        %v2948 = vpop.f32.mrf.mxu0
        %v2949 = vadd.f32 0.0, %v2948
        %2950 = vmatmul.bf16.gmra.mxu0 %v2617
        %v2951 = vpop.f32.mrf.mxu0
        %v2952 = vadd.f32 0.0, %v2951
        %v2953 = vpop.f32.mrf.mxu0
        %v2954 = vadd.f32 0.0, %v2953
        %2955 = vmatmul.bf16.gmra.mxu0 %v2620
        %v2956 = vpop.f32.mrf.mxu0
        %v2957 = vadd.f32 0.0, %v2956
        %v2958 = vpop.f32.mrf.mxu0
        %v2959 = vadd.f32 0.0, %v2958
        %2960 = vmatmul.bf16.gmra.mxu0 %v2623
        %v2961 = vpop.f32.mrf.mxu0
        %v2962 = vadd.f32 0.0, %v2961
        %v2963 = vpop.f32.mrf.mxu0
        %v2964 = vadd.f32 0.0, %v2963
        %2965 = vmatmul.bf16.gmra.mxu0 %v2626
        %v2966 = vpop.f32.mrf.mxu0
        %v2967 = vadd.f32 0.0, %v2966
        %v2968 = vpop.f32.mrf.mxu0
        %v2969 = vadd.f32 0.0, %v2968
        %2970 = vmatmul.bf16.gmra.mxu0 %v2629
        %v2971 = vpop.f32.mrf.mxu0
        %v2972 = vadd.f32 0.0, %v2971
        %v2973 = vpop.f32.mrf.mxu0
        %v2974 = vadd.f32 0.0, %v2973
        %2975 = vmatmul.bf16.gmra.mxu0 %v2632
        %v2976 = vpop.f32.mrf.mxu0
        %v2977 = vadd.f32 0.0, %v2976
        %v2978 = vpop.f32.mrf.mxu0
        %v2979 = vadd.f32 0.0, %v2978
        %2980 = vmatmul.bf16.gmra.mxu0 %v2635
        %v2981 = vpop.f32.mrf.mxu0
        %v2982 = vadd.f32 0.0, %v2981
        %v2983 = vpop.f32.mrf.mxu0
        %v2984 = vadd.f32 0.0, %v2983
        %2985 = vdwg.mxu0
        %v2986 = vadd.f32 %v1935, %v2647
        %v2987 = vadd.f32 %v1937, %v2649
        %v2988 = vadd.f32 %v1940, %v2652
        %v2989 = vadd.f32 %v1942, %v2654
        %v2990 = vadd.f32 %v1945, %v2657
        %v2991 = vadd.f32 %v1947, %v2659
        %v2992 = vadd.f32 %v1950, %v2662
        %v2993 = vadd.f32 %v1952, %v2664
        %v2994 = vadd.f32 %v1955, %v2667
        %v2995 = vadd.f32 %v1957, %v2669
        %v2996 = vadd.f32 %v1960, %v2672
        %v2997 = vadd.f32 %v1962, %v2674
        %v2998 = vadd.f32 %v1965, %v2677
        %v2999 = vadd.f32 %v1967, %v2679
        %v3000 = vadd.f32 %v1970, %v2682
        %v3001 = vadd.f32 %v1972, %v2684
        %v3002 = vadd.f32 %v1975, %v2687
        %v3003 = vadd.f32 %v1977, %v2689
        %v3004 = vadd.f32 %v1980, %v2692
        %v3005 = vadd.f32 %v1982, %v2694
        %v3006 = vadd.f32 %v1985, %v2697
        %v3007 = vadd.f32 %v1987, %v2699
        %v3008 = vadd.f32 %v1990, %v2702
        %v3009 = vadd.f32 %v1992, %v2704
        %v3010 = vadd.f32 %v1995, %v2707
        %v3011 = vadd.f32 %v1997, %v2709
        %v3012 = vadd.f32 %v2000, %v2712
        %v3013 = vadd.f32 %v2002, %v2714
        %v3014 = vadd.f32 %v2005, %v2717
        %v3015 = vadd.f32 %v2007, %v2719
        %v3016 = vadd.f32 %v2010, %v2722
        %v3017 = vadd.f32 %v2012, %v2724
        %v3018 = vadd.f32 %v2015, %v2727
        %v3019 = vadd.f32 %v2017, %v2729
        %v3020 = vadd.f32 %v2020, %v2732
        %v3021 = vadd.f32 %v2022, %v2734
        %v3022 = vadd.f32 %v2025, %v2737
        %v3023 = vadd.f32 %v2027, %v2739
        %v3024 = vadd.f32 %v2030, %v2742
        %v3025 = vadd.f32 %v2032, %v2744
        %v3026 = vadd.f32 %v2035, %v2747
        %v3027 = vadd.f32 %v2037, %v2749
        %v3028 = vadd.f32 %v2040, %v2752
        %v3029 = vadd.f32 %v2042, %v2754
        %v3030 = vadd.f32 %v2045, %v2757
        %v3031 = vadd.f32 %v2047, %v2759
        %v3032 = vadd.f32 %v2050, %v2762
        %v3033 = vadd.f32 %v2052, %v2764
        %v3034 = vadd.f32 %v2055, %v2767
        %v3035 = vadd.f32 %v2057, %v2769
        %v3036 = vadd.f32 %v2060, %v2772
        %v3037 = vadd.f32 %v2062, %v2774
        %v3038 = vadd.f32 %v2065, %v2777
        %v3039 = vadd.f32 %v2067, %v2779
        %v3040 = vadd.f32 %v2070, %v2782
        %v3041 = vadd.f32 %v2072, %v2784
        %v3042 = vadd.f32 %v2075, %v2787
        %v3043 = vadd.f32 %v2077, %v2789
        %v3044 = vadd.f32 %v2080, %v2792
        %v3045 = vadd.f32 %v2082, %v2794
        %v3046 = vadd.f32 %v2085, %v2797
        %v3047 = vadd.f32 %v2087, %v2799
        %v3048 = vadd.f32 %v2090, %v2802
        %v3049 = vadd.f32 %v2092, %v2804
        %v3050 = vadd.f32 %v2095, %v2807
        %v3051 = vadd.f32 %v2097, %v2809
        %v3052 = vadd.f32 %v2100, %v2812
        %v3053 = vadd.f32 %v2102, %v2814
        %v3054 = vadd.f32 %v2105, %v2817
        %v3055 = vadd.f32 %v2107, %v2819
        %v3056 = vadd.f32 %v2110, %v2822
        %v3057 = vadd.f32 %v2112, %v2824
        %v3058 = vadd.f32 %v2115, %v2827
        %v3059 = vadd.f32 %v2117, %v2829
        %v3060 = vadd.f32 %v2120, %v2832
        %v3061 = vadd.f32 %v2122, %v2834
        %v3062 = vadd.f32 %v2125, %v2837
        %v3063 = vadd.f32 %v2127, %v2839
        %v3064 = vadd.f32 %v2130, %v2842
        %v3065 = vadd.f32 %v2132, %v2844
        %v3066 = vadd.f32 %v2135, %v2847
        %v3067 = vadd.f32 %v2137, %v2849
        %v3068 = vadd.f32 %v2140, %v2852
        %v3069 = vadd.f32 %v2142, %v2854
        %v3070 = vadd.f32 %v2145, %v2857
        %v3071 = vadd.f32 %v2147, %v2859
        %v3072 = vadd.f32 %v2150, %v2862
        %v3073 = vadd.f32 %v2152, %v2864
        %v3074 = vadd.f32 %v2155, %v2867
        %v3075 = vadd.f32 %v2157, %v2869
        %v3076 = vadd.f32 %v2160, %v2872
        %v3077 = vadd.f32 %v2162, %v2874
        %v3078 = vadd.f32 %v2165, %v2877
        %v3079 = vadd.f32 %v2167, %v2879
        %v3080 = vadd.f32 %v2170, %v2882
        %v3081 = vadd.f32 %v2172, %v2884
        %v3082 = vadd.f32 %v2175, %v2887
        %v3083 = vadd.f32 %v2177, %v2889
        %v3084 = vadd.f32 %v2180, %v2892
        %v3085 = vadd.f32 %v2182, %v2894
        %v3086 = vadd.f32 %v2185, %v2897
        %v3087 = vadd.f32 %v2187, %v2899
        %v3088 = vadd.f32 %v2190, %v2902
        %v3089 = vadd.f32 %v2192, %v2904
        %v3090 = vadd.f32 %v2195, %v2907
        %v3091 = vadd.f32 %v2197, %v2909
        %v3092 = vadd.f32 %v2200, %v2912
        %v3093 = vadd.f32 %v2202, %v2914
        %v3094 = vadd.f32 %v2205, %v2917
        %v3095 = vadd.f32 %v2207, %v2919
        %v3096 = vadd.f32 %v2210, %v2922
        %v3097 = vadd.f32 %v2212, %v2924
        %v3098 = vadd.f32 %v2215, %v2927
        %v3099 = vadd.f32 %v2217, %v2929
        %v3100 = vadd.f32 %v2220, %v2932
        %v3101 = vadd.f32 %v2222, %v2934
        %v3102 = vadd.f32 %v2225, %v2937
        %v3103 = vadd.f32 %v2227, %v2939
        %v3104 = vadd.f32 %v2230, %v2942
        %v3105 = vadd.f32 %v2232, %v2944
        %v3106 = vadd.f32 %v2235, %v2947
        %v3107 = vadd.f32 %v2237, %v2949
        %v3108 = vadd.f32 %v2240, %v2952
        %v3109 = vadd.f32 %v2242, %v2954
        %v3110 = vadd.f32 %v2245, %v2957
        %v3111 = vadd.f32 %v2247, %v2959
        %v3112 = vadd.f32 %v2250, %v2962
        %v3113 = vadd.f32 %v2252, %v2964
        %v3114 = vadd.f32 %v2255, %v2967
        %v3115 = vadd.f32 %v2257, %v2969
        %v3116 = vadd.f32 %v2260, %v2972
        %v3117 = vadd.f32 %v2262, %v2974
        %v3118 = vadd.f32 %v2265, %v2977
        %v3119 = vadd.f32 %v2267, %v2979
        %v3120 = vadd.f32 %v2270, %v2982
        %v3121 = vadd.f32 %v2272, %v2984
        %v3122 = vld [vmem:[%s169 + $0x10] sm:$0xe]
        %v3123 = vld [vmem:[%s169 + $0x14] sm:$0xf]
        %v3124 = vld [vmem:[%s169 + $0x18] sm:$0xf]
        %v3125 = vld [vmem:[%s169 + $0x1c] sm:$0xf]
        %v3126 = vld [vmem:[%s169 + $0x20] sm:$0xf]
        %v3127 = vld [vmem:[%s169 + $0x24] sm:$0xf]
        %v3128 = vld [vmem:[%s169 + $0x28] sm:$0xf]
        %v3129 = vld [vmem:[%s169 + $0x2c] sm:$0xf]
        %v3130 = vld [vmem:[%s169 + $0x30] sm:$0xf]
        %v3131 = vld [vmem:[%s169 + $0x34] sm:$0xf]
        %v3132 = vld [vmem:[%s169 + $0x38] sm:$0xf]
        %v3133 = vld [vmem:[%s169 + $0x3c] sm:$0xf]
        %v3134 = vld [vmem:[%s169 + $0x40] sm:$0xf]
        %v3135 = vld [vmem:[%s169 + $0x44] sm:$0xf]
        %v3136 = vld [vmem:[%s169 + $0x48] sm:$0xf]
        %v3137 = vld [vmem:[%s169 + $0x4c] sm:$0xf]
        %v3138 = vld [vmem:[%s169 + $0x50] sm:$0xf]
        %v3139 = vld [vmem:[%s169 + $0x54] sm:$0xf]
        %v3140 = vld [vmem:[%s169 + $0x58] sm:$0xf]
        %v3141 = vld [vmem:[%s169 + $0x5c] sm:$0xf]
        %v3142 = vld [vmem:[%s169 + $0x60] sm:$0xf]
        %v3143 = vld [vmem:[%s169 + $0x64] sm:$0xf]
        %v3144 = vld [vmem:[%s169 + $0x68] sm:$0xf]
        %v3145 = vld [vmem:[%s169 + $0x6c] sm:$0xf]
        %v3146 = vld [vmem:[%s169 + $0x70] sm:$0xf]
        %v3147 = vld [vmem:[%s169 + $0x74] sm:$0xf]
        %v3148 = vld [vmem:[%s169 + $0x78] sm:$0xf]
        %v3149 = vld [vmem:[%s169 + $0x7c] sm:$0xf]
        %v3150 = vld [vmem:[%s169 + $0x80] sm:$0xf]
        %v3151 = vld [vmem:[%s169 + $0x84] sm:$0xf]
        %v3152 = vld [vmem:[%s169 + $0x88] sm:$0xf]
        %v3153 = vld [vmem:[%s169 + $0x8c] sm:$0xf]
        %v3154 = vld [vmem:[%s169 + $0x90] sm:$0xf]
        %v3155 = vld [vmem:[%s169 + $0x94] sm:$0xf]
        %v3156 = vld [vmem:[%s169 + $0x98] sm:$0xf]
        %v3157 = vld [vmem:[%s169 + $0x9c] sm:$0xf]
        %v3158 = vld [vmem:[%s169 + $0xa0] sm:$0xf]
        %v3159 = vld [vmem:[%s169 + $0xa4] sm:$0xf]
        %v3160 = vld [vmem:[%s169 + $0xa8] sm:$0xf]
        %v3161 = vld [vmem:[%s169 + $0xac] sm:$0xf]
        %v3162 = vld [vmem:[%s169 + $0xb0] sm:$0xf]
        %v3163 = vld [vmem:[%s169 + $0xb4] sm:$0xf]
        %v3164 = vld [vmem:[%s169 + $0xb8] sm:$0xf]
        %v3165 = vld [vmem:[%s169 + $0xbc] sm:$0xf]
        %v3166 = vld [vmem:[%s169 + $0xc0] sm:$0xf]
        %v3167 = vld [vmem:[%s169 + $0xc4] sm:$0xf]
        %v3168 = vld [vmem:[%s169 + $0xc8] sm:$0xf]
        %v3169 = vld [vmem:[%s169 + $0xcc] sm:$0xf]
        %v3170 = vld [vmem:[%s169 + $0xd0] sm:$0xf]
        %v3171 = vld [vmem:[%s169 + $0xd4] sm:$0xf]
        %v3172 = vld [vmem:[%s169 + $0xd8] sm:$0xf]
        %v3173 = vld [vmem:[%s169 + $0xdc] sm:$0xf]
        %v3174 = vld [vmem:[%s169 + $0xe0] sm:$0xf]
        %v3175 = vld [vmem:[%s169 + $0xe4] sm:$0xf]
        %v3176 = vld [vmem:[%s169 + $0xe8] sm:$0xf]
        %v3177 = vld [vmem:[%s169 + $0xec] sm:$0xf]
        %v3178 = vld [vmem:[%s169 + $0xf0] sm:$0xf]
        %v3179 = vld [vmem:[%s169 + $0xf4] sm:$0xf]
        %v3180 = vld [vmem:[%s169 + $0xf8] sm:$0xf]
        %v3181 = vld [vmem:[%s169 + $0xfc] sm:$0xf]
        %v3182 = vld [vmem:[%s169 + $0x100] sm:$0xf]
        %v3183 = vld [vmem:[%s169 + $0x104] sm:$0xf]
        %v3184 = vld [vmem:[%s169 + $0x108] sm:$0xf]
        %v3185 = vld [vmem:[%s169 + $0x10c] sm:$0xf]
        %v3186 = vld [vmem:[%s169 + $0x110] sm:$0xf]
        %v3187 = vld [vmem:[%s169 + $0x114] sm:$0xf]
        %v3188 = vld [vmem:[%s169 + $0x118] sm:$0xf]
        %v3189 = vld [vmem:[%s169 + $0x11c] sm:$0xf]
        %v3190 = vld [vmem:[%s169 + $0x120] sm:$0xf]
        %v3191 = vld [vmem:[%s169 + $0x124] sm:$0xf]
        %v3192 = vld [vmem:[%s169 + $0x128] sm:$0xf]
        %v3193 = vld [vmem:[%s169 + $0x12c] sm:$0xf]
        %v3194 = vld [vmem:[%s169 + $0x130] sm:$0xf]
        %v3195 = vld [vmem:[%s169 + $0x134] sm:$0xf]
        %v3196 = vld [vmem:[%s169 + $0x138] sm:$0xf]
        %v3197 = vld [vmem:[%s169 + $0x13c] sm:$0xf]
        %v3198 = vld [vmem:[%s169 + $0x140] sm:$0xf]
        %v3199 = vld [vmem:[%s169 + $0x144] sm:$0xf]
        %v3200 = vld [vmem:[%s169 + $0x148] sm:$0xf]
        %v3201 = vld [vmem:[%s169 + $0x14c] sm:$0xf]
        %v3202 = vld [vmem:[%s169 + $0x150] sm:$0xf]
        %v3203 = vld [vmem:[%s169 + $0x154] sm:$0xf]
        %v3204 = vld [vmem:[%s169 + $0x158] sm:$0xf]
        %v3205 = vld [vmem:[%s169 + $0x15c] sm:$0xf]
        %v3206 = vld [vmem:[%s169 + $0x160] sm:$0xf]
        %v3207 = vld [vmem:[%s169 + $0x164] sm:$0xf]
        %v3208 = vld [vmem:[%s169 + $0x168] sm:$0xf]
        %v3209 = vld [vmem:[%s169 + $0x16c] sm:$0xf]
        %v3210 = vld [vmem:[%s169 + $0x170] sm:$0xf]
        %v3211 = vld [vmem:[%s169 + $0x174] sm:$0xf]
        %v3212 = vld [vmem:[%s169 + $0x178] sm:$0xf]
        %v3213 = vld [vmem:[%s169 + $0x17c] sm:$0xf]
        %v3214 = vld [vmem:[%s169 + $0x180] sm:$0xf]
        %v3215 = vld [vmem:[%s169 + $0x184] sm:$0xf]
        %v3216 = vld [vmem:[%s169 + $0x188] sm:$0xf]
        %v3217 = vld [vmem:[%s169 + $0x18c] sm:$0xf]
        %v3218 = vld [vmem:[%s169 + $0x190] sm:$0xf]
        %v3219 = vld [vmem:[%s169 + $0x194] sm:$0xf]
        %v3220 = vld [vmem:[%s169 + $0x198] sm:$0xf]
        %v3221 = vld [vmem:[%s169 + $0x19c] sm:$0xf]
        %v3222 = vld [vmem:[%s169 + $0x1a0] sm:$0xf]
        %v3223 = vld [vmem:[%s169 + $0x1a4] sm:$0xf]
        %v3224 = vld [vmem:[%s169 + $0x1a8] sm:$0xf]
        %v3225 = vld [vmem:[%s169 + $0x1ac] sm:$0xf]
        %v3226 = vld [vmem:[%s169 + $0x1b0] sm:$0xf]
        %v3227 = vld [vmem:[%s169 + $0x1b4] sm:$0xf]
        %v3228 = vld [vmem:[%s169 + $0x1b8] sm:$0xf]
        %v3229 = vld [vmem:[%s169 + $0x1bc] sm:$0xf]
        %v3230 = vld [vmem:[%s169 + $0x1c0] sm:$0xf]
        %v3231 = vld [vmem:[%s169 + $0x1c4] sm:$0xf]
        %v3232 = vld [vmem:[%s169 + $0x1c8] sm:$0xf]
        %v3233 = vld [vmem:[%s169 + $0x1cc] sm:$0xf]
        %v3234 = vld [vmem:[%s169 + $0x1d0] sm:$0xf]
        %v3235 = vld [vmem:[%s169 + $0x1d4] sm:$0xf]
        %v3236 = vld [vmem:[%s169 + $0x1d8] sm:$0xf]
        %v3237 = vld [vmem:[%s169 + $0x1dc] sm:$0xf]
        %v3238 = vld [vmem:[%s169 + $0x1e0] sm:$0xf]
        %v3239 = vld [vmem:[%s169 + $0x1e4] sm:$0xf]
        %v3240 = vld [vmem:[%s169 + $0x1e8] sm:$0xf]
        %v3241 = vld [vmem:[%s169 + $0x1ec] sm:$0xf]
        %v3242 = vld [vmem:[%s169 + $0x1f0] sm:$0xf]
        %v3243 = vld [vmem:[%s169 + $0x1f4] sm:$0xf]
        %v3244 = vld [vmem:[%s169 + $0x1f8] sm:$0xf]
        %v3245 = vld [vmem:[%s169 + $0x1fc] sm:$0xf]
        %v3246 = vld [vmem:[%s169 + $0x200] sm:$0xf]
        %v3247 = vld [vmem:[%s169 + $0x204] sm:$0xf]
        %v3248 = vld [vmem:[%s169 + $0x208] sm:$0xf]
        %v3249 = vld [vmem:[%s169 + $0x20c] sm:$0xf]
        %v3250 = vld [vmem:[%s169 + $0x210] sm:$0xf]
        %v3251 = vld [vmem:[%s169 + $0x214] sm:$0xf]
        %v3252 = vld [vmem:[%s169 + $0x218] sm:$0xf]
        %v3253 = vld [vmem:[%s169 + $0x21c] sm:$0xf]
        %v3254 = vld [vmem:[%s169 + $0x220] sm:$0xf]
        %v3255 = vld [vmem:[%s169 + $0x224] sm:$0xf]
        %v3256 = vld [vmem:[%s169 + $0x228] sm:$0xf]
        %v3257 = vld [vmem:[%s169 + $0x22c] sm:$0xf]
        %v3258 = vld [vmem:[%s169 + $0x230] sm:$0x1]
        %s3259 = scalar_lea.vmem %s1, 48
        %v3260 = vld [vmem:[%s3259] sm:$0xf]
        %v3261 = vld [vmem:[%s3259 + $0x4] sm:$0xf]
        %v3262 = vld [vmem:[%s3259 + $0x8] sm:$0xf]
        %v3263 = vld [vmem:[%s3259 + $0xc] sm:$0xf]
        %v3401 = vunpack.c.l.b16 %v3122
        %v3402 = vunpack.c.l.b16 %v3123
        %v3403 = vunpack.c.l.b16 %v3124
        %v3404 = vunpack.c.l.b16 %v3125
        %v3405 = vunpack.c.l.b16 %v3126
        %v3406 = vunpack.c.l.b16 %v3127
        %v3407 = vunpack.c.l.b16 %v3128
        %v3408 = vunpack.c.l.b16 %v3129
        %v3409 = vunpack.c.l.b16 %v3130
        %v3410 = vunpack.c.l.b16 %v3131
        %v3411 = vunpack.c.l.b16 %v3132
        %v3412 = vunpack.c.l.b16 %v3133
        %v3413 = vunpack.c.l.b16 %v3134
        %v3414 = vunpack.c.l.b16 %v3135
        %v3415 = vunpack.c.l.b16 %v3136
        %v3416 = vunpack.c.l.b16 %v3137
        %v3417 = vunpack.c.l.b16 %v3138
        %v3418 = vunpack.c.l.b16 %v3139
        %v3419 = vunpack.c.l.b16 %v3140
        %v3420 = vunpack.c.l.b16 %v3141
        %v3421 = vunpack.c.l.b16 %v3142
        %v3422 = vunpack.c.l.b16 %v3143
        %v3423 = vunpack.c.l.b16 %v3144
        %v3424 = vunpack.c.l.b16 %v3145
        %v3425 = vunpack.c.l.b16 %v3146
        %v3426 = vunpack.c.l.b16 %v3147
        %v3427 = vunpack.c.l.b16 %v3148
        %v3428 = vunpack.c.l.b16 %v3149
        %v3429 = vunpack.c.l.b16 %v3150
        %v3430 = vunpack.c.l.b16 %v3151
        %v3431 = vunpack.c.l.b16 %v3152
        %v3432 = vunpack.c.l.b16 %v3153
        %v3433 = vunpack.c.l.b16 %v3154
        %v3434 = vunpack.c.l.b16 %v3155
        %v3435 = vunpack.c.l.b16 %v3156
        %v3436 = vunpack.c.l.b16 %v3157
        %v3437 = vunpack.c.l.b16 %v3158
        %v3438 = vunpack.c.l.b16 %v3159
        %v3439 = vunpack.c.l.b16 %v3160
        %v3440 = vunpack.c.l.b16 %v3161
        %v3441 = vunpack.c.l.b16 %v3162
        %v3442 = vunpack.c.l.b16 %v3163
        %v3443 = vunpack.c.l.b16 %v3164
        %v3444 = vunpack.c.l.b16 %v3165
        %v3445 = vunpack.c.l.b16 %v3166
        %v3446 = vunpack.c.l.b16 %v3167
        %v3447 = vunpack.c.l.b16 %v3168
        %v3448 = vunpack.c.l.b16 %v3169
        %v3449 = vunpack.c.l.b16 %v3170
        %v3450 = vunpack.c.l.b16 %v3171
        %v3451 = vunpack.c.l.b16 %v3172
        %v3452 = vunpack.c.l.b16 %v3173
        %v3453 = vunpack.c.l.b16 %v3174
        %v3454 = vunpack.c.l.b16 %v3175
        %v3455 = vunpack.c.l.b16 %v3176
        %v3456 = vunpack.c.l.b16 %v3177
        %v3457 = vunpack.c.l.b16 %v3178
        %v3458 = vunpack.c.l.b16 %v3179
        %v3459 = vunpack.c.l.b16 %v3180
        %v3460 = vunpack.c.l.b16 %v3181
        %v3461 = vunpack.c.l.b16 %v3182
        %v3462 = vunpack.c.l.b16 %v3183
        %v3463 = vunpack.c.l.b16 %v3184
        %v3464 = vunpack.c.l.b16 %v3185
        %v3465 = vunpack.c.l.b16 %v3186
        %v3466 = vunpack.c.l.b16 %v3187
        %v3467 = vunpack.c.l.b16 %v3188
        %v3468 = vunpack.c.l.b16 %v3189
        %v3469 = vunpack.c.l.b16 %v3190
        %v3470 = vunpack.c.l.b16 %v3191
        %v3471 = vunpack.c.l.b16 %v3192
        %v3472 = vunpack.c.l.b16 %v3193
        %v3473 = vunpack.c.l.b16 %v3194
        %v3474 = vunpack.c.l.b16 %v3195
        %v3475 = vunpack.c.l.b16 %v3196
        %v3476 = vunpack.c.l.b16 %v3197
        %v3477 = vunpack.c.l.b16 %v3198
        %v3478 = vunpack.c.l.b16 %v3199
        %v3479 = vunpack.c.l.b16 %v3200
        %v3480 = vunpack.c.l.b16 %v3201
        %v3481 = vunpack.c.l.b16 %v3202
        %v3482 = vunpack.c.l.b16 %v3203
        %v3483 = vunpack.c.l.b16 %v3204
        %v3484 = vunpack.c.l.b16 %v3205
        %v3485 = vunpack.c.l.b16 %v3206
        %v3486 = vunpack.c.l.b16 %v3207
        %v3487 = vunpack.c.l.b16 %v3208
        %v3488 = vunpack.c.l.b16 %v3209
        %v3489 = vunpack.c.l.b16 %v3210
        %v3490 = vunpack.c.l.b16 %v3211
        %v3491 = vunpack.c.l.b16 %v3212
        %v3492 = vunpack.c.l.b16 %v3213
        %v3493 = vunpack.c.l.b16 %v3214
        %v3494 = vunpack.c.l.b16 %v3215
        %v3495 = vunpack.c.l.b16 %v3216
        %v3496 = vunpack.c.l.b16 %v3217
        %v3497 = vunpack.c.l.b16 %v3218
        %v3498 = vunpack.c.l.b16 %v3219
        %v3499 = vunpack.c.l.b16 %v3220
        %v3500 = vunpack.c.l.b16 %v3221
        %v3501 = vunpack.c.l.b16 %v3222
        %v3502 = vunpack.c.l.b16 %v3223
        %v3503 = vunpack.c.l.b16 %v3224
        %v3504 = vunpack.c.l.b16 %v3225
        %v3505 = vunpack.c.l.b16 %v3226
        %v3506 = vunpack.c.l.b16 %v3227
        %v3507 = vunpack.c.l.b16 %v3228
        %v3508 = vunpack.c.l.b16 %v3229
        %v3509 = vunpack.c.l.b16 %v3230
        %v3510 = vunpack.c.l.b16 %v3231
        %v3511 = vunpack.c.l.b16 %v3232
        %v3512 = vunpack.c.l.b16 %v3233
        %v3513 = vunpack.c.l.b16 %v3234
        %v3514 = vunpack.c.l.b16 %v3235
        %v3515 = vunpack.c.l.b16 %v3236
        %v3516 = vunpack.c.l.b16 %v3237
        %v3517 = vunpack.c.l.b16 %v3238
        %v3518 = vunpack.c.l.b16 %v3239
        %v3519 = vunpack.c.l.b16 %v3240
        %v3520 = vunpack.c.l.b16 %v3241
        %v3521 = vunpack.c.l.b16 %v3242
        %v3522 = vunpack.c.l.b16 %v3243
        %v3523 = vunpack.c.l.b16 %v3244
        %v3524 = vunpack.c.l.b16 %v3245
        %v3525 = vunpack.c.l.b16 %v3246
        %v3526 = vunpack.c.l.b16 %v3247
        %v3527 = vunpack.c.l.b16 %v3248
        %v3528 = vunpack.c.l.b16 %v3249
        %v3529 = vunpack.c.l.b16 %v3250
        %v3530 = vunpack.c.l.b16 %v3251
        %v3531 = vunpack.c.l.b16 %v3252
        %v3532 = vunpack.c.l.b16 %v3253
        %v3533 = vunpack.c.l.b16 %v3254
        %v3534 = vunpack.c.l.b16 %v3255
        %v3535 = vunpack.c.l.b16 %v3256
        %v3536 = vunpack.c.l.b16 %v3257
        %v3537 = vunpack.c.l.b16 %v3258
        %v3538 = vpack.c.b16 %v3402, %v3401
        %v3539 = vpack.c.b16 %v3404, %v3403
        %v3540 = vpack.c.b16 %v3406, %v3405
        %v3541 = vpack.c.b16 %v3408, %v3407
        %v3542 = vpack.c.b16 %v3410, %v3409
        %v3543 = vpack.c.b16 %v3412, %v3411
        %v3544 = vpack.c.b16 %v3414, %v3413
        %v3545 = vpack.c.b16 %v3416, %v3415
        %v3546 = vpack.c.b16 %v3418, %v3417
        %v3547 = vpack.c.b16 %v3420, %v3419
        %v3548 = vpack.c.b16 %v3422, %v3421
        %v3549 = vpack.c.b16 %v3424, %v3423
        %v3550 = vpack.c.b16 %v3426, %v3425
        %v3551 = vpack.c.b16 %v3428, %v3427
        %v3552 = vpack.c.b16 %v3430, %v3429
        %v3553 = vpack.c.b16 %v3432, %v3431
        %v3554 = vpack.c.b16 %v3434, %v3433
        %v3555 = vpack.c.b16 %v3436, %v3435
        %v3556 = vpack.c.b16 %v3438, %v3437
        %v3557 = vpack.c.b16 %v3440, %v3439
        %v3558 = vpack.c.b16 %v3442, %v3441
        %v3559 = vpack.c.b16 %v3444, %v3443
        %v3560 = vpack.c.b16 %v3446, %v3445
        %v3561 = vpack.c.b16 %v3448, %v3447
        %v3562 = vpack.c.b16 %v3450, %v3449
        %v3563 = vpack.c.b16 %v3452, %v3451
        %v3564 = vpack.c.b16 %v3454, %v3453
        %v3565 = vpack.c.b16 %v3456, %v3455
        %v3566 = vpack.c.b16 %v3458, %v3457
        %v3567 = vpack.c.b16 %v3460, %v3459
        %v3568 = vpack.c.b16 %v3462, %v3461
        %v3569 = vpack.c.b16 %v3464, %v3463
        %v3570 = vpack.c.b16 %v3466, %v3465
        %v3571 = vpack.c.b16 %v3468, %v3467
        %v3572 = vpack.c.b16 %v3470, %v3469
        %v3573 = vpack.c.b16 %v3472, %v3471
        %v3574 = vpack.c.b16 %v3474, %v3473
        %v3575 = vpack.c.b16 %v3476, %v3475
        %v3576 = vpack.c.b16 %v3478, %v3477
        %v3577 = vpack.c.b16 %v3480, %v3479
        %v3578 = vpack.c.b16 %v3482, %v3481
        %v3579 = vpack.c.b16 %v3484, %v3483
        %v3580 = vpack.c.b16 %v3486, %v3485
        %v3581 = vpack.c.b16 %v3488, %v3487
        %v3582 = vpack.c.b16 %v3490, %v3489
        %v3583 = vpack.c.b16 %v3492, %v3491
        %v3584 = vpack.c.b16 %v3494, %v3493
        %v3585 = vpack.c.b16 %v3496, %v3495
        %v3586 = vpack.c.b16 %v3498, %v3497
        %v3587 = vpack.c.b16 %v3500, %v3499
        %v3588 = vpack.c.b16 %v3502, %v3501
        %v3589 = vpack.c.b16 %v3504, %v3503
        %v3590 = vpack.c.b16 %v3506, %v3505
        %v3591 = vpack.c.b16 %v3508, %v3507
        %v3592 = vpack.c.b16 %v3510, %v3509
        %v3593 = vpack.c.b16 %v3512, %v3511
        %v3594 = vpack.c.b16 %v3514, %v3513
        %v3595 = vpack.c.b16 %v3516, %v3515
        %v3596 = vpack.c.b16 %v3518, %v3517
        %v3597 = vpack.c.b16 %v3520, %v3519
        %v3598 = vpack.c.b16 %v3522, %v3521
        %v3599 = vpack.c.b16 %v3524, %v3523
        %v3600 = vpack.c.b16 %v3526, %v3525
        %v3601 = vpack.c.b16 %v3528, %v3527
        %v3602 = vpack.c.b16 %v3530, %v3529
        %v3603 = vpack.c.b16 %v3532, %v3531
        %v3604 = vpack.c.b16 %v3534, %v3533
        %v3605 = vpack.c.b16 %v3536, %v3535
        %v3606 = vpack.c.b16 %v3537, %v3537
        %v3607 = vrot.slane %v3538, 1
        %v3608 = vrot.slane %v3539, 1
        %v3609 = vsel %vm2283, %v3607, %v3608
        %v3610 = vrot.slane %v3540, 1
        %v3611 = vsel %vm2283, %v3608, %v3610
        %v3612 = vrot.slane %v3541, 1
        %v3613 = vsel %vm2283, %v3610, %v3612
        %v3614 = vrot.slane %v3542, 1
        %v3615 = vsel %vm2283, %v3612, %v3614
        %v3616 = vrot.slane %v3543, 1
        %v3617 = vsel %vm2283, %v3614, %v3616
        %v3618 = vrot.slane %v3544, 1
        %v3619 = vsel %vm2283, %v3616, %v3618
        %v3620 = vrot.slane %v3545, 1
        %v3621 = vsel %vm2283, %v3618, %v3620
        %v3622 = vrot.slane %v3546, 1
        %v3623 = vsel %vm2283, %v3620, %v3622
        %v3624 = vrot.slane %v3547, 1
        %v3625 = vsel %vm2283, %v3622, %v3624
        %v3626 = vrot.slane %v3548, 1
        %v3627 = vsel %vm2283, %v3624, %v3626
        %v3628 = vrot.slane %v3549, 1
        %v3629 = vsel %vm2283, %v3626, %v3628
        %v3630 = vrot.slane %v3550, 1
        %v3631 = vsel %vm2283, %v3628, %v3630
        %v3632 = vrot.slane %v3551, 1
        %v3633 = vsel %vm2283, %v3630, %v3632
        %v3634 = vrot.slane %v3552, 1
        %v3635 = vsel %vm2283, %v3632, %v3634
        %v3636 = vrot.slane %v3553, 1
        %v3637 = vsel %vm2283, %v3634, %v3636
        %v3638 = vrot.slane %v3554, 1
        %v3639 = vsel %vm2283, %v3636, %v3638
        %v3640 = vrot.slane %v3555, 1
        %v3641 = vsel %vm2283, %v3638, %v3640
        %v3642 = vrot.slane %v3556, 1
        %v3643 = vsel %vm2283, %v3640, %v3642
        %v3644 = vrot.slane %v3557, 1
        %v3645 = vsel %vm2283, %v3642, %v3644
        %v3646 = vrot.slane %v3558, 1
        %v3647 = vsel %vm2283, %v3644, %v3646
        %v3648 = vrot.slane %v3559, 1
        %v3649 = vsel %vm2283, %v3646, %v3648
        %v3650 = vrot.slane %v3560, 1
        %v3651 = vsel %vm2283, %v3648, %v3650
        %v3652 = vrot.slane %v3561, 1
        %v3653 = vsel %vm2283, %v3650, %v3652
        %v3654 = vrot.slane %v3562, 1
        %v3655 = vsel %vm2283, %v3652, %v3654
        %v3656 = vrot.slane %v3563, 1
        %v3657 = vsel %vm2283, %v3654, %v3656
        %v3658 = vrot.slane %v3564, 1
        %v3659 = vsel %vm2283, %v3656, %v3658
        %v3660 = vrot.slane %v3565, 1
        %v3661 = vsel %vm2283, %v3658, %v3660
        %v3662 = vrot.slane %v3566, 1
        %v3663 = vsel %vm2283, %v3660, %v3662
        %v3664 = vrot.slane %v3567, 1
        %v3665 = vsel %vm2283, %v3662, %v3664
        %v3666 = vrot.slane %v3568, 1
        %v3667 = vsel %vm2283, %v3664, %v3666
        %v3668 = vrot.slane %v3569, 1
        %v3669 = vsel %vm2283, %v3666, %v3668
        %v3670 = vrot.slane %v3570, 1
        %v3671 = vsel %vm2283, %v3668, %v3670
        %v3672 = vrot.slane %v3571, 1
        %v3673 = vsel %vm2283, %v3670, %v3672
        %v3674 = vrot.slane %v3572, 1
        %v3675 = vsel %vm2283, %v3672, %v3674
        %v3676 = vrot.slane %v3573, 1
        %v3677 = vsel %vm2283, %v3674, %v3676
        %v3678 = vrot.slane %v3574, 1
        %v3679 = vsel %vm2283, %v3676, %v3678
        %v3680 = vrot.slane %v3575, 1
        %v3681 = vsel %vm2283, %v3678, %v3680
        %v3682 = vrot.slane %v3576, 1
        %v3683 = vsel %vm2283, %v3680, %v3682
        %v3684 = vrot.slane %v3577, 1
        %v3685 = vsel %vm2283, %v3682, %v3684
        %v3686 = vrot.slane %v3578, 1
        %v3687 = vsel %vm2283, %v3684, %v3686
        %v3688 = vrot.slane %v3579, 1
        %v3689 = vsel %vm2283, %v3686, %v3688
        %v3690 = vrot.slane %v3580, 1
        %v3691 = vsel %vm2283, %v3688, %v3690
        %v3692 = vrot.slane %v3581, 1
        %v3693 = vsel %vm2283, %v3690, %v3692
        %v3694 = vrot.slane %v3582, 1
        %v3695 = vsel %vm2283, %v3692, %v3694
        %v3696 = vrot.slane %v3583, 1
        %v3697 = vsel %vm2283, %v3694, %v3696
        %v3698 = vrot.slane %v3584, 1
        %v3699 = vsel %vm2283, %v3696, %v3698
        %v3700 = vrot.slane %v3585, 1
        %v3701 = vsel %vm2283, %v3698, %v3700
        %v3702 = vrot.slane %v3586, 1
        %v3703 = vsel %vm2283, %v3700, %v3702
        %v3704 = vrot.slane %v3587, 1
        %v3705 = vsel %vm2283, %v3702, %v3704
        %v3706 = vrot.slane %v3588, 1
        %v3707 = vsel %vm2283, %v3704, %v3706
        %v3708 = vrot.slane %v3589, 1
        %v3709 = vsel %vm2283, %v3706, %v3708
        %v3710 = vrot.slane %v3590, 1
        %v3711 = vsel %vm2283, %v3708, %v3710
        %v3712 = vrot.slane %v3591, 1
        %v3713 = vsel %vm2283, %v3710, %v3712
        %v3714 = vrot.slane %v3592, 1
        %v3715 = vsel %vm2283, %v3712, %v3714
        %v3716 = vrot.slane %v3593, 1
        %v3717 = vsel %vm2283, %v3714, %v3716
        %v3718 = vrot.slane %v3594, 1
        %v3719 = vsel %vm2283, %v3716, %v3718
        %v3720 = vrot.slane %v3595, 1
        %v3721 = vsel %vm2283, %v3718, %v3720
        %v3722 = vrot.slane %v3596, 1
        %v3723 = vsel %vm2283, %v3720, %v3722
        %v3724 = vrot.slane %v3597, 1
        %v3725 = vsel %vm2283, %v3722, %v3724
        %v3726 = vrot.slane %v3598, 1
        %v3727 = vsel %vm2283, %v3724, %v3726
        %v3728 = vrot.slane %v3599, 1
        %v3729 = vsel %vm2283, %v3726, %v3728
        %v3730 = vrot.slane %v3600, 1
        %v3731 = vsel %vm2283, %v3728, %v3730
        %v3732 = vrot.slane %v3601, 1
        %v3733 = vsel %vm2283, %v3730, %v3732
        %v3734 = vrot.slane %v3602, 1
        %v3735 = vsel %vm2283, %v3732, %v3734
        %v3736 = vrot.slane %v3603, 1
        %v3737 = vsel %vm2283, %v3734, %v3736
        %v3738 = vrot.slane %v3604, 1
        %v3739 = vsel %vm2283, %v3736, %v3738
        %v3740 = vrot.slane %v3605, 1
        %v3741 = vsel %vm2283, %v3738, %v3740
        %v3742 = vrot.slane %v3606, 1
        %v3743 = vsel %vm2283, %v3740, %v3742
        %v3748 = vunpack.c.l.b16 %v3260
        %v3749 = vunpack.c.l.b16 %v3261
        %v3750 = vunpack.c.l.b16 %v3262
        %v3751 = vunpack.c.l.b16 %v3263
        %v3752 = vpack.c.b16 %v3749, %v3748
        %v3753 = vpack.c.b16 %v3751, %v3750
        %v3757 = vsel %vm1223, %v3609, 0
        %v3760 = vsel %vm1223, %v3611, 0
        %v3763 = vsel %vm1223, %v3613, 0
        %v3766 = vsel %vm1223, %v3615, 0
        %v3769 = vsel %vm1223, %v3617, 0
        %v3772 = vsel %vm1223, %v3619, 0
        %v3775 = vsel %vm1223, %v3621, 0
        %v3778 = vsel %vm1223, %v3623, 0
        %v3781 = vsel %vm1223, %v3625, 0
        %v3784 = vsel %vm1223, %v3627, 0
        %v3787 = vsel %vm1223, %v3629, 0
        %v3790 = vsel %vm1223, %v3631, 0
        %v3793 = vsel %vm1223, %v3633, 0
        %v3796 = vsel %vm1223, %v3635, 0
        %v3799 = vsel %vm1223, %v3637, 0
        %v3802 = vsel %vm1223, %v3639, 0
        %v3805 = vsel %vm1223, %v3641, 0
        %v3808 = vsel %vm1223, %v3643, 0
        %v3811 = vsel %vm1223, %v3645, 0
        %v3814 = vsel %vm1223, %v3647, 0
        %v3817 = vsel %vm1223, %v3649, 0
        %v3820 = vsel %vm1223, %v3651, 0
        %v3823 = vsel %vm1223, %v3653, 0
        %v3826 = vsel %vm1223, %v3655, 0
        %v3829 = vsel %vm1223, %v3657, 0
        %v3832 = vsel %vm1223, %v3659, 0
        %v3835 = vsel %vm1223, %v3661, 0
        %v3838 = vsel %vm1223, %v3663, 0
        %v3841 = vsel %vm1223, %v3665, 0
        %v3844 = vsel %vm1223, %v3667, 0
        %v3847 = vsel %vm1223, %v3669, 0
        %v3850 = vsel %vm1223, %v3671, 0
        %v3853 = vsel %vm1223, %v3673, 0
        %v3856 = vsel %vm1223, %v3675, 0
        %v3859 = vsel %vm1223, %v3677, 0
        %v3862 = vsel %vm1223, %v3679, 0
        %v3865 = vsel %vm1223, %v3681, 0
        %v3868 = vsel %vm1223, %v3683, 0
        %v3871 = vsel %vm1223, %v3685, 0
        %v3874 = vsel %vm1223, %v3687, 0
        %v3877 = vsel %vm1223, %v3689, 0
        %v3880 = vsel %vm1223, %v3691, 0
        %v3883 = vsel %vm1223, %v3693, 0
        %v3886 = vsel %vm1223, %v3695, 0
        %v3889 = vsel %vm1223, %v3697, 0
        %v3892 = vsel %vm1223, %v3699, 0
        %v3895 = vsel %vm1223, %v3701, 0
        %v3898 = vsel %vm1223, %v3703, 0
        %v3901 = vsel %vm1223, %v3705, 0
        %v3904 = vsel %vm1223, %v3707, 0
        %v3907 = vsel %vm1223, %v3709, 0
        %v3910 = vsel %vm1223, %v3711, 0
        %v3913 = vsel %vm1223, %v3713, 0
        %v3916 = vsel %vm1223, %v3715, 0
        %v3919 = vsel %vm1223, %v3717, 0
        %v3922 = vsel %vm1223, %v3719, 0
        %v3925 = vsel %vm1223, %v3721, 0
        %v3928 = vsel %vm1223, %v3723, 0
        %v3931 = vsel %vm1223, %v3725, 0
        %v3934 = vsel %vm1223, %v3727, 0
        %v3937 = vsel %vm1223, %v3729, 0
        %v3940 = vsel %vm1223, %v3731, 0
        %v3943 = vsel %vm1223, %v3733, 0
        %v3946 = vsel %vm1223, %v3735, 0
        %v3949 = vsel %vm1223, %v3737, 0
        %v3952 = vsel %vm1223, %v3739, 0
        %v3955 = vsel %vm1223, %v3741, 0
        %v3958 = vsel %vm1223, %v3743, 0
        %3960 = vmatpush.bf16.msra.mxu0 0
        %3961 = vmatpush.bf16.msra.mxu0 0
        %3962 = vmatpush.bf16.msra.mxu0 0
        %3963 = vmatpush.bf16.msra.mxu0 0
        %3964 = vmatpush.bf16.msra.mxu0 0
        %3965 = vmatpush.bf16.msra.mxu0 0
        %3966 = vmatpush.bf16.msra.mxu0 %v3753
        %3967 = vmatpush.bf16.msra.mxu0 %v3752
        %3968 = vmatmul.bf16.gmra.mxu0 %v3757
        %v3969 = vpop.f32.mrf.mxu0
        %v3970 = vadd.f32 0.0, %v3969
        %v3971 = vpop.f32.mrf.mxu0
        %v3972 = vadd.f32 0.0, %v3971
        %3973 = vmatmul.bf16.gmra.mxu0 %v3760
        %v3974 = vpop.f32.mrf.mxu0
        %v3975 = vadd.f32 0.0, %v3974
        %v3976 = vpop.f32.mrf.mxu0
        %v3977 = vadd.f32 0.0, %v3976
        %3978 = vmatmul.bf16.gmra.mxu0 %v3763
        %v3979 = vpop.f32.mrf.mxu0
        %v3980 = vadd.f32 0.0, %v3979
        %v3981 = vpop.f32.mrf.mxu0
        %v3982 = vadd.f32 0.0, %v3981
        %3983 = vmatmul.bf16.gmra.mxu0 %v3766
        %v3984 = vpop.f32.mrf.mxu0
        %v3985 = vadd.f32 0.0, %v3984
        %v3986 = vpop.f32.mrf.mxu0
        %v3987 = vadd.f32 0.0, %v3986
        %3988 = vmatmul.bf16.gmra.mxu0 %v3769
        %v3989 = vpop.f32.mrf.mxu0
        %v3990 = vadd.f32 0.0, %v3989
        %v3991 = vpop.f32.mrf.mxu0
        %v3992 = vadd.f32 0.0, %v3991
        %3993 = vmatmul.bf16.gmra.mxu0 %v3772
        %v3994 = vpop.f32.mrf.mxu0
        %v3995 = vadd.f32 0.0, %v3994
        %v3996 = vpop.f32.mrf.mxu0
        %v3997 = vadd.f32 0.0, %v3996
        %3998 = vmatmul.bf16.gmra.mxu0 %v3775
        %v3999 = vpop.f32.mrf.mxu0
        %v4000 = vadd.f32 0.0, %v3999
        %v4001 = vpop.f32.mrf.mxu0
        %v4002 = vadd.f32 0.0, %v4001
        %4003 = vmatmul.bf16.gmra.mxu0 %v3778
        %v4004 = vpop.f32.mrf.mxu0
        %v4005 = vadd.f32 0.0, %v4004
        %v4006 = vpop.f32.mrf.mxu0
        %v4007 = vadd.f32 0.0, %v4006
        %4008 = vmatmul.bf16.gmra.mxu0 %v3781
        %v4009 = vpop.f32.mrf.mxu0
        %v4010 = vadd.f32 0.0, %v4009
        %v4011 = vpop.f32.mrf.mxu0
        %v4012 = vadd.f32 0.0, %v4011
        %4013 = vmatmul.bf16.gmra.mxu0 %v3784
        %v4014 = vpop.f32.mrf.mxu0
        %v4015 = vadd.f32 0.0, %v4014
        %v4016 = vpop.f32.mrf.mxu0
        %v4017 = vadd.f32 0.0, %v4016
        %4018 = vmatmul.bf16.gmra.mxu0 %v3787
        %v4019 = vpop.f32.mrf.mxu0
        %v4020 = vadd.f32 0.0, %v4019
        %v4021 = vpop.f32.mrf.mxu0
        %v4022 = vadd.f32 0.0, %v4021
        %4023 = vmatmul.bf16.gmra.mxu0 %v3790
        %v4024 = vpop.f32.mrf.mxu0
        %v4025 = vadd.f32 0.0, %v4024
        %v4026 = vpop.f32.mrf.mxu0
        %v4027 = vadd.f32 0.0, %v4026
        %4028 = vmatmul.bf16.gmra.mxu0 %v3793
        %v4029 = vpop.f32.mrf.mxu0
        %v4030 = vadd.f32 0.0, %v4029
        %v4031 = vpop.f32.mrf.mxu0
        %v4032 = vadd.f32 0.0, %v4031
        %4033 = vmatmul.bf16.gmra.mxu0 %v3796
        %v4034 = vpop.f32.mrf.mxu0
        %v4035 = vadd.f32 0.0, %v4034
        %v4036 = vpop.f32.mrf.mxu0
        %v4037 = vadd.f32 0.0, %v4036
        %4038 = vmatmul.bf16.gmra.mxu0 %v3799
        %v4039 = vpop.f32.mrf.mxu0
        %v4040 = vadd.f32 0.0, %v4039
        %v4041 = vpop.f32.mrf.mxu0
        %v4042 = vadd.f32 0.0, %v4041
        %4043 = vmatmul.bf16.gmra.mxu0 %v3802
        %v4044 = vpop.f32.mrf.mxu0
        %v4045 = vadd.f32 0.0, %v4044
        %v4046 = vpop.f32.mrf.mxu0
        %v4047 = vadd.f32 0.0, %v4046
        %4048 = vmatmul.bf16.gmra.mxu0 %v3805
        %v4049 = vpop.f32.mrf.mxu0
        %v4050 = vadd.f32 0.0, %v4049
        %v4051 = vpop.f32.mrf.mxu0
        %v4052 = vadd.f32 0.0, %v4051
        %4053 = vmatmul.bf16.gmra.mxu0 %v3808
        %v4054 = vpop.f32.mrf.mxu0
        %v4055 = vadd.f32 0.0, %v4054
        %v4056 = vpop.f32.mrf.mxu0
        %v4057 = vadd.f32 0.0, %v4056
        %4058 = vmatmul.bf16.gmra.mxu0 %v3811
        %v4059 = vpop.f32.mrf.mxu0
        %v4060 = vadd.f32 0.0, %v4059
        %v4061 = vpop.f32.mrf.mxu0
        %v4062 = vadd.f32 0.0, %v4061
        %4063 = vmatmul.bf16.gmra.mxu0 %v3814
        %v4064 = vpop.f32.mrf.mxu0
        %v4065 = vadd.f32 0.0, %v4064
        %v4066 = vpop.f32.mrf.mxu0
        %v4067 = vadd.f32 0.0, %v4066
        %4068 = vmatmul.bf16.gmra.mxu0 %v3817
        %v4069 = vpop.f32.mrf.mxu0
        %v4070 = vadd.f32 0.0, %v4069
        %v4071 = vpop.f32.mrf.mxu0
        %v4072 = vadd.f32 0.0, %v4071
        %4073 = vmatmul.bf16.gmra.mxu0 %v3820
        %v4074 = vpop.f32.mrf.mxu0
        %v4075 = vadd.f32 0.0, %v4074
        %v4076 = vpop.f32.mrf.mxu0
        %v4077 = vadd.f32 0.0, %v4076
        %4078 = vmatmul.bf16.gmra.mxu0 %v3823
        %v4079 = vpop.f32.mrf.mxu0
        %v4080 = vadd.f32 0.0, %v4079
        %v4081 = vpop.f32.mrf.mxu0
        %v4082 = vadd.f32 0.0, %v4081
        %4083 = vmatmul.bf16.gmra.mxu0 %v3826
        %v4084 = vpop.f32.mrf.mxu0
        %v4085 = vadd.f32 0.0, %v4084
        %v4086 = vpop.f32.mrf.mxu0
        %v4087 = vadd.f32 0.0, %v4086
        %4088 = vmatmul.bf16.gmra.mxu0 %v3829
        %v4089 = vpop.f32.mrf.mxu0
        %v4090 = vadd.f32 0.0, %v4089
        %v4091 = vpop.f32.mrf.mxu0
        %v4092 = vadd.f32 0.0, %v4091
        %4093 = vmatmul.bf16.gmra.mxu0 %v3832
        %v4094 = vpop.f32.mrf.mxu0
        %v4095 = vadd.f32 0.0, %v4094
        %v4096 = vpop.f32.mrf.mxu0
        %v4097 = vadd.f32 0.0, %v4096
        %4098 = vmatmul.bf16.gmra.mxu0 %v3835
        %v4099 = vpop.f32.mrf.mxu0
        %v4100 = vadd.f32 0.0, %v4099
        %v4101 = vpop.f32.mrf.mxu0
        %v4102 = vadd.f32 0.0, %v4101
        %4103 = vmatmul.bf16.gmra.mxu0 %v3838
        %v4104 = vpop.f32.mrf.mxu0
        %v4105 = vadd.f32 0.0, %v4104
        %v4106 = vpop.f32.mrf.mxu0
        %v4107 = vadd.f32 0.0, %v4106
        %4108 = vmatmul.bf16.gmra.mxu0 %v3841
        %v4109 = vpop.f32.mrf.mxu0
        %v4110 = vadd.f32 0.0, %v4109
        %v4111 = vpop.f32.mrf.mxu0
        %v4112 = vadd.f32 0.0, %v4111
        %4113 = vmatmul.bf16.gmra.mxu0 %v3844
        %v4114 = vpop.f32.mrf.mxu0
        %v4115 = vadd.f32 0.0, %v4114
        %v4116 = vpop.f32.mrf.mxu0
        %v4117 = vadd.f32 0.0, %v4116
        %4118 = vmatmul.bf16.gmra.mxu0 %v3847
        %v4119 = vpop.f32.mrf.mxu0
        %v4120 = vadd.f32 0.0, %v4119
        %v4121 = vpop.f32.mrf.mxu0
        %v4122 = vadd.f32 0.0, %v4121
        %4123 = vmatmul.bf16.gmra.mxu0 %v3850
        %v4124 = vpop.f32.mrf.mxu0
        %v4125 = vadd.f32 0.0, %v4124
        %v4126 = vpop.f32.mrf.mxu0
        %v4127 = vadd.f32 0.0, %v4126
        %4128 = vmatmul.bf16.gmra.mxu0 %v3853
        %v4129 = vpop.f32.mrf.mxu0
        %v4130 = vadd.f32 0.0, %v4129
        %v4131 = vpop.f32.mrf.mxu0
        %v4132 = vadd.f32 0.0, %v4131
        %4133 = vmatmul.bf16.gmra.mxu0 %v3856
        %v4134 = vpop.f32.mrf.mxu0
        %v4135 = vadd.f32 0.0, %v4134
        %v4136 = vpop.f32.mrf.mxu0
        %v4137 = vadd.f32 0.0, %v4136
        %4138 = vmatmul.bf16.gmra.mxu0 %v3859
        %v4139 = vpop.f32.mrf.mxu0
        %v4140 = vadd.f32 0.0, %v4139
        %v4141 = vpop.f32.mrf.mxu0
        %v4142 = vadd.f32 0.0, %v4141
        %4143 = vmatmul.bf16.gmra.mxu0 %v3862
        %v4144 = vpop.f32.mrf.mxu0
        %v4145 = vadd.f32 0.0, %v4144
        %v4146 = vpop.f32.mrf.mxu0
        %v4147 = vadd.f32 0.0, %v4146
        %4148 = vmatmul.bf16.gmra.mxu0 %v3865
        %v4149 = vpop.f32.mrf.mxu0
        %v4150 = vadd.f32 0.0, %v4149
        %v4151 = vpop.f32.mrf.mxu0
        %v4152 = vadd.f32 0.0, %v4151
        %4153 = vmatmul.bf16.gmra.mxu0 %v3868
        %v4154 = vpop.f32.mrf.mxu0
        %v4155 = vadd.f32 0.0, %v4154
        %v4156 = vpop.f32.mrf.mxu0
        %v4157 = vadd.f32 0.0, %v4156
        %4158 = vmatmul.bf16.gmra.mxu0 %v3871
        %v4159 = vpop.f32.mrf.mxu0
        %v4160 = vadd.f32 0.0, %v4159
        %v4161 = vpop.f32.mrf.mxu0
        %v4162 = vadd.f32 0.0, %v4161
        %4163 = vmatmul.bf16.gmra.mxu0 %v3874
        %v4164 = vpop.f32.mrf.mxu0
        %v4165 = vadd.f32 0.0, %v4164
        %v4166 = vpop.f32.mrf.mxu0
        %v4167 = vadd.f32 0.0, %v4166
        %4168 = vmatmul.bf16.gmra.mxu0 %v3877
        %v4169 = vpop.f32.mrf.mxu0
        %v4170 = vadd.f32 0.0, %v4169
        %v4171 = vpop.f32.mrf.mxu0
        %v4172 = vadd.f32 0.0, %v4171
        %4173 = vmatmul.bf16.gmra.mxu0 %v3880
        %v4174 = vpop.f32.mrf.mxu0
        %v4175 = vadd.f32 0.0, %v4174
        %v4176 = vpop.f32.mrf.mxu0
        %v4177 = vadd.f32 0.0, %v4176
        %4178 = vmatmul.bf16.gmra.mxu0 %v3883
        %v4179 = vpop.f32.mrf.mxu0
        %v4180 = vadd.f32 0.0, %v4179
        %v4181 = vpop.f32.mrf.mxu0
        %v4182 = vadd.f32 0.0, %v4181
        %4183 = vmatmul.bf16.gmra.mxu0 %v3886
        %v4184 = vpop.f32.mrf.mxu0
        %v4185 = vadd.f32 0.0, %v4184
        %v4186 = vpop.f32.mrf.mxu0
        %v4187 = vadd.f32 0.0, %v4186
        %4188 = vmatmul.bf16.gmra.mxu0 %v3889
        %v4189 = vpop.f32.mrf.mxu0
        %v4190 = vadd.f32 0.0, %v4189
        %v4191 = vpop.f32.mrf.mxu0
        %v4192 = vadd.f32 0.0, %v4191
        %4193 = vmatmul.bf16.gmra.mxu0 %v3892
        %v4194 = vpop.f32.mrf.mxu0
        %v4195 = vadd.f32 0.0, %v4194
        %v4196 = vpop.f32.mrf.mxu0
        %v4197 = vadd.f32 0.0, %v4196
        %4198 = vmatmul.bf16.gmra.mxu0 %v3895
        %v4199 = vpop.f32.mrf.mxu0
        %v4200 = vadd.f32 0.0, %v4199
        %v4201 = vpop.f32.mrf.mxu0
        %v4202 = vadd.f32 0.0, %v4201
        %4203 = vmatmul.bf16.gmra.mxu0 %v3898
        %v4204 = vpop.f32.mrf.mxu0
        %v4205 = vadd.f32 0.0, %v4204
        %v4206 = vpop.f32.mrf.mxu0
        %v4207 = vadd.f32 0.0, %v4206
        %4208 = vmatmul.bf16.gmra.mxu0 %v3901
        %v4209 = vpop.f32.mrf.mxu0
        %v4210 = vadd.f32 0.0, %v4209
        %v4211 = vpop.f32.mrf.mxu0
        %v4212 = vadd.f32 0.0, %v4211
        %4213 = vmatmul.bf16.gmra.mxu0 %v3904
        %v4214 = vpop.f32.mrf.mxu0
        %v4215 = vadd.f32 0.0, %v4214
        %v4216 = vpop.f32.mrf.mxu0
        %v4217 = vadd.f32 0.0, %v4216
        %4218 = vmatmul.bf16.gmra.mxu0 %v3907
        %v4219 = vpop.f32.mrf.mxu0
        %v4220 = vadd.f32 0.0, %v4219
        %v4221 = vpop.f32.mrf.mxu0
        %v4222 = vadd.f32 0.0, %v4221
        %4223 = vmatmul.bf16.gmra.mxu0 %v3910
        %v4224 = vpop.f32.mrf.mxu0
        %v4225 = vadd.f32 0.0, %v4224
        %v4226 = vpop.f32.mrf.mxu0
        %v4227 = vadd.f32 0.0, %v4226
        %4228 = vmatmul.bf16.gmra.mxu0 %v3913
        %v4229 = vpop.f32.mrf.mxu0
        %v4230 = vadd.f32 0.0, %v4229
        %v4231 = vpop.f32.mrf.mxu0
        %v4232 = vadd.f32 0.0, %v4231
        %4233 = vmatmul.bf16.gmra.mxu0 %v3916
        %v4234 = vpop.f32.mrf.mxu0
        %v4235 = vadd.f32 0.0, %v4234
        %v4236 = vpop.f32.mrf.mxu0
        %v4237 = vadd.f32 0.0, %v4236
        %4238 = vmatmul.bf16.gmra.mxu0 %v3919
        %v4239 = vpop.f32.mrf.mxu0
        %v4240 = vadd.f32 0.0, %v4239
        %v4241 = vpop.f32.mrf.mxu0
        %v4242 = vadd.f32 0.0, %v4241
        %4243 = vmatmul.bf16.gmra.mxu0 %v3922
        %v4244 = vpop.f32.mrf.mxu0
        %v4245 = vadd.f32 0.0, %v4244
        %v4246 = vpop.f32.mrf.mxu0
        %v4247 = vadd.f32 0.0, %v4246
        %4248 = vmatmul.bf16.gmra.mxu0 %v3925
        %v4249 = vpop.f32.mrf.mxu0
        %v4250 = vadd.f32 0.0, %v4249
        %v4251 = vpop.f32.mrf.mxu0
        %v4252 = vadd.f32 0.0, %v4251
        %4253 = vmatmul.bf16.gmra.mxu0 %v3928
        %v4254 = vpop.f32.mrf.mxu0
        %v4255 = vadd.f32 0.0, %v4254
        %v4256 = vpop.f32.mrf.mxu0
        %v4257 = vadd.f32 0.0, %v4256
        %4258 = vmatmul.bf16.gmra.mxu0 %v3931
        %v4259 = vpop.f32.mrf.mxu0
        %v4260 = vadd.f32 0.0, %v4259
        %v4261 = vpop.f32.mrf.mxu0
        %v4262 = vadd.f32 0.0, %v4261
        %4263 = vmatmul.bf16.gmra.mxu0 %v3934
        %v4264 = vpop.f32.mrf.mxu0
        %v4265 = vadd.f32 0.0, %v4264
        %v4266 = vpop.f32.mrf.mxu0
        %v4267 = vadd.f32 0.0, %v4266
        %4268 = vmatmul.bf16.gmra.mxu0 %v3937
        %v4269 = vpop.f32.mrf.mxu0
        %v4270 = vadd.f32 0.0, %v4269
        %v4271 = vpop.f32.mrf.mxu0
        %v4272 = vadd.f32 0.0, %v4271
        %4273 = vmatmul.bf16.gmra.mxu0 %v3940
        %v4274 = vpop.f32.mrf.mxu0
        %v4275 = vadd.f32 0.0, %v4274
        %v4276 = vpop.f32.mrf.mxu0
        %v4277 = vadd.f32 0.0, %v4276
        %4278 = vmatmul.bf16.gmra.mxu0 %v3943
        %v4279 = vpop.f32.mrf.mxu0
        %v4280 = vadd.f32 0.0, %v4279
        %v4281 = vpop.f32.mrf.mxu0
        %v4282 = vadd.f32 0.0, %v4281
        %4283 = vmatmul.bf16.gmra.mxu0 %v3946
        %v4284 = vpop.f32.mrf.mxu0
        %v4285 = vadd.f32 0.0, %v4284
        %v4286 = vpop.f32.mrf.mxu0
        %v4287 = vadd.f32 0.0, %v4286
        %4288 = vmatmul.bf16.gmra.mxu0 %v3949
        %v4289 = vpop.f32.mrf.mxu0
        %v4290 = vadd.f32 0.0, %v4289
        %v4291 = vpop.f32.mrf.mxu0
        %v4292 = vadd.f32 0.0, %v4291
        %4293 = vmatmul.bf16.gmra.mxu0 %v3952
        %v4294 = vpop.f32.mrf.mxu0
        %v4295 = vadd.f32 0.0, %v4294
        %v4296 = vpop.f32.mrf.mxu0
        %v4297 = vadd.f32 0.0, %v4296
        %4298 = vmatmul.bf16.gmra.mxu0 %v3955
        %v4299 = vpop.f32.mrf.mxu0
        %v4300 = vadd.f32 0.0, %v4299
        %v4301 = vpop.f32.mrf.mxu0
        %v4302 = vadd.f32 0.0, %v4301
        %4303 = vmatmul.bf16.gmra.mxu0 %v3958
        %v4304 = vpop.f32.mrf.mxu0
        %v4305 = vadd.f32 0.0, %v4304
        %v4306 = vpop.f32.mrf.mxu0
        %v4307 = vadd.f32 0.0, %v4306
        %4308 = vdwg.mxu0
        %v4309 = vadd.f32 %v2986, %v3970
        %v4310 = vadd.f32 %v2987, %v3972
        %v4311 = vadd.f32 %v2988, %v3975
        %v4312 = vadd.f32 %v2989, %v3977
        %v4313 = vadd.f32 %v2990, %v3980
        %v4314 = vadd.f32 %v2991, %v3982
        %v4315 = vadd.f32 %v2992, %v3985
        %v4316 = vadd.f32 %v2993, %v3987
        %v4317 = vadd.f32 %v2994, %v3990
        %v4318 = vadd.f32 %v2995, %v3992
        %v4319 = vadd.f32 %v2996, %v3995
        %v4320 = vadd.f32 %v2997, %v3997
        %v4321 = vadd.f32 %v2998, %v4000
        %v4322 = vadd.f32 %v2999, %v4002
        %v4323 = vadd.f32 %v3000, %v4005
        %v4324 = vadd.f32 %v3001, %v4007
        %v4325 = vadd.f32 %v3002, %v4010
        %v4326 = vadd.f32 %v3003, %v4012
        %v4327 = vadd.f32 %v3004, %v4015
        %v4328 = vadd.f32 %v3005, %v4017
        %v4329 = vadd.f32 %v3006, %v4020
        %v4330 = vadd.f32 %v3007, %v4022
        %v4331 = vadd.f32 %v3008, %v4025
        %v4332 = vadd.f32 %v3009, %v4027
        %v4333 = vadd.f32 %v3010, %v4030
        %v4334 = vadd.f32 %v3011, %v4032
        %v4335 = vadd.f32 %v3012, %v4035
        %v4336 = vadd.f32 %v3013, %v4037
        %v4337 = vadd.f32 %v3014, %v4040
        %v4338 = vadd.f32 %v3015, %v4042
        %v4339 = vadd.f32 %v3016, %v4045
        %v4340 = vadd.f32 %v3017, %v4047
        %v4341 = vadd.f32 %v3018, %v4050
        %v4342 = vadd.f32 %v3019, %v4052
        %v4343 = vadd.f32 %v3020, %v4055
        %v4344 = vadd.f32 %v3021, %v4057
        %v4345 = vadd.f32 %v3022, %v4060
        %v4346 = vadd.f32 %v3023, %v4062
        %v4347 = vadd.f32 %v3024, %v4065
        %v4348 = vadd.f32 %v3025, %v4067
        %v4349 = vadd.f32 %v3026, %v4070
        %v4350 = vadd.f32 %v3027, %v4072
        %v4351 = vadd.f32 %v3028, %v4075
        %v4352 = vadd.f32 %v3029, %v4077
        %v4353 = vadd.f32 %v3030, %v4080
        %v4354 = vadd.f32 %v3031, %v4082
        %v4355 = vadd.f32 %v3032, %v4085
        %v4356 = vadd.f32 %v3033, %v4087
        %v4357 = vadd.f32 %v3034, %v4090
        %v4358 = vadd.f32 %v3035, %v4092
        %v4359 = vadd.f32 %v3036, %v4095
        %v4360 = vadd.f32 %v3037, %v4097
        %v4361 = vadd.f32 %v3038, %v4100
        %v4362 = vadd.f32 %v3039, %v4102
        %v4363 = vadd.f32 %v3040, %v4105
        %v4364 = vadd.f32 %v3041, %v4107
        %v4365 = vadd.f32 %v3042, %v4110
        %v4366 = vadd.f32 %v3043, %v4112
        %v4367 = vadd.f32 %v3044, %v4115
        %v4368 = vadd.f32 %v3045, %v4117
        %v4369 = vadd.f32 %v3046, %v4120
        %v4370 = vadd.f32 %v3047, %v4122
        %v4371 = vadd.f32 %v3048, %v4125
        %v4372 = vadd.f32 %v3049, %v4127
        %v4373 = vadd.f32 %v3050, %v4130
        %v4374 = vadd.f32 %v3051, %v4132
        %v4375 = vadd.f32 %v3052, %v4135
        %v4376 = vadd.f32 %v3053, %v4137
        %v4377 = vadd.f32 %v3054, %v4140
        %v4378 = vadd.f32 %v3055, %v4142
        %v4379 = vadd.f32 %v3056, %v4145
        %v4380 = vadd.f32 %v3057, %v4147
        %v4381 = vadd.f32 %v3058, %v4150
        %v4382 = vadd.f32 %v3059, %v4152
        %v4383 = vadd.f32 %v3060, %v4155
        %v4384 = vadd.f32 %v3061, %v4157
        %v4385 = vadd.f32 %v3062, %v4160
        %v4386 = vadd.f32 %v3063, %v4162
        %v4387 = vadd.f32 %v3064, %v4165
        %v4388 = vadd.f32 %v3065, %v4167
        %v4389 = vadd.f32 %v3066, %v4170
        %v4390 = vadd.f32 %v3067, %v4172
        %v4391 = vadd.f32 %v3068, %v4175
        %v4392 = vadd.f32 %v3069, %v4177
        %v4393 = vadd.f32 %v3070, %v4180
        %v4394 = vadd.f32 %v3071, %v4182
        %v4395 = vadd.f32 %v3072, %v4185
        %v4396 = vadd.f32 %v3073, %v4187
        %v4397 = vadd.f32 %v3074, %v4190
        %v4398 = vadd.f32 %v3075, %v4192
        %v4399 = vadd.f32 %v3076, %v4195
        %v4400 = vadd.f32 %v3077, %v4197
        %v4401 = vadd.f32 %v3078, %v4200
        %v4402 = vadd.f32 %v3079, %v4202
        %v4403 = vadd.f32 %v3080, %v4205
        %v4404 = vadd.f32 %v3081, %v4207
        %v4405 = vadd.f32 %v3082, %v4210
        %v4406 = vadd.f32 %v3083, %v4212
        %v4407 = vadd.f32 %v3084, %v4215
        %v4408 = vadd.f32 %v3085, %v4217
        %v4409 = vadd.f32 %v3086, %v4220
        %v4410 = vadd.f32 %v3087, %v4222
        %v4411 = vadd.f32 %v3088, %v4225
        %v4412 = vadd.f32 %v3089, %v4227
        %v4413 = vadd.f32 %v3090, %v4230
        %v4414 = vadd.f32 %v3091, %v4232
        %v4415 = vadd.f32 %v3092, %v4235
        %v4416 = vadd.f32 %v3093, %v4237
        %v4417 = vadd.f32 %v3094, %v4240
        %v4418 = vadd.f32 %v3095, %v4242
        %v4419 = vadd.f32 %v3096, %v4245
        %v4420 = vadd.f32 %v3097, %v4247
        %v4421 = vadd.f32 %v3098, %v4250
        %v4422 = vadd.f32 %v3099, %v4252
        %v4423 = vadd.f32 %v3100, %v4255
        %v4424 = vadd.f32 %v3101, %v4257
        %v4425 = vadd.f32 %v3102, %v4260
        %v4426 = vadd.f32 %v3103, %v4262
        %v4427 = vadd.f32 %v3104, %v4265
        %v4428 = vadd.f32 %v3105, %v4267
        %v4429 = vadd.f32 %v3106, %v4270
        %v4430 = vadd.f32 %v3107, %v4272
        %v4431 = vadd.f32 %v3108, %v4275
        %v4432 = vadd.f32 %v3109, %v4277
        %v4433 = vadd.f32 %v3110, %v4280
        %v4434 = vadd.f32 %v3111, %v4282
        %v4435 = vadd.f32 %v3112, %v4285
        %v4436 = vadd.f32 %v3113, %v4287
        %v4437 = vadd.f32 %v3114, %v4290
        %v4438 = vadd.f32 %v3115, %v4292
        %v4439 = vadd.f32 %v3116, %v4295
        %v4440 = vadd.f32 %v3117, %v4297
        %v4441 = vadd.f32 %v3118, %v4300
        %v4442 = vadd.f32 %v3119, %v4302
        %v4443 = vadd.f32 %v3120, %v4305
        %v4444 = vadd.f32 %v3121, %v4307
        %v4445 = vld [vmem:[%s169 + $0x230] sm:$0x3]
        %s4446 = scalar_lea.vmem %s1, 64
        %v4447 = vld [vmem:[%s4446] sm:$0xf]
        %v4448 = vld [vmem:[%s4446 + $0x4] sm:$0xf]
        %v4449 = vld [vmem:[%s4446 + $0x8] sm:$0xf]
        %v4450 = vld [vmem:[%s4446 + $0xc] sm:$0xf]
        %v4452 = vunpack.c.l.b16 %v4445
        %v4453 = vpack.c.b16 %v4452, %v4452
        %vm4454 = vsmask.f32 6400
        %v4456 = vshrl.u32 %v3538, 16
        %v4458 = vrot.slane %v4456, 1
        %v4459 = vshll.u32 %v3538, 16
        %v4461 = vrot.slane %v4459, 2
        %v4462 = vor.u32 %v4458, %v4461
        %v4464 = vshrl.u32 %v3539, 16
        %v4466 = vrot.slane %v4464, 1
        %v4467 = vshll.u32 %v3539, 16
        %v4469 = vrot.slane %v4467, 2
        %v4470 = vor.u32 %v4466, %v4469
        %v4471 = vsel %vm4454, %v4462, %v4470
        %v4473 = vshrl.u32 %v3540, 16
        %v4475 = vrot.slane %v4473, 1
        %v4476 = vshll.u32 %v3540, 16
        %v4478 = vrot.slane %v4476, 2
        %v4479 = vor.u32 %v4475, %v4478
        %v4480 = vsel %vm4454, %v4470, %v4479
        %v4482 = vshrl.u32 %v3541, 16
        %v4484 = vrot.slane %v4482, 1
        %v4485 = vshll.u32 %v3541, 16
        %v4487 = vrot.slane %v4485, 2
        %v4488 = vor.u32 %v4484, %v4487
        %v4489 = vsel %vm4454, %v4479, %v4488
        %v4491 = vshrl.u32 %v3542, 16
        %v4493 = vrot.slane %v4491, 1
        %v4494 = vshll.u32 %v3542, 16
        %v4496 = vrot.slane %v4494, 2
        %v4497 = vor.u32 %v4493, %v4496
        %v4498 = vsel %vm4454, %v4488, %v4497
        %v4500 = vshrl.u32 %v3543, 16
        %v4502 = vrot.slane %v4500, 1
        %v4503 = vshll.u32 %v3543, 16
        %v4505 = vrot.slane %v4503, 2
        %v4506 = vor.u32 %v4502, %v4505
        %v4507 = vsel %vm4454, %v4497, %v4506
        %v4509 = vshrl.u32 %v3544, 16
        %v4511 = vrot.slane %v4509, 1
        %v4512 = vshll.u32 %v3544, 16
        %v4514 = vrot.slane %v4512, 2
        %v4515 = vor.u32 %v4511, %v4514
        %v4516 = vsel %vm4454, %v4506, %v4515
        %v4518 = vshrl.u32 %v3545, 16
        %v4520 = vrot.slane %v4518, 1
        %v4521 = vshll.u32 %v3545, 16
        %v4523 = vrot.slane %v4521, 2
        %v4524 = vor.u32 %v4520, %v4523
        %v4525 = vsel %vm4454, %v4515, %v4524
        %v4527 = vshrl.u32 %v3546, 16
        %v4529 = vrot.slane %v4527, 1
        %v4530 = vshll.u32 %v3546, 16
        %v4532 = vrot.slane %v4530, 2
        %v4533 = vor.u32 %v4529, %v4532
        %v4534 = vsel %vm4454, %v4524, %v4533
        %v4536 = vshrl.u32 %v3547, 16
        %v4538 = vrot.slane %v4536, 1
        %v4539 = vshll.u32 %v3547, 16
        %v4541 = vrot.slane %v4539, 2
        %v4542 = vor.u32 %v4538, %v4541
        %v4543 = vsel %vm4454, %v4533, %v4542
        %v4545 = vshrl.u32 %v3548, 16
        %v4547 = vrot.slane %v4545, 1
        %v4548 = vshll.u32 %v3548, 16
        %v4550 = vrot.slane %v4548, 2
        %v4551 = vor.u32 %v4547, %v4550
        %v4552 = vsel %vm4454, %v4542, %v4551
        %v4554 = vshrl.u32 %v3549, 16
        %v4556 = vrot.slane %v4554, 1
        %v4557 = vshll.u32 %v3549, 16
        %v4559 = vrot.slane %v4557, 2
        %v4560 = vor.u32 %v4556, %v4559
        %v4561 = vsel %vm4454, %v4551, %v4560
        %v4563 = vshrl.u32 %v3550, 16
        %v4565 = vrot.slane %v4563, 1
        %v4566 = vshll.u32 %v3550, 16
        %v4568 = vrot.slane %v4566, 2
        %v4569 = vor.u32 %v4565, %v4568
        %v4570 = vsel %vm4454, %v4560, %v4569
        %v4572 = vshrl.u32 %v3551, 16
        %v4574 = vrot.slane %v4572, 1
        %v4575 = vshll.u32 %v3551, 16
        %v4577 = vrot.slane %v4575, 2
        %v4578 = vor.u32 %v4574, %v4577
        %v4579 = vsel %vm4454, %v4569, %v4578
        %v4581 = vshrl.u32 %v3552, 16
        %v4583 = vrot.slane %v4581, 1
        %v4584 = vshll.u32 %v3552, 16
        %v4586 = vrot.slane %v4584, 2
        %v4587 = vor.u32 %v4583, %v4586
        %v4588 = vsel %vm4454, %v4578, %v4587
        %v4590 = vshrl.u32 %v3553, 16
        %v4592 = vrot.slane %v4590, 1
        %v4593 = vshll.u32 %v3553, 16
        %v4595 = vrot.slane %v4593, 2
        %v4596 = vor.u32 %v4592, %v4595
        %v4597 = vsel %vm4454, %v4587, %v4596
        %v4599 = vshrl.u32 %v3554, 16
        %v4601 = vrot.slane %v4599, 1
        %v4602 = vshll.u32 %v3554, 16
        %v4604 = vrot.slane %v4602, 2
        %v4605 = vor.u32 %v4601, %v4604
        %v4606 = vsel %vm4454, %v4596, %v4605
        %v4608 = vshrl.u32 %v3555, 16
        %v4610 = vrot.slane %v4608, 1
        %v4611 = vshll.u32 %v3555, 16
        %v4613 = vrot.slane %v4611, 2
        %v4614 = vor.u32 %v4610, %v4613
        %v4615 = vsel %vm4454, %v4605, %v4614
        %v4617 = vshrl.u32 %v3556, 16
        %v4619 = vrot.slane %v4617, 1
        %v4620 = vshll.u32 %v3556, 16
        %v4622 = vrot.slane %v4620, 2
        %v4623 = vor.u32 %v4619, %v4622
        %v4624 = vsel %vm4454, %v4614, %v4623
        %v4626 = vshrl.u32 %v3557, 16
        %v4628 = vrot.slane %v4626, 1
        %v4629 = vshll.u32 %v3557, 16
        %v4631 = vrot.slane %v4629, 2
        %v4632 = vor.u32 %v4628, %v4631
        %v4633 = vsel %vm4454, %v4623, %v4632
        %v4635 = vshrl.u32 %v3558, 16
        %v4637 = vrot.slane %v4635, 1
        %v4638 = vshll.u32 %v3558, 16
        %v4640 = vrot.slane %v4638, 2
        %v4641 = vor.u32 %v4637, %v4640
        %v4642 = vsel %vm4454, %v4632, %v4641
        %v4644 = vshrl.u32 %v3559, 16
        %v4646 = vrot.slane %v4644, 1
        %v4647 = vshll.u32 %v3559, 16
        %v4649 = vrot.slane %v4647, 2
        %v4650 = vor.u32 %v4646, %v4649
        %v4651 = vsel %vm4454, %v4641, %v4650
        %v4653 = vshrl.u32 %v3560, 16
        %v4655 = vrot.slane %v4653, 1
        %v4656 = vshll.u32 %v3560, 16
        %v4658 = vrot.slane %v4656, 2
        %v4659 = vor.u32 %v4655, %v4658
        %v4660 = vsel %vm4454, %v4650, %v4659
        %v4662 = vshrl.u32 %v3561, 16
        %v4664 = vrot.slane %v4662, 1
        %v4665 = vshll.u32 %v3561, 16
        %v4667 = vrot.slane %v4665, 2
        %v4668 = vor.u32 %v4664, %v4667
        %v4669 = vsel %vm4454, %v4659, %v4668
        %v4671 = vshrl.u32 %v3562, 16
        %v4673 = vrot.slane %v4671, 1
        %v4674 = vshll.u32 %v3562, 16
        %v4676 = vrot.slane %v4674, 2
        %v4677 = vor.u32 %v4673, %v4676
        %v4678 = vsel %vm4454, %v4668, %v4677
        %v4680 = vshrl.u32 %v3563, 16
        %v4682 = vrot.slane %v4680, 1
        %v4683 = vshll.u32 %v3563, 16
        %v4685 = vrot.slane %v4683, 2
        %v4686 = vor.u32 %v4682, %v4685
        %v4687 = vsel %vm4454, %v4677, %v4686
        %v4689 = vshrl.u32 %v3564, 16
        %v4691 = vrot.slane %v4689, 1
        %v4692 = vshll.u32 %v3564, 16
        %v4694 = vrot.slane %v4692, 2
        %v4695 = vor.u32 %v4691, %v4694
        %v4696 = vsel %vm4454, %v4686, %v4695
        %v4698 = vshrl.u32 %v3565, 16
        %v4700 = vrot.slane %v4698, 1
        %v4701 = vshll.u32 %v3565, 16
        %v4703 = vrot.slane %v4701, 2
        %v4704 = vor.u32 %v4700, %v4703
        %v4705 = vsel %vm4454, %v4695, %v4704
        %v4707 = vshrl.u32 %v3566, 16
        %v4709 = vrot.slane %v4707, 1
        %v4710 = vshll.u32 %v3566, 16
        %v4712 = vrot.slane %v4710, 2
        %v4713 = vor.u32 %v4709, %v4712
        %v4714 = vsel %vm4454, %v4704, %v4713
        %v4716 = vshrl.u32 %v3567, 16
        %v4718 = vrot.slane %v4716, 1
        %v4719 = vshll.u32 %v3567, 16
        %v4721 = vrot.slane %v4719, 2
        %v4722 = vor.u32 %v4718, %v4721
        %v4723 = vsel %vm4454, %v4713, %v4722
        %v4725 = vshrl.u32 %v3568, 16
        %v4727 = vrot.slane %v4725, 1
        %v4728 = vshll.u32 %v3568, 16
        %v4730 = vrot.slane %v4728, 2
        %v4731 = vor.u32 %v4727, %v4730
        %v4732 = vsel %vm4454, %v4722, %v4731
        %v4734 = vshrl.u32 %v3569, 16
        %v4736 = vrot.slane %v4734, 1
        %v4737 = vshll.u32 %v3569, 16
        %v4739 = vrot.slane %v4737, 2
        %v4740 = vor.u32 %v4736, %v4739
        %v4741 = vsel %vm4454, %v4731, %v4740
        %v4743 = vshrl.u32 %v3570, 16
        %v4745 = vrot.slane %v4743, 1
        %v4746 = vshll.u32 %v3570, 16
        %v4748 = vrot.slane %v4746, 2
        %v4749 = vor.u32 %v4745, %v4748
        %v4750 = vsel %vm4454, %v4740, %v4749
        %v4752 = vshrl.u32 %v3571, 16
        %v4754 = vrot.slane %v4752, 1
        %v4755 = vshll.u32 %v3571, 16
        %v4757 = vrot.slane %v4755, 2
        %v4758 = vor.u32 %v4754, %v4757
        %v4759 = vsel %vm4454, %v4749, %v4758
        %v4761 = vshrl.u32 %v3572, 16
        %v4763 = vrot.slane %v4761, 1
        %v4764 = vshll.u32 %v3572, 16
        %v4766 = vrot.slane %v4764, 2
        %v4767 = vor.u32 %v4763, %v4766
        %v4768 = vsel %vm4454, %v4758, %v4767
        %v4770 = vshrl.u32 %v3573, 16
        %v4772 = vrot.slane %v4770, 1
        %v4773 = vshll.u32 %v3573, 16
        %v4775 = vrot.slane %v4773, 2
        %v4776 = vor.u32 %v4772, %v4775
        %v4777 = vsel %vm4454, %v4767, %v4776
        %v4779 = vshrl.u32 %v3574, 16
        %v4781 = vrot.slane %v4779, 1
        %v4782 = vshll.u32 %v3574, 16
        %v4784 = vrot.slane %v4782, 2
        %v4785 = vor.u32 %v4781, %v4784
        %v4786 = vsel %vm4454, %v4776, %v4785
        %v4788 = vshrl.u32 %v3575, 16
        %v4790 = vrot.slane %v4788, 1
        %v4791 = vshll.u32 %v3575, 16
        %v4793 = vrot.slane %v4791, 2
        %v4794 = vor.u32 %v4790, %v4793
        %v4795 = vsel %vm4454, %v4785, %v4794
        %v4797 = vshrl.u32 %v3576, 16
        %v4799 = vrot.slane %v4797, 1
        %v4800 = vshll.u32 %v3576, 16
        %v4802 = vrot.slane %v4800, 2
        %v4803 = vor.u32 %v4799, %v4802
        %v4804 = vsel %vm4454, %v4794, %v4803
        %v4806 = vshrl.u32 %v3577, 16
        %v4808 = vrot.slane %v4806, 1
        %v4809 = vshll.u32 %v3577, 16
        %v4811 = vrot.slane %v4809, 2
        %v4812 = vor.u32 %v4808, %v4811
        %v4813 = vsel %vm4454, %v4803, %v4812
        %v4815 = vshrl.u32 %v3578, 16
        %v4817 = vrot.slane %v4815, 1
        %v4818 = vshll.u32 %v3578, 16
        %v4820 = vrot.slane %v4818, 2
        %v4821 = vor.u32 %v4817, %v4820
        %v4822 = vsel %vm4454, %v4812, %v4821
        %v4824 = vshrl.u32 %v3579, 16
        %v4826 = vrot.slane %v4824, 1
        %v4827 = vshll.u32 %v3579, 16
        %v4829 = vrot.slane %v4827, 2
        %v4830 = vor.u32 %v4826, %v4829
        %v4831 = vsel %vm4454, %v4821, %v4830
        %v4833 = vshrl.u32 %v3580, 16
        %v4835 = vrot.slane %v4833, 1
        %v4836 = vshll.u32 %v3580, 16
        %v4838 = vrot.slane %v4836, 2
        %v4839 = vor.u32 %v4835, %v4838
        %v4840 = vsel %vm4454, %v4830, %v4839
        %v4842 = vshrl.u32 %v3581, 16
        %v4844 = vrot.slane %v4842, 1
        %v4845 = vshll.u32 %v3581, 16
        %v4847 = vrot.slane %v4845, 2
        %v4848 = vor.u32 %v4844, %v4847
        %v4849 = vsel %vm4454, %v4839, %v4848
        %v4851 = vshrl.u32 %v3582, 16
        %v4853 = vrot.slane %v4851, 1
        %v4854 = vshll.u32 %v3582, 16
        %v4856 = vrot.slane %v4854, 2
        %v4857 = vor.u32 %v4853, %v4856
        %v4858 = vsel %vm4454, %v4848, %v4857
        %v4860 = vshrl.u32 %v3583, 16
        %v4862 = vrot.slane %v4860, 1
        %v4863 = vshll.u32 %v3583, 16
        %v4865 = vrot.slane %v4863, 2
        %v4866 = vor.u32 %v4862, %v4865
        %v4867 = vsel %vm4454, %v4857, %v4866
        %v4869 = vshrl.u32 %v3584, 16
        %v4871 = vrot.slane %v4869, 1
        %v4872 = vshll.u32 %v3584, 16
        %v4874 = vrot.slane %v4872, 2
        %v4875 = vor.u32 %v4871, %v4874
        %v4876 = vsel %vm4454, %v4866, %v4875
        %v4878 = vshrl.u32 %v3585, 16
        %v4880 = vrot.slane %v4878, 1
        %v4881 = vshll.u32 %v3585, 16
        %v4883 = vrot.slane %v4881, 2
        %v4884 = vor.u32 %v4880, %v4883
        %v4885 = vsel %vm4454, %v4875, %v4884
        %v4887 = vshrl.u32 %v3586, 16
        %v4889 = vrot.slane %v4887, 1
        %v4890 = vshll.u32 %v3586, 16
        %v4892 = vrot.slane %v4890, 2
        %v4893 = vor.u32 %v4889, %v4892
        %v4894 = vsel %vm4454, %v4884, %v4893
        %v4896 = vshrl.u32 %v3587, 16
        %v4898 = vrot.slane %v4896, 1
        %v4899 = vshll.u32 %v3587, 16
        %v4901 = vrot.slane %v4899, 2
        %v4902 = vor.u32 %v4898, %v4901
        %v4903 = vsel %vm4454, %v4893, %v4902
        %v4905 = vshrl.u32 %v3588, 16
        %v4907 = vrot.slane %v4905, 1
        %v4908 = vshll.u32 %v3588, 16
        %v4910 = vrot.slane %v4908, 2
        %v4911 = vor.u32 %v4907, %v4910
        %v4912 = vsel %vm4454, %v4902, %v4911
        %v4914 = vshrl.u32 %v3589, 16
        %v4916 = vrot.slane %v4914, 1
        %v4917 = vshll.u32 %v3589, 16
        %v4919 = vrot.slane %v4917, 2
        %v4920 = vor.u32 %v4916, %v4919
        %v4921 = vsel %vm4454, %v4911, %v4920
        %v4923 = vshrl.u32 %v3590, 16
        %v4925 = vrot.slane %v4923, 1
        %v4926 = vshll.u32 %v3590, 16
        %v4928 = vrot.slane %v4926, 2
        %v4929 = vor.u32 %v4925, %v4928
        %v4930 = vsel %vm4454, %v4920, %v4929
        %v4932 = vshrl.u32 %v3591, 16
        %v4934 = vrot.slane %v4932, 1
        %v4935 = vshll.u32 %v3591, 16
        %v4937 = vrot.slane %v4935, 2
        %v4938 = vor.u32 %v4934, %v4937
        %v4939 = vsel %vm4454, %v4929, %v4938
        %v4941 = vshrl.u32 %v3592, 16
        %v4943 = vrot.slane %v4941, 1
        %v4944 = vshll.u32 %v3592, 16
        %v4946 = vrot.slane %v4944, 2
        %v4947 = vor.u32 %v4943, %v4946
        %v4948 = vsel %vm4454, %v4938, %v4947
        %v4950 = vshrl.u32 %v3593, 16
        %v4952 = vrot.slane %v4950, 1
        %v4953 = vshll.u32 %v3593, 16
        %v4955 = vrot.slane %v4953, 2
        %v4956 = vor.u32 %v4952, %v4955
        %v4957 = vsel %vm4454, %v4947, %v4956
        %v4959 = vshrl.u32 %v3594, 16
        %v4961 = vrot.slane %v4959, 1
        %v4962 = vshll.u32 %v3594, 16
        %v4964 = vrot.slane %v4962, 2
        %v4965 = vor.u32 %v4961, %v4964
        %v4966 = vsel %vm4454, %v4956, %v4965
        %v4968 = vshrl.u32 %v3595, 16
        %v4970 = vrot.slane %v4968, 1
        %v4971 = vshll.u32 %v3595, 16
        %v4973 = vrot.slane %v4971, 2
        %v4974 = vor.u32 %v4970, %v4973
        %v4975 = vsel %vm4454, %v4965, %v4974
        %v4977 = vshrl.u32 %v3596, 16
        %v4979 = vrot.slane %v4977, 1
        %v4980 = vshll.u32 %v3596, 16
        %v4982 = vrot.slane %v4980, 2
        %v4983 = vor.u32 %v4979, %v4982
        %v4984 = vsel %vm4454, %v4974, %v4983
        %v4986 = vshrl.u32 %v3597, 16
        %v4988 = vrot.slane %v4986, 1
        %v4989 = vshll.u32 %v3597, 16
        %v4991 = vrot.slane %v4989, 2
        %v4992 = vor.u32 %v4988, %v4991
        %v4993 = vsel %vm4454, %v4983, %v4992
        %v4995 = vshrl.u32 %v3598, 16
        %v4997 = vrot.slane %v4995, 1
        %v4998 = vshll.u32 %v3598, 16
        %v5000 = vrot.slane %v4998, 2
        %v5001 = vor.u32 %v4997, %v5000
        %v5002 = vsel %vm4454, %v4992, %v5001
        %v5004 = vshrl.u32 %v3599, 16
        %v5006 = vrot.slane %v5004, 1
        %v5007 = vshll.u32 %v3599, 16
        %v5009 = vrot.slane %v5007, 2
        %v5010 = vor.u32 %v5006, %v5009
        %v5011 = vsel %vm4454, %v5001, %v5010
        %v5013 = vshrl.u32 %v3600, 16
        %v5015 = vrot.slane %v5013, 1
        %v5016 = vshll.u32 %v3600, 16
        %v5018 = vrot.slane %v5016, 2
        %v5019 = vor.u32 %v5015, %v5018
        %v5020 = vsel %vm4454, %v5010, %v5019
        %v5022 = vshrl.u32 %v3601, 16
        %v5024 = vrot.slane %v5022, 1
        %v5025 = vshll.u32 %v3601, 16
        %v5027 = vrot.slane %v5025, 2
        %v5028 = vor.u32 %v5024, %v5027
        %v5029 = vsel %vm4454, %v5019, %v5028
        %v5031 = vshrl.u32 %v3602, 16
        %v5033 = vrot.slane %v5031, 1
        %v5034 = vshll.u32 %v3602, 16
        %v5036 = vrot.slane %v5034, 2
        %v5037 = vor.u32 %v5033, %v5036
        %v5038 = vsel %vm4454, %v5028, %v5037
        %v5040 = vshrl.u32 %v3603, 16
        %v5042 = vrot.slane %v5040, 1
        %v5043 = vshll.u32 %v3603, 16
        %v5045 = vrot.slane %v5043, 2
        %v5046 = vor.u32 %v5042, %v5045
        %v5047 = vsel %vm4454, %v5037, %v5046
        %v5049 = vshrl.u32 %v3604, 16
        %v5051 = vrot.slane %v5049, 1
        %v5052 = vshll.u32 %v3604, 16
        %v5054 = vrot.slane %v5052, 2
        %v5055 = vor.u32 %v5051, %v5054
        %v5056 = vsel %vm4454, %v5046, %v5055
        %v5058 = vshrl.u32 %v3605, 16
        %v5060 = vrot.slane %v5058, 1
        %v5061 = vshll.u32 %v3605, 16
        %v5063 = vrot.slane %v5061, 2
        %v5064 = vor.u32 %v5060, %v5063
        %v5065 = vsel %vm4454, %v5055, %v5064
        %v5067 = vshrl.u32 %v4453, 16
        %v5069 = vrot.slane %v5067, 1
        %v5070 = vshll.u32 %v4453, 16
        %v5072 = vrot.slane %v5070, 2
        %v5073 = vor.u32 %v5069, %v5072
        %v5074 = vsel %vm4454, %v5064, %v5073
        %v5079 = vunpack.c.l.b16 %v4447
        %v5080 = vunpack.c.l.b16 %v4448
        %v5081 = vunpack.c.l.b16 %v4449
        %v5082 = vunpack.c.l.b16 %v4450
        %v5083 = vpack.c.b16 %v5080, %v5079
        %v5084 = vpack.c.b16 %v5082, %v5081
        %v5088 = vsel %vm1223, %v4471, 0
        %v5091 = vsel %vm1223, %v4480, 0
        %v5094 = vsel %vm1223, %v4489, 0
        %v5097 = vsel %vm1223, %v4498, 0
        %v5100 = vsel %vm1223, %v4507, 0
        %v5103 = vsel %vm1223, %v4516, 0
        %v5106 = vsel %vm1223, %v4525, 0
        %v5109 = vsel %vm1223, %v4534, 0
        %v5112 = vsel %vm1223, %v4543, 0
        %v5115 = vsel %vm1223, %v4552, 0
        %v5118 = vsel %vm1223, %v4561, 0
        %v5121 = vsel %vm1223, %v4570, 0
        %v5124 = vsel %vm1223, %v4579, 0
        %v5127 = vsel %vm1223, %v4588, 0
        %v5130 = vsel %vm1223, %v4597, 0
        %v5133 = vsel %vm1223, %v4606, 0
        %v5136 = vsel %vm1223, %v4615, 0
        %v5139 = vsel %vm1223, %v4624, 0
        %v5142 = vsel %vm1223, %v4633, 0
        %v5145 = vsel %vm1223, %v4642, 0
        %v5148 = vsel %vm1223, %v4651, 0
        %v5151 = vsel %vm1223, %v4660, 0
        %v5154 = vsel %vm1223, %v4669, 0
        %v5157 = vsel %vm1223, %v4678, 0
        %v5160 = vsel %vm1223, %v4687, 0
        %v5163 = vsel %vm1223, %v4696, 0
        %v5166 = vsel %vm1223, %v4705, 0
        %v5169 = vsel %vm1223, %v4714, 0
        %v5172 = vsel %vm1223, %v4723, 0
        %v5175 = vsel %vm1223, %v4732, 0
        %v5178 = vsel %vm1223, %v4741, 0
        %v5181 = vsel %vm1223, %v4750, 0
        %v5184 = vsel %vm1223, %v4759, 0
        %v5187 = vsel %vm1223, %v4768, 0
        %v5190 = vsel %vm1223, %v4777, 0
        %v5193 = vsel %vm1223, %v4786, 0
        %v5196 = vsel %vm1223, %v4795, 0
        %v5199 = vsel %vm1223, %v4804, 0
        %v5202 = vsel %vm1223, %v4813, 0
        %v5205 = vsel %vm1223, %v4822, 0
        %v5208 = vsel %vm1223, %v4831, 0
        %v5211 = vsel %vm1223, %v4840, 0
        %v5214 = vsel %vm1223, %v4849, 0
        %v5217 = vsel %vm1223, %v4858, 0
        %v5220 = vsel %vm1223, %v4867, 0
        %v5223 = vsel %vm1223, %v4876, 0
        %v5226 = vsel %vm1223, %v4885, 0
        %v5229 = vsel %vm1223, %v4894, 0
        %v5232 = vsel %vm1223, %v4903, 0
        %v5235 = vsel %vm1223, %v4912, 0
        %v5238 = vsel %vm1223, %v4921, 0
        %v5241 = vsel %vm1223, %v4930, 0
        %v5244 = vsel %vm1223, %v4939, 0
        %v5247 = vsel %vm1223, %v4948, 0
        %v5250 = vsel %vm1223, %v4957, 0
        %v5253 = vsel %vm1223, %v4966, 0
        %v5256 = vsel %vm1223, %v4975, 0
        %v5259 = vsel %vm1223, %v4984, 0
        %v5262 = vsel %vm1223, %v4993, 0
        %v5265 = vsel %vm1223, %v5002, 0
        %v5268 = vsel %vm1223, %v5011, 0
        %v5271 = vsel %vm1223, %v5020, 0
        %v5274 = vsel %vm1223, %v5029, 0
        %v5277 = vsel %vm1223, %v5038, 0
        %v5280 = vsel %vm1223, %v5047, 0
        %v5283 = vsel %vm1223, %v5056, 0
        %v5286 = vsel %vm1223, %v5065, 0
        %v5289 = vsel %vm1223, %v5074, 0
        %5291 = vmatpush.bf16.msra.mxu0 0
        %5292 = vmatpush.bf16.msra.mxu0 0
        %5293 = vmatpush.bf16.msra.mxu0 0
        %5294 = vmatpush.bf16.msra.mxu0 0
        %5295 = vmatpush.bf16.msra.mxu0 0
        %5296 = vmatpush.bf16.msra.mxu0 0
        %5297 = vmatpush.bf16.msra.mxu0 %v5084
        %5298 = vmatpush.bf16.msra.mxu0 %v5083
        %5299 = vmatmul.bf16.gmra.mxu0 %v5088
        %v5300 = vpop.f32.mrf.mxu0
        %v5301 = vadd.f32 0.0, %v5300
        %v5302 = vpop.f32.mrf.mxu0
        %v5303 = vadd.f32 0.0, %v5302
        %5304 = vmatmul.bf16.gmra.mxu0 %v5091
        %v5305 = vpop.f32.mrf.mxu0
        %v5306 = vadd.f32 0.0, %v5305
        %v5307 = vpop.f32.mrf.mxu0
        %v5308 = vadd.f32 0.0, %v5307
        %5309 = vmatmul.bf16.gmra.mxu0 %v5094
        %v5310 = vpop.f32.mrf.mxu0
        %v5311 = vadd.f32 0.0, %v5310
        %v5312 = vpop.f32.mrf.mxu0
        %v5313 = vadd.f32 0.0, %v5312
        %5314 = vmatmul.bf16.gmra.mxu0 %v5097
        %v5315 = vpop.f32.mrf.mxu0
        %v5316 = vadd.f32 0.0, %v5315
        %v5317 = vpop.f32.mrf.mxu0
        %v5318 = vadd.f32 0.0, %v5317
        %5319 = vmatmul.bf16.gmra.mxu0 %v5100
        %v5320 = vpop.f32.mrf.mxu0
        %v5321 = vadd.f32 0.0, %v5320
        %v5322 = vpop.f32.mrf.mxu0
        %v5323 = vadd.f32 0.0, %v5322
        %5324 = vmatmul.bf16.gmra.mxu0 %v5103
        %v5325 = vpop.f32.mrf.mxu0
        %v5326 = vadd.f32 0.0, %v5325
        %v5327 = vpop.f32.mrf.mxu0
        %v5328 = vadd.f32 0.0, %v5327
        %5329 = vmatmul.bf16.gmra.mxu0 %v5106
        %v5330 = vpop.f32.mrf.mxu0
        %v5331 = vadd.f32 0.0, %v5330
        %v5332 = vpop.f32.mrf.mxu0
        %v5333 = vadd.f32 0.0, %v5332
        %5334 = vmatmul.bf16.gmra.mxu0 %v5109
        %v5335 = vpop.f32.mrf.mxu0
        %v5336 = vadd.f32 0.0, %v5335
        %v5337 = vpop.f32.mrf.mxu0
        %v5338 = vadd.f32 0.0, %v5337
        %5339 = vmatmul.bf16.gmra.mxu0 %v5112
        %v5340 = vpop.f32.mrf.mxu0
        %v5341 = vadd.f32 0.0, %v5340
        %v5342 = vpop.f32.mrf.mxu0
        %v5343 = vadd.f32 0.0, %v5342
        %5344 = vmatmul.bf16.gmra.mxu0 %v5115
        %v5345 = vpop.f32.mrf.mxu0
        %v5346 = vadd.f32 0.0, %v5345
        %v5347 = vpop.f32.mrf.mxu0
        %v5348 = vadd.f32 0.0, %v5347
        %5349 = vmatmul.bf16.gmra.mxu0 %v5118
        %v5350 = vpop.f32.mrf.mxu0
        %v5351 = vadd.f32 0.0, %v5350
        %v5352 = vpop.f32.mrf.mxu0
        %v5353 = vadd.f32 0.0, %v5352
        %5354 = vmatmul.bf16.gmra.mxu0 %v5121
        %v5355 = vpop.f32.mrf.mxu0
        %v5356 = vadd.f32 0.0, %v5355
        %v5357 = vpop.f32.mrf.mxu0
        %v5358 = vadd.f32 0.0, %v5357
        %5359 = vmatmul.bf16.gmra.mxu0 %v5124
        %v5360 = vpop.f32.mrf.mxu0
        %v5361 = vadd.f32 0.0, %v5360
        %v5362 = vpop.f32.mrf.mxu0
        %v5363 = vadd.f32 0.0, %v5362
        %5364 = vmatmul.bf16.gmra.mxu0 %v5127
        %v5365 = vpop.f32.mrf.mxu0
        %v5366 = vadd.f32 0.0, %v5365
        %v5367 = vpop.f32.mrf.mxu0
        %v5368 = vadd.f32 0.0, %v5367
        %5369 = vmatmul.bf16.gmra.mxu0 %v5130
        %v5370 = vpop.f32.mrf.mxu0
        %v5371 = vadd.f32 0.0, %v5370
        %v5372 = vpop.f32.mrf.mxu0
        %v5373 = vadd.f32 0.0, %v5372
        %5374 = vmatmul.bf16.gmra.mxu0 %v5133
        %v5375 = vpop.f32.mrf.mxu0
        %v5376 = vadd.f32 0.0, %v5375
        %v5377 = vpop.f32.mrf.mxu0
        %v5378 = vadd.f32 0.0, %v5377
        %5379 = vmatmul.bf16.gmra.mxu0 %v5136
        %v5380 = vpop.f32.mrf.mxu0
        %v5381 = vadd.f32 0.0, %v5380
        %v5382 = vpop.f32.mrf.mxu0
        %v5383 = vadd.f32 0.0, %v5382
        %5384 = vmatmul.bf16.gmra.mxu0 %v5139
        %v5385 = vpop.f32.mrf.mxu0
        %v5386 = vadd.f32 0.0, %v5385
        %v5387 = vpop.f32.mrf.mxu0
        %v5388 = vadd.f32 0.0, %v5387
        %5389 = vmatmul.bf16.gmra.mxu0 %v5142
        %v5390 = vpop.f32.mrf.mxu0
        %v5391 = vadd.f32 0.0, %v5390
        %v5392 = vpop.f32.mrf.mxu0
        %v5393 = vadd.f32 0.0, %v5392
        %5394 = vmatmul.bf16.gmra.mxu0 %v5145
        %v5395 = vpop.f32.mrf.mxu0
        %v5396 = vadd.f32 0.0, %v5395
        %v5397 = vpop.f32.mrf.mxu0
        %v5398 = vadd.f32 0.0, %v5397
        %5399 = vmatmul.bf16.gmra.mxu0 %v5148
        %v5400 = vpop.f32.mrf.mxu0
        %v5401 = vadd.f32 0.0, %v5400
        %v5402 = vpop.f32.mrf.mxu0
        %v5403 = vadd.f32 0.0, %v5402
        %5404 = vmatmul.bf16.gmra.mxu0 %v5151
        %v5405 = vpop.f32.mrf.mxu0
        %v5406 = vadd.f32 0.0, %v5405
        %v5407 = vpop.f32.mrf.mxu0
        %v5408 = vadd.f32 0.0, %v5407
        %5409 = vmatmul.bf16.gmra.mxu0 %v5154
        %v5410 = vpop.f32.mrf.mxu0
        %v5411 = vadd.f32 0.0, %v5410
        %v5412 = vpop.f32.mrf.mxu0
        %v5413 = vadd.f32 0.0, %v5412
        %5414 = vmatmul.bf16.gmra.mxu0 %v5157
        %v5415 = vpop.f32.mrf.mxu0
        %v5416 = vadd.f32 0.0, %v5415
        %v5417 = vpop.f32.mrf.mxu0
        %v5418 = vadd.f32 0.0, %v5417
        %5419 = vmatmul.bf16.gmra.mxu0 %v5160
        %v5420 = vpop.f32.mrf.mxu0
        %v5421 = vadd.f32 0.0, %v5420
        %v5422 = vpop.f32.mrf.mxu0
        %v5423 = vadd.f32 0.0, %v5422
        %5424 = vmatmul.bf16.gmra.mxu0 %v5163
        %v5425 = vpop.f32.mrf.mxu0
        %v5426 = vadd.f32 0.0, %v5425
        %v5427 = vpop.f32.mrf.mxu0
        %v5428 = vadd.f32 0.0, %v5427
        %5429 = vmatmul.bf16.gmra.mxu0 %v5166
        %v5430 = vpop.f32.mrf.mxu0
        %v5431 = vadd.f32 0.0, %v5430
        %v5432 = vpop.f32.mrf.mxu0
        %v5433 = vadd.f32 0.0, %v5432
        %5434 = vmatmul.bf16.gmra.mxu0 %v5169
        %v5435 = vpop.f32.mrf.mxu0
        %v5436 = vadd.f32 0.0, %v5435
        %v5437 = vpop.f32.mrf.mxu0
        %v5438 = vadd.f32 0.0, %v5437
        %5439 = vmatmul.bf16.gmra.mxu0 %v5172
        %v5440 = vpop.f32.mrf.mxu0
        %v5441 = vadd.f32 0.0, %v5440
        %v5442 = vpop.f32.mrf.mxu0
        %v5443 = vadd.f32 0.0, %v5442
        %5444 = vmatmul.bf16.gmra.mxu0 %v5175
        %v5445 = vpop.f32.mrf.mxu0
        %v5446 = vadd.f32 0.0, %v5445
        %v5447 = vpop.f32.mrf.mxu0
        %v5448 = vadd.f32 0.0, %v5447
        %5449 = vmatmul.bf16.gmra.mxu0 %v5178
        %v5450 = vpop.f32.mrf.mxu0
        %v5451 = vadd.f32 0.0, %v5450
        %v5452 = vpop.f32.mrf.mxu0
        %v5453 = vadd.f32 0.0, %v5452
        %5454 = vmatmul.bf16.gmra.mxu0 %v5181
        %v5455 = vpop.f32.mrf.mxu0
        %v5456 = vadd.f32 0.0, %v5455
        %v5457 = vpop.f32.mrf.mxu0
        %v5458 = vadd.f32 0.0, %v5457
        %5459 = vmatmul.bf16.gmra.mxu0 %v5184
        %v5460 = vpop.f32.mrf.mxu0
        %v5461 = vadd.f32 0.0, %v5460
        %v5462 = vpop.f32.mrf.mxu0
        %v5463 = vadd.f32 0.0, %v5462
        %5464 = vmatmul.bf16.gmra.mxu0 %v5187
        %v5465 = vpop.f32.mrf.mxu0
        %v5466 = vadd.f32 0.0, %v5465
        %v5467 = vpop.f32.mrf.mxu0
        %v5468 = vadd.f32 0.0, %v5467
        %5469 = vmatmul.bf16.gmra.mxu0 %v5190
        %v5470 = vpop.f32.mrf.mxu0
        %v5471 = vadd.f32 0.0, %v5470
        %v5472 = vpop.f32.mrf.mxu0
        %v5473 = vadd.f32 0.0, %v5472
        %5474 = vmatmul.bf16.gmra.mxu0 %v5193
        %v5475 = vpop.f32.mrf.mxu0
        %v5476 = vadd.f32 0.0, %v5475
        %v5477 = vpop.f32.mrf.mxu0
        %v5478 = vadd.f32 0.0, %v5477
        %5479 = vmatmul.bf16.gmra.mxu0 %v5196
        %v5480 = vpop.f32.mrf.mxu0
        %v5481 = vadd.f32 0.0, %v5480
        %v5482 = vpop.f32.mrf.mxu0
        %v5483 = vadd.f32 0.0, %v5482
        %5484 = vmatmul.bf16.gmra.mxu0 %v5199
        %v5485 = vpop.f32.mrf.mxu0
        %v5486 = vadd.f32 0.0, %v5485
        %v5487 = vpop.f32.mrf.mxu0
        %v5488 = vadd.f32 0.0, %v5487
        %5489 = vmatmul.bf16.gmra.mxu0 %v5202
        %v5490 = vpop.f32.mrf.mxu0
        %v5491 = vadd.f32 0.0, %v5490
        %v5492 = vpop.f32.mrf.mxu0
        %v5493 = vadd.f32 0.0, %v5492
        %5494 = vmatmul.bf16.gmra.mxu0 %v5205
        %v5495 = vpop.f32.mrf.mxu0
        %v5496 = vadd.f32 0.0, %v5495
        %v5497 = vpop.f32.mrf.mxu0
        %v5498 = vadd.f32 0.0, %v5497
        %5499 = vmatmul.bf16.gmra.mxu0 %v5208
        %v5500 = vpop.f32.mrf.mxu0
        %v5501 = vadd.f32 0.0, %v5500
        %v5502 = vpop.f32.mrf.mxu0
        %v5503 = vadd.f32 0.0, %v5502
        %5504 = vmatmul.bf16.gmra.mxu0 %v5211
        %v5505 = vpop.f32.mrf.mxu0
        %v5506 = vadd.f32 0.0, %v5505
        %v5507 = vpop.f32.mrf.mxu0
        %v5508 = vadd.f32 0.0, %v5507
        %5509 = vmatmul.bf16.gmra.mxu0 %v5214
        %v5510 = vpop.f32.mrf.mxu0
        %v5511 = vadd.f32 0.0, %v5510
        %v5512 = vpop.f32.mrf.mxu0
        %v5513 = vadd.f32 0.0, %v5512
        %5514 = vmatmul.bf16.gmra.mxu0 %v5217
        %v5515 = vpop.f32.mrf.mxu0
        %v5516 = vadd.f32 0.0, %v5515
        %v5517 = vpop.f32.mrf.mxu0
        %v5518 = vadd.f32 0.0, %v5517
        %5519 = vmatmul.bf16.gmra.mxu0 %v5220
        %v5520 = vpop.f32.mrf.mxu0
        %v5521 = vadd.f32 0.0, %v5520
        %v5522 = vpop.f32.mrf.mxu0
        %v5523 = vadd.f32 0.0, %v5522
        %5524 = vmatmul.bf16.gmra.mxu0 %v5223
        %v5525 = vpop.f32.mrf.mxu0
        %v5526 = vadd.f32 0.0, %v5525
        %v5527 = vpop.f32.mrf.mxu0
        %v5528 = vadd.f32 0.0, %v5527
        %5529 = vmatmul.bf16.gmra.mxu0 %v5226
        %v5530 = vpop.f32.mrf.mxu0
        %v5531 = vadd.f32 0.0, %v5530
        %v5532 = vpop.f32.mrf.mxu0
        %v5533 = vadd.f32 0.0, %v5532
        %5534 = vmatmul.bf16.gmra.mxu0 %v5229
        %v5535 = vpop.f32.mrf.mxu0
        %v5536 = vadd.f32 0.0, %v5535
        %v5537 = vpop.f32.mrf.mxu0
        %v5538 = vadd.f32 0.0, %v5537
        %5539 = vmatmul.bf16.gmra.mxu0 %v5232
        %v5540 = vpop.f32.mrf.mxu0
        %v5541 = vadd.f32 0.0, %v5540
        %v5542 = vpop.f32.mrf.mxu0
        %v5543 = vadd.f32 0.0, %v5542
        %5544 = vmatmul.bf16.gmra.mxu0 %v5235
        %v5545 = vpop.f32.mrf.mxu0
        %v5546 = vadd.f32 0.0, %v5545
        %v5547 = vpop.f32.mrf.mxu0
        %v5548 = vadd.f32 0.0, %v5547
        %5549 = vmatmul.bf16.gmra.mxu0 %v5238
        %v5550 = vpop.f32.mrf.mxu0
        %v5551 = vadd.f32 0.0, %v5550
        %v5552 = vpop.f32.mrf.mxu0
        %v5553 = vadd.f32 0.0, %v5552
        %5554 = vmatmul.bf16.gmra.mxu0 %v5241
        %v5555 = vpop.f32.mrf.mxu0
        %v5556 = vadd.f32 0.0, %v5555
        %v5557 = vpop.f32.mrf.mxu0
        %v5558 = vadd.f32 0.0, %v5557
        %5559 = vmatmul.bf16.gmra.mxu0 %v5244
        %v5560 = vpop.f32.mrf.mxu0
        %v5561 = vadd.f32 0.0, %v5560
        %v5562 = vpop.f32.mrf.mxu0
        %v5563 = vadd.f32 0.0, %v5562
        %5564 = vmatmul.bf16.gmra.mxu0 %v5247
        %v5565 = vpop.f32.mrf.mxu0
        %v5566 = vadd.f32 0.0, %v5565
        %v5567 = vpop.f32.mrf.mxu0
        %v5568 = vadd.f32 0.0, %v5567
        %5569 = vmatmul.bf16.gmra.mxu0 %v5250
        %v5570 = vpop.f32.mrf.mxu0
        %v5571 = vadd.f32 0.0, %v5570
        %v5572 = vpop.f32.mrf.mxu0
        %v5573 = vadd.f32 0.0, %v5572
        %5574 = vmatmul.bf16.gmra.mxu0 %v5253
        %v5575 = vpop.f32.mrf.mxu0
        %v5576 = vadd.f32 0.0, %v5575
        %v5577 = vpop.f32.mrf.mxu0
        %v5578 = vadd.f32 0.0, %v5577
        %5579 = vmatmul.bf16.gmra.mxu0 %v5256
        %v5580 = vpop.f32.mrf.mxu0
        %v5581 = vadd.f32 0.0, %v5580
        %v5582 = vpop.f32.mrf.mxu0
        %v5583 = vadd.f32 0.0, %v5582
        %5584 = vmatmul.bf16.gmra.mxu0 %v5259
        %v5585 = vpop.f32.mrf.mxu0
        %v5586 = vadd.f32 0.0, %v5585
        %v5587 = vpop.f32.mrf.mxu0
        %v5588 = vadd.f32 0.0, %v5587
        %5589 = vmatmul.bf16.gmra.mxu0 %v5262
        %v5590 = vpop.f32.mrf.mxu0
        %v5591 = vadd.f32 0.0, %v5590
        %v5592 = vpop.f32.mrf.mxu0
        %v5593 = vadd.f32 0.0, %v5592
        %5594 = vmatmul.bf16.gmra.mxu0 %v5265
        %v5595 = vpop.f32.mrf.mxu0
        %v5596 = vadd.f32 0.0, %v5595
        %v5597 = vpop.f32.mrf.mxu0
        %v5598 = vadd.f32 0.0, %v5597
        %5599 = vmatmul.bf16.gmra.mxu0 %v5268
        %v5600 = vpop.f32.mrf.mxu0
        %v5601 = vadd.f32 0.0, %v5600
        %v5602 = vpop.f32.mrf.mxu0
        %v5603 = vadd.f32 0.0, %v5602
        %5604 = vmatmul.bf16.gmra.mxu0 %v5271
        %v5605 = vpop.f32.mrf.mxu0
        %v5606 = vadd.f32 0.0, %v5605
        %v5607 = vpop.f32.mrf.mxu0
        %v5608 = vadd.f32 0.0, %v5607
        %5609 = vmatmul.bf16.gmra.mxu0 %v5274
        %v5610 = vpop.f32.mrf.mxu0
        %v5611 = vadd.f32 0.0, %v5610
        %v5612 = vpop.f32.mrf.mxu0
        %v5613 = vadd.f32 0.0, %v5612
        %5614 = vmatmul.bf16.gmra.mxu0 %v5277
        %v5615 = vpop.f32.mrf.mxu0
        %v5616 = vadd.f32 0.0, %v5615
        %v5617 = vpop.f32.mrf.mxu0
        %v5618 = vadd.f32 0.0, %v5617
        %5619 = vmatmul.bf16.gmra.mxu0 %v5280
        %v5620 = vpop.f32.mrf.mxu0
        %v5621 = vadd.f32 0.0, %v5620
        %v5622 = vpop.f32.mrf.mxu0
        %v5623 = vadd.f32 0.0, %v5622
        %5624 = vmatmul.bf16.gmra.mxu0 %v5283
        %v5625 = vpop.f32.mrf.mxu0
        %v5626 = vadd.f32 0.0, %v5625
        %v5627 = vpop.f32.mrf.mxu0
        %v5628 = vadd.f32 0.0, %v5627
        %5629 = vmatmul.bf16.gmra.mxu0 %v5286
        %v5630 = vpop.f32.mrf.mxu0
        %v5631 = vadd.f32 0.0, %v5630
        %v5632 = vpop.f32.mrf.mxu0
        %v5633 = vadd.f32 0.0, %v5632
        %5634 = vmatmul.bf16.gmra.mxu0 %v5289
        %v5635 = vpop.f32.mrf.mxu0
        %v5636 = vadd.f32 0.0, %v5635
        %v5637 = vpop.f32.mrf.mxu0
        %v5638 = vadd.f32 0.0, %v5637
        %5639 = vdwg.mxu0
        %v5640 = vadd.f32 %v4309, %v5301
        %v5641 = vadd.f32 %v4310, %v5303
        %v5642 = vadd.f32 %v4311, %v5306
        %v5643 = vadd.f32 %v4312, %v5308
        %v5644 = vadd.f32 %v4313, %v5311
        %v5645 = vadd.f32 %v4314, %v5313
        %v5646 = vadd.f32 %v4315, %v5316
        %v5647 = vadd.f32 %v4316, %v5318
        %v5648 = vadd.f32 %v4317, %v5321
        %v5649 = vadd.f32 %v4318, %v5323
        %v5650 = vadd.f32 %v4319, %v5326
        %v5651 = vadd.f32 %v4320, %v5328
        %v5652 = vadd.f32 %v4321, %v5331
        %v5653 = vadd.f32 %v4322, %v5333
        %v5654 = vadd.f32 %v4323, %v5336
        %v5655 = vadd.f32 %v4324, %v5338
        %v5656 = vadd.f32 %v4325, %v5341
        %v5657 = vadd.f32 %v4326, %v5343
        %v5658 = vadd.f32 %v4327, %v5346
        %v5659 = vadd.f32 %v4328, %v5348
        %v5660 = vadd.f32 %v4329, %v5351
        %v5661 = vadd.f32 %v4330, %v5353
        %v5662 = vadd.f32 %v4331, %v5356
        %v5663 = vadd.f32 %v4332, %v5358
        %v5664 = vadd.f32 %v4333, %v5361
        %v5665 = vadd.f32 %v4334, %v5363
        %v5666 = vadd.f32 %v4335, %v5366
        %v5667 = vadd.f32 %v4336, %v5368
        %v5668 = vadd.f32 %v4337, %v5371
        %v5669 = vadd.f32 %v4338, %v5373
        %v5670 = vadd.f32 %v4339, %v5376
        %v5671 = vadd.f32 %v4340, %v5378
        %v5672 = vadd.f32 %v4341, %v5381
        %v5673 = vadd.f32 %v4342, %v5383
        %v5674 = vadd.f32 %v4343, %v5386
        %v5675 = vadd.f32 %v4344, %v5388
        %v5676 = vadd.f32 %v4345, %v5391
        %v5677 = vadd.f32 %v4346, %v5393
        %v5678 = vadd.f32 %v4347, %v5396
        %v5679 = vadd.f32 %v4348, %v5398
        %v5680 = vadd.f32 %v4349, %v5401
        %v5681 = vadd.f32 %v4350, %v5403
        %v5682 = vadd.f32 %v4351, %v5406
        %v5683 = vadd.f32 %v4352, %v5408
        %v5684 = vadd.f32 %v4353, %v5411
        %v5685 = vadd.f32 %v4354, %v5413
        %v5686 = vadd.f32 %v4355, %v5416
        %v5687 = vadd.f32 %v4356, %v5418
        %v5688 = vadd.f32 %v4357, %v5421
        %v5689 = vadd.f32 %v4358, %v5423
        %v5690 = vadd.f32 %v4359, %v5426
        %v5691 = vadd.f32 %v4360, %v5428
        %v5692 = vadd.f32 %v4361, %v5431
        %v5693 = vadd.f32 %v4362, %v5433
        %v5694 = vadd.f32 %v4363, %v5436
        %v5695 = vadd.f32 %v4364, %v5438
        %v5696 = vadd.f32 %v4365, %v5441
        %v5697 = vadd.f32 %v4366, %v5443
        %v5698 = vadd.f32 %v4367, %v5446
        %v5699 = vadd.f32 %v4368, %v5448
        %v5700 = vadd.f32 %v4369, %v5451
        %v5701 = vadd.f32 %v4370, %v5453
        %v5702 = vadd.f32 %v4371, %v5456
        %v5703 = vadd.f32 %v4372, %v5458
        %v5704 = vadd.f32 %v4373, %v5461
        %v5705 = vadd.f32 %v4374, %v5463
        %v5706 = vadd.f32 %v4375, %v5466
        %v5707 = vadd.f32 %v4376, %v5468
        %v5708 = vadd.f32 %v4377, %v5471
        %v5709 = vadd.f32 %v4378, %v5473
        %v5710 = vadd.f32 %v4379, %v5476
        %v5711 = vadd.f32 %v4380, %v5478
        %v5712 = vadd.f32 %v4381, %v5481
        %v5713 = vadd.f32 %v4382, %v5483
        %v5714 = vadd.f32 %v4383, %v5486
        %v5715 = vadd.f32 %v4384, %v5488
        %v5716 = vadd.f32 %v4385, %v5491
        %v5717 = vadd.f32 %v4386, %v5493
        %v5718 = vadd.f32 %v4387, %v5496
        %v5719 = vadd.f32 %v4388, %v5498
        %v5720 = vadd.f32 %v4389, %v5501
        %v5721 = vadd.f32 %v4390, %v5503
        %v5722 = vadd.f32 %v4391, %v5506
        %v5723 = vadd.f32 %v4392, %v5508
        %v5724 = vadd.f32 %v4393, %v5511
        %v5725 = vadd.f32 %v4394, %v5513
        %v5726 = vadd.f32 %v4395, %v5516
        %v5727 = vadd.f32 %v4396, %v5518
        %v5728 = vadd.f32 %v4397, %v5521
        %v5729 = vadd.f32 %v4398, %v5523
        %v5730 = vadd.f32 %v4399, %v5526
        %v5731 = vadd.f32 %v4400, %v5528
        %v5732 = vadd.f32 %v4401, %v5531
        %v5733 = vadd.f32 %v4402, %v5533
        %v5734 = vadd.f32 %v4403, %v5536
        %v5735 = vadd.f32 %v4404, %v5538
        %v5736 = vadd.f32 %v4405, %v5541
        %v5737 = vadd.f32 %v4406, %v5543
        %v5738 = vadd.f32 %v4407, %v5546
        %v5739 = vadd.f32 %v4408, %v5548
        %v5740 = vadd.f32 %v4409, %v5551
        %v5741 = vadd.f32 %v4410, %v5553
        %v5742 = vadd.f32 %v4411, %v5556
        %v5743 = vadd.f32 %v4412, %v5558
        %v5744 = vadd.f32 %v4413, %v5561
        %v5745 = vadd.f32 %v4414, %v5563
        %v5746 = vadd.f32 %v4415, %v5566
        %v5747 = vadd.f32 %v4416, %v5568
        %v5748 = vadd.f32 %v4417, %v5571
        %v5749 = vadd.f32 %v4418, %v5573
        %v5750 = vadd.f32 %v4419, %v5576
        %v5751 = vadd.f32 %v4420, %v5578
        %v5752 = vadd.f32 %v4421, %v5581
        %v5753 = vadd.f32 %v4422, %v5583
        %v5754 = vadd.f32 %v4423, %v5586
        %v5755 = vadd.f32 %v4424, %v5588
        %v5756 = vadd.f32 %v4425, %v5591
        %v5757 = vadd.f32 %v4426, %v5593
        %v5758 = vadd.f32 %v4427, %v5596
        %v5759 = vadd.f32 %v4428, %v5598
        %v5760 = vadd.f32 %v4429, %v5601
        %v5761 = vadd.f32 %v4430, %v5603
        %v5762 = vadd.f32 %v4431, %v5606
        %v5763 = vadd.f32 %v4432, %v5608
        %v5764 = vadd.f32 %v4433, %v5611
        %v5765 = vadd.f32 %v4434, %v5613
        %v5766 = vadd.f32 %v4435, %v5616
        %v5767 = vadd.f32 %v4436, %v5618
        %v5768 = vadd.f32 %v4437, %v5621
        %v5769 = vadd.f32 %v4438, %v5623
        %v5770 = vadd.f32 %v4439, %v5626
        %v5771 = vadd.f32 %v4440, %v5628
        %v5772 = vadd.f32 %v4441, %v5631
        %v5773 = vadd.f32 %v4442, %v5633
        %v5774 = vadd.f32 %v4443, %v5636
        %v5775 = vadd.f32 %v4444, %v5638
        %v5776 = vld [vmem:[%s169 + $0x10] sm:$0xc]
        %s5777 = scalar_lea.vmem %s1, 80
        %v5778 = vld [vmem:[%s5777] sm:$0xf]
        %v5779 = vld [vmem:[%s5777 + $0x4] sm:$0xf]
        %v5780 = vld [vmem:[%s5777 + $0x8] sm:$0xf]
        %v5781 = vld [vmem:[%s5777 + $0xc] sm:$0xf]
        %v5783 = vunpack.c.l.b16 %v5776
        %v5784 = vpack.c.b16 %v3402, %v5783
        %vm5785 = vcmask 1045504
        %v5786 = vrot.slane %v5784, 2
        %v5787 = vrot.slane %v3539, 2
        %v5788 = vsel %vm5785, %v5786, %v5787
        %v5789 = vrot.slane %v3540, 2
        %v5790 = vsel %vm5785, %v5787, %v5789
        %v5791 = vrot.slane %v3541, 2
        %v5792 = vsel %vm5785, %v5789, %v5791
        %v5793 = vrot.slane %v3542, 2
        %v5794 = vsel %vm5785, %v5791, %v5793
        %v5795 = vrot.slane %v3543, 2
        %v5796 = vsel %vm5785, %v5793, %v5795
        %v5797 = vrot.slane %v3544, 2
        %v5798 = vsel %vm5785, %v5795, %v5797
        %v5799 = vrot.slane %v3545, 2
        %v5800 = vsel %vm5785, %v5797, %v5799
        %v5801 = vrot.slane %v3546, 2
        %v5802 = vsel %vm5785, %v5799, %v5801
        %v5803 = vrot.slane %v3547, 2
        %v5804 = vsel %vm5785, %v5801, %v5803
        %v5805 = vrot.slane %v3548, 2
        %v5806 = vsel %vm5785, %v5803, %v5805
        %v5807 = vrot.slane %v3549, 2
        %v5808 = vsel %vm5785, %v5805, %v5807
        %v5809 = vrot.slane %v3550, 2
        %v5810 = vsel %vm5785, %v5807, %v5809
        %v5811 = vrot.slane %v3551, 2
        %v5812 = vsel %vm5785, %v5809, %v5811
        %v5813 = vrot.slane %v3552, 2
        %v5814 = vsel %vm5785, %v5811, %v5813
        %v5815 = vrot.slane %v3553, 2
        %v5816 = vsel %vm5785, %v5813, %v5815
        %v5817 = vrot.slane %v3554, 2
        %v5818 = vsel %vm5785, %v5815, %v5817
        %v5819 = vrot.slane %v3555, 2
        %v5820 = vsel %vm5785, %v5817, %v5819
        %v5821 = vrot.slane %v3556, 2
        %v5822 = vsel %vm5785, %v5819, %v5821
        %v5823 = vrot.slane %v3557, 2
        %v5824 = vsel %vm5785, %v5821, %v5823
        %v5825 = vrot.slane %v3558, 2
        %v5826 = vsel %vm5785, %v5823, %v5825
        %v5827 = vrot.slane %v3559, 2
        %v5828 = vsel %vm5785, %v5825, %v5827
        %v5829 = vrot.slane %v3560, 2
        %v5830 = vsel %vm5785, %v5827, %v5829
        %v5831 = vrot.slane %v3561, 2
        %v5832 = vsel %vm5785, %v5829, %v5831
        %v5833 = vrot.slane %v3562, 2
        %v5834 = vsel %vm5785, %v5831, %v5833
        %v5835 = vrot.slane %v3563, 2
        %v5836 = vsel %vm5785, %v5833, %v5835
        %v5837 = vrot.slane %v3564, 2
        %v5838 = vsel %vm5785, %v5835, %v5837
        %v5839 = vrot.slane %v3565, 2
        %v5840 = vsel %vm5785, %v5837, %v5839
        %v5841 = vrot.slane %v3566, 2
        %v5842 = vsel %vm5785, %v5839, %v5841
        %v5843 = vrot.slane %v3567, 2
        %v5844 = vsel %vm5785, %v5841, %v5843
        %v5845 = vrot.slane %v3568, 2
        %v5846 = vsel %vm5785, %v5843, %v5845
        %v5847 = vrot.slane %v3569, 2
        %v5848 = vsel %vm5785, %v5845, %v5847
        %v5849 = vrot.slane %v3570, 2
        %v5850 = vsel %vm5785, %v5847, %v5849
        %v5851 = vrot.slane %v3571, 2
        %v5852 = vsel %vm5785, %v5849, %v5851
        %v5853 = vrot.slane %v3572, 2
        %v5854 = vsel %vm5785, %v5851, %v5853
        %v5855 = vrot.slane %v3573, 2
        %v5856 = vsel %vm5785, %v5853, %v5855
        %v5857 = vrot.slane %v3574, 2
        %v5858 = vsel %vm5785, %v5855, %v5857
        %v5859 = vrot.slane %v3575, 2
        %v5860 = vsel %vm5785, %v5857, %v5859
        %v5861 = vrot.slane %v3576, 2
        %v5862 = vsel %vm5785, %v5859, %v5861
        %v5863 = vrot.slane %v3577, 2
        %v5864 = vsel %vm5785, %v5861, %v5863
        %v5865 = vrot.slane %v3578, 2
        %v5866 = vsel %vm5785, %v5863, %v5865
        %v5867 = vrot.slane %v3579, 2
        %v5868 = vsel %vm5785, %v5865, %v5867
        %v5869 = vrot.slane %v3580, 2
        %v5870 = vsel %vm5785, %v5867, %v5869
        %v5871 = vrot.slane %v3581, 2
        %v5872 = vsel %vm5785, %v5869, %v5871
        %v5873 = vrot.slane %v3582, 2
        %v5874 = vsel %vm5785, %v5871, %v5873
        %v5875 = vrot.slane %v3583, 2
        %v5876 = vsel %vm5785, %v5873, %v5875
        %v5877 = vrot.slane %v3584, 2
        %v5878 = vsel %vm5785, %v5875, %v5877
        %v5879 = vrot.slane %v3585, 2
        %v5880 = vsel %vm5785, %v5877, %v5879
        %v5881 = vrot.slane %v3586, 2
        %v5882 = vsel %vm5785, %v5879, %v5881
        %v5883 = vrot.slane %v3587, 2
        %v5884 = vsel %vm5785, %v5881, %v5883
        %v5885 = vrot.slane %v3588, 2
        %v5886 = vsel %vm5785, %v5883, %v5885
        %v5887 = vrot.slane %v3589, 2
        %v5888 = vsel %vm5785, %v5885, %v5887
        %v5889 = vrot.slane %v3590, 2
        %v5890 = vsel %vm5785, %v5887, %v5889
        %v5891 = vrot.slane %v3591, 2
        %v5892 = vsel %vm5785, %v5889, %v5891
        %v5893 = vrot.slane %v3592, 2
        %v5894 = vsel %vm5785, %v5891, %v5893
        %v5895 = vrot.slane %v3593, 2
        %v5896 = vsel %vm5785, %v5893, %v5895
        %v5897 = vrot.slane %v3594, 2
        %v5898 = vsel %vm5785, %v5895, %v5897
        %v5899 = vrot.slane %v3595, 2
        %v5900 = vsel %vm5785, %v5897, %v5899
        %v5901 = vrot.slane %v3596, 2
        %v5902 = vsel %vm5785, %v5899, %v5901
        %v5903 = vrot.slane %v3597, 2
        %v5904 = vsel %vm5785, %v5901, %v5903
        %v5905 = vrot.slane %v3598, 2
        %v5906 = vsel %vm5785, %v5903, %v5905
        %v5907 = vrot.slane %v3599, 2
        %v5908 = vsel %vm5785, %v5905, %v5907
        %v5909 = vrot.slane %v3600, 2
        %v5910 = vsel %vm5785, %v5907, %v5909
        %v5911 = vrot.slane %v3601, 2
        %v5912 = vsel %vm5785, %v5909, %v5911
        %v5913 = vrot.slane %v3602, 2
        %v5914 = vsel %vm5785, %v5911, %v5913
        %v5915 = vrot.slane %v3603, 2
        %v5916 = vsel %vm5785, %v5913, %v5915
        %v5917 = vrot.slane %v3604, 2
        %v5918 = vsel %vm5785, %v5915, %v5917
        %v5919 = vrot.slane %v3605, 2
        %v5920 = vsel %vm5785, %v5917, %v5919
        %v5921 = vrot.slane %v4453, 2
        %v5922 = vsel %vm5785, %v5919, %v5921
        %v5927 = vunpack.c.l.b16 %v5778
        %v5928 = vunpack.c.l.b16 %v5779
        %v5929 = vunpack.c.l.b16 %v5780
        %v5930 = vunpack.c.l.b16 %v5781
        %v5931 = vpack.c.b16 %v5928, %v5927
        %v5932 = vpack.c.b16 %v5930, %v5929
        %v5936 = vsel %vm1223, %v5788, 0
        %v5939 = vsel %vm1223, %v5790, 0
        %v5942 = vsel %vm1223, %v5792, 0
        %v5945 = vsel %vm1223, %v5794, 0
        %v5948 = vsel %vm1223, %v5796, 0
        %v5951 = vsel %vm1223, %v5798, 0
        %v5954 = vsel %vm1223, %v5800, 0
        %v5957 = vsel %vm1223, %v5802, 0
        %v5960 = vsel %vm1223, %v5804, 0
        %v5963 = vsel %vm1223, %v5806, 0
        %v5966 = vsel %vm1223, %v5808, 0
        %v5969 = vsel %vm1223, %v5810, 0
        %v5972 = vsel %vm1223, %v5812, 0
        %v5975 = vsel %vm1223, %v5814, 0
        %v5978 = vsel %vm1223, %v5816, 0
        %v5981 = vsel %vm1223, %v5818, 0
        %v5984 = vsel %vm1223, %v5820, 0
        %v5987 = vsel %vm1223, %v5822, 0
        %v5990 = vsel %vm1223, %v5824, 0
        %v5993 = vsel %vm1223, %v5826, 0
        %v5996 = vsel %vm1223, %v5828, 0
        %v5999 = vsel %vm1223, %v5830, 0
        %v6002 = vsel %vm1223, %v5832, 0
        %v6005 = vsel %vm1223, %v5834, 0
        %v6008 = vsel %vm1223, %v5836, 0
        %v6011 = vsel %vm1223, %v5838, 0
        %v6014 = vsel %vm1223, %v5840, 0
        %v6017 = vsel %vm1223, %v5842, 0
        %v6020 = vsel %vm1223, %v5844, 0
        %v6023 = vsel %vm1223, %v5846, 0
        %v6026 = vsel %vm1223, %v5848, 0
        %v6029 = vsel %vm1223, %v5850, 0
        %v6032 = vsel %vm1223, %v5852, 0
        %v6035 = vsel %vm1223, %v5854, 0
        %v6038 = vsel %vm1223, %v5856, 0
        %v6041 = vsel %vm1223, %v5858, 0
        %v6044 = vsel %vm1223, %v5860, 0
        %v6047 = vsel %vm1223, %v5862, 0
        %v6050 = vsel %vm1223, %v5864, 0
        %v6053 = vsel %vm1223, %v5866, 0
        %v6056 = vsel %vm1223, %v5868, 0
        %v6059 = vsel %vm1223, %v5870, 0
        %v6062 = vsel %vm1223, %v5872, 0
        %v6065 = vsel %vm1223, %v5874, 0
        %v6068 = vsel %vm1223, %v5876, 0
        %v6071 = vsel %vm1223, %v5878, 0
        %v6074 = vsel %vm1223, %v5880, 0
        %v6077 = vsel %vm1223, %v5882, 0
        %v6080 = vsel %vm1223, %v5884, 0
        %v6083 = vsel %vm1223, %v5886, 0
        %v6086 = vsel %vm1223, %v5888, 0
        %v6089 = vsel %vm1223, %v5890, 0
        %v6092 = vsel %vm1223, %v5892, 0
        %v6095 = vsel %vm1223, %v5894, 0
        %v6098 = vsel %vm1223, %v5896, 0
        %v6101 = vsel %vm1223, %v5898, 0
        %v6104 = vsel %vm1223, %v5900, 0
        %v6107 = vsel %vm1223, %v5902, 0
        %v6110 = vsel %vm1223, %v5904, 0
        %v6113 = vsel %vm1223, %v5906, 0
        %v6116 = vsel %vm1223, %v5908, 0
        %v6119 = vsel %vm1223, %v5910, 0
        %v6122 = vsel %vm1223, %v5912, 0
        %v6125 = vsel %vm1223, %v5914, 0
        %v6128 = vsel %vm1223, %v5916, 0
        %v6131 = vsel %vm1223, %v5918, 0
        %v6134 = vsel %vm1223, %v5920, 0
        %v6137 = vsel %vm1223, %v5922, 0
        %6139 = vmatpush.bf16.msra.mxu0 0
        %6140 = vmatpush.bf16.msra.mxu0 0
        %6141 = vmatpush.bf16.msra.mxu0 0
        %6142 = vmatpush.bf16.msra.mxu0 0
        %6143 = vmatpush.bf16.msra.mxu0 0
        %6144 = vmatpush.bf16.msra.mxu0 0
        %6145 = vmatpush.bf16.msra.mxu0 %v5932
        %6146 = vmatpush.bf16.msra.mxu0 %v5931
        %6147 = vmatmul.bf16.gmra.mxu0 %v5936
        %v6148 = vpop.f32.mrf.mxu0
        %v6149 = vadd.f32 0.0, %v6148
        %v6150 = vpop.f32.mrf.mxu0
        %v6151 = vadd.f32 0.0, %v6150
        %6152 = vmatmul.bf16.gmra.mxu0 %v5939
        %v6153 = vpop.f32.mrf.mxu0
        %v6154 = vadd.f32 0.0, %v6153
        %v6155 = vpop.f32.mrf.mxu0
        %v6156 = vadd.f32 0.0, %v6155
        %6157 = vmatmul.bf16.gmra.mxu0 %v5942
        %v6158 = vpop.f32.mrf.mxu0
        %v6159 = vadd.f32 0.0, %v6158
        %v6160 = vpop.f32.mrf.mxu0
        %v6161 = vadd.f32 0.0, %v6160
        %6162 = vmatmul.bf16.gmra.mxu0 %v5945
        %v6163 = vpop.f32.mrf.mxu0
        %v6164 = vadd.f32 0.0, %v6163
        %v6165 = vpop.f32.mrf.mxu0
        %v6166 = vadd.f32 0.0, %v6165
        %6167 = vmatmul.bf16.gmra.mxu0 %v5948
        %v6168 = vpop.f32.mrf.mxu0
        %v6169 = vadd.f32 0.0, %v6168
        %v6170 = vpop.f32.mrf.mxu0
        %v6171 = vadd.f32 0.0, %v6170
        %6172 = vmatmul.bf16.gmra.mxu0 %v5951
        %v6173 = vpop.f32.mrf.mxu0
        %v6174 = vadd.f32 0.0, %v6173
        %v6175 = vpop.f32.mrf.mxu0
        %v6176 = vadd.f32 0.0, %v6175
        %6177 = vmatmul.bf16.gmra.mxu0 %v5954
        %v6178 = vpop.f32.mrf.mxu0
        %v6179 = vadd.f32 0.0, %v6178
        %v6180 = vpop.f32.mrf.mxu0
        %v6181 = vadd.f32 0.0, %v6180
        %6182 = vmatmul.bf16.gmra.mxu0 %v5957
        %v6183 = vpop.f32.mrf.mxu0
        %v6184 = vadd.f32 0.0, %v6183
        %v6185 = vpop.f32.mrf.mxu0
        %v6186 = vadd.f32 0.0, %v6185
        %6187 = vmatmul.bf16.gmra.mxu0 %v5960
        %v6188 = vpop.f32.mrf.mxu0
        %v6189 = vadd.f32 0.0, %v6188
        %v6190 = vpop.f32.mrf.mxu0
        %v6191 = vadd.f32 0.0, %v6190
        %6192 = vmatmul.bf16.gmra.mxu0 %v5963
        %v6193 = vpop.f32.mrf.mxu0
        %v6194 = vadd.f32 0.0, %v6193
        %v6195 = vpop.f32.mrf.mxu0
        %v6196 = vadd.f32 0.0, %v6195
        %6197 = vmatmul.bf16.gmra.mxu0 %v5966
        %v6198 = vpop.f32.mrf.mxu0
        %v6199 = vadd.f32 0.0, %v6198
        %v6200 = vpop.f32.mrf.mxu0
        %v6201 = vadd.f32 0.0, %v6200
        %6202 = vmatmul.bf16.gmra.mxu0 %v5969
        %v6203 = vpop.f32.mrf.mxu0
        %v6204 = vadd.f32 0.0, %v6203
        %v6205 = vpop.f32.mrf.mxu0
        %v6206 = vadd.f32 0.0, %v6205
        %6207 = vmatmul.bf16.gmra.mxu0 %v5972
        %v6208 = vpop.f32.mrf.mxu0
        %v6209 = vadd.f32 0.0, %v6208
        %v6210 = vpop.f32.mrf.mxu0
        %v6211 = vadd.f32 0.0, %v6210
        %6212 = vmatmul.bf16.gmra.mxu0 %v5975
        %v6213 = vpop.f32.mrf.mxu0
        %v6214 = vadd.f32 0.0, %v6213
        %v6215 = vpop.f32.mrf.mxu0
        %v6216 = vadd.f32 0.0, %v6215
        %6217 = vmatmul.bf16.gmra.mxu0 %v5978
        %v6218 = vpop.f32.mrf.mxu0
        %v6219 = vadd.f32 0.0, %v6218
        %v6220 = vpop.f32.mrf.mxu0
        %v6221 = vadd.f32 0.0, %v6220
        %6222 = vmatmul.bf16.gmra.mxu0 %v5981
        %v6223 = vpop.f32.mrf.mxu0
        %v6224 = vadd.f32 0.0, %v6223
        %v6225 = vpop.f32.mrf.mxu0
        %v6226 = vadd.f32 0.0, %v6225
        %6227 = vmatmul.bf16.gmra.mxu0 %v5984
        %v6228 = vpop.f32.mrf.mxu0
        %v6229 = vadd.f32 0.0, %v6228
        %v6230 = vpop.f32.mrf.mxu0
        %v6231 = vadd.f32 0.0, %v6230
        %6232 = vmatmul.bf16.gmra.mxu0 %v5987
        %v6233 = vpop.f32.mrf.mxu0
        %v6234 = vadd.f32 0.0, %v6233
        %v6235 = vpop.f32.mrf.mxu0
        %v6236 = vadd.f32 0.0, %v6235
        %6237 = vmatmul.bf16.gmra.mxu0 %v5990
        %v6238 = vpop.f32.mrf.mxu0
        %v6239 = vadd.f32 0.0, %v6238
        %v6240 = vpop.f32.mrf.mxu0
        %v6241 = vadd.f32 0.0, %v6240
        %6242 = vmatmul.bf16.gmra.mxu0 %v5993
        %v6243 = vpop.f32.mrf.mxu0
        %v6244 = vadd.f32 0.0, %v6243
        %v6245 = vpop.f32.mrf.mxu0
        %v6246 = vadd.f32 0.0, %v6245
        %6247 = vmatmul.bf16.gmra.mxu0 %v5996
        %v6248 = vpop.f32.mrf.mxu0
        %v6249 = vadd.f32 0.0, %v6248
        %v6250 = vpop.f32.mrf.mxu0
        %v6251 = vadd.f32 0.0, %v6250
        %6252 = vmatmul.bf16.gmra.mxu0 %v5999
        %v6253 = vpop.f32.mrf.mxu0
        %v6254 = vadd.f32 0.0, %v6253
        %v6255 = vpop.f32.mrf.mxu0
        %v6256 = vadd.f32 0.0, %v6255
        %6257 = vmatmul.bf16.gmra.mxu0 %v6002
        %v6258 = vpop.f32.mrf.mxu0
        %v6259 = vadd.f32 0.0, %v6258
        %v6260 = vpop.f32.mrf.mxu0
        %v6261 = vadd.f32 0.0, %v6260
        %6262 = vmatmul.bf16.gmra.mxu0 %v6005
        %v6263 = vpop.f32.mrf.mxu0
        %v6264 = vadd.f32 0.0, %v6263
        %v6265 = vpop.f32.mrf.mxu0
        %v6266 = vadd.f32 0.0, %v6265
        %6267 = vmatmul.bf16.gmra.mxu0 %v6008
        %v6268 = vpop.f32.mrf.mxu0
        %v6269 = vadd.f32 0.0, %v6268
        %v6270 = vpop.f32.mrf.mxu0
        %v6271 = vadd.f32 0.0, %v6270
        %6272 = vmatmul.bf16.gmra.mxu0 %v6011
        %v6273 = vpop.f32.mrf.mxu0
        %v6274 = vadd.f32 0.0, %v6273
        %v6275 = vpop.f32.mrf.mxu0
        %v6276 = vadd.f32 0.0, %v6275
        %6277 = vmatmul.bf16.gmra.mxu0 %v6014
        %v6278 = vpop.f32.mrf.mxu0
        %v6279 = vadd.f32 0.0, %v6278
        %v6280 = vpop.f32.mrf.mxu0
        %v6281 = vadd.f32 0.0, %v6280
        %6282 = vmatmul.bf16.gmra.mxu0 %v6017
        %v6283 = vpop.f32.mrf.mxu0
        %v6284 = vadd.f32 0.0, %v6283
        %v6285 = vpop.f32.mrf.mxu0
        %v6286 = vadd.f32 0.0, %v6285
        %6287 = vmatmul.bf16.gmra.mxu0 %v6020
        %v6288 = vpop.f32.mrf.mxu0
        %v6289 = vadd.f32 0.0, %v6288
        %v6290 = vpop.f32.mrf.mxu0
        %v6291 = vadd.f32 0.0, %v6290
        %6292 = vmatmul.bf16.gmra.mxu0 %v6023
        %v6293 = vpop.f32.mrf.mxu0
        %v6294 = vadd.f32 0.0, %v6293
        %v6295 = vpop.f32.mrf.mxu0
        %v6296 = vadd.f32 0.0, %v6295
        %6297 = vmatmul.bf16.gmra.mxu0 %v6026
        %v6298 = vpop.f32.mrf.mxu0
        %v6299 = vadd.f32 0.0, %v6298
        %v6300 = vpop.f32.mrf.mxu0
        %v6301 = vadd.f32 0.0, %v6300
        %6302 = vmatmul.bf16.gmra.mxu0 %v6029
        %v6303 = vpop.f32.mrf.mxu0
        %v6304 = vadd.f32 0.0, %v6303
        %v6305 = vpop.f32.mrf.mxu0
        %v6306 = vadd.f32 0.0, %v6305
        %6307 = vmatmul.bf16.gmra.mxu0 %v6032
        %v6308 = vpop.f32.mrf.mxu0
        %v6309 = vadd.f32 0.0, %v6308
        %v6310 = vpop.f32.mrf.mxu0
        %v6311 = vadd.f32 0.0, %v6310
        %6312 = vmatmul.bf16.gmra.mxu0 %v6035
        %v6313 = vpop.f32.mrf.mxu0
        %v6314 = vadd.f32 0.0, %v6313
        %v6315 = vpop.f32.mrf.mxu0
        %v6316 = vadd.f32 0.0, %v6315
        %6317 = vmatmul.bf16.gmra.mxu0 %v6038
        %v6318 = vpop.f32.mrf.mxu0
        %v6319 = vadd.f32 0.0, %v6318
        %v6320 = vpop.f32.mrf.mxu0
        %v6321 = vadd.f32 0.0, %v6320
        %6322 = vmatmul.bf16.gmra.mxu0 %v6041
        %v6323 = vpop.f32.mrf.mxu0
        %v6324 = vadd.f32 0.0, %v6323
        %v6325 = vpop.f32.mrf.mxu0
        %v6326 = vadd.f32 0.0, %v6325
        %6327 = vmatmul.bf16.gmra.mxu0 %v6044
        %v6328 = vpop.f32.mrf.mxu0
        %v6329 = vadd.f32 0.0, %v6328
        %v6330 = vpop.f32.mrf.mxu0
        %v6331 = vadd.f32 0.0, %v6330
        %6332 = vmatmul.bf16.gmra.mxu0 %v6047
        %v6333 = vpop.f32.mrf.mxu0
        %v6334 = vadd.f32 0.0, %v6333
        %v6335 = vpop.f32.mrf.mxu0
        %v6336 = vadd.f32 0.0, %v6335
        %6337 = vmatmul.bf16.gmra.mxu0 %v6050
        %v6338 = vpop.f32.mrf.mxu0
        %v6339 = vadd.f32 0.0, %v6338
        %v6340 = vpop.f32.mrf.mxu0
        %v6341 = vadd.f32 0.0, %v6340
        %6342 = vmatmul.bf16.gmra.mxu0 %v6053
        %v6343 = vpop.f32.mrf.mxu0
        %v6344 = vadd.f32 0.0, %v6343
        %v6345 = vpop.f32.mrf.mxu0
        %v6346 = vadd.f32 0.0, %v6345
        %6347 = vmatmul.bf16.gmra.mxu0 %v6056
        %v6348 = vpop.f32.mrf.mxu0
        %v6349 = vadd.f32 0.0, %v6348
        %v6350 = vpop.f32.mrf.mxu0
        %v6351 = vadd.f32 0.0, %v6350
        %6352 = vmatmul.bf16.gmra.mxu0 %v6059
        %v6353 = vpop.f32.mrf.mxu0
        %v6354 = vadd.f32 0.0, %v6353
        %v6355 = vpop.f32.mrf.mxu0
        %v6356 = vadd.f32 0.0, %v6355
        %6357 = vmatmul.bf16.gmra.mxu0 %v6062
        %v6358 = vpop.f32.mrf.mxu0
        %v6359 = vadd.f32 0.0, %v6358
        %v6360 = vpop.f32.mrf.mxu0
        %v6361 = vadd.f32 0.0, %v6360
        %6362 = vmatmul.bf16.gmra.mxu0 %v6065
        %v6363 = vpop.f32.mrf.mxu0
        %v6364 = vadd.f32 0.0, %v6363
        %v6365 = vpop.f32.mrf.mxu0
        %v6366 = vadd.f32 0.0, %v6365
        %6367 = vmatmul.bf16.gmra.mxu0 %v6068
        %v6368 = vpop.f32.mrf.mxu0
        %v6369 = vadd.f32 0.0, %v6368
        %v6370 = vpop.f32.mrf.mxu0
        %v6371 = vadd.f32 0.0, %v6370
        %6372 = vmatmul.bf16.gmra.mxu0 %v6071
        %v6373 = vpop.f32.mrf.mxu0
        %v6374 = vadd.f32 0.0, %v6373
        %v6375 = vpop.f32.mrf.mxu0
        %v6376 = vadd.f32 0.0, %v6375
        %6377 = vmatmul.bf16.gmra.mxu0 %v6074
        %v6378 = vpop.f32.mrf.mxu0
        %v6379 = vadd.f32 0.0, %v6378
        %v6380 = vpop.f32.mrf.mxu0
        %v6381 = vadd.f32 0.0, %v6380
        %6382 = vmatmul.bf16.gmra.mxu0 %v6077
        %v6383 = vpop.f32.mrf.mxu0
        %v6384 = vadd.f32 0.0, %v6383
        %v6385 = vpop.f32.mrf.mxu0
        %v6386 = vadd.f32 0.0, %v6385
        %6387 = vmatmul.bf16.gmra.mxu0 %v6080
        %v6388 = vpop.f32.mrf.mxu0
        %v6389 = vadd.f32 0.0, %v6388
        %v6390 = vpop.f32.mrf.mxu0
        %v6391 = vadd.f32 0.0, %v6390
        %6392 = vmatmul.bf16.gmra.mxu0 %v6083
        %v6393 = vpop.f32.mrf.mxu0
        %v6394 = vadd.f32 0.0, %v6393
        %v6395 = vpop.f32.mrf.mxu0
        %v6396 = vadd.f32 0.0, %v6395
        %6397 = vmatmul.bf16.gmra.mxu0 %v6086
        %v6398 = vpop.f32.mrf.mxu0
        %v6399 = vadd.f32 0.0, %v6398
        %v6400 = vpop.f32.mrf.mxu0
        %v6401 = vadd.f32 0.0, %v6400
        %6402 = vmatmul.bf16.gmra.mxu0 %v6089
        %v6403 = vpop.f32.mrf.mxu0
        %v6404 = vadd.f32 0.0, %v6403
        %v6405 = vpop.f32.mrf.mxu0
        %v6406 = vadd.f32 0.0, %v6405
        %6407 = vmatmul.bf16.gmra.mxu0 %v6092
        %v6408 = vpop.f32.mrf.mxu0
        %v6409 = vadd.f32 0.0, %v6408
        %v6410 = vpop.f32.mrf.mxu0
        %v6411 = vadd.f32 0.0, %v6410
        %6412 = vmatmul.bf16.gmra.mxu0 %v6095
        %v6413 = vpop.f32.mrf.mxu0
        %v6414 = vadd.f32 0.0, %v6413
        %v6415 = vpop.f32.mrf.mxu0
        %v6416 = vadd.f32 0.0, %v6415
        %6417 = vmatmul.bf16.gmra.mxu0 %v6098
        %v6418 = vpop.f32.mrf.mxu0
        %v6419 = vadd.f32 0.0, %v6418
        %v6420 = vpop.f32.mrf.mxu0
        %v6421 = vadd.f32 0.0, %v6420
        %6422 = vmatmul.bf16.gmra.mxu0 %v6101
        %v6423 = vpop.f32.mrf.mxu0
        %v6424 = vadd.f32 0.0, %v6423
        %v6425 = vpop.f32.mrf.mxu0
        %v6426 = vadd.f32 0.0, %v6425
        %6427 = vmatmul.bf16.gmra.mxu0 %v6104
        %v6428 = vpop.f32.mrf.mxu0
        %v6429 = vadd.f32 0.0, %v6428
        %v6430 = vpop.f32.mrf.mxu0
        %v6431 = vadd.f32 0.0, %v6430
        %6432 = vmatmul.bf16.gmra.mxu0 %v6107
        %v6433 = vpop.f32.mrf.mxu0
        %v6434 = vadd.f32 0.0, %v6433
        %v6435 = vpop.f32.mrf.mxu0
        %v6436 = vadd.f32 0.0, %v6435
        %6437 = vmatmul.bf16.gmra.mxu0 %v6110
        %v6438 = vpop.f32.mrf.mxu0
        %v6439 = vadd.f32 0.0, %v6438
        %v6440 = vpop.f32.mrf.mxu0
        %v6441 = vadd.f32 0.0, %v6440
        %6442 = vmatmul.bf16.gmra.mxu0 %v6113
        %v6443 = vpop.f32.mrf.mxu0
        %v6444 = vadd.f32 0.0, %v6443
        %v6445 = vpop.f32.mrf.mxu0
        %v6446 = vadd.f32 0.0, %v6445
        %6447 = vmatmul.bf16.gmra.mxu0 %v6116
        %v6448 = vpop.f32.mrf.mxu0
        %v6449 = vadd.f32 0.0, %v6448
        %v6450 = vpop.f32.mrf.mxu0
        %v6451 = vadd.f32 0.0, %v6450
        %6452 = vmatmul.bf16.gmra.mxu0 %v6119
        %v6453 = vpop.f32.mrf.mxu0
        %v6454 = vadd.f32 0.0, %v6453
        %v6455 = vpop.f32.mrf.mxu0
        %v6456 = vadd.f32 0.0, %v6455
        %6457 = vmatmul.bf16.gmra.mxu0 %v6122
        %v6458 = vpop.f32.mrf.mxu0
        %v6459 = vadd.f32 0.0, %v6458
        %v6460 = vpop.f32.mrf.mxu0
        %v6461 = vadd.f32 0.0, %v6460
        %6462 = vmatmul.bf16.gmra.mxu0 %v6125
        %v6463 = vpop.f32.mrf.mxu0
        %v6464 = vadd.f32 0.0, %v6463
        %v6465 = vpop.f32.mrf.mxu0
        %v6466 = vadd.f32 0.0, %v6465
        %6467 = vmatmul.bf16.gmra.mxu0 %v6128
        %v6468 = vpop.f32.mrf.mxu0
        %v6469 = vadd.f32 0.0, %v6468
        %v6470 = vpop.f32.mrf.mxu0
        %v6471 = vadd.f32 0.0, %v6470
        %6472 = vmatmul.bf16.gmra.mxu0 %v6131
        %v6473 = vpop.f32.mrf.mxu0
        %v6474 = vadd.f32 0.0, %v6473
        %v6475 = vpop.f32.mrf.mxu0
        %v6476 = vadd.f32 0.0, %v6475
        %6477 = vmatmul.bf16.gmra.mxu0 %v6134
        %v6478 = vpop.f32.mrf.mxu0
        %v6479 = vadd.f32 0.0, %v6478
        %v6480 = vpop.f32.mrf.mxu0
        %v6481 = vadd.f32 0.0, %v6480
        %6482 = vmatmul.bf16.gmra.mxu0 %v6137
        %v6483 = vpop.f32.mrf.mxu0
        %v6484 = vadd.f32 0.0, %v6483
        %v6485 = vpop.f32.mrf.mxu0
        %v6486 = vadd.f32 0.0, %v6485
        %6487 = vdwg.mxu0
        %v6488 = vadd.f32 %v5640, %v6149
        %v6489 = vadd.f32 %v5641, %v6151
        %v6490 = vadd.f32 %v5642, %v6154
        %v6491 = vadd.f32 %v5643, %v6156
        %v6492 = vadd.f32 %v5644, %v6159
        %v6493 = vadd.f32 %v5645, %v6161
        %v6494 = vadd.f32 %v5646, %v6164
        %v6495 = vadd.f32 %v5647, %v6166
        %v6496 = vadd.f32 %v5648, %v6169
        %v6497 = vadd.f32 %v5649, %v6171
        %v6498 = vadd.f32 %v5650, %v6174
        %v6499 = vadd.f32 %v5651, %v6176
        %v6500 = vadd.f32 %v5652, %v6179
        %v6501 = vadd.f32 %v5653, %v6181
        %v6502 = vadd.f32 %v5654, %v6184
        %v6503 = vadd.f32 %v5655, %v6186
        %v6504 = vadd.f32 %v5656, %v6189
        %v6505 = vadd.f32 %v5657, %v6191
        %v6506 = vadd.f32 %v5658, %v6194
        %v6507 = vadd.f32 %v5659, %v6196
        %v6508 = vadd.f32 %v5660, %v6199
        %v6509 = vadd.f32 %v5661, %v6201
        %v6510 = vadd.f32 %v5662, %v6204
        %v6511 = vadd.f32 %v5663, %v6206
        %v6512 = vadd.f32 %v5664, %v6209
        %v6513 = vadd.f32 %v5665, %v6211
        %v6514 = vadd.f32 %v5666, %v6214
        %v6515 = vadd.f32 %v5667, %v6216
        %v6516 = vadd.f32 %v5668, %v6219
        %v6517 = vadd.f32 %v5669, %v6221
        %v6518 = vadd.f32 %v5670, %v6224
        %v6519 = vadd.f32 %v5671, %v6226
        %v6520 = vadd.f32 %v5672, %v6229
        %v6521 = vadd.f32 %v5673, %v6231
        %v6522 = vadd.f32 %v5674, %v6234
        %v6523 = vadd.f32 %v5675, %v6236
        %v6524 = vadd.f32 %v5676, %v6239
        %v6525 = vadd.f32 %v5677, %v6241
        %v6526 = vadd.f32 %v5678, %v6244
        %v6527 = vadd.f32 %v5679, %v6246
        %v6528 = vadd.f32 %v5680, %v6249
        %v6529 = vadd.f32 %v5681, %v6251
        %v6530 = vadd.f32 %v5682, %v6254
        %v6531 = vadd.f32 %v5683, %v6256
        %v6532 = vadd.f32 %v5684, %v6259
        %v6533 = vadd.f32 %v5685, %v6261
        %v6534 = vadd.f32 %v5686, %v6264
        %v6535 = vadd.f32 %v5687, %v6266
        %v6536 = vadd.f32 %v5688, %v6269
        %v6537 = vadd.f32 %v5689, %v6271
        %v6538 = vadd.f32 %v5690, %v6274
        %v6539 = vadd.f32 %v5691, %v6276
        %v6540 = vadd.f32 %v5692, %v6279
        %v6541 = vadd.f32 %v5693, %v6281
        %v6542 = vadd.f32 %v5694, %v6284
        %v6543 = vadd.f32 %v5695, %v6286
        %v6544 = vadd.f32 %v5696, %v6289
        %v6545 = vadd.f32 %v5697, %v6291
        %v6546 = vadd.f32 %v5698, %v6294
        %v6547 = vadd.f32 %v5699, %v6296
        %v6548 = vadd.f32 %v5700, %v6299
        %v6549 = vadd.f32 %v5701, %v6301
        %v6550 = vadd.f32 %v5702, %v6304
        %v6551 = vadd.f32 %v5703, %v6306
        %v6552 = vadd.f32 %v5704, %v6309
        %v6553 = vadd.f32 %v5705, %v6311
        %v6554 = vadd.f32 %v5706, %v6314
        %v6555 = vadd.f32 %v5707, %v6316
        %v6556 = vadd.f32 %v5708, %v6319
        %v6557 = vadd.f32 %v5709, %v6321
        %v6558 = vadd.f32 %v5710, %v6324
        %v6559 = vadd.f32 %v5711, %v6326
        %v6560 = vadd.f32 %v5712, %v6329
        %v6561 = vadd.f32 %v5713, %v6331
        %v6562 = vadd.f32 %v5714, %v6334
        %v6563 = vadd.f32 %v5715, %v6336
        %v6564 = vadd.f32 %v5716, %v6339
        %v6565 = vadd.f32 %v5717, %v6341
        %v6566 = vadd.f32 %v5718, %v6344
        %v6567 = vadd.f32 %v5719, %v6346
        %v6568 = vadd.f32 %v5720, %v6349
        %v6569 = vadd.f32 %v5721, %v6351
        %v6570 = vadd.f32 %v5722, %v6354
        %v6571 = vadd.f32 %v5723, %v6356
        %v6572 = vadd.f32 %v5724, %v6359
        %v6573 = vadd.f32 %v5725, %v6361
        %v6574 = vadd.f32 %v5726, %v6364
        %v6575 = vadd.f32 %v5727, %v6366
        %v6576 = vadd.f32 %v5728, %v6369
        %v6577 = vadd.f32 %v5729, %v6371
        %v6578 = vadd.f32 %v5730, %v6374
        %v6579 = vadd.f32 %v5731, %v6376
        %v6580 = vadd.f32 %v5732, %v6379
        %v6581 = vadd.f32 %v5733, %v6381
        %v6582 = vadd.f32 %v5734, %v6384
        %v6583 = vadd.f32 %v5735, %v6386
        %v6584 = vadd.f32 %v5736, %v6389
        %v6585 = vadd.f32 %v5737, %v6391
        %v6586 = vadd.f32 %v5738, %v6394
        %v6587 = vadd.f32 %v5739, %v6396
        %v6588 = vadd.f32 %v5740, %v6399
        %v6589 = vadd.f32 %v5741, %v6401
        %v6590 = vadd.f32 %v5742, %v6404
        %v6591 = vadd.f32 %v5743, %v6406
        %v6592 = vadd.f32 %v5744, %v6409
        %v6593 = vadd.f32 %v5745, %v6411
        %v6594 = vadd.f32 %v5746, %v6414
        %v6595 = vadd.f32 %v5747, %v6416
        %v6596 = vadd.f32 %v5748, %v6419
        %v6597 = vadd.f32 %v5749, %v6421
        %v6598 = vadd.f32 %v5750, %v6424
        %v6599 = vadd.f32 %v5751, %v6426
        %v6600 = vadd.f32 %v5752, %v6429
        %v6601 = vadd.f32 %v5753, %v6431
        %v6602 = vadd.f32 %v5754, %v6434
        %v6603 = vadd.f32 %v5755, %v6436
        %v6604 = vadd.f32 %v5756, %v6439
        %v6605 = vadd.f32 %v5757, %v6441
        %v6606 = vadd.f32 %v5758, %v6444
        %v6607 = vadd.f32 %v5759, %v6446
        %v6608 = vadd.f32 %v5760, %v6449
        %v6609 = vadd.f32 %v5761, %v6451
        %v6610 = vadd.f32 %v5762, %v6454
        %v6611 = vadd.f32 %v5763, %v6456
        %v6612 = vadd.f32 %v5764, %v6459
        %v6613 = vadd.f32 %v5765, %v6461
        %v6614 = vadd.f32 %v5766, %v6464
        %v6615 = vadd.f32 %v5767, %v6466
        %v6616 = vadd.f32 %v5768, %v6469
        %v6617 = vadd.f32 %v5769, %v6471
        %v6618 = vadd.f32 %v5770, %v6474
        %v6619 = vadd.f32 %v5771, %v6476
        %v6620 = vadd.f32 %v5772, %v6479
        %v6621 = vadd.f32 %v5773, %v6481
        %v6622 = vadd.f32 %v5774, %v6484
        %v6623 = vadd.f32 %v5775, %v6486
        %v6624 = vld [vmem:[%s169 + $0x20] sm:$0xc]
        %v6625 = vld [vmem:[%s169 + $0x24] sm:$0xf]
        %v6626 = vld [vmem:[%s169 + $0x28] sm:$0xf]
        %v6627 = vld [vmem:[%s169 + $0x2c] sm:$0xf]
        %v6628 = vld [vmem:[%s169 + $0x30] sm:$0xf]
        %v6629 = vld [vmem:[%s169 + $0x34] sm:$0xf]
        %v6630 = vld [vmem:[%s169 + $0x38] sm:$0xf]
        %v6631 = vld [vmem:[%s169 + $0x3c] sm:$0xf]
        %v6632 = vld [vmem:[%s169 + $0x40] sm:$0xf]
        %v6633 = vld [vmem:[%s169 + $0x44] sm:$0xf]
        %v6634 = vld [vmem:[%s169 + $0x48] sm:$0xf]
        %v6635 = vld [vmem:[%s169 + $0x4c] sm:$0xf]
        %v6636 = vld [vmem:[%s169 + $0x50] sm:$0xf]
        %v6637 = vld [vmem:[%s169 + $0x54] sm:$0xf]
        %v6638 = vld [vmem:[%s169 + $0x58] sm:$0xf]
        %v6639 = vld [vmem:[%s169 + $0x5c] sm:$0xf]
        %v6640 = vld [vmem:[%s169 + $0x60] sm:$0xf]
        %v6641 = vld [vmem:[%s169 + $0x64] sm:$0xf]
        %v6642 = vld [vmem:[%s169 + $0x68] sm:$0xf]
        %v6643 = vld [vmem:[%s169 + $0x6c] sm:$0xf]
        %v6644 = vld [vmem:[%s169 + $0x70] sm:$0xf]
        %v6645 = vld [vmem:[%s169 + $0x74] sm:$0xf]
        %v6646 = vld [vmem:[%s169 + $0x78] sm:$0xf]
        %v6647 = vld [vmem:[%s169 + $0x7c] sm:$0xf]
        %v6648 = vld [vmem:[%s169 + $0x80] sm:$0xf]
        %v6649 = vld [vmem:[%s169 + $0x84] sm:$0xf]
        %v6650 = vld [vmem:[%s169 + $0x88] sm:$0xf]
        %v6651 = vld [vmem:[%s169 + $0x8c] sm:$0xf]
        %v6652 = vld [vmem:[%s169 + $0x90] sm:$0xf]
        %v6653 = vld [vmem:[%s169 + $0x94] sm:$0xf]
        %v6654 = vld [vmem:[%s169 + $0x98] sm:$0xf]
        %v6655 = vld [vmem:[%s169 + $0x9c] sm:$0xf]
        %v6656 = vld [vmem:[%s169 + $0xa0] sm:$0xf]
        %v6657 = vld [vmem:[%s169 + $0xa4] sm:$0xf]
        %v6658 = vld [vmem:[%s169 + $0xa8] sm:$0xf]
        %v6659 = vld [vmem:[%s169 + $0xac] sm:$0xf]
        %v6660 = vld [vmem:[%s169 + $0xb0] sm:$0xf]
        %v6661 = vld [vmem:[%s169 + $0xb4] sm:$0xf]
        %v6662 = vld [vmem:[%s169 + $0xb8] sm:$0xf]
        %v6663 = vld [vmem:[%s169 + $0xbc] sm:$0xf]
        %v6664 = vld [vmem:[%s169 + $0xc0] sm:$0xf]
        %v6665 = vld [vmem:[%s169 + $0xc4] sm:$0xf]
        %v6666 = vld [vmem:[%s169 + $0xc8] sm:$0xf]
        %v6667 = vld [vmem:[%s169 + $0xcc] sm:$0xf]
        %v6668 = vld [vmem:[%s169 + $0xd0] sm:$0xf]
        %v6669 = vld [vmem:[%s169 + $0xd4] sm:$0xf]
        %v6670 = vld [vmem:[%s169 + $0xd8] sm:$0xf]
        %v6671 = vld [vmem:[%s169 + $0xdc] sm:$0xf]
        %v6672 = vld [vmem:[%s169 + $0xe0] sm:$0xf]
        %v6673 = vld [vmem:[%s169 + $0xe4] sm:$0xf]
        %v6674 = vld [vmem:[%s169 + $0xe8] sm:$0xf]
        %v6675 = vld [vmem:[%s169 + $0xec] sm:$0xf]
        %v6676 = vld [vmem:[%s169 + $0xf0] sm:$0xf]
        %v6677 = vld [vmem:[%s169 + $0xf4] sm:$0xf]
        %v6678 = vld [vmem:[%s169 + $0xf8] sm:$0xf]
        %v6679 = vld [vmem:[%s169 + $0xfc] sm:$0xf]
        %v6680 = vld [vmem:[%s169 + $0x100] sm:$0xf]
        %v6681 = vld [vmem:[%s169 + $0x104] sm:$0xf]
        %v6682 = vld [vmem:[%s169 + $0x108] sm:$0xf]
        %v6683 = vld [vmem:[%s169 + $0x10c] sm:$0xf]
        %v6684 = vld [vmem:[%s169 + $0x110] sm:$0xf]
        %v6685 = vld [vmem:[%s169 + $0x114] sm:$0xf]
        %v6686 = vld [vmem:[%s169 + $0x118] sm:$0xf]
        %v6687 = vld [vmem:[%s169 + $0x11c] sm:$0xf]
        %v6688 = vld [vmem:[%s169 + $0x120] sm:$0xf]
        %v6689 = vld [vmem:[%s169 + $0x124] sm:$0xf]
        %v6690 = vld [vmem:[%s169 + $0x128] sm:$0xf]
        %v6691 = vld [vmem:[%s169 + $0x12c] sm:$0xf]
        %v6692 = vld [vmem:[%s169 + $0x130] sm:$0xf]
        %v6693 = vld [vmem:[%s169 + $0x134] sm:$0xf]
        %v6694 = vld [vmem:[%s169 + $0x138] sm:$0xf]
        %v6695 = vld [vmem:[%s169 + $0x13c] sm:$0xf]
        %v6696 = vld [vmem:[%s169 + $0x140] sm:$0xf]
        %v6697 = vld [vmem:[%s169 + $0x144] sm:$0xf]
        %v6698 = vld [vmem:[%s169 + $0x148] sm:$0xf]
        %v6699 = vld [vmem:[%s169 + $0x14c] sm:$0xf]
        %v6700 = vld [vmem:[%s169 + $0x150] sm:$0xf]
        %v6701 = vld [vmem:[%s169 + $0x154] sm:$0xf]
        %v6702 = vld [vmem:[%s169 + $0x158] sm:$0xf]
        %v6703 = vld [vmem:[%s169 + $0x15c] sm:$0xf]
        %v6704 = vld [vmem:[%s169 + $0x160] sm:$0xf]
        %v6705 = vld [vmem:[%s169 + $0x164] sm:$0xf]
        %v6706 = vld [vmem:[%s169 + $0x168] sm:$0xf]
        %v6707 = vld [vmem:[%s169 + $0x16c] sm:$0xf]
        %v6708 = vld [vmem:[%s169 + $0x170] sm:$0xf]
        %v6709 = vld [vmem:[%s169 + $0x174] sm:$0xf]
        %v6710 = vld [vmem:[%s169 + $0x178] sm:$0xf]
        %v6711 = vld [vmem:[%s169 + $0x17c] sm:$0xf]
        %v6712 = vld [vmem:[%s169 + $0x180] sm:$0xf]
        %v6713 = vld [vmem:[%s169 + $0x184] sm:$0xf]
        %v6714 = vld [vmem:[%s169 + $0x188] sm:$0xf]
        %v6715 = vld [vmem:[%s169 + $0x18c] sm:$0xf]
        %v6716 = vld [vmem:[%s169 + $0x190] sm:$0xf]
        %v6717 = vld [vmem:[%s169 + $0x194] sm:$0xf]
        %v6718 = vld [vmem:[%s169 + $0x198] sm:$0xf]
        %v6719 = vld [vmem:[%s169 + $0x19c] sm:$0xf]
        %v6720 = vld [vmem:[%s169 + $0x1a0] sm:$0xf]
        %v6721 = vld [vmem:[%s169 + $0x1a4] sm:$0xf]
        %v6722 = vld [vmem:[%s169 + $0x1a8] sm:$0xf]
        %v6723 = vld [vmem:[%s169 + $0x1ac] sm:$0xf]
        %v6724 = vld [vmem:[%s169 + $0x1b0] sm:$0xf]
        %v6725 = vld [vmem:[%s169 + $0x1b4] sm:$0xf]
        %v6726 = vld [vmem:[%s169 + $0x1b8] sm:$0xf]
        %v6727 = vld [vmem:[%s169 + $0x1bc] sm:$0xf]
        %v6728 = vld [vmem:[%s169 + $0x1c0] sm:$0xf]
        %v6729 = vld [vmem:[%s169 + $0x1c4] sm:$0xf]
        %v6730 = vld [vmem:[%s169 + $0x1c8] sm:$0xf]
        %v6731 = vld [vmem:[%s169 + $0x1cc] sm:$0xf]
        %v6732 = vld [vmem:[%s169 + $0x1d0] sm:$0xf]
        %v6733 = vld [vmem:[%s169 + $0x1d4] sm:$0xf]
        %v6734 = vld [vmem:[%s169 + $0x1d8] sm:$0xf]
        %v6735 = vld [vmem:[%s169 + $0x1dc] sm:$0xf]
        %v6736 = vld [vmem:[%s169 + $0x1e0] sm:$0xf]
        %v6737 = vld [vmem:[%s169 + $0x1e4] sm:$0xf]
        %v6738 = vld [vmem:[%s169 + $0x1e8] sm:$0xf]
        %v6739 = vld [vmem:[%s169 + $0x1ec] sm:$0xf]
        %v6740 = vld [vmem:[%s169 + $0x1f0] sm:$0xf]
        %v6741 = vld [vmem:[%s169 + $0x1f4] sm:$0xf]
        %v6742 = vld [vmem:[%s169 + $0x1f8] sm:$0xf]
        %v6743 = vld [vmem:[%s169 + $0x1fc] sm:$0xf]
        %v6744 = vld [vmem:[%s169 + $0x200] sm:$0xf]
        %v6745 = vld [vmem:[%s169 + $0x204] sm:$0xf]
        %v6746 = vld [vmem:[%s169 + $0x208] sm:$0xf]
        %v6747 = vld [vmem:[%s169 + $0x20c] sm:$0xf]
        %v6748 = vld [vmem:[%s169 + $0x210] sm:$0xf]
        %v6749 = vld [vmem:[%s169 + $0x214] sm:$0xf]
        %v6750 = vld [vmem:[%s169 + $0x218] sm:$0xf]
        %v6751 = vld [vmem:[%s169 + $0x21c] sm:$0xf]
        %v6752 = vld [vmem:[%s169 + $0x220] sm:$0xf]
        %v6753 = vld [vmem:[%s169 + $0x224] sm:$0xf]
        %v6754 = vld [vmem:[%s169 + $0x228] sm:$0xf]
        %v6755 = vld [vmem:[%s169 + $0x22c] sm:$0xf]
        %v6756 = vld [vmem:[%s169 + $0x230] sm:$0xf]
        %v6757 = vld [vmem:[%s169 + $0x234] sm:$0xf]
        %v6758 = vld [vmem:[%s169 + $0x238] sm:$0xf]
        %v6759 = vld [vmem:[%s169 + $0x23c] sm:$0xf]
        %v6760 = vld [vmem:[%s169 + $0x240] sm:$0x3]
        %s6761 = scalar_lea.vmem %s1, 96
        %v6762 = vld [vmem:[%s6761] sm:$0xf]
        %v6763 = vld [vmem:[%s6761 + $0x4] sm:$0xf]
        %v6764 = vld [vmem:[%s6761 + $0x8] sm:$0xf]
        %v6765 = vld [vmem:[%s6761 + $0xc] sm:$0xf]
        %v6903 = vunpack.c.l.b16 %v6624
        %v6904 = vunpack.c.l.b16 %v6625
        %v6905 = vunpack.c.l.b16 %v6626
        %v6906 = vunpack.c.l.b16 %v6627
        %v6907 = vunpack.c.l.b16 %v6628
        %v6908 = vunpack.c.l.b16 %v6629
        %v6909 = vunpack.c.l.b16 %v6630
        %v6910 = vunpack.c.l.b16 %v6631
        %v6911 = vunpack.c.l.b16 %v6632
        %v6912 = vunpack.c.l.b16 %v6633
        %v6913 = vunpack.c.l.b16 %v6634
        %v6914 = vunpack.c.l.b16 %v6635
        %v6915 = vunpack.c.l.b16 %v6636
        %v6916 = vunpack.c.l.b16 %v6637
        %v6917 = vunpack.c.l.b16 %v6638
        %v6918 = vunpack.c.l.b16 %v6639
        %v6919 = vunpack.c.l.b16 %v6640
        %v6920 = vunpack.c.l.b16 %v6641
        %v6921 = vunpack.c.l.b16 %v6642
        %v6922 = vunpack.c.l.b16 %v6643
        %v6923 = vunpack.c.l.b16 %v6644
        %v6924 = vunpack.c.l.b16 %v6645
        %v6925 = vunpack.c.l.b16 %v6646
        %v6926 = vunpack.c.l.b16 %v6647
        %v6927 = vunpack.c.l.b16 %v6648
        %v6928 = vunpack.c.l.b16 %v6649
        %v6929 = vunpack.c.l.b16 %v6650
        %v6930 = vunpack.c.l.b16 %v6651
        %v6931 = vunpack.c.l.b16 %v6652
        %v6932 = vunpack.c.l.b16 %v6653
        %v6933 = vunpack.c.l.b16 %v6654
        %v6934 = vunpack.c.l.b16 %v6655
        %v6935 = vunpack.c.l.b16 %v6656
        %v6936 = vunpack.c.l.b16 %v6657
        %v6937 = vunpack.c.l.b16 %v6658
        %v6938 = vunpack.c.l.b16 %v6659
        %v6939 = vunpack.c.l.b16 %v6660
        %v6940 = vunpack.c.l.b16 %v6661
        %v6941 = vunpack.c.l.b16 %v6662
        %v6942 = vunpack.c.l.b16 %v6663
        %v6943 = vunpack.c.l.b16 %v6664
        %v6944 = vunpack.c.l.b16 %v6665
        %v6945 = vunpack.c.l.b16 %v6666
        %v6946 = vunpack.c.l.b16 %v6667
        %v6947 = vunpack.c.l.b16 %v6668
        %v6948 = vunpack.c.l.b16 %v6669
        %v6949 = vunpack.c.l.b16 %v6670
        %v6950 = vunpack.c.l.b16 %v6671
        %v6951 = vunpack.c.l.b16 %v6672
        %v6952 = vunpack.c.l.b16 %v6673
        %v6953 = vunpack.c.l.b16 %v6674
        %v6954 = vunpack.c.l.b16 %v6675
        %v6955 = vunpack.c.l.b16 %v6676
        %v6956 = vunpack.c.l.b16 %v6677
        %v6957 = vunpack.c.l.b16 %v6678
        %v6958 = vunpack.c.l.b16 %v6679
        %v6959 = vunpack.c.l.b16 %v6680
        %v6960 = vunpack.c.l.b16 %v6681
        %v6961 = vunpack.c.l.b16 %v6682
        %v6962 = vunpack.c.l.b16 %v6683
        %v6963 = vunpack.c.l.b16 %v6684
        %v6964 = vunpack.c.l.b16 %v6685
        %v6965 = vunpack.c.l.b16 %v6686
        %v6966 = vunpack.c.l.b16 %v6687
        %v6967 = vunpack.c.l.b16 %v6688
        %v6968 = vunpack.c.l.b16 %v6689
        %v6969 = vunpack.c.l.b16 %v6690
        %v6970 = vunpack.c.l.b16 %v6691
        %v6971 = vunpack.c.l.b16 %v6692
        %v6972 = vunpack.c.l.b16 %v6693
        %v6973 = vunpack.c.l.b16 %v6694
        %v6974 = vunpack.c.l.b16 %v6695
        %v6975 = vunpack.c.l.b16 %v6696
        %v6976 = vunpack.c.l.b16 %v6697
        %v6977 = vunpack.c.l.b16 %v6698
        %v6978 = vunpack.c.l.b16 %v6699
        %v6979 = vunpack.c.l.b16 %v6700
        %v6980 = vunpack.c.l.b16 %v6701
        %v6981 = vunpack.c.l.b16 %v6702
        %v6982 = vunpack.c.l.b16 %v6703
        %v6983 = vunpack.c.l.b16 %v6704
        %v6984 = vunpack.c.l.b16 %v6705
        %v6985 = vunpack.c.l.b16 %v6706
        %v6986 = vunpack.c.l.b16 %v6707
        %v6987 = vunpack.c.l.b16 %v6708
        %v6988 = vunpack.c.l.b16 %v6709
        %v6989 = vunpack.c.l.b16 %v6710
        %v6990 = vunpack.c.l.b16 %v6711
        %v6991 = vunpack.c.l.b16 %v6712
        %v6992 = vunpack.c.l.b16 %v6713
        %v6993 = vunpack.c.l.b16 %v6714
        %v6994 = vunpack.c.l.b16 %v6715
        %v6995 = vunpack.c.l.b16 %v6716
        %v6996 = vunpack.c.l.b16 %v6717
        %v6997 = vunpack.c.l.b16 %v6718
        %v6998 = vunpack.c.l.b16 %v6719
        %v6999 = vunpack.c.l.b16 %v6720
        %v7000 = vunpack.c.l.b16 %v6721
        %v7001 = vunpack.c.l.b16 %v6722
        %v7002 = vunpack.c.l.b16 %v6723
        %v7003 = vunpack.c.l.b16 %v6724
        %v7004 = vunpack.c.l.b16 %v6725
        %v7005 = vunpack.c.l.b16 %v6726
        %v7006 = vunpack.c.l.b16 %v6727
        %v7007 = vunpack.c.l.b16 %v6728
        %v7008 = vunpack.c.l.b16 %v6729
        %v7009 = vunpack.c.l.b16 %v6730
        %v7010 = vunpack.c.l.b16 %v6731
        %v7011 = vunpack.c.l.b16 %v6732
        %v7012 = vunpack.c.l.b16 %v6733
        %v7013 = vunpack.c.l.b16 %v6734
        %v7014 = vunpack.c.l.b16 %v6735
        %v7015 = vunpack.c.l.b16 %v6736
        %v7016 = vunpack.c.l.b16 %v6737
        %v7017 = vunpack.c.l.b16 %v6738
        %v7018 = vunpack.c.l.b16 %v6739
        %v7019 = vunpack.c.l.b16 %v6740
        %v7020 = vunpack.c.l.b16 %v6741
        %v7021 = vunpack.c.l.b16 %v6742
        %v7022 = vunpack.c.l.b16 %v6743
        %v7023 = vunpack.c.l.b16 %v6744
        %v7024 = vunpack.c.l.b16 %v6745
        %v7025 = vunpack.c.l.b16 %v6746
        %v7026 = vunpack.c.l.b16 %v6747
        %v7027 = vunpack.c.l.b16 %v6748
        %v7028 = vunpack.c.l.b16 %v6749
        %v7029 = vunpack.c.l.b16 %v6750
        %v7030 = vunpack.c.l.b16 %v6751
        %v7031 = vunpack.c.l.b16 %v6752
        %v7032 = vunpack.c.l.b16 %v6753
        %v7033 = vunpack.c.l.b16 %v6754
        %v7034 = vunpack.c.l.b16 %v6755
        %v7035 = vunpack.c.l.b16 %v6756
        %v7036 = vunpack.c.l.b16 %v6757
        %v7037 = vunpack.c.l.b16 %v6758
        %v7038 = vunpack.c.l.b16 %v6759
        %v7039 = vunpack.c.l.b16 %v6760
        %v7040 = vpack.c.b16 %v6904, %v6903
        %v7041 = vpack.c.b16 %v6906, %v6905
        %v7042 = vpack.c.b16 %v6908, %v6907
        %v7043 = vpack.c.b16 %v6910, %v6909
        %v7044 = vpack.c.b16 %v6912, %v6911
        %v7045 = vpack.c.b16 %v6914, %v6913
        %v7046 = vpack.c.b16 %v6916, %v6915
        %v7047 = vpack.c.b16 %v6918, %v6917
        %v7048 = vpack.c.b16 %v6920, %v6919
        %v7049 = vpack.c.b16 %v6922, %v6921
        %v7050 = vpack.c.b16 %v6924, %v6923
        %v7051 = vpack.c.b16 %v6926, %v6925
        %v7052 = vpack.c.b16 %v6928, %v6927
        %v7053 = vpack.c.b16 %v6930, %v6929
        %v7054 = vpack.c.b16 %v6932, %v6931
        %v7055 = vpack.c.b16 %v6934, %v6933
        %v7056 = vpack.c.b16 %v6936, %v6935
        %v7057 = vpack.c.b16 %v6938, %v6937
        %v7058 = vpack.c.b16 %v6940, %v6939
        %v7059 = vpack.c.b16 %v6942, %v6941
        %v7060 = vpack.c.b16 %v6944, %v6943
        %v7061 = vpack.c.b16 %v6946, %v6945
        %v7062 = vpack.c.b16 %v6948, %v6947
        %v7063 = vpack.c.b16 %v6950, %v6949
        %v7064 = vpack.c.b16 %v6952, %v6951
        %v7065 = vpack.c.b16 %v6954, %v6953
        %v7066 = vpack.c.b16 %v6956, %v6955
        %v7067 = vpack.c.b16 %v6958, %v6957
        %v7068 = vpack.c.b16 %v6960, %v6959
        %v7069 = vpack.c.b16 %v6962, %v6961
        %v7070 = vpack.c.b16 %v6964, %v6963
        %v7071 = vpack.c.b16 %v6966, %v6965
        %v7072 = vpack.c.b16 %v6968, %v6967
        %v7073 = vpack.c.b16 %v6970, %v6969
        %v7074 = vpack.c.b16 %v6972, %v6971
        %v7075 = vpack.c.b16 %v6974, %v6973
        %v7076 = vpack.c.b16 %v6976, %v6975
        %v7077 = vpack.c.b16 %v6978, %v6977
        %v7078 = vpack.c.b16 %v6980, %v6979
        %v7079 = vpack.c.b16 %v6982, %v6981
        %v7080 = vpack.c.b16 %v6984, %v6983
        %v7081 = vpack.c.b16 %v6986, %v6985
        %v7082 = vpack.c.b16 %v6988, %v6987
        %v7083 = vpack.c.b16 %v6990, %v6989
        %v7084 = vpack.c.b16 %v6992, %v6991
        %v7085 = vpack.c.b16 %v6994, %v6993
        %v7086 = vpack.c.b16 %v6996, %v6995
        %v7087 = vpack.c.b16 %v6998, %v6997
        %v7088 = vpack.c.b16 %v7000, %v6999
        %v7089 = vpack.c.b16 %v7002, %v7001
        %v7090 = vpack.c.b16 %v7004, %v7003
        %v7091 = vpack.c.b16 %v7006, %v7005
        %v7092 = vpack.c.b16 %v7008, %v7007
        %v7093 = vpack.c.b16 %v7010, %v7009
        %v7094 = vpack.c.b16 %v7012, %v7011
        %v7095 = vpack.c.b16 %v7014, %v7013
        %v7096 = vpack.c.b16 %v7016, %v7015
        %v7097 = vpack.c.b16 %v7018, %v7017
        %v7098 = vpack.c.b16 %v7020, %v7019
        %v7099 = vpack.c.b16 %v7022, %v7021
        %v7100 = vpack.c.b16 %v7024, %v7023
        %v7101 = vpack.c.b16 %v7026, %v7025
        %v7102 = vpack.c.b16 %v7028, %v7027
        %v7103 = vpack.c.b16 %v7030, %v7029
        %v7104 = vpack.c.b16 %v7032, %v7031
        %v7105 = vpack.c.b16 %v7034, %v7033
        %v7106 = vpack.c.b16 %v7036, %v7035
        %v7107 = vpack.c.b16 %v7038, %v7037
        %v7108 = vpack.c.b16 %v7039, %v7039
        %v7109 = vrot.slane %v7040, 2
        %v7110 = vrot.slane %v7041, 2
        %v7111 = vsel %vm5785, %v7109, %v7110
        %v7112 = vrot.slane %v7042, 2
        %v7113 = vsel %vm5785, %v7110, %v7112
        %v7114 = vrot.slane %v7043, 2
        %v7115 = vsel %vm5785, %v7112, %v7114
        %v7116 = vrot.slane %v7044, 2
        %v7117 = vsel %vm5785, %v7114, %v7116
        %v7118 = vrot.slane %v7045, 2
        %v7119 = vsel %vm5785, %v7116, %v7118
        %v7120 = vrot.slane %v7046, 2
        %v7121 = vsel %vm5785, %v7118, %v7120
        %v7122 = vrot.slane %v7047, 2
        %v7123 = vsel %vm5785, %v7120, %v7122
        %v7124 = vrot.slane %v7048, 2
        %v7125 = vsel %vm5785, %v7122, %v7124
        %v7126 = vrot.slane %v7049, 2
        %v7127 = vsel %vm5785, %v7124, %v7126
        %v7128 = vrot.slane %v7050, 2
        %v7129 = vsel %vm5785, %v7126, %v7128
        %v7130 = vrot.slane %v7051, 2
        %v7131 = vsel %vm5785, %v7128, %v7130
        %v7132 = vrot.slane %v7052, 2
        %v7133 = vsel %vm5785, %v7130, %v7132
        %v7134 = vrot.slane %v7053, 2
        %v7135 = vsel %vm5785, %v7132, %v7134
        %v7136 = vrot.slane %v7054, 2
        %v7137 = vsel %vm5785, %v7134, %v7136
        %v7138 = vrot.slane %v7055, 2
        %v7139 = vsel %vm5785, %v7136, %v7138
        %v7140 = vrot.slane %v7056, 2
        %v7141 = vsel %vm5785, %v7138, %v7140
        %v7142 = vrot.slane %v7057, 2
        %v7143 = vsel %vm5785, %v7140, %v7142
        %v7144 = vrot.slane %v7058, 2
        %v7145 = vsel %vm5785, %v7142, %v7144
        %v7146 = vrot.slane %v7059, 2
        %v7147 = vsel %vm5785, %v7144, %v7146
        %v7148 = vrot.slane %v7060, 2
        %v7149 = vsel %vm5785, %v7146, %v7148
        %v7150 = vrot.slane %v7061, 2
        %v7151 = vsel %vm5785, %v7148, %v7150
        %v7152 = vrot.slane %v7062, 2
        %v7153 = vsel %vm5785, %v7150, %v7152
        %v7154 = vrot.slane %v7063, 2
        %v7155 = vsel %vm5785, %v7152, %v7154
        %v7156 = vrot.slane %v7064, 2
        %v7157 = vsel %vm5785, %v7154, %v7156
        %v7158 = vrot.slane %v7065, 2
        %v7159 = vsel %vm5785, %v7156, %v7158
        %v7160 = vrot.slane %v7066, 2
        %v7161 = vsel %vm5785, %v7158, %v7160
        %v7162 = vrot.slane %v7067, 2
        %v7163 = vsel %vm5785, %v7160, %v7162
        %v7164 = vrot.slane %v7068, 2
        %v7165 = vsel %vm5785, %v7162, %v7164
        %v7166 = vrot.slane %v7069, 2
        %v7167 = vsel %vm5785, %v7164, %v7166
        %v7168 = vrot.slane %v7070, 2
        %v7169 = vsel %vm5785, %v7166, %v7168
        %v7170 = vrot.slane %v7071, 2
        %v7171 = vsel %vm5785, %v7168, %v7170
        %v7172 = vrot.slane %v7072, 2
        %v7173 = vsel %vm5785, %v7170, %v7172
        %v7174 = vrot.slane %v7073, 2
        %v7175 = vsel %vm5785, %v7172, %v7174
        %v7176 = vrot.slane %v7074, 2
        %v7177 = vsel %vm5785, %v7174, %v7176
        %v7178 = vrot.slane %v7075, 2
        %v7179 = vsel %vm5785, %v7176, %v7178
        %v7180 = vrot.slane %v7076, 2
        %v7181 = vsel %vm5785, %v7178, %v7180
        %v7182 = vrot.slane %v7077, 2
        %v7183 = vsel %vm5785, %v7180, %v7182
        %v7184 = vrot.slane %v7078, 2
        %v7185 = vsel %vm5785, %v7182, %v7184
        %v7186 = vrot.slane %v7079, 2
        %v7187 = vsel %vm5785, %v7184, %v7186
        %v7188 = vrot.slane %v7080, 2
        %v7189 = vsel %vm5785, %v7186, %v7188
        %v7190 = vrot.slane %v7081, 2
        %v7191 = vsel %vm5785, %v7188, %v7190
        %v7192 = vrot.slane %v7082, 2
        %v7193 = vsel %vm5785, %v7190, %v7192
        %v7194 = vrot.slane %v7083, 2
        %v7195 = vsel %vm5785, %v7192, %v7194
        %v7196 = vrot.slane %v7084, 2
        %v7197 = vsel %vm5785, %v7194, %v7196
        %v7198 = vrot.slane %v7085, 2
        %v7199 = vsel %vm5785, %v7196, %v7198
        %v7200 = vrot.slane %v7086, 2
        %v7201 = vsel %vm5785, %v7198, %v7200
        %v7202 = vrot.slane %v7087, 2
        %v7203 = vsel %vm5785, %v7200, %v7202
        %v7204 = vrot.slane %v7088, 2
        %v7205 = vsel %vm5785, %v7202, %v7204
        %v7206 = vrot.slane %v7089, 2
        %v7207 = vsel %vm5785, %v7204, %v7206
        %v7208 = vrot.slane %v7090, 2
        %v7209 = vsel %vm5785, %v7206, %v7208
        %v7210 = vrot.slane %v7091, 2
        %v7211 = vsel %vm5785, %v7208, %v7210
        %v7212 = vrot.slane %v7092, 2
        %v7213 = vsel %vm5785, %v7210, %v7212
        %v7214 = vrot.slane %v7093, 2
        %v7215 = vsel %vm5785, %v7212, %v7214
        %v7216 = vrot.slane %v7094, 2
        %v7217 = vsel %vm5785, %v7214, %v7216
        %v7218 = vrot.slane %v7095, 2
        %v7219 = vsel %vm5785, %v7216, %v7218
        %v7220 = vrot.slane %v7096, 2
        %v7221 = vsel %vm5785, %v7218, %v7220
        %v7222 = vrot.slane %v7097, 2
        %v7223 = vsel %vm5785, %v7220, %v7222
        %v7224 = vrot.slane %v7098, 2
        %v7225 = vsel %vm5785, %v7222, %v7224
        %v7226 = vrot.slane %v7099, 2
        %v7227 = vsel %vm5785, %v7224, %v7226
        %v7228 = vrot.slane %v7100, 2
        %v7229 = vsel %vm5785, %v7226, %v7228
        %v7230 = vrot.slane %v7101, 2
        %v7231 = vsel %vm5785, %v7228, %v7230
        %v7232 = vrot.slane %v7102, 2
        %v7233 = vsel %vm5785, %v7230, %v7232
        %v7234 = vrot.slane %v7103, 2
        %v7235 = vsel %vm5785, %v7232, %v7234
        %v7236 = vrot.slane %v7104, 2
        %v7237 = vsel %vm5785, %v7234, %v7236
        %v7238 = vrot.slane %v7105, 2
        %v7239 = vsel %vm5785, %v7236, %v7238
        %v7240 = vrot.slane %v7106, 2
        %v7241 = vsel %vm5785, %v7238, %v7240
        %v7242 = vrot.slane %v7107, 2
        %v7243 = vsel %vm5785, %v7240, %v7242
        %v7244 = vrot.slane %v7108, 2
        %v7245 = vsel %vm5785, %v7242, %v7244
        %v7250 = vunpack.c.l.b16 %v6762
        %v7251 = vunpack.c.l.b16 %v6763
        %v7252 = vunpack.c.l.b16 %v6764
        %v7253 = vunpack.c.l.b16 %v6765
        %v7254 = vpack.c.b16 %v7251, %v7250
        %v7255 = vpack.c.b16 %v7253, %v7252
        %v7259 = vsel %vm1223, %v7111, 0
        %v7262 = vsel %vm1223, %v7113, 0
        %v7265 = vsel %vm1223, %v7115, 0
        %v7268 = vsel %vm1223, %v7117, 0
        %v7271 = vsel %vm1223, %v7119, 0
        %v7274 = vsel %vm1223, %v7121, 0
        %v7277 = vsel %vm1223, %v7123, 0
        %v7280 = vsel %vm1223, %v7125, 0
        %v7283 = vsel %vm1223, %v7127, 0
        %v7286 = vsel %vm1223, %v7129, 0
        %v7289 = vsel %vm1223, %v7131, 0
        %v7292 = vsel %vm1223, %v7133, 0
        %v7295 = vsel %vm1223, %v7135, 0
        %v7298 = vsel %vm1223, %v7137, 0
        %v7301 = vsel %vm1223, %v7139, 0
        %v7304 = vsel %vm1223, %v7141, 0
        %v7307 = vsel %vm1223, %v7143, 0
        %v7310 = vsel %vm1223, %v7145, 0
        %v7313 = vsel %vm1223, %v7147, 0
        %v7316 = vsel %vm1223, %v7149, 0
        %v7319 = vsel %vm1223, %v7151, 0
        %v7322 = vsel %vm1223, %v7153, 0
        %v7325 = vsel %vm1223, %v7155, 0
        %v7328 = vsel %vm1223, %v7157, 0
        %v7331 = vsel %vm1223, %v7159, 0
        %v7334 = vsel %vm1223, %v7161, 0
        %v7337 = vsel %vm1223, %v7163, 0
        %v7340 = vsel %vm1223, %v7165, 0
        %v7343 = vsel %vm1223, %v7167, 0
        %v7346 = vsel %vm1223, %v7169, 0
        %v7349 = vsel %vm1223, %v7171, 0
        %v7352 = vsel %vm1223, %v7173, 0
        %v7355 = vsel %vm1223, %v7175, 0
        %v7358 = vsel %vm1223, %v7177, 0
        %v7361 = vsel %vm1223, %v7179, 0
        %v7364 = vsel %vm1223, %v7181, 0
        %v7367 = vsel %vm1223, %v7183, 0
        %v7370 = vsel %vm1223, %v7185, 0
        %v7373 = vsel %vm1223, %v7187, 0
        %v7376 = vsel %vm1223, %v7189, 0
        %v7379 = vsel %vm1223, %v7191, 0
        %v7382 = vsel %vm1223, %v7193, 0
        %v7385 = vsel %vm1223, %v7195, 0
        %v7388 = vsel %vm1223, %v7197, 0
        %v7391 = vsel %vm1223, %v7199, 0
        %v7394 = vsel %vm1223, %v7201, 0
        %v7397 = vsel %vm1223, %v7203, 0
        %v7400 = vsel %vm1223, %v7205, 0
        %v7403 = vsel %vm1223, %v7207, 0
        %v7406 = vsel %vm1223, %v7209, 0
        %v7409 = vsel %vm1223, %v7211, 0
        %v7412 = vsel %vm1223, %v7213, 0
        %v7415 = vsel %vm1223, %v7215, 0
        %v7418 = vsel %vm1223, %v7217, 0
        %v7421 = vsel %vm1223, %v7219, 0
        %v7424 = vsel %vm1223, %v7221, 0
        %v7427 = vsel %vm1223, %v7223, 0
        %v7430 = vsel %vm1223, %v7225, 0
        %v7433 = vsel %vm1223, %v7227, 0
        %v7436 = vsel %vm1223, %v7229, 0
        %v7439 = vsel %vm1223, %v7231, 0
        %v7442 = vsel %vm1223, %v7233, 0
        %v7445 = vsel %vm1223, %v7235, 0
        %v7448 = vsel %vm1223, %v7237, 0
        %v7451 = vsel %vm1223, %v7239, 0
        %v7454 = vsel %vm1223, %v7241, 0
        %v7457 = vsel %vm1223, %v7243, 0
        %v7460 = vsel %vm1223, %v7245, 0
        %7462 = vmatpush.bf16.msra.mxu0 0
        %7463 = vmatpush.bf16.msra.mxu0 0
        %7464 = vmatpush.bf16.msra.mxu0 0
        %7465 = vmatpush.bf16.msra.mxu0 0
        %7466 = vmatpush.bf16.msra.mxu0 0
        %7467 = vmatpush.bf16.msra.mxu0 0
        %7468 = vmatpush.bf16.msra.mxu0 %v7255
        %7469 = vmatpush.bf16.msra.mxu0 %v7254
        %7470 = vmatmul.bf16.gmra.mxu0 %v7259
        %v7471 = vpop.f32.mrf.mxu0
        %v7472 = vadd.f32 0.0, %v7471
        %v7473 = vpop.f32.mrf.mxu0
        %v7474 = vadd.f32 0.0, %v7473
        %7475 = vmatmul.bf16.gmra.mxu0 %v7262
        %v7476 = vpop.f32.mrf.mxu0
        %v7477 = vadd.f32 0.0, %v7476
        %v7478 = vpop.f32.mrf.mxu0
        %v7479 = vadd.f32 0.0, %v7478
        %7480 = vmatmul.bf16.gmra.mxu0 %v7265
        %v7481 = vpop.f32.mrf.mxu0
        %v7482 = vadd.f32 0.0, %v7481
        %v7483 = vpop.f32.mrf.mxu0
        %v7484 = vadd.f32 0.0, %v7483
        %7485 = vmatmul.bf16.gmra.mxu0 %v7268
        %v7486 = vpop.f32.mrf.mxu0
        %v7487 = vadd.f32 0.0, %v7486
        %v7488 = vpop.f32.mrf.mxu0
        %v7489 = vadd.f32 0.0, %v7488
        %7490 = vmatmul.bf16.gmra.mxu0 %v7271
        %v7491 = vpop.f32.mrf.mxu0
        %v7492 = vadd.f32 0.0, %v7491
        %v7493 = vpop.f32.mrf.mxu0
        %v7494 = vadd.f32 0.0, %v7493
        %7495 = vmatmul.bf16.gmra.mxu0 %v7274
        %v7496 = vpop.f32.mrf.mxu0
        %v7497 = vadd.f32 0.0, %v7496
        %v7498 = vpop.f32.mrf.mxu0
        %v7499 = vadd.f32 0.0, %v7498
        %7500 = vmatmul.bf16.gmra.mxu0 %v7277
        %v7501 = vpop.f32.mrf.mxu0
        %v7502 = vadd.f32 0.0, %v7501
        %v7503 = vpop.f32.mrf.mxu0
        %v7504 = vadd.f32 0.0, %v7503
        %7505 = vmatmul.bf16.gmra.mxu0 %v7280
        %v7506 = vpop.f32.mrf.mxu0
        %v7507 = vadd.f32 0.0, %v7506
        %v7508 = vpop.f32.mrf.mxu0
        %v7509 = vadd.f32 0.0, %v7508
        %7510 = vmatmul.bf16.gmra.mxu0 %v7283
        %v7511 = vpop.f32.mrf.mxu0
        %v7512 = vadd.f32 0.0, %v7511
        %v7513 = vpop.f32.mrf.mxu0
        %v7514 = vadd.f32 0.0, %v7513
        %7515 = vmatmul.bf16.gmra.mxu0 %v7286
        %v7516 = vpop.f32.mrf.mxu0
        %v7517 = vadd.f32 0.0, %v7516
        %v7518 = vpop.f32.mrf.mxu0
        %v7519 = vadd.f32 0.0, %v7518
        %7520 = vmatmul.bf16.gmra.mxu0 %v7289
        %v7521 = vpop.f32.mrf.mxu0
        %v7522 = vadd.f32 0.0, %v7521
        %v7523 = vpop.f32.mrf.mxu0
        %v7524 = vadd.f32 0.0, %v7523
        %7525 = vmatmul.bf16.gmra.mxu0 %v7292
        %v7526 = vpop.f32.mrf.mxu0
        %v7527 = vadd.f32 0.0, %v7526
        %v7528 = vpop.f32.mrf.mxu0
        %v7529 = vadd.f32 0.0, %v7528
        %7530 = vmatmul.bf16.gmra.mxu0 %v7295
        %v7531 = vpop.f32.mrf.mxu0
        %v7532 = vadd.f32 0.0, %v7531
        %v7533 = vpop.f32.mrf.mxu0
        %v7534 = vadd.f32 0.0, %v7533
        %7535 = vmatmul.bf16.gmra.mxu0 %v7298
        %v7536 = vpop.f32.mrf.mxu0
        %v7537 = vadd.f32 0.0, %v7536
        %v7538 = vpop.f32.mrf.mxu0
        %v7539 = vadd.f32 0.0, %v7538
        %7540 = vmatmul.bf16.gmra.mxu0 %v7301
        %v7541 = vpop.f32.mrf.mxu0
        %v7542 = vadd.f32 0.0, %v7541
        %v7543 = vpop.f32.mrf.mxu0
        %v7544 = vadd.f32 0.0, %v7543
        %7545 = vmatmul.bf16.gmra.mxu0 %v7304
        %v7546 = vpop.f32.mrf.mxu0
        %v7547 = vadd.f32 0.0, %v7546
        %v7548 = vpop.f32.mrf.mxu0
        %v7549 = vadd.f32 0.0, %v7548
        %7550 = vmatmul.bf16.gmra.mxu0 %v7307
        %v7551 = vpop.f32.mrf.mxu0
        %v7552 = vadd.f32 0.0, %v7551
        %v7553 = vpop.f32.mrf.mxu0
        %v7554 = vadd.f32 0.0, %v7553
        %7555 = vmatmul.bf16.gmra.mxu0 %v7310
        %v7556 = vpop.f32.mrf.mxu0
        %v7557 = vadd.f32 0.0, %v7556
        %v7558 = vpop.f32.mrf.mxu0
        %v7559 = vadd.f32 0.0, %v7558
        %7560 = vmatmul.bf16.gmra.mxu0 %v7313
        %v7561 = vpop.f32.mrf.mxu0
        %v7562 = vadd.f32 0.0, %v7561
        %v7563 = vpop.f32.mrf.mxu0
        %v7564 = vadd.f32 0.0, %v7563
        %7565 = vmatmul.bf16.gmra.mxu0 %v7316
        %v7566 = vpop.f32.mrf.mxu0
        %v7567 = vadd.f32 0.0, %v7566
        %v7568 = vpop.f32.mrf.mxu0
        %v7569 = vadd.f32 0.0, %v7568
        %7570 = vmatmul.bf16.gmra.mxu0 %v7319
        %v7571 = vpop.f32.mrf.mxu0
        %v7572 = vadd.f32 0.0, %v7571
        %v7573 = vpop.f32.mrf.mxu0
        %v7574 = vadd.f32 0.0, %v7573
        %7575 = vmatmul.bf16.gmra.mxu0 %v7322
        %v7576 = vpop.f32.mrf.mxu0
        %v7577 = vadd.f32 0.0, %v7576
        %v7578 = vpop.f32.mrf.mxu0
        %v7579 = vadd.f32 0.0, %v7578
        %7580 = vmatmul.bf16.gmra.mxu0 %v7325
        %v7581 = vpop.f32.mrf.mxu0
        %v7582 = vadd.f32 0.0, %v7581
        %v7583 = vpop.f32.mrf.mxu0
        %v7584 = vadd.f32 0.0, %v7583
        %7585 = vmatmul.bf16.gmra.mxu0 %v7328
        %v7586 = vpop.f32.mrf.mxu0
        %v7587 = vadd.f32 0.0, %v7586
        %v7588 = vpop.f32.mrf.mxu0
        %v7589 = vadd.f32 0.0, %v7588
        %7590 = vmatmul.bf16.gmra.mxu0 %v7331
        %v7591 = vpop.f32.mrf.mxu0
        %v7592 = vadd.f32 0.0, %v7591
        %v7593 = vpop.f32.mrf.mxu0
        %v7594 = vadd.f32 0.0, %v7593
        %7595 = vmatmul.bf16.gmra.mxu0 %v7334
        %v7596 = vpop.f32.mrf.mxu0
        %v7597 = vadd.f32 0.0, %v7596
        %v7598 = vpop.f32.mrf.mxu0
        %v7599 = vadd.f32 0.0, %v7598
        %7600 = vmatmul.bf16.gmra.mxu0 %v7337
        %v7601 = vpop.f32.mrf.mxu0
        %v7602 = vadd.f32 0.0, %v7601
        %v7603 = vpop.f32.mrf.mxu0
        %v7604 = vadd.f32 0.0, %v7603
        %7605 = vmatmul.bf16.gmra.mxu0 %v7340
        %v7606 = vpop.f32.mrf.mxu0
        %v7607 = vadd.f32 0.0, %v7606
        %v7608 = vpop.f32.mrf.mxu0
        %v7609 = vadd.f32 0.0, %v7608
        %7610 = vmatmul.bf16.gmra.mxu0 %v7343
        %v7611 = vpop.f32.mrf.mxu0
        %v7612 = vadd.f32 0.0, %v7611
        %v7613 = vpop.f32.mrf.mxu0
        %v7614 = vadd.f32 0.0, %v7613
        %7615 = vmatmul.bf16.gmra.mxu0 %v7346
        %v7616 = vpop.f32.mrf.mxu0
        %v7617 = vadd.f32 0.0, %v7616
        %v7618 = vpop.f32.mrf.mxu0
        %v7619 = vadd.f32 0.0, %v7618
        %7620 = vmatmul.bf16.gmra.mxu0 %v7349
        %v7621 = vpop.f32.mrf.mxu0
        %v7622 = vadd.f32 0.0, %v7621
        %v7623 = vpop.f32.mrf.mxu0
        %v7624 = vadd.f32 0.0, %v7623
        %7625 = vmatmul.bf16.gmra.mxu0 %v7352
        %v7626 = vpop.f32.mrf.mxu0
        %v7627 = vadd.f32 0.0, %v7626
        %v7628 = vpop.f32.mrf.mxu0
        %v7629 = vadd.f32 0.0, %v7628
        %7630 = vmatmul.bf16.gmra.mxu0 %v7355
        %v7631 = vpop.f32.mrf.mxu0
        %v7632 = vadd.f32 0.0, %v7631
        %v7633 = vpop.f32.mrf.mxu0
        %v7634 = vadd.f32 0.0, %v7633
        %7635 = vmatmul.bf16.gmra.mxu0 %v7358
        %v7636 = vpop.f32.mrf.mxu0
        %v7637 = vadd.f32 0.0, %v7636
        %v7638 = vpop.f32.mrf.mxu0
        %v7639 = vadd.f32 0.0, %v7638
        %7640 = vmatmul.bf16.gmra.mxu0 %v7361
        %v7641 = vpop.f32.mrf.mxu0
        %v7642 = vadd.f32 0.0, %v7641
        %v7643 = vpop.f32.mrf.mxu0
        %v7644 = vadd.f32 0.0, %v7643
        %7645 = vmatmul.bf16.gmra.mxu0 %v7364
        %v7646 = vpop.f32.mrf.mxu0
        %v7647 = vadd.f32 0.0, %v7646
        %v7648 = vpop.f32.mrf.mxu0
        %v7649 = vadd.f32 0.0, %v7648
        %7650 = vmatmul.bf16.gmra.mxu0 %v7367
        %v7651 = vpop.f32.mrf.mxu0
        %v7652 = vadd.f32 0.0, %v7651
        %v7653 = vpop.f32.mrf.mxu0
        %v7654 = vadd.f32 0.0, %v7653
        %7655 = vmatmul.bf16.gmra.mxu0 %v7370
        %v7656 = vpop.f32.mrf.mxu0
        %v7657 = vadd.f32 0.0, %v7656
        %v7658 = vpop.f32.mrf.mxu0
        %v7659 = vadd.f32 0.0, %v7658
        %7660 = vmatmul.bf16.gmra.mxu0 %v7373
        %v7661 = vpop.f32.mrf.mxu0
        %v7662 = vadd.f32 0.0, %v7661
        %v7663 = vpop.f32.mrf.mxu0
        %v7664 = vadd.f32 0.0, %v7663
        %7665 = vmatmul.bf16.gmra.mxu0 %v7376
        %v7666 = vpop.f32.mrf.mxu0
        %v7667 = vadd.f32 0.0, %v7666
        %v7668 = vpop.f32.mrf.mxu0
        %v7669 = vadd.f32 0.0, %v7668
        %7670 = vmatmul.bf16.gmra.mxu0 %v7379
        %v7671 = vpop.f32.mrf.mxu0
        %v7672 = vadd.f32 0.0, %v7671
        %v7673 = vpop.f32.mrf.mxu0
        %v7674 = vadd.f32 0.0, %v7673
        %7675 = vmatmul.bf16.gmra.mxu0 %v7382
        %v7676 = vpop.f32.mrf.mxu0
        %v7677 = vadd.f32 0.0, %v7676
        %v7678 = vpop.f32.mrf.mxu0
        %v7679 = vadd.f32 0.0, %v7678
        %7680 = vmatmul.bf16.gmra.mxu0 %v7385
        %v7681 = vpop.f32.mrf.mxu0
        %v7682 = vadd.f32 0.0, %v7681
        %v7683 = vpop.f32.mrf.mxu0
        %v7684 = vadd.f32 0.0, %v7683
        %7685 = vmatmul.bf16.gmra.mxu0 %v7388
        %v7686 = vpop.f32.mrf.mxu0
        %v7687 = vadd.f32 0.0, %v7686
        %v7688 = vpop.f32.mrf.mxu0
        %v7689 = vadd.f32 0.0, %v7688
        %7690 = vmatmul.bf16.gmra.mxu0 %v7391
        %v7691 = vpop.f32.mrf.mxu0
        %v7692 = vadd.f32 0.0, %v7691
        %v7693 = vpop.f32.mrf.mxu0
        %v7694 = vadd.f32 0.0, %v7693
        %7695 = vmatmul.bf16.gmra.mxu0 %v7394
        %v7696 = vpop.f32.mrf.mxu0
        %v7697 = vadd.f32 0.0, %v7696
        %v7698 = vpop.f32.mrf.mxu0
        %v7699 = vadd.f32 0.0, %v7698
        %7700 = vmatmul.bf16.gmra.mxu0 %v7397
        %v7701 = vpop.f32.mrf.mxu0
        %v7702 = vadd.f32 0.0, %v7701
        %v7703 = vpop.f32.mrf.mxu0
        %v7704 = vadd.f32 0.0, %v7703
        %7705 = vmatmul.bf16.gmra.mxu0 %v7400
        %v7706 = vpop.f32.mrf.mxu0
        %v7707 = vadd.f32 0.0, %v7706
        %v7708 = vpop.f32.mrf.mxu0
        %v7709 = vadd.f32 0.0, %v7708
        %7710 = vmatmul.bf16.gmra.mxu0 %v7403
        %v7711 = vpop.f32.mrf.mxu0
        %v7712 = vadd.f32 0.0, %v7711
        %v7713 = vpop.f32.mrf.mxu0
        %v7714 = vadd.f32 0.0, %v7713
        %7715 = vmatmul.bf16.gmra.mxu0 %v7406
        %v7716 = vpop.f32.mrf.mxu0
        %v7717 = vadd.f32 0.0, %v7716
        %v7718 = vpop.f32.mrf.mxu0
        %v7719 = vadd.f32 0.0, %v7718
        %7720 = vmatmul.bf16.gmra.mxu0 %v7409
        %v7721 = vpop.f32.mrf.mxu0
        %v7722 = vadd.f32 0.0, %v7721
        %v7723 = vpop.f32.mrf.mxu0
        %v7724 = vadd.f32 0.0, %v7723
        %7725 = vmatmul.bf16.gmra.mxu0 %v7412
        %v7726 = vpop.f32.mrf.mxu0
        %v7727 = vadd.f32 0.0, %v7726
        %v7728 = vpop.f32.mrf.mxu0
        %v7729 = vadd.f32 0.0, %v7728
        %7730 = vmatmul.bf16.gmra.mxu0 %v7415
        %v7731 = vpop.f32.mrf.mxu0
        %v7732 = vadd.f32 0.0, %v7731
        %v7733 = vpop.f32.mrf.mxu0
        %v7734 = vadd.f32 0.0, %v7733
        %7735 = vmatmul.bf16.gmra.mxu0 %v7418
        %v7736 = vpop.f32.mrf.mxu0
        %v7737 = vadd.f32 0.0, %v7736
        %v7738 = vpop.f32.mrf.mxu0
        %v7739 = vadd.f32 0.0, %v7738
        %7740 = vmatmul.bf16.gmra.mxu0 %v7421
        %v7741 = vpop.f32.mrf.mxu0
        %v7742 = vadd.f32 0.0, %v7741
        %v7743 = vpop.f32.mrf.mxu0
        %v7744 = vadd.f32 0.0, %v7743
        %7745 = vmatmul.bf16.gmra.mxu0 %v7424
        %v7746 = vpop.f32.mrf.mxu0
        %v7747 = vadd.f32 0.0, %v7746
        %v7748 = vpop.f32.mrf.mxu0
        %v7749 = vadd.f32 0.0, %v7748
        %7750 = vmatmul.bf16.gmra.mxu0 %v7427
        %v7751 = vpop.f32.mrf.mxu0
        %v7752 = vadd.f32 0.0, %v7751
        %v7753 = vpop.f32.mrf.mxu0
        %v7754 = vadd.f32 0.0, %v7753
        %7755 = vmatmul.bf16.gmra.mxu0 %v7430
        %v7756 = vpop.f32.mrf.mxu0
        %v7757 = vadd.f32 0.0, %v7756
        %v7758 = vpop.f32.mrf.mxu0
        %v7759 = vadd.f32 0.0, %v7758
        %7760 = vmatmul.bf16.gmra.mxu0 %v7433
        %v7761 = vpop.f32.mrf.mxu0
        %v7762 = vadd.f32 0.0, %v7761
        %v7763 = vpop.f32.mrf.mxu0
        %v7764 = vadd.f32 0.0, %v7763
        %7765 = vmatmul.bf16.gmra.mxu0 %v7436
        %v7766 = vpop.f32.mrf.mxu0
        %v7767 = vadd.f32 0.0, %v7766
        %v7768 = vpop.f32.mrf.mxu0
        %v7769 = vadd.f32 0.0, %v7768
        %7770 = vmatmul.bf16.gmra.mxu0 %v7439
        %v7771 = vpop.f32.mrf.mxu0
        %v7772 = vadd.f32 0.0, %v7771
        %v7773 = vpop.f32.mrf.mxu0
        %v7774 = vadd.f32 0.0, %v7773
        %7775 = vmatmul.bf16.gmra.mxu0 %v7442
        %v7776 = vpop.f32.mrf.mxu0
        %v7777 = vadd.f32 0.0, %v7776
        %v7778 = vpop.f32.mrf.mxu0
        %v7779 = vadd.f32 0.0, %v7778
        %7780 = vmatmul.bf16.gmra.mxu0 %v7445
        %v7781 = vpop.f32.mrf.mxu0
        %v7782 = vadd.f32 0.0, %v7781
        %v7783 = vpop.f32.mrf.mxu0
        %v7784 = vadd.f32 0.0, %v7783
        %7785 = vmatmul.bf16.gmra.mxu0 %v7448
        %v7786 = vpop.f32.mrf.mxu0
        %v7787 = vadd.f32 0.0, %v7786
        %v7788 = vpop.f32.mrf.mxu0
        %v7789 = vadd.f32 0.0, %v7788
        %7790 = vmatmul.bf16.gmra.mxu0 %v7451
        %v7791 = vpop.f32.mrf.mxu0
        %v7792 = vadd.f32 0.0, %v7791
        %v7793 = vpop.f32.mrf.mxu0
        %v7794 = vadd.f32 0.0, %v7793
        %7795 = vmatmul.bf16.gmra.mxu0 %v7454
        %v7796 = vpop.f32.mrf.mxu0
        %v7797 = vadd.f32 0.0, %v7796
        %v7798 = vpop.f32.mrf.mxu0
        %v7799 = vadd.f32 0.0, %v7798
        %7800 = vmatmul.bf16.gmra.mxu0 %v7457
        %v7801 = vpop.f32.mrf.mxu0
        %v7802 = vadd.f32 0.0, %v7801
        %v7803 = vpop.f32.mrf.mxu0
        %v7804 = vadd.f32 0.0, %v7803
        %7805 = vmatmul.bf16.gmra.mxu0 %v7460
        %v7806 = vpop.f32.mrf.mxu0
        %v7807 = vadd.f32 0.0, %v7806
        %v7808 = vpop.f32.mrf.mxu0
        %v7809 = vadd.f32 0.0, %v7808
        %7810 = vdwg.mxu0
        %v7811 = vadd.f32 %v6488, %v7472
        %v7812 = vadd.f32 %v6489, %v7474
        %v7813 = vadd.f32 %v6490, %v7477
        %v7814 = vadd.f32 %v6491, %v7479
        %v7815 = vadd.f32 %v6492, %v7482
        %v7816 = vadd.f32 %v6493, %v7484
        %v7817 = vadd.f32 %v6494, %v7487
        %v7818 = vadd.f32 %v6495, %v7489
        %v7819 = vadd.f32 %v6496, %v7492
        %v7820 = vadd.f32 %v6497, %v7494
        %v7821 = vadd.f32 %v6498, %v7497
        %v7822 = vadd.f32 %v6499, %v7499
        %v7823 = vadd.f32 %v6500, %v7502
        %v7824 = vadd.f32 %v6501, %v7504
        %v7825 = vadd.f32 %v6502, %v7507
        %v7826 = vadd.f32 %v6503, %v7509
        %v7827 = vadd.f32 %v6504, %v7512
        %v7828 = vadd.f32 %v6505, %v7514
        %v7829 = vadd.f32 %v6506, %v7517
        %v7830 = vadd.f32 %v6507, %v7519
        %v7831 = vadd.f32 %v6508, %v7522
        %v7832 = vadd.f32 %v6509, %v7524
        %v7833 = vadd.f32 %v6510, %v7527
        %v7834 = vadd.f32 %v6511, %v7529
        %v7835 = vadd.f32 %v6512, %v7532
        %v7836 = vadd.f32 %v6513, %v7534
        %v7837 = vadd.f32 %v6514, %v7537
        %v7838 = vadd.f32 %v6515, %v7539
        %v7839 = vadd.f32 %v6516, %v7542
        %v7840 = vadd.f32 %v6517, %v7544
        %v7841 = vadd.f32 %v6518, %v7547
        %v7842 = vadd.f32 %v6519, %v7549
        %v7843 = vadd.f32 %v6520, %v7552
        %v7844 = vadd.f32 %v6521, %v7554
        %v7845 = vadd.f32 %v6522, %v7557
        %v7846 = vadd.f32 %v6523, %v7559
        %v7847 = vadd.f32 %v6524, %v7562
        %v7848 = vadd.f32 %v6525, %v7564
        %v7849 = vadd.f32 %v6526, %v7567
        %v7850 = vadd.f32 %v6527, %v7569
        %v7851 = vadd.f32 %v6528, %v7572
        %v7852 = vadd.f32 %v6529, %v7574
        %v7853 = vadd.f32 %v6530, %v7577
        %v7854 = vadd.f32 %v6531, %v7579
        %v7855 = vadd.f32 %v6532, %v7582
        %v7856 = vadd.f32 %v6533, %v7584
        %v7857 = vadd.f32 %v6534, %v7587
        %v7858 = vadd.f32 %v6535, %v7589
        %v7859 = vadd.f32 %v6536, %v7592
        %v7860 = vadd.f32 %v6537, %v7594
        %v7861 = vadd.f32 %v6538, %v7597
        %v7862 = vadd.f32 %v6539, %v7599
        %v7863 = vadd.f32 %v6540, %v7602
        %v7864 = vadd.f32 %v6541, %v7604
        %v7865 = vadd.f32 %v6542, %v7607
        %v7866 = vadd.f32 %v6543, %v7609
        %v7867 = vadd.f32 %v6544, %v7612
        %v7868 = vadd.f32 %v6545, %v7614
        %v7869 = vadd.f32 %v6546, %v7617
        %v7870 = vadd.f32 %v6547, %v7619
        %v7871 = vadd.f32 %v6548, %v7622
        %v7872 = vadd.f32 %v6549, %v7624
        %v7873 = vadd.f32 %v6550, %v7627
        %v7874 = vadd.f32 %v6551, %v7629
        %v7875 = vadd.f32 %v6552, %v7632
        %v7876 = vadd.f32 %v6553, %v7634
        %v7877 = vadd.f32 %v6554, %v7637
        %v7878 = vadd.f32 %v6555, %v7639
        %v7879 = vadd.f32 %v6556, %v7642
        %v7880 = vadd.f32 %v6557, %v7644
        %v7881 = vadd.f32 %v6558, %v7647
        %v7882 = vadd.f32 %v6559, %v7649
        %v7883 = vadd.f32 %v6560, %v7652
        %v7884 = vadd.f32 %v6561, %v7654
        %v7885 = vadd.f32 %v6562, %v7657
        %v7886 = vadd.f32 %v6563, %v7659
        %v7887 = vadd.f32 %v6564, %v7662
        %v7888 = vadd.f32 %v6565, %v7664
        %v7889 = vadd.f32 %v6566, %v7667
        %v7890 = vadd.f32 %v6567, %v7669
        %v7891 = vadd.f32 %v6568, %v7672
        %v7892 = vadd.f32 %v6569, %v7674
        %v7893 = vadd.f32 %v6570, %v7677
        %v7894 = vadd.f32 %v6571, %v7679
        %v7895 = vadd.f32 %v6572, %v7682
        %v7896 = vadd.f32 %v6573, %v7684
        %v7897 = vadd.f32 %v6574, %v7687
        %v7898 = vadd.f32 %v6575, %v7689
        %v7899 = vadd.f32 %v6576, %v7692
        %v7900 = vadd.f32 %v6577, %v7694
        %v7901 = vadd.f32 %v6578, %v7697
        %v7902 = vadd.f32 %v6579, %v7699
        %v7903 = vadd.f32 %v6580, %v7702
        %v7904 = vadd.f32 %v6581, %v7704
        %v7905 = vadd.f32 %v6582, %v7707
        %v7906 = vadd.f32 %v6583, %v7709
        %v7907 = vadd.f32 %v6584, %v7712
        %v7908 = vadd.f32 %v6585, %v7714
        %v7909 = vadd.f32 %v6586, %v7717
        %v7910 = vadd.f32 %v6587, %v7719
        %v7911 = vadd.f32 %v6588, %v7722
        %v7912 = vadd.f32 %v6589, %v7724
        %v7913 = vadd.f32 %v6590, %v7727
        %v7914 = vadd.f32 %v6591, %v7729
        %v7915 = vadd.f32 %v6592, %v7732
        %v7916 = vadd.f32 %v6593, %v7734
        %v7917 = vadd.f32 %v6594, %v7737
        %v7918 = vadd.f32 %v6595, %v7739
        %v7919 = vadd.f32 %v6596, %v7742
        %v7920 = vadd.f32 %v6597, %v7744
        %v7921 = vadd.f32 %v6598, %v7747
        %v7922 = vadd.f32 %v6599, %v7749
        %v7923 = vadd.f32 %v6600, %v7752
        %v7924 = vadd.f32 %v6601, %v7754
        %v7925 = vadd.f32 %v6602, %v7757
        %v7926 = vadd.f32 %v6603, %v7759
        %v7927 = vadd.f32 %v6604, %v7762
        %v7928 = vadd.f32 %v6605, %v7764
        %v7929 = vadd.f32 %v6606, %v7767
        %v7930 = vadd.f32 %v6607, %v7769
        %v7931 = vadd.f32 %v6608, %v7772
        %v7932 = vadd.f32 %v6609, %v7774
        %v7933 = vadd.f32 %v6610, %v7777
        %v7934 = vadd.f32 %v6611, %v7779
        %v7935 = vadd.f32 %v6612, %v7782
        %v7936 = vadd.f32 %v6613, %v7784
        %v7937 = vadd.f32 %v6614, %v7787
        %v7938 = vadd.f32 %v6615, %v7789
        %v7939 = vadd.f32 %v6616, %v7792
        %v7940 = vadd.f32 %v6617, %v7794
        %v7941 = vadd.f32 %v6618, %v7797
        %v7942 = vadd.f32 %v6619, %v7799
        %v7943 = vadd.f32 %v6620, %v7802
        %v7944 = vadd.f32 %v6621, %v7804
        %v7945 = vadd.f32 %v6622, %v7807
        %v7946 = vadd.f32 %v6623, %v7809
        %v7947 = vld [vmem:[%s169 + $0x240] sm:$0x7]
        %s7948 = scalar_lea.vmem %s1, 112
        %v7949 = vld [vmem:[%s7948] sm:$0xf]
        %v7950 = vld [vmem:[%s7948 + $0x4] sm:$0xf]
        %v7951 = vld [vmem:[%s7948 + $0x8] sm:$0xf]
        %v7952 = vld [vmem:[%s7948 + $0xc] sm:$0xf]
        %v7954 = vunpack.c.l.b16 %v7947
        %v7955 = vpack.c.b16 %v7954, %v7954
        %vm7956 = vsmask.f32 5376
        %v7958 = vshrl.u32 %v7040, 16
        %v7960 = vrot.slane %v7958, 2
        %v7961 = vshll.u32 %v7040, 16
        %v7963 = vrot.slane %v7961, 3
        %v7964 = vor.u32 %v7960, %v7963
        %v7966 = vshrl.u32 %v7041, 16
        %v7968 = vrot.slane %v7966, 2
        %v7969 = vshll.u32 %v7041, 16
        %v7971 = vrot.slane %v7969, 3
        %v7972 = vor.u32 %v7968, %v7971
        %v7973 = vsel %vm7956, %v7964, %v7972
        %v7975 = vshrl.u32 %v7042, 16
        %v7977 = vrot.slane %v7975, 2
        %v7978 = vshll.u32 %v7042, 16
        %v7980 = vrot.slane %v7978, 3
        %v7981 = vor.u32 %v7977, %v7980
        %v7982 = vsel %vm7956, %v7972, %v7981
        %v7984 = vshrl.u32 %v7043, 16
        %v7986 = vrot.slane %v7984, 2
        %v7987 = vshll.u32 %v7043, 16
        %v7989 = vrot.slane %v7987, 3
        %v7990 = vor.u32 %v7986, %v7989
        %v7991 = vsel %vm7956, %v7981, %v7990
        %v7993 = vshrl.u32 %v7044, 16
        %v7995 = vrot.slane %v7993, 2
        %v7996 = vshll.u32 %v7044, 16
        %v7998 = vrot.slane %v7996, 3
        %v7999 = vor.u32 %v7995, %v7998
        %v8000 = vsel %vm7956, %v7990, %v7999
        %v8002 = vshrl.u32 %v7045, 16
        %v8004 = vrot.slane %v8002, 2
        %v8005 = vshll.u32 %v7045, 16
        %v8007 = vrot.slane %v8005, 3
        %v8008 = vor.u32 %v8004, %v8007
        %v8009 = vsel %vm7956, %v7999, %v8008
        %v8011 = vshrl.u32 %v7046, 16
        %v8013 = vrot.slane %v8011, 2
        %v8014 = vshll.u32 %v7046, 16
        %v8016 = vrot.slane %v8014, 3
        %v8017 = vor.u32 %v8013, %v8016
        %v8018 = vsel %vm7956, %v8008, %v8017
        %v8020 = vshrl.u32 %v7047, 16
        %v8022 = vrot.slane %v8020, 2
        %v8023 = vshll.u32 %v7047, 16
        %v8025 = vrot.slane %v8023, 3
        %v8026 = vor.u32 %v8022, %v8025
        %v8027 = vsel %vm7956, %v8017, %v8026
        %v8029 = vshrl.u32 %v7048, 16
        %v8031 = vrot.slane %v8029, 2
        %v8032 = vshll.u32 %v7048, 16
        %v8034 = vrot.slane %v8032, 3
        %v8035 = vor.u32 %v8031, %v8034
        %v8036 = vsel %vm7956, %v8026, %v8035
        %v8038 = vshrl.u32 %v7049, 16
        %v8040 = vrot.slane %v8038, 2
        %v8041 = vshll.u32 %v7049, 16
        %v8043 = vrot.slane %v8041, 3
        %v8044 = vor.u32 %v8040, %v8043
        %v8045 = vsel %vm7956, %v8035, %v8044
        %v8047 = vshrl.u32 %v7050, 16
        %v8049 = vrot.slane %v8047, 2
        %v8050 = vshll.u32 %v7050, 16
        %v8052 = vrot.slane %v8050, 3
        %v8053 = vor.u32 %v8049, %v8052
        %v8054 = vsel %vm7956, %v8044, %v8053
        %v8056 = vshrl.u32 %v7051, 16
        %v8058 = vrot.slane %v8056, 2
        %v8059 = vshll.u32 %v7051, 16
        %v8061 = vrot.slane %v8059, 3
        %v8062 = vor.u32 %v8058, %v8061
        %v8063 = vsel %vm7956, %v8053, %v8062
        %v8065 = vshrl.u32 %v7052, 16
        %v8067 = vrot.slane %v8065, 2
        %v8068 = vshll.u32 %v7052, 16
        %v8070 = vrot.slane %v8068, 3
        %v8071 = vor.u32 %v8067, %v8070
        %v8072 = vsel %vm7956, %v8062, %v8071
        %v8074 = vshrl.u32 %v7053, 16
        %v8076 = vrot.slane %v8074, 2
        %v8077 = vshll.u32 %v7053, 16
        %v8079 = vrot.slane %v8077, 3
        %v8080 = vor.u32 %v8076, %v8079
        %v8081 = vsel %vm7956, %v8071, %v8080
        %v8083 = vshrl.u32 %v7054, 16
        %v8085 = vrot.slane %v8083, 2
        %v8086 = vshll.u32 %v7054, 16
        %v8088 = vrot.slane %v8086, 3
        %v8089 = vor.u32 %v8085, %v8088
        %v8090 = vsel %vm7956, %v8080, %v8089
        %v8092 = vshrl.u32 %v7055, 16
        %v8094 = vrot.slane %v8092, 2
        %v8095 = vshll.u32 %v7055, 16
        %v8097 = vrot.slane %v8095, 3
        %v8098 = vor.u32 %v8094, %v8097
        %v8099 = vsel %vm7956, %v8089, %v8098
        %v8101 = vshrl.u32 %v7056, 16
        %v8103 = vrot.slane %v8101, 2
        %v8104 = vshll.u32 %v7056, 16
        %v8106 = vrot.slane %v8104, 3
        %v8107 = vor.u32 %v8103, %v8106
        %v8108 = vsel %vm7956, %v8098, %v8107
        %v8110 = vshrl.u32 %v7057, 16
        %v8112 = vrot.slane %v8110, 2
        %v8113 = vshll.u32 %v7057, 16
        %v8115 = vrot.slane %v8113, 3
        %v8116 = vor.u32 %v8112, %v8115
        %v8117 = vsel %vm7956, %v8107, %v8116
        %v8119 = vshrl.u32 %v7058, 16
        %v8121 = vrot.slane %v8119, 2
        %v8122 = vshll.u32 %v7058, 16
        %v8124 = vrot.slane %v8122, 3
        %v8125 = vor.u32 %v8121, %v8124
        %v8126 = vsel %vm7956, %v8116, %v8125
        %v8128 = vshrl.u32 %v7059, 16
        %v8130 = vrot.slane %v8128, 2
        %v8131 = vshll.u32 %v7059, 16
        %v8133 = vrot.slane %v8131, 3
        %v8134 = vor.u32 %v8130, %v8133
        %v8135 = vsel %vm7956, %v8125, %v8134
        %v8137 = vshrl.u32 %v7060, 16
        %v8139 = vrot.slane %v8137, 2
        %v8140 = vshll.u32 %v7060, 16
        %v8142 = vrot.slane %v8140, 3
        %v8143 = vor.u32 %v8139, %v8142
        %v8144 = vsel %vm7956, %v8134, %v8143
        %v8146 = vshrl.u32 %v7061, 16
        %v8148 = vrot.slane %v8146, 2
        %v8149 = vshll.u32 %v7061, 16
        %v8151 = vrot.slane %v8149, 3
        %v8152 = vor.u32 %v8148, %v8151
        %v8153 = vsel %vm7956, %v8143, %v8152
        %v8155 = vshrl.u32 %v7062, 16
        %v8157 = vrot.slane %v8155, 2
        %v8158 = vshll.u32 %v7062, 16
        %v8160 = vrot.slane %v8158, 3
        %v8161 = vor.u32 %v8157, %v8160
        %v8162 = vsel %vm7956, %v8152, %v8161
        %v8164 = vshrl.u32 %v7063, 16
        %v8166 = vrot.slane %v8164, 2
        %v8167 = vshll.u32 %v7063, 16
        %v8169 = vrot.slane %v8167, 3
        %v8170 = vor.u32 %v8166, %v8169
        %v8171 = vsel %vm7956, %v8161, %v8170
        %v8173 = vshrl.u32 %v7064, 16
        %v8175 = vrot.slane %v8173, 2
        %v8176 = vshll.u32 %v7064, 16
        %v8178 = vrot.slane %v8176, 3
        %v8179 = vor.u32 %v8175, %v8178
        %v8180 = vsel %vm7956, %v8170, %v8179
        %v8182 = vshrl.u32 %v7065, 16
        %v8184 = vrot.slane %v8182, 2
        %v8185 = vshll.u32 %v7065, 16
        %v8187 = vrot.slane %v8185, 3
        %v8188 = vor.u32 %v8184, %v8187
        %v8189 = vsel %vm7956, %v8179, %v8188
        %v8191 = vshrl.u32 %v7066, 16
        %v8193 = vrot.slane %v8191, 2
        %v8194 = vshll.u32 %v7066, 16
        %v8196 = vrot.slane %v8194, 3
        %v8197 = vor.u32 %v8193, %v8196
        %v8198 = vsel %vm7956, %v8188, %v8197
        %v8200 = vshrl.u32 %v7067, 16
        %v8202 = vrot.slane %v8200, 2
        %v8203 = vshll.u32 %v7067, 16
        %v8205 = vrot.slane %v8203, 3
        %v8206 = vor.u32 %v8202, %v8205
        %v8207 = vsel %vm7956, %v8197, %v8206
        %v8209 = vshrl.u32 %v7068, 16
        %v8211 = vrot.slane %v8209, 2
        %v8212 = vshll.u32 %v7068, 16
        %v8214 = vrot.slane %v8212, 3
        %v8215 = vor.u32 %v8211, %v8214
        %v8216 = vsel %vm7956, %v8206, %v8215
        %v8218 = vshrl.u32 %v7069, 16
        %v8220 = vrot.slane %v8218, 2
        %v8221 = vshll.u32 %v7069, 16
        %v8223 = vrot.slane %v8221, 3
        %v8224 = vor.u32 %v8220, %v8223
        %v8225 = vsel %vm7956, %v8215, %v8224
        %v8227 = vshrl.u32 %v7070, 16
        %v8229 = vrot.slane %v8227, 2
        %v8230 = vshll.u32 %v7070, 16
        %v8232 = vrot.slane %v8230, 3
        %v8233 = vor.u32 %v8229, %v8232
        %v8234 = vsel %vm7956, %v8224, %v8233
        %v8236 = vshrl.u32 %v7071, 16
        %v8238 = vrot.slane %v8236, 2
        %v8239 = vshll.u32 %v7071, 16
        %v8241 = vrot.slane %v8239, 3
        %v8242 = vor.u32 %v8238, %v8241
        %v8243 = vsel %vm7956, %v8233, %v8242
        %v8245 = vshrl.u32 %v7072, 16
        %v8247 = vrot.slane %v8245, 2
        %v8248 = vshll.u32 %v7072, 16
        %v8250 = vrot.slane %v8248, 3
        %v8251 = vor.u32 %v8247, %v8250
        %v8252 = vsel %vm7956, %v8242, %v8251
        %v8254 = vshrl.u32 %v7073, 16
        %v8256 = vrot.slane %v8254, 2
        %v8257 = vshll.u32 %v7073, 16
        %v8259 = vrot.slane %v8257, 3
        %v8260 = vor.u32 %v8256, %v8259
        %v8261 = vsel %vm7956, %v8251, %v8260
        %v8263 = vshrl.u32 %v7074, 16
        %v8265 = vrot.slane %v8263, 2
        %v8266 = vshll.u32 %v7074, 16
        %v8268 = vrot.slane %v8266, 3
        %v8269 = vor.u32 %v8265, %v8268
        %v8270 = vsel %vm7956, %v8260, %v8269
        %v8272 = vshrl.u32 %v7075, 16
        %v8274 = vrot.slane %v8272, 2
        %v8275 = vshll.u32 %v7075, 16
        %v8277 = vrot.slane %v8275, 3
        %v8278 = vor.u32 %v8274, %v8277
        %v8279 = vsel %vm7956, %v8269, %v8278
        %v8281 = vshrl.u32 %v7076, 16
        %v8283 = vrot.slane %v8281, 2
        %v8284 = vshll.u32 %v7076, 16
        %v8286 = vrot.slane %v8284, 3
        %v8287 = vor.u32 %v8283, %v8286
        %v8288 = vsel %vm7956, %v8278, %v8287
        %v8290 = vshrl.u32 %v7077, 16
        %v8292 = vrot.slane %v8290, 2
        %v8293 = vshll.u32 %v7077, 16
        %v8295 = vrot.slane %v8293, 3
        %v8296 = vor.u32 %v8292, %v8295
        %v8297 = vsel %vm7956, %v8287, %v8296
        %v8299 = vshrl.u32 %v7078, 16
        %v8301 = vrot.slane %v8299, 2
        %v8302 = vshll.u32 %v7078, 16
        %v8304 = vrot.slane %v8302, 3
        %v8305 = vor.u32 %v8301, %v8304
        %v8306 = vsel %vm7956, %v8296, %v8305
        %v8308 = vshrl.u32 %v7079, 16
        %v8310 = vrot.slane %v8308, 2
        %v8311 = vshll.u32 %v7079, 16
        %v8313 = vrot.slane %v8311, 3
        %v8314 = vor.u32 %v8310, %v8313
        %v8315 = vsel %vm7956, %v8305, %v8314
        %v8317 = vshrl.u32 %v7080, 16
        %v8319 = vrot.slane %v8317, 2
        %v8320 = vshll.u32 %v7080, 16
        %v8322 = vrot.slane %v8320, 3
        %v8323 = vor.u32 %v8319, %v8322
        %v8324 = vsel %vm7956, %v8314, %v8323
        %v8326 = vshrl.u32 %v7081, 16
        %v8328 = vrot.slane %v8326, 2
        %v8329 = vshll.u32 %v7081, 16
        %v8331 = vrot.slane %v8329, 3
        %v8332 = vor.u32 %v8328, %v8331
        %v8333 = vsel %vm7956, %v8323, %v8332
        %v8335 = vshrl.u32 %v7082, 16
        %v8337 = vrot.slane %v8335, 2
        %v8338 = vshll.u32 %v7082, 16
        %v8340 = vrot.slane %v8338, 3
        %v8341 = vor.u32 %v8337, %v8340
        %v8342 = vsel %vm7956, %v8332, %v8341
        %v8344 = vshrl.u32 %v7083, 16
        %v8346 = vrot.slane %v8344, 2
        %v8347 = vshll.u32 %v7083, 16
        %v8349 = vrot.slane %v8347, 3
        %v8350 = vor.u32 %v8346, %v8349
        %v8351 = vsel %vm7956, %v8341, %v8350
        %v8353 = vshrl.u32 %v7084, 16
        %v8355 = vrot.slane %v8353, 2
        %v8356 = vshll.u32 %v7084, 16
        %v8358 = vrot.slane %v8356, 3
        %v8359 = vor.u32 %v8355, %v8358
        %v8360 = vsel %vm7956, %v8350, %v8359
        %v8362 = vshrl.u32 %v7085, 16
        %v8364 = vrot.slane %v8362, 2
        %v8365 = vshll.u32 %v7085, 16
        %v8367 = vrot.slane %v8365, 3
        %v8368 = vor.u32 %v8364, %v8367
        %v8369 = vsel %vm7956, %v8359, %v8368
        %v8371 = vshrl.u32 %v7086, 16
        %v8373 = vrot.slane %v8371, 2
        %v8374 = vshll.u32 %v7086, 16
        %v8376 = vrot.slane %v8374, 3
        %v8377 = vor.u32 %v8373, %v8376
        %v8378 = vsel %vm7956, %v8368, %v8377
        %v8380 = vshrl.u32 %v7087, 16
        %v8382 = vrot.slane %v8380, 2
        %v8383 = vshll.u32 %v7087, 16
        %v8385 = vrot.slane %v8383, 3
        %v8386 = vor.u32 %v8382, %v8385
        %v8387 = vsel %vm7956, %v8377, %v8386
        %v8389 = vshrl.u32 %v7088, 16
        %v8391 = vrot.slane %v8389, 2
        %v8392 = vshll.u32 %v7088, 16
        %v8394 = vrot.slane %v8392, 3
        %v8395 = vor.u32 %v8391, %v8394
        %v8396 = vsel %vm7956, %v8386, %v8395
        %v8398 = vshrl.u32 %v7089, 16
        %v8400 = vrot.slane %v8398, 2
        %v8401 = vshll.u32 %v7089, 16
        %v8403 = vrot.slane %v8401, 3
        %v8404 = vor.u32 %v8400, %v8403
        %v8405 = vsel %vm7956, %v8395, %v8404
        %v8407 = vshrl.u32 %v7090, 16
        %v8409 = vrot.slane %v8407, 2
        %v8410 = vshll.u32 %v7090, 16
        %v8412 = vrot.slane %v8410, 3
        %v8413 = vor.u32 %v8409, %v8412
        %v8414 = vsel %vm7956, %v8404, %v8413
        %v8416 = vshrl.u32 %v7091, 16
        %v8418 = vrot.slane %v8416, 2
        %v8419 = vshll.u32 %v7091, 16
        %v8421 = vrot.slane %v8419, 3
        %v8422 = vor.u32 %v8418, %v8421
        %v8423 = vsel %vm7956, %v8413, %v8422
        %v8425 = vshrl.u32 %v7092, 16
        %v8427 = vrot.slane %v8425, 2
        %v8428 = vshll.u32 %v7092, 16
        %v8430 = vrot.slane %v8428, 3
        %v8431 = vor.u32 %v8427, %v8430
        %v8432 = vsel %vm7956, %v8422, %v8431
        %v8434 = vshrl.u32 %v7093, 16
        %v8436 = vrot.slane %v8434, 2
        %v8437 = vshll.u32 %v7093, 16
        %v8439 = vrot.slane %v8437, 3
        %v8440 = vor.u32 %v8436, %v8439
        %v8441 = vsel %vm7956, %v8431, %v8440
        %v8443 = vshrl.u32 %v7094, 16
        %v8445 = vrot.slane %v8443, 2
        %v8446 = vshll.u32 %v7094, 16
        %v8448 = vrot.slane %v8446, 3
        %v8449 = vor.u32 %v8445, %v8448
        %v8450 = vsel %vm7956, %v8440, %v8449
        %v8452 = vshrl.u32 %v7095, 16
        %v8454 = vrot.slane %v8452, 2
        %v8455 = vshll.u32 %v7095, 16
        %v8457 = vrot.slane %v8455, 3
        %v8458 = vor.u32 %v8454, %v8457
        %v8459 = vsel %vm7956, %v8449, %v8458
        %v8461 = vshrl.u32 %v7096, 16
        %v8463 = vrot.slane %v8461, 2
        %v8464 = vshll.u32 %v7096, 16
        %v8466 = vrot.slane %v8464, 3
        %v8467 = vor.u32 %v8463, %v8466
        %v8468 = vsel %vm7956, %v8458, %v8467
        %v8470 = vshrl.u32 %v7097, 16
        %v8472 = vrot.slane %v8470, 2
        %v8473 = vshll.u32 %v7097, 16
        %v8475 = vrot.slane %v8473, 3
        %v8476 = vor.u32 %v8472, %v8475
        %v8477 = vsel %vm7956, %v8467, %v8476
        %v8479 = vshrl.u32 %v7098, 16
        %v8481 = vrot.slane %v8479, 2
        %v8482 = vshll.u32 %v7098, 16
        %v8484 = vrot.slane %v8482, 3
        %v8485 = vor.u32 %v8481, %v8484
        %v8486 = vsel %vm7956, %v8476, %v8485
        %v8488 = vshrl.u32 %v7099, 16
        %v8490 = vrot.slane %v8488, 2
        %v8491 = vshll.u32 %v7099, 16
        %v8493 = vrot.slane %v8491, 3
        %v8494 = vor.u32 %v8490, %v8493
        %v8495 = vsel %vm7956, %v8485, %v8494
        %v8497 = vshrl.u32 %v7100, 16
        %v8499 = vrot.slane %v8497, 2
        %v8500 = vshll.u32 %v7100, 16
        %v8502 = vrot.slane %v8500, 3
        %v8503 = vor.u32 %v8499, %v8502
        %v8504 = vsel %vm7956, %v8494, %v8503
        %v8506 = vshrl.u32 %v7101, 16
        %v8508 = vrot.slane %v8506, 2
        %v8509 = vshll.u32 %v7101, 16
        %v8511 = vrot.slane %v8509, 3
        %v8512 = vor.u32 %v8508, %v8511
        %v8513 = vsel %vm7956, %v8503, %v8512
        %v8515 = vshrl.u32 %v7102, 16
        %v8517 = vrot.slane %v8515, 2
        %v8518 = vshll.u32 %v7102, 16
        %v8520 = vrot.slane %v8518, 3
        %v8521 = vor.u32 %v8517, %v8520
        %v8522 = vsel %vm7956, %v8512, %v8521
        %v8524 = vshrl.u32 %v7103, 16
        %v8526 = vrot.slane %v8524, 2
        %v8527 = vshll.u32 %v7103, 16
        %v8529 = vrot.slane %v8527, 3
        %v8530 = vor.u32 %v8526, %v8529
        %v8531 = vsel %vm7956, %v8521, %v8530
        %v8533 = vshrl.u32 %v7104, 16
        %v8535 = vrot.slane %v8533, 2
        %v8536 = vshll.u32 %v7104, 16
        %v8538 = vrot.slane %v8536, 3
        %v8539 = vor.u32 %v8535, %v8538
        %v8540 = vsel %vm7956, %v8530, %v8539
        %v8542 = vshrl.u32 %v7105, 16
        %v8544 = vrot.slane %v8542, 2
        %v8545 = vshll.u32 %v7105, 16
        %v8547 = vrot.slane %v8545, 3
        %v8548 = vor.u32 %v8544, %v8547
        %v8549 = vsel %vm7956, %v8539, %v8548
        %v8551 = vshrl.u32 %v7106, 16
        %v8553 = vrot.slane %v8551, 2
        %v8554 = vshll.u32 %v7106, 16
        %v8556 = vrot.slane %v8554, 3
        %v8557 = vor.u32 %v8553, %v8556
        %v8558 = vsel %vm7956, %v8548, %v8557
        %v8560 = vshrl.u32 %v7107, 16
        %v8562 = vrot.slane %v8560, 2
        %v8563 = vshll.u32 %v7107, 16
        %v8565 = vrot.slane %v8563, 3
        %v8566 = vor.u32 %v8562, %v8565
        %v8567 = vsel %vm7956, %v8557, %v8566
        %v8569 = vshrl.u32 %v7955, 16
        %v8571 = vrot.slane %v8569, 2
        %v8572 = vshll.u32 %v7955, 16
        %v8574 = vrot.slane %v8572, 3
        %v8575 = vor.u32 %v8571, %v8574
        %v8576 = vsel %vm7956, %v8566, %v8575
        %v8581 = vunpack.c.l.b16 %v7949
        %v8582 = vunpack.c.l.b16 %v7950
        %v8583 = vunpack.c.l.b16 %v7951
        %v8584 = vunpack.c.l.b16 %v7952
        %v8585 = vpack.c.b16 %v8582, %v8581
        %v8586 = vpack.c.b16 %v8584, %v8583
        %v8590 = vsel %vm1223, %v7973, 0
        %v8593 = vsel %vm1223, %v7982, 0
        %v8596 = vsel %vm1223, %v7991, 0
        %v8599 = vsel %vm1223, %v8000, 0
        %v8602 = vsel %vm1223, %v8009, 0
        %v8605 = vsel %vm1223, %v8018, 0
        %v8608 = vsel %vm1223, %v8027, 0
        %v8611 = vsel %vm1223, %v8036, 0
        %v8614 = vsel %vm1223, %v8045, 0
        %v8617 = vsel %vm1223, %v8054, 0
        %v8620 = vsel %vm1223, %v8063, 0
        %v8623 = vsel %vm1223, %v8072, 0
        %v8626 = vsel %vm1223, %v8081, 0
        %v8629 = vsel %vm1223, %v8090, 0
        %v8632 = vsel %vm1223, %v8099, 0
        %v8635 = vsel %vm1223, %v8108, 0
        %v8638 = vsel %vm1223, %v8117, 0
        %v8641 = vsel %vm1223, %v8126, 0
        %v8644 = vsel %vm1223, %v8135, 0
        %v8647 = vsel %vm1223, %v8144, 0
        %v8650 = vsel %vm1223, %v8153, 0
        %v8653 = vsel %vm1223, %v8162, 0
        %v8656 = vsel %vm1223, %v8171, 0
        %v8659 = vsel %vm1223, %v8180, 0
        %v8662 = vsel %vm1223, %v8189, 0
        %v8665 = vsel %vm1223, %v8198, 0
        %v8668 = vsel %vm1223, %v8207, 0
        %v8671 = vsel %vm1223, %v8216, 0
        %v8674 = vsel %vm1223, %v8225, 0
        %v8677 = vsel %vm1223, %v8234, 0
        %v8680 = vsel %vm1223, %v8243, 0
        %v8683 = vsel %vm1223, %v8252, 0
        %v8686 = vsel %vm1223, %v8261, 0
        %v8689 = vsel %vm1223, %v8270, 0
        %v8692 = vsel %vm1223, %v8279, 0
        %v8695 = vsel %vm1223, %v8288, 0
        %v8698 = vsel %vm1223, %v8297, 0
        %v8701 = vsel %vm1223, %v8306, 0
        %v8704 = vsel %vm1223, %v8315, 0
        %v8707 = vsel %vm1223, %v8324, 0
        %v8710 = vsel %vm1223, %v8333, 0
        %v8713 = vsel %vm1223, %v8342, 0
        %v8716 = vsel %vm1223, %v8351, 0
        %v8719 = vsel %vm1223, %v8360, 0
        %v8722 = vsel %vm1223, %v8369, 0
        %v8725 = vsel %vm1223, %v8378, 0
        %v8728 = vsel %vm1223, %v8387, 0
        %v8731 = vsel %vm1223, %v8396, 0
        %v8734 = vsel %vm1223, %v8405, 0
        %v8737 = vsel %vm1223, %v8414, 0
        %v8740 = vsel %vm1223, %v8423, 0
        %v8743 = vsel %vm1223, %v8432, 0
        %v8746 = vsel %vm1223, %v8441, 0
        %v8749 = vsel %vm1223, %v8450, 0
        %v8752 = vsel %vm1223, %v8459, 0
        %v8755 = vsel %vm1223, %v8468, 0
        %v8758 = vsel %vm1223, %v8477, 0
        %v8761 = vsel %vm1223, %v8486, 0
        %v8764 = vsel %vm1223, %v8495, 0
        %v8767 = vsel %vm1223, %v8504, 0
        %v8770 = vsel %vm1223, %v8513, 0
        %v8773 = vsel %vm1223, %v8522, 0
        %v8776 = vsel %vm1223, %v8531, 0
        %v8779 = vsel %vm1223, %v8540, 0
        %v8782 = vsel %vm1223, %v8549, 0
        %v8785 = vsel %vm1223, %v8558, 0
        %v8788 = vsel %vm1223, %v8567, 0
        %v8791 = vsel %vm1223, %v8576, 0
        %8793 = vmatpush.bf16.msra.mxu0 0
        %8794 = vmatpush.bf16.msra.mxu0 0
        %8795 = vmatpush.bf16.msra.mxu0 0
        %8796 = vmatpush.bf16.msra.mxu0 0
        %8797 = vmatpush.bf16.msra.mxu0 0
        %8798 = vmatpush.bf16.msra.mxu0 0
        %8799 = vmatpush.bf16.msra.mxu0 %v8586
        %8800 = vmatpush.bf16.msra.mxu0 %v8585
        %8801 = vmatmul.bf16.gmra.mxu0 %v8590
        %v8802 = vpop.f32.mrf.mxu0
        %v8803 = vadd.f32 0.0, %v8802
        %v8804 = vpop.f32.mrf.mxu0
        %v8805 = vadd.f32 0.0, %v8804
        %8806 = vmatmul.bf16.gmra.mxu0 %v8593
        %v8807 = vpop.f32.mrf.mxu0
        %v8808 = vadd.f32 0.0, %v8807
        %v8809 = vpop.f32.mrf.mxu0
        %v8810 = vadd.f32 0.0, %v8809
        %8811 = vmatmul.bf16.gmra.mxu0 %v8596
        %v8812 = vpop.f32.mrf.mxu0
        %v8813 = vadd.f32 0.0, %v8812
        %v8814 = vpop.f32.mrf.mxu0
        %v8815 = vadd.f32 0.0, %v8814
        %8816 = vmatmul.bf16.gmra.mxu0 %v8599
        %v8817 = vpop.f32.mrf.mxu0
        %v8818 = vadd.f32 0.0, %v8817
        %v8819 = vpop.f32.mrf.mxu0
        %v8820 = vadd.f32 0.0, %v8819
        %8821 = vmatmul.bf16.gmra.mxu0 %v8602
        %v8822 = vpop.f32.mrf.mxu0
        %v8823 = vadd.f32 0.0, %v8822
        %v8824 = vpop.f32.mrf.mxu0
        %v8825 = vadd.f32 0.0, %v8824
        %8826 = vmatmul.bf16.gmra.mxu0 %v8605
        %v8827 = vpop.f32.mrf.mxu0
        %v8828 = vadd.f32 0.0, %v8827
        %v8829 = vpop.f32.mrf.mxu0
        %v8830 = vadd.f32 0.0, %v8829
        %8831 = vmatmul.bf16.gmra.mxu0 %v8608
        %v8832 = vpop.f32.mrf.mxu0
        %v8833 = vadd.f32 0.0, %v8832
        %v8834 = vpop.f32.mrf.mxu0
        %v8835 = vadd.f32 0.0, %v8834
        %8836 = vmatmul.bf16.gmra.mxu0 %v8611
        %v8837 = vpop.f32.mrf.mxu0
        %v8838 = vadd.f32 0.0, %v8837
        %v8839 = vpop.f32.mrf.mxu0
        %v8840 = vadd.f32 0.0, %v8839
        %8841 = vmatmul.bf16.gmra.mxu0 %v8614
        %v8842 = vpop.f32.mrf.mxu0
        %v8843 = vadd.f32 0.0, %v8842
        %v8844 = vpop.f32.mrf.mxu0
        %v8845 = vadd.f32 0.0, %v8844
        %8846 = vmatmul.bf16.gmra.mxu0 %v8617
        %v8847 = vpop.f32.mrf.mxu0
        %v8848 = vadd.f32 0.0, %v8847
        %v8849 = vpop.f32.mrf.mxu0
        %v8850 = vadd.f32 0.0, %v8849
        %8851 = vmatmul.bf16.gmra.mxu0 %v8620
        %v8852 = vpop.f32.mrf.mxu0
        %v8853 = vadd.f32 0.0, %v8852
        %v8854 = vpop.f32.mrf.mxu0
        %v8855 = vadd.f32 0.0, %v8854
        %8856 = vmatmul.bf16.gmra.mxu0 %v8623
        %v8857 = vpop.f32.mrf.mxu0
        %v8858 = vadd.f32 0.0, %v8857
        %v8859 = vpop.f32.mrf.mxu0
        %v8860 = vadd.f32 0.0, %v8859
        %8861 = vmatmul.bf16.gmra.mxu0 %v8626
        %v8862 = vpop.f32.mrf.mxu0
        %v8863 = vadd.f32 0.0, %v8862
        %v8864 = vpop.f32.mrf.mxu0
        %v8865 = vadd.f32 0.0, %v8864
        %8866 = vmatmul.bf16.gmra.mxu0 %v8629
        %v8867 = vpop.f32.mrf.mxu0
        %v8868 = vadd.f32 0.0, %v8867
        %v8869 = vpop.f32.mrf.mxu0
        %v8870 = vadd.f32 0.0, %v8869
        %8871 = vmatmul.bf16.gmra.mxu0 %v8632
        %v8872 = vpop.f32.mrf.mxu0
        %v8873 = vadd.f32 0.0, %v8872
        %v8874 = vpop.f32.mrf.mxu0
        %v8875 = vadd.f32 0.0, %v8874
        %8876 = vmatmul.bf16.gmra.mxu0 %v8635
        %v8877 = vpop.f32.mrf.mxu0
        %v8878 = vadd.f32 0.0, %v8877
        %v8879 = vpop.f32.mrf.mxu0
        %v8880 = vadd.f32 0.0, %v8879
        %8881 = vmatmul.bf16.gmra.mxu0 %v8638
        %v8882 = vpop.f32.mrf.mxu0
        %v8883 = vadd.f32 0.0, %v8882
        %v8884 = vpop.f32.mrf.mxu0
        %v8885 = vadd.f32 0.0, %v8884
        %8886 = vmatmul.bf16.gmra.mxu0 %v8641
        %v8887 = vpop.f32.mrf.mxu0
        %v8888 = vadd.f32 0.0, %v8887
        %v8889 = vpop.f32.mrf.mxu0
        %v8890 = vadd.f32 0.0, %v8889
        %8891 = vmatmul.bf16.gmra.mxu0 %v8644
        %v8892 = vpop.f32.mrf.mxu0
        %v8893 = vadd.f32 0.0, %v8892
        %v8894 = vpop.f32.mrf.mxu0
        %v8895 = vadd.f32 0.0, %v8894
        %8896 = vmatmul.bf16.gmra.mxu0 %v8647
        %v8897 = vpop.f32.mrf.mxu0
        %v8898 = vadd.f32 0.0, %v8897
        %v8899 = vpop.f32.mrf.mxu0
        %v8900 = vadd.f32 0.0, %v8899
        %8901 = vmatmul.bf16.gmra.mxu0 %v8650
        %v8902 = vpop.f32.mrf.mxu0
        %v8903 = vadd.f32 0.0, %v8902
        %v8904 = vpop.f32.mrf.mxu0
        %v8905 = vadd.f32 0.0, %v8904
        %8906 = vmatmul.bf16.gmra.mxu0 %v8653
        %v8907 = vpop.f32.mrf.mxu0
        %v8908 = vadd.f32 0.0, %v8907
        %v8909 = vpop.f32.mrf.mxu0
        %v8910 = vadd.f32 0.0, %v8909
        %8911 = vmatmul.bf16.gmra.mxu0 %v8656
        %v8912 = vpop.f32.mrf.mxu0
        %v8913 = vadd.f32 0.0, %v8912
        %v8914 = vpop.f32.mrf.mxu0
        %v8915 = vadd.f32 0.0, %v8914
        %8916 = vmatmul.bf16.gmra.mxu0 %v8659
        %v8917 = vpop.f32.mrf.mxu0
        %v8918 = vadd.f32 0.0, %v8917
        %v8919 = vpop.f32.mrf.mxu0
        %v8920 = vadd.f32 0.0, %v8919
        %8921 = vmatmul.bf16.gmra.mxu0 %v8662
        %v8922 = vpop.f32.mrf.mxu0
        %v8923 = vadd.f32 0.0, %v8922
        %v8924 = vpop.f32.mrf.mxu0
        %v8925 = vadd.f32 0.0, %v8924
        %8926 = vmatmul.bf16.gmra.mxu0 %v8665
        %v8927 = vpop.f32.mrf.mxu0
        %v8928 = vadd.f32 0.0, %v8927
        %v8929 = vpop.f32.mrf.mxu0
        %v8930 = vadd.f32 0.0, %v8929
        %8931 = vmatmul.bf16.gmra.mxu0 %v8668
        %v8932 = vpop.f32.mrf.mxu0
        %v8933 = vadd.f32 0.0, %v8932
        %v8934 = vpop.f32.mrf.mxu0
        %v8935 = vadd.f32 0.0, %v8934
        %8936 = vmatmul.bf16.gmra.mxu0 %v8671
        %v8937 = vpop.f32.mrf.mxu0
        %v8938 = vadd.f32 0.0, %v8937
        %v8939 = vpop.f32.mrf.mxu0
        %v8940 = vadd.f32 0.0, %v8939
        %8941 = vmatmul.bf16.gmra.mxu0 %v8674
        %v8942 = vpop.f32.mrf.mxu0
        %v8943 = vadd.f32 0.0, %v8942
        %v8944 = vpop.f32.mrf.mxu0
        %v8945 = vadd.f32 0.0, %v8944
        %8946 = vmatmul.bf16.gmra.mxu0 %v8677
        %v8947 = vpop.f32.mrf.mxu0
        %v8948 = vadd.f32 0.0, %v8947
        %v8949 = vpop.f32.mrf.mxu0
        %v8950 = vadd.f32 0.0, %v8949
        %8951 = vmatmul.bf16.gmra.mxu0 %v8680
        %v8952 = vpop.f32.mrf.mxu0
        %v8953 = vadd.f32 0.0, %v8952
        %v8954 = vpop.f32.mrf.mxu0
        %v8955 = vadd.f32 0.0, %v8954
        %8956 = vmatmul.bf16.gmra.mxu0 %v8683
        %v8957 = vpop.f32.mrf.mxu0
        %v8958 = vadd.f32 0.0, %v8957
        %v8959 = vpop.f32.mrf.mxu0
        %v8960 = vadd.f32 0.0, %v8959
        %8961 = vmatmul.bf16.gmra.mxu0 %v8686
        %v8962 = vpop.f32.mrf.mxu0
        %v8963 = vadd.f32 0.0, %v8962
        %v8964 = vpop.f32.mrf.mxu0
        %v8965 = vadd.f32 0.0, %v8964
        %8966 = vmatmul.bf16.gmra.mxu0 %v8689
        %v8967 = vpop.f32.mrf.mxu0
        %v8968 = vadd.f32 0.0, %v8967
        %v8969 = vpop.f32.mrf.mxu0
        %v8970 = vadd.f32 0.0, %v8969
        %8971 = vmatmul.bf16.gmra.mxu0 %v8692
        %v8972 = vpop.f32.mrf.mxu0
        %v8973 = vadd.f32 0.0, %v8972
        %v8974 = vpop.f32.mrf.mxu0
        %v8975 = vadd.f32 0.0, %v8974
        %8976 = vmatmul.bf16.gmra.mxu0 %v8695
        %v8977 = vpop.f32.mrf.mxu0
        %v8978 = vadd.f32 0.0, %v8977
        %v8979 = vpop.f32.mrf.mxu0
        %v8980 = vadd.f32 0.0, %v8979
        %8981 = vmatmul.bf16.gmra.mxu0 %v8698
        %v8982 = vpop.f32.mrf.mxu0
        %v8983 = vadd.f32 0.0, %v8982
        %v8984 = vpop.f32.mrf.mxu0
        %v8985 = vadd.f32 0.0, %v8984
        %8986 = vmatmul.bf16.gmra.mxu0 %v8701
        %v8987 = vpop.f32.mrf.mxu0
        %v8988 = vadd.f32 0.0, %v8987
        %v8989 = vpop.f32.mrf.mxu0
        %v8990 = vadd.f32 0.0, %v8989
        %8991 = vmatmul.bf16.gmra.mxu0 %v8704
        %v8992 = vpop.f32.mrf.mxu0
        %v8993 = vadd.f32 0.0, %v8992
        %v8994 = vpop.f32.mrf.mxu0
        %v8995 = vadd.f32 0.0, %v8994
        %8996 = vmatmul.bf16.gmra.mxu0 %v8707
        %v8997 = vpop.f32.mrf.mxu0
        %v8998 = vadd.f32 0.0, %v8997
        %v8999 = vpop.f32.mrf.mxu0
        %v9000 = vadd.f32 0.0, %v8999
        %9001 = vmatmul.bf16.gmra.mxu0 %v8710
        %v9002 = vpop.f32.mrf.mxu0
        %v9003 = vadd.f32 0.0, %v9002
        %v9004 = vpop.f32.mrf.mxu0
        %v9005 = vadd.f32 0.0, %v9004
        %9006 = vmatmul.bf16.gmra.mxu0 %v8713
        %v9007 = vpop.f32.mrf.mxu0
        %v9008 = vadd.f32 0.0, %v9007
        %v9009 = vpop.f32.mrf.mxu0
        %v9010 = vadd.f32 0.0, %v9009
        %9011 = vmatmul.bf16.gmra.mxu0 %v8716
        %v9012 = vpop.f32.mrf.mxu0
        %v9013 = vadd.f32 0.0, %v9012
        %v9014 = vpop.f32.mrf.mxu0
        %v9015 = vadd.f32 0.0, %v9014
        %9016 = vmatmul.bf16.gmra.mxu0 %v8719
        %v9017 = vpop.f32.mrf.mxu0
        %v9018 = vadd.f32 0.0, %v9017
        %v9019 = vpop.f32.mrf.mxu0
        %v9020 = vadd.f32 0.0, %v9019
        %9021 = vmatmul.bf16.gmra.mxu0 %v8722
        %v9022 = vpop.f32.mrf.mxu0
        %v9023 = vadd.f32 0.0, %v9022
        %v9024 = vpop.f32.mrf.mxu0
        %v9025 = vadd.f32 0.0, %v9024
        %9026 = vmatmul.bf16.gmra.mxu0 %v8725
        %v9027 = vpop.f32.mrf.mxu0
        %v9028 = vadd.f32 0.0, %v9027
        %v9029 = vpop.f32.mrf.mxu0
        %v9030 = vadd.f32 0.0, %v9029
        %9031 = vmatmul.bf16.gmra.mxu0 %v8728
        %v9032 = vpop.f32.mrf.mxu0
        %v9033 = vadd.f32 0.0, %v9032
        %v9034 = vpop.f32.mrf.mxu0
        %v9035 = vadd.f32 0.0, %v9034
        %9036 = vmatmul.bf16.gmra.mxu0 %v8731
        %v9037 = vpop.f32.mrf.mxu0
        %v9038 = vadd.f32 0.0, %v9037
        %v9039 = vpop.f32.mrf.mxu0
        %v9040 = vadd.f32 0.0, %v9039
        %9041 = vmatmul.bf16.gmra.mxu0 %v8734
        %v9042 = vpop.f32.mrf.mxu0
        %v9043 = vadd.f32 0.0, %v9042
        %v9044 = vpop.f32.mrf.mxu0
        %v9045 = vadd.f32 0.0, %v9044
        %9046 = vmatmul.bf16.gmra.mxu0 %v8737
        %v9047 = vpop.f32.mrf.mxu0
        %v9048 = vadd.f32 0.0, %v9047
        %v9049 = vpop.f32.mrf.mxu0
        %v9050 = vadd.f32 0.0, %v9049
        %9051 = vmatmul.bf16.gmra.mxu0 %v8740
        %v9052 = vpop.f32.mrf.mxu0
        %v9053 = vadd.f32 0.0, %v9052
        %v9054 = vpop.f32.mrf.mxu0
        %v9055 = vadd.f32 0.0, %v9054
        %9056 = vmatmul.bf16.gmra.mxu0 %v8743
        %v9057 = vpop.f32.mrf.mxu0
        %v9058 = vadd.f32 0.0, %v9057
        %v9059 = vpop.f32.mrf.mxu0
        %v9060 = vadd.f32 0.0, %v9059
        %9061 = vmatmul.bf16.gmra.mxu0 %v8746
        %v9062 = vpop.f32.mrf.mxu0
        %v9063 = vadd.f32 0.0, %v9062
        %v9064 = vpop.f32.mrf.mxu0
        %v9065 = vadd.f32 0.0, %v9064
        %9066 = vmatmul.bf16.gmra.mxu0 %v8749
        %v9067 = vpop.f32.mrf.mxu0
        %v9068 = vadd.f32 0.0, %v9067
        %v9069 = vpop.f32.mrf.mxu0
        %v9070 = vadd.f32 0.0, %v9069
        %9071 = vmatmul.bf16.gmra.mxu0 %v8752
        %v9072 = vpop.f32.mrf.mxu0
        %v9073 = vadd.f32 0.0, %v9072
        %v9074 = vpop.f32.mrf.mxu0
        %v9075 = vadd.f32 0.0, %v9074
        %9076 = vmatmul.bf16.gmra.mxu0 %v8755
        %v9077 = vpop.f32.mrf.mxu0
        %v9078 = vadd.f32 0.0, %v9077
        %v9079 = vpop.f32.mrf.mxu0
        %v9080 = vadd.f32 0.0, %v9079
        %9081 = vmatmul.bf16.gmra.mxu0 %v8758
        %v9082 = vpop.f32.mrf.mxu0
        %v9083 = vadd.f32 0.0, %v9082
        %v9084 = vpop.f32.mrf.mxu0
        %v9085 = vadd.f32 0.0, %v9084
        %9086 = vmatmul.bf16.gmra.mxu0 %v8761
        %v9087 = vpop.f32.mrf.mxu0
        %v9088 = vadd.f32 0.0, %v9087
        %v9089 = vpop.f32.mrf.mxu0
        %v9090 = vadd.f32 0.0, %v9089
        %9091 = vmatmul.bf16.gmra.mxu0 %v8764
        %v9092 = vpop.f32.mrf.mxu0
        %v9093 = vadd.f32 0.0, %v9092
        %v9094 = vpop.f32.mrf.mxu0
        %v9095 = vadd.f32 0.0, %v9094
        %9096 = vmatmul.bf16.gmra.mxu0 %v8767
        %v9097 = vpop.f32.mrf.mxu0
        %v9098 = vadd.f32 0.0, %v9097
        %v9099 = vpop.f32.mrf.mxu0
        %v9100 = vadd.f32 0.0, %v9099
        %9101 = vmatmul.bf16.gmra.mxu0 %v8770
        %v9102 = vpop.f32.mrf.mxu0
        %v9103 = vadd.f32 0.0, %v9102
        %v9104 = vpop.f32.mrf.mxu0
        %v9105 = vadd.f32 0.0, %v9104
        %9106 = vmatmul.bf16.gmra.mxu0 %v8773
        %v9107 = vpop.f32.mrf.mxu0
        %v9108 = vadd.f32 0.0, %v9107
        %v9109 = vpop.f32.mrf.mxu0
        %v9110 = vadd.f32 0.0, %v9109
        %9111 = vmatmul.bf16.gmra.mxu0 %v8776
        %v9112 = vpop.f32.mrf.mxu0
        %v9113 = vadd.f32 0.0, %v9112
        %v9114 = vpop.f32.mrf.mxu0
        %v9115 = vadd.f32 0.0, %v9114
        %9116 = vmatmul.bf16.gmra.mxu0 %v8779
        %v9117 = vpop.f32.mrf.mxu0
        %v9118 = vadd.f32 0.0, %v9117
        %v9119 = vpop.f32.mrf.mxu0
        %v9120 = vadd.f32 0.0, %v9119
        %9121 = vmatmul.bf16.gmra.mxu0 %v8782
        %v9122 = vpop.f32.mrf.mxu0
        %v9123 = vadd.f32 0.0, %v9122
        %v9124 = vpop.f32.mrf.mxu0
        %v9125 = vadd.f32 0.0, %v9124
        %9126 = vmatmul.bf16.gmra.mxu0 %v8785
        %v9127 = vpop.f32.mrf.mxu0
        %v9128 = vadd.f32 0.0, %v9127
        %v9129 = vpop.f32.mrf.mxu0
        %v9130 = vadd.f32 0.0, %v9129
        %9131 = vmatmul.bf16.gmra.mxu0 %v8788
        %v9132 = vpop.f32.mrf.mxu0
        %v9133 = vadd.f32 0.0, %v9132
        %v9134 = vpop.f32.mrf.mxu0
        %v9135 = vadd.f32 0.0, %v9134
        %9136 = vmatmul.bf16.gmra.mxu0 %v8791
        %v9137 = vpop.f32.mrf.mxu0
        %v9138 = vadd.f32 0.0, %v9137
        %v9139 = vpop.f32.mrf.mxu0
        %v9140 = vadd.f32 0.0, %v9139
        %9141 = vdwg.mxu0
        %v9142 = vadd.f32 %v7811, %v8803
        %v9143 = vadd.f32 %v7812, %v8805
        %v9144 = vadd.f32 %v7813, %v8808
        %v9145 = vadd.f32 %v7814, %v8810
        %v9146 = vadd.f32 %v7815, %v8813
        %v9147 = vadd.f32 %v7816, %v8815
        %v9148 = vadd.f32 %v7817, %v8818
        %v9149 = vadd.f32 %v7818, %v8820
        %v9150 = vadd.f32 %v7819, %v8823
        %v9151 = vadd.f32 %v7820, %v8825
        %v9152 = vadd.f32 %v7821, %v8828
        %v9153 = vadd.f32 %v7822, %v8830
        %v9154 = vadd.f32 %v7823, %v8833
        %v9155 = vadd.f32 %v7824, %v8835
        %v9156 = vadd.f32 %v7825, %v8838
        %v9157 = vadd.f32 %v7826, %v8840
        %v9158 = vadd.f32 %v7827, %v8843
        %v9159 = vadd.f32 %v7828, %v8845
        %v9160 = vadd.f32 %v7829, %v8848
        %v9161 = vadd.f32 %v7830, %v8850
        %v9162 = vadd.f32 %v7831, %v8853
        %v9163 = vadd.f32 %v7832, %v8855
        %v9164 = vadd.f32 %v7833, %v8858
        %v9165 = vadd.f32 %v7834, %v8860
        %v9166 = vadd.f32 %v7835, %v8863
        %v9167 = vadd.f32 %v7836, %v8865
        %v9168 = vadd.f32 %v7837, %v8868
        %v9169 = vadd.f32 %v7838, %v8870
        %v9170 = vadd.f32 %v7839, %v8873
        %v9171 = vadd.f32 %v7840, %v8875
        %v9172 = vadd.f32 %v7841, %v8878
        %v9173 = vadd.f32 %v7842, %v8880
        %v9174 = vadd.f32 %v7843, %v8883
        %v9175 = vadd.f32 %v7844, %v8885
        %v9176 = vadd.f32 %v7845, %v8888
        %v9177 = vadd.f32 %v7846, %v8890
        %v9178 = vadd.f32 %v7847, %v8893
        %v9179 = vadd.f32 %v7848, %v8895
        %v9180 = vadd.f32 %v7849, %v8898
        %v9181 = vadd.f32 %v7850, %v8900
        %v9182 = vadd.f32 %v7851, %v8903
        %v9183 = vadd.f32 %v7852, %v8905
        %v9184 = vadd.f32 %v7853, %v8908
        %v9185 = vadd.f32 %v7854, %v8910
        %v9186 = vadd.f32 %v7855, %v8913
        %v9187 = vadd.f32 %v7856, %v8915
        %v9188 = vadd.f32 %v7857, %v8918
        %v9189 = vadd.f32 %v7858, %v8920
        %v9190 = vadd.f32 %v7859, %v8923
        %v9191 = vadd.f32 %v7860, %v8925
        %v9192 = vadd.f32 %v7861, %v8928
        %v9193 = vadd.f32 %v7862, %v8930
        %v9194 = vadd.f32 %v7863, %v8933
        %v9195 = vadd.f32 %v7864, %v8935
        %v9196 = vadd.f32 %v7865, %v8938
        %v9197 = vadd.f32 %v7866, %v8940
        %v9198 = vadd.f32 %v7867, %v8943
        %v9199 = vadd.f32 %v7868, %v8945
        %v9200 = vadd.f32 %v7869, %v8948
        %v9201 = vadd.f32 %v7870, %v8950
        %v9202 = vadd.f32 %v7871, %v8953
        %v9203 = vadd.f32 %v7872, %v8955
        %v9204 = vadd.f32 %v7873, %v8958
        %v9205 = vadd.f32 %v7874, %v8960
        %v9206 = vadd.f32 %v7875, %v8963
        %v9207 = vadd.f32 %v7876, %v8965
        %v9208 = vadd.f32 %v7877, %v8968
        %v9209 = vadd.f32 %v7878, %v8970
        %v9210 = vadd.f32 %v7879, %v8973
        %v9211 = vadd.f32 %v7880, %v8975
        %v9212 = vadd.f32 %v7881, %v8978
        %v9213 = vadd.f32 %v7882, %v8980
        %v9214 = vadd.f32 %v7883, %v8983
        %v9215 = vadd.f32 %v7884, %v8985
        %v9216 = vadd.f32 %v7885, %v8988
        %v9217 = vadd.f32 %v7886, %v8990
        %v9218 = vadd.f32 %v7887, %v8993
        %v9219 = vadd.f32 %v7888, %v8995
        %v9220 = vadd.f32 %v7889, %v8998
        %v9221 = vadd.f32 %v7890, %v9000
        %v9222 = vadd.f32 %v7891, %v9003
        %v9223 = vadd.f32 %v7892, %v9005
        %v9224 = vadd.f32 %v7893, %v9008
        %v9225 = vadd.f32 %v7894, %v9010
        %v9226 = vadd.f32 %v7895, %v9013
        %v9227 = vadd.f32 %v7896, %v9015
        %v9228 = vadd.f32 %v7897, %v9018
        %v9229 = vadd.f32 %v7898, %v9020
        %v9230 = vadd.f32 %v7899, %v9023
        %v9231 = vadd.f32 %v7900, %v9025
        %v9232 = vadd.f32 %v7901, %v9028
        %v9233 = vadd.f32 %v7902, %v9030
        %v9234 = vadd.f32 %v7903, %v9033
        %v9235 = vadd.f32 %v7904, %v9035
        %v9236 = vadd.f32 %v7905, %v9038
        %v9237 = vadd.f32 %v7906, %v9040
        %v9238 = vadd.f32 %v7907, %v9043
        %v9239 = vadd.f32 %v7908, %v9045
        %v9240 = vadd.f32 %v7909, %v9048
        %v9241 = vadd.f32 %v7910, %v9050
        %v9242 = vadd.f32 %v7911, %v9053
        %v9243 = vadd.f32 %v7912, %v9055
        %v9244 = vadd.f32 %v7913, %v9058
        %v9245 = vadd.f32 %v7914, %v9060
        %v9246 = vadd.f32 %v7915, %v9063
        %v9247 = vadd.f32 %v7916, %v9065
        %v9248 = vadd.f32 %v7917, %v9068
        %v9249 = vadd.f32 %v7918, %v9070
        %v9250 = vadd.f32 %v7919, %v9073
        %v9251 = vadd.f32 %v7920, %v9075
        %v9252 = vadd.f32 %v7921, %v9078
        %v9253 = vadd.f32 %v7922, %v9080
        %v9254 = vadd.f32 %v7923, %v9083
        %v9255 = vadd.f32 %v7924, %v9085
        %v9256 = vadd.f32 %v7925, %v9088
        %v9257 = vadd.f32 %v7926, %v9090
        %v9258 = vadd.f32 %v7927, %v9093
        %v9259 = vadd.f32 %v7928, %v9095
        %v9260 = vadd.f32 %v7929, %v9098
        %v9261 = vadd.f32 %v7930, %v9100
        %v9262 = vadd.f32 %v7931, %v9103
        %v9263 = vadd.f32 %v7932, %v9105
        %v9264 = vadd.f32 %v7933, %v9108
        %v9265 = vadd.f32 %v7934, %v9110
        %v9266 = vadd.f32 %v7935, %v9113
        %v9267 = vadd.f32 %v7936, %v9115
        %v9268 = vadd.f32 %v7937, %v9118
        %v9269 = vadd.f32 %v7938, %v9120
        %v9270 = vadd.f32 %v7939, %v9123
        %v9271 = vadd.f32 %v7940, %v9125
        %v9272 = vadd.f32 %v7941, %v9128
        %v9273 = vadd.f32 %v7942, %v9130
        %v9274 = vadd.f32 %v7943, %v9133
        %v9275 = vadd.f32 %v7944, %v9135
        %v9276 = vadd.f32 %v7945, %v9138
        %v9277 = vadd.f32 %v7946, %v9140
        %v9278 = vld [vmem:[%s169 + $0x20] sm:$0x8]
        %s9279 = scalar_lea.vmem %s1, 128
        %v9280 = vld [vmem:[%s9279] sm:$0xf]
        %v9281 = vld [vmem:[%s9279 + $0x4] sm:$0xf]
        %v9282 = vld [vmem:[%s9279 + $0x8] sm:$0xf]
        %v9283 = vld [vmem:[%s9279 + $0xc] sm:$0xf]
        %v9285 = vunpack.c.l.b16 %v9278
        %v9286 = vpack.c.b16 %v6904, %v9285
        %vm9287 = vcmask 1044480
        %v9288 = vrot.slane %v9286, 3
        %v9289 = vrot.slane %v7041, 3
        %v9290 = vsel %vm9287, %v9288, %v9289
        %v9291 = vrot.slane %v7042, 3
        %v9292 = vsel %vm9287, %v9289, %v9291
        %v9293 = vrot.slane %v7043, 3
        %v9294 = vsel %vm9287, %v9291, %v9293
        %v9295 = vrot.slane %v7044, 3
        %v9296 = vsel %vm9287, %v9293, %v9295
        %v9297 = vrot.slane %v7045, 3
        %v9298 = vsel %vm9287, %v9295, %v9297
        %v9299 = vrot.slane %v7046, 3
        %v9300 = vsel %vm9287, %v9297, %v9299
        %v9301 = vrot.slane %v7047, 3
        %v9302 = vsel %vm9287, %v9299, %v9301
        %v9303 = vrot.slane %v7048, 3
        %v9304 = vsel %vm9287, %v9301, %v9303
        %v9305 = vrot.slane %v7049, 3
        %v9306 = vsel %vm9287, %v9303, %v9305
        %v9307 = vrot.slane %v7050, 3
        %v9308 = vsel %vm9287, %v9305, %v9307
        %v9309 = vrot.slane %v7051, 3
        %v9310 = vsel %vm9287, %v9307, %v9309
        %v9311 = vrot.slane %v7052, 3
        %v9312 = vsel %vm9287, %v9309, %v9311
        %v9313 = vrot.slane %v7053, 3
        %v9314 = vsel %vm9287, %v9311, %v9313
        %v9315 = vrot.slane %v7054, 3
        %v9316 = vsel %vm9287, %v9313, %v9315
        %v9317 = vrot.slane %v7055, 3
        %v9318 = vsel %vm9287, %v9315, %v9317
        %v9319 = vrot.slane %v7056, 3
        %v9320 = vsel %vm9287, %v9317, %v9319
        %v9321 = vrot.slane %v7057, 3
        %v9322 = vsel %vm9287, %v9319, %v9321
        %v9323 = vrot.slane %v7058, 3
        %v9324 = vsel %vm9287, %v9321, %v9323
        %v9325 = vrot.slane %v7059, 3
        %v9326 = vsel %vm9287, %v9323, %v9325
        %v9327 = vrot.slane %v7060, 3
        %v9328 = vsel %vm9287, %v9325, %v9327
        %v9329 = vrot.slane %v7061, 3
        %v9330 = vsel %vm9287, %v9327, %v9329
        %v9331 = vrot.slane %v7062, 3
        %v9332 = vsel %vm9287, %v9329, %v9331
        %v9333 = vrot.slane %v7063, 3
        %v9334 = vsel %vm9287, %v9331, %v9333
        %v9335 = vrot.slane %v7064, 3
        %v9336 = vsel %vm9287, %v9333, %v9335
        %v9337 = vrot.slane %v7065, 3
        %v9338 = vsel %vm9287, %v9335, %v9337
        %v9339 = vrot.slane %v7066, 3
        %v9340 = vsel %vm9287, %v9337, %v9339
        %v9341 = vrot.slane %v7067, 3
        %v9342 = vsel %vm9287, %v9339, %v9341
        %v9343 = vrot.slane %v7068, 3
        %v9344 = vsel %vm9287, %v9341, %v9343
        %v9345 = vrot.slane %v7069, 3
        %v9346 = vsel %vm9287, %v9343, %v9345
        %v9347 = vrot.slane %v7070, 3
        %v9348 = vsel %vm9287, %v9345, %v9347
        %v9349 = vrot.slane %v7071, 3
        %v9350 = vsel %vm9287, %v9347, %v9349
        %v9351 = vrot.slane %v7072, 3
        %v9352 = vsel %vm9287, %v9349, %v9351
        %v9353 = vrot.slane %v7073, 3
        %v9354 = vsel %vm9287, %v9351, %v9353
        %v9355 = vrot.slane %v7074, 3
        %v9356 = vsel %vm9287, %v9353, %v9355
        %v9357 = vrot.slane %v7075, 3
        %v9358 = vsel %vm9287, %v9355, %v9357
        %v9359 = vrot.slane %v7076, 3
        %v9360 = vsel %vm9287, %v9357, %v9359
        %v9361 = vrot.slane %v7077, 3
        %v9362 = vsel %vm9287, %v9359, %v9361
        %v9363 = vrot.slane %v7078, 3
        %v9364 = vsel %vm9287, %v9361, %v9363
        %v9365 = vrot.slane %v7079, 3
        %v9366 = vsel %vm9287, %v9363, %v9365
        %v9367 = vrot.slane %v7080, 3
        %v9368 = vsel %vm9287, %v9365, %v9367
        %v9369 = vrot.slane %v7081, 3
        %v9370 = vsel %vm9287, %v9367, %v9369
        %v9371 = vrot.slane %v7082, 3
        %v9372 = vsel %vm9287, %v9369, %v9371
        %v9373 = vrot.slane %v7083, 3
        %v9374 = vsel %vm9287, %v9371, %v9373
        %v9375 = vrot.slane %v7084, 3
        %v9376 = vsel %vm9287, %v9373, %v9375
        %v9377 = vrot.slane %v7085, 3
        %v9378 = vsel %vm9287, %v9375, %v9377
        %v9379 = vrot.slane %v7086, 3
        %v9380 = vsel %vm9287, %v9377, %v9379
        %v9381 = vrot.slane %v7087, 3
        %v9382 = vsel %vm9287, %v9379, %v9381
        %v9383 = vrot.slane %v7088, 3
        %v9384 = vsel %vm9287, %v9381, %v9383
        %v9385 = vrot.slane %v7089, 3
        %v9386 = vsel %vm9287, %v9383, %v9385
        %v9387 = vrot.slane %v7090, 3
        %v9388 = vsel %vm9287, %v9385, %v9387
        %v9389 = vrot.slane %v7091, 3
        %v9390 = vsel %vm9287, %v9387, %v9389
        %v9391 = vrot.slane %v7092, 3
        %v9392 = vsel %vm9287, %v9389, %v9391
        %v9393 = vrot.slane %v7093, 3
        %v9394 = vsel %vm9287, %v9391, %v9393
        %v9395 = vrot.slane %v7094, 3
        %v9396 = vsel %vm9287, %v9393, %v9395
        %v9397 = vrot.slane %v7095, 3
        %v9398 = vsel %vm9287, %v9395, %v9397
        %v9399 = vrot.slane %v7096, 3
        %v9400 = vsel %vm9287, %v9397, %v9399
        %v9401 = vrot.slane %v7097, 3
        %v9402 = vsel %vm9287, %v9399, %v9401
        %v9403 = vrot.slane %v7098, 3
        %v9404 = vsel %vm9287, %v9401, %v9403
        %v9405 = vrot.slane %v7099, 3
        %v9406 = vsel %vm9287, %v9403, %v9405
        %v9407 = vrot.slane %v7100, 3
        %v9408 = vsel %vm9287, %v9405, %v9407
        %v9409 = vrot.slane %v7101, 3
        %v9410 = vsel %vm9287, %v9407, %v9409
        %v9411 = vrot.slane %v7102, 3
        %v9412 = vsel %vm9287, %v9409, %v9411
        %v9413 = vrot.slane %v7103, 3
        %v9414 = vsel %vm9287, %v9411, %v9413
        %v9415 = vrot.slane %v7104, 3
        %v9416 = vsel %vm9287, %v9413, %v9415
        %v9417 = vrot.slane %v7105, 3
        %v9418 = vsel %vm9287, %v9415, %v9417
        %v9419 = vrot.slane %v7106, 3
        %v9420 = vsel %vm9287, %v9417, %v9419
        %v9421 = vrot.slane %v7107, 3
        %v9422 = vsel %vm9287, %v9419, %v9421
        %v9423 = vrot.slane %v7955, 3
        %v9424 = vsel %vm9287, %v9421, %v9423
        %v9429 = vunpack.c.l.b16 %v9280
        %v9430 = vunpack.c.l.b16 %v9281
        %v9431 = vunpack.c.l.b16 %v9282
        %v9432 = vunpack.c.l.b16 %v9283
        %v9433 = vpack.c.b16 %v9430, %v9429
        %v9434 = vpack.c.b16 %v9432, %v9431
        %v9438 = vsel %vm1223, %v9290, 0
        %v9441 = vsel %vm1223, %v9292, 0
        %v9444 = vsel %vm1223, %v9294, 0
        %v9447 = vsel %vm1223, %v9296, 0
        %v9450 = vsel %vm1223, %v9298, 0
        %v9453 = vsel %vm1223, %v9300, 0
        %v9456 = vsel %vm1223, %v9302, 0
        %v9459 = vsel %vm1223, %v9304, 0
        %v9462 = vsel %vm1223, %v9306, 0
        %v9465 = vsel %vm1223, %v9308, 0
        %v9468 = vsel %vm1223, %v9310, 0
        %v9471 = vsel %vm1223, %v9312, 0
        %v9474 = vsel %vm1223, %v9314, 0
        %v9477 = vsel %vm1223, %v9316, 0
        %v9480 = vsel %vm1223, %v9318, 0
        %v9483 = vsel %vm1223, %v9320, 0
        %v9486 = vsel %vm1223, %v9322, 0
        %v9489 = vsel %vm1223, %v9324, 0
        %v9492 = vsel %vm1223, %v9326, 0
        %v9495 = vsel %vm1223, %v9328, 0
        %v9498 = vsel %vm1223, %v9330, 0
        %v9501 = vsel %vm1223, %v9332, 0
        %v9504 = vsel %vm1223, %v9334, 0
        %v9507 = vsel %vm1223, %v9336, 0
        %v9510 = vsel %vm1223, %v9338, 0
        %v9513 = vsel %vm1223, %v9340, 0
        %v9516 = vsel %vm1223, %v9342, 0
        %v9519 = vsel %vm1223, %v9344, 0
        %v9522 = vsel %vm1223, %v9346, 0
        %v9525 = vsel %vm1223, %v9348, 0
        %v9528 = vsel %vm1223, %v9350, 0
        %v9531 = vsel %vm1223, %v9352, 0
        %v9534 = vsel %vm1223, %v9354, 0
        %v9537 = vsel %vm1223, %v9356, 0
        %v9540 = vsel %vm1223, %v9358, 0
        %v9543 = vsel %vm1223, %v9360, 0
        %v9546 = vsel %vm1223, %v9362, 0
        %v9549 = vsel %vm1223, %v9364, 0
        %v9552 = vsel %vm1223, %v9366, 0
        %v9555 = vsel %vm1223, %v9368, 0
        %v9558 = vsel %vm1223, %v9370, 0
        %v9561 = vsel %vm1223, %v9372, 0
        %v9564 = vsel %vm1223, %v9374, 0
        %v9567 = vsel %vm1223, %v9376, 0
        %v9570 = vsel %vm1223, %v9378, 0
        %v9573 = vsel %vm1223, %v9380, 0
        %v9576 = vsel %vm1223, %v9382, 0
        %v9579 = vsel %vm1223, %v9384, 0
        %v9582 = vsel %vm1223, %v9386, 0
        %v9585 = vsel %vm1223, %v9388, 0
        %v9588 = vsel %vm1223, %v9390, 0
        %v9591 = vsel %vm1223, %v9392, 0
        %v9594 = vsel %vm1223, %v9394, 0
        %v9597 = vsel %vm1223, %v9396, 0
        %v9600 = vsel %vm1223, %v9398, 0
        %v9603 = vsel %vm1223, %v9400, 0
        %v9606 = vsel %vm1223, %v9402, 0
        %v9609 = vsel %vm1223, %v9404, 0
        %v9612 = vsel %vm1223, %v9406, 0
        %v9615 = vsel %vm1223, %v9408, 0
        %v9618 = vsel %vm1223, %v9410, 0
        %v9621 = vsel %vm1223, %v9412, 0
        %v9624 = vsel %vm1223, %v9414, 0
        %v9627 = vsel %vm1223, %v9416, 0
        %v9630 = vsel %vm1223, %v9418, 0
        %v9633 = vsel %vm1223, %v9420, 0
        %v9636 = vsel %vm1223, %v9422, 0
        %v9639 = vsel %vm1223, %v9424, 0
        %9641 = vmatpush.bf16.msra.mxu0 0
        %9642 = vmatpush.bf16.msra.mxu0 0
        %9643 = vmatpush.bf16.msra.mxu0 0
        %9644 = vmatpush.bf16.msra.mxu0 0
        %9645 = vmatpush.bf16.msra.mxu0 0
        %9646 = vmatpush.bf16.msra.mxu0 0
        %9647 = vmatpush.bf16.msra.mxu0 %v9434
        %9648 = vmatpush.bf16.msra.mxu0 %v9433
        %9649 = vmatmul.bf16.gmra.mxu0 %v9438
        %v9650 = vpop.f32.mrf.mxu0
        %v9651 = vadd.f32 0.0, %v9650
        %v9652 = vpop.f32.mrf.mxu0
        %v9653 = vadd.f32 0.0, %v9652
        %9654 = vmatmul.bf16.gmra.mxu0 %v9441
        %v9655 = vpop.f32.mrf.mxu0
        %v9656 = vadd.f32 0.0, %v9655
        %v9657 = vpop.f32.mrf.mxu0
        %v9658 = vadd.f32 0.0, %v9657
        %9659 = vmatmul.bf16.gmra.mxu0 %v9444
        %v9660 = vpop.f32.mrf.mxu0
        %v9661 = vadd.f32 0.0, %v9660
        %v9662 = vpop.f32.mrf.mxu0
        %v9663 = vadd.f32 0.0, %v9662
        %9664 = vmatmul.bf16.gmra.mxu0 %v9447
        %v9665 = vpop.f32.mrf.mxu0
        %v9666 = vadd.f32 0.0, %v9665
        %v9667 = vpop.f32.mrf.mxu0
        %v9668 = vadd.f32 0.0, %v9667
        %9669 = vmatmul.bf16.gmra.mxu0 %v9450
        %v9670 = vpop.f32.mrf.mxu0
        %v9671 = vadd.f32 0.0, %v9670
        %v9672 = vpop.f32.mrf.mxu0
        %v9673 = vadd.f32 0.0, %v9672
        %9674 = vmatmul.bf16.gmra.mxu0 %v9453
        %v9675 = vpop.f32.mrf.mxu0
        %v9676 = vadd.f32 0.0, %v9675
        %v9677 = vpop.f32.mrf.mxu0
        %v9678 = vadd.f32 0.0, %v9677
        %9679 = vmatmul.bf16.gmra.mxu0 %v9456
        %v9680 = vpop.f32.mrf.mxu0
        %v9681 = vadd.f32 0.0, %v9680
        %v9682 = vpop.f32.mrf.mxu0
        %v9683 = vadd.f32 0.0, %v9682
        %9684 = vmatmul.bf16.gmra.mxu0 %v9459
        %v9685 = vpop.f32.mrf.mxu0
        %v9686 = vadd.f32 0.0, %v9685
        %v9687 = vpop.f32.mrf.mxu0
        %v9688 = vadd.f32 0.0, %v9687
        %9689 = vmatmul.bf16.gmra.mxu0 %v9462
        %v9690 = vpop.f32.mrf.mxu0
        %v9691 = vadd.f32 0.0, %v9690
        %v9692 = vpop.f32.mrf.mxu0
        %v9693 = vadd.f32 0.0, %v9692
        %9694 = vmatmul.bf16.gmra.mxu0 %v9465
        %v9695 = vpop.f32.mrf.mxu0
        %v9696 = vadd.f32 0.0, %v9695
        %v9697 = vpop.f32.mrf.mxu0
        %v9698 = vadd.f32 0.0, %v9697
        %9699 = vmatmul.bf16.gmra.mxu0 %v9468
        %v9700 = vpop.f32.mrf.mxu0
        %v9701 = vadd.f32 0.0, %v9700
        %v9702 = vpop.f32.mrf.mxu0
        %v9703 = vadd.f32 0.0, %v9702
        %9704 = vmatmul.bf16.gmra.mxu0 %v9471
        %v9705 = vpop.f32.mrf.mxu0
        %v9706 = vadd.f32 0.0, %v9705
        %v9707 = vpop.f32.mrf.mxu0
        %v9708 = vadd.f32 0.0, %v9707
        %9709 = vmatmul.bf16.gmra.mxu0 %v9474
        %v9710 = vpop.f32.mrf.mxu0
        %v9711 = vadd.f32 0.0, %v9710
        %v9712 = vpop.f32.mrf.mxu0
        %v9713 = vadd.f32 0.0, %v9712
        %9714 = vmatmul.bf16.gmra.mxu0 %v9477
        %v9715 = vpop.f32.mrf.mxu0
        %v9716 = vadd.f32 0.0, %v9715
        %v9717 = vpop.f32.mrf.mxu0
        %v9718 = vadd.f32 0.0, %v9717
        %9719 = vmatmul.bf16.gmra.mxu0 %v9480
        %v9720 = vpop.f32.mrf.mxu0
        %v9721 = vadd.f32 0.0, %v9720
        %v9722 = vpop.f32.mrf.mxu0
        %v9723 = vadd.f32 0.0, %v9722
        %9724 = vmatmul.bf16.gmra.mxu0 %v9483
        %v9725 = vpop.f32.mrf.mxu0
        %v9726 = vadd.f32 0.0, %v9725
        %v9727 = vpop.f32.mrf.mxu0
        %v9728 = vadd.f32 0.0, %v9727
        %9729 = vmatmul.bf16.gmra.mxu0 %v9486
        %v9730 = vpop.f32.mrf.mxu0
        %v9731 = vadd.f32 0.0, %v9730
        %v9732 = vpop.f32.mrf.mxu0
        %v9733 = vadd.f32 0.0, %v9732
        %9734 = vmatmul.bf16.gmra.mxu0 %v9489
        %v9735 = vpop.f32.mrf.mxu0
        %v9736 = vadd.f32 0.0, %v9735
        %v9737 = vpop.f32.mrf.mxu0
        %v9738 = vadd.f32 0.0, %v9737
        %9739 = vmatmul.bf16.gmra.mxu0 %v9492
        %v9740 = vpop.f32.mrf.mxu0
        %v9741 = vadd.f32 0.0, %v9740
        %v9742 = vpop.f32.mrf.mxu0
        %v9743 = vadd.f32 0.0, %v9742
        %9744 = vmatmul.bf16.gmra.mxu0 %v9495
        %v9745 = vpop.f32.mrf.mxu0
        %v9746 = vadd.f32 0.0, %v9745
        %v9747 = vpop.f32.mrf.mxu0
        %v9748 = vadd.f32 0.0, %v9747
        %9749 = vmatmul.bf16.gmra.mxu0 %v9498
        %v9750 = vpop.f32.mrf.mxu0
        %v9751 = vadd.f32 0.0, %v9750
        %v9752 = vpop.f32.mrf.mxu0
        %v9753 = vadd.f32 0.0, %v9752
        %9754 = vmatmul.bf16.gmra.mxu0 %v9501
        %v9755 = vpop.f32.mrf.mxu0
        %v9756 = vadd.f32 0.0, %v9755
        %v9757 = vpop.f32.mrf.mxu0
        %v9758 = vadd.f32 0.0, %v9757
        %9759 = vmatmul.bf16.gmra.mxu0 %v9504
        %v9760 = vpop.f32.mrf.mxu0
        %v9761 = vadd.f32 0.0, %v9760
        %v9762 = vpop.f32.mrf.mxu0
        %v9763 = vadd.f32 0.0, %v9762
        %9764 = vmatmul.bf16.gmra.mxu0 %v9507
        %v9765 = vpop.f32.mrf.mxu0
        %v9766 = vadd.f32 0.0, %v9765
        %v9767 = vpop.f32.mrf.mxu0
        %v9768 = vadd.f32 0.0, %v9767
        %9769 = vmatmul.bf16.gmra.mxu0 %v9510
        %v9770 = vpop.f32.mrf.mxu0
        %v9771 = vadd.f32 0.0, %v9770
        %v9772 = vpop.f32.mrf.mxu0
        %v9773 = vadd.f32 0.0, %v9772
        %9774 = vmatmul.bf16.gmra.mxu0 %v9513
        %v9775 = vpop.f32.mrf.mxu0
        %v9776 = vadd.f32 0.0, %v9775
        %v9777 = vpop.f32.mrf.mxu0
        %v9778 = vadd.f32 0.0, %v9777
        %9779 = vmatmul.bf16.gmra.mxu0 %v9516
        %v9780 = vpop.f32.mrf.mxu0
        %v9781 = vadd.f32 0.0, %v9780
        %v9782 = vpop.f32.mrf.mxu0
        %v9783 = vadd.f32 0.0, %v9782
        %9784 = vmatmul.bf16.gmra.mxu0 %v9519
        %v9785 = vpop.f32.mrf.mxu0
        %v9786 = vadd.f32 0.0, %v9785
        %v9787 = vpop.f32.mrf.mxu0
        %v9788 = vadd.f32 0.0, %v9787
        %9789 = vmatmul.bf16.gmra.mxu0 %v9522
        %v9790 = vpop.f32.mrf.mxu0
        %v9791 = vadd.f32 0.0, %v9790
        %v9792 = vpop.f32.mrf.mxu0
        %v9793 = vadd.f32 0.0, %v9792
        %9794 = vmatmul.bf16.gmra.mxu0 %v9525
        %v9795 = vpop.f32.mrf.mxu0
        %v9796 = vadd.f32 0.0, %v9795
        %v9797 = vpop.f32.mrf.mxu0
        %v9798 = vadd.f32 0.0, %v9797
        %9799 = vmatmul.bf16.gmra.mxu0 %v9528
        %v9800 = vpop.f32.mrf.mxu0
        %v9801 = vadd.f32 0.0, %v9800
        %v9802 = vpop.f32.mrf.mxu0
        %v9803 = vadd.f32 0.0, %v9802
        %9804 = vmatmul.bf16.gmra.mxu0 %v9531
        %v9805 = vpop.f32.mrf.mxu0
        %v9806 = vadd.f32 0.0, %v9805
        %v9807 = vpop.f32.mrf.mxu0
        %v9808 = vadd.f32 0.0, %v9807
        %9809 = vmatmul.bf16.gmra.mxu0 %v9534
        %v9810 = vpop.f32.mrf.mxu0
        %v9811 = vadd.f32 0.0, %v9810
        %v9812 = vpop.f32.mrf.mxu0
        %v9813 = vadd.f32 0.0, %v9812
        %9814 = vmatmul.bf16.gmra.mxu0 %v9537
        %v9815 = vpop.f32.mrf.mxu0
        %v9816 = vadd.f32 0.0, %v9815
        %v9817 = vpop.f32.mrf.mxu0
        %v9818 = vadd.f32 0.0, %v9817
        %9819 = vmatmul.bf16.gmra.mxu0 %v9540
        %v9820 = vpop.f32.mrf.mxu0
        %v9821 = vadd.f32 0.0, %v9820
        %v9822 = vpop.f32.mrf.mxu0
        %v9823 = vadd.f32 0.0, %v9822
        %9824 = vmatmul.bf16.gmra.mxu0 %v9543
        %v9825 = vpop.f32.mrf.mxu0
        %v9826 = vadd.f32 0.0, %v9825
        %v9827 = vpop.f32.mrf.mxu0
        %v9828 = vadd.f32 0.0, %v9827
        %9829 = vmatmul.bf16.gmra.mxu0 %v9546
        %v9830 = vpop.f32.mrf.mxu0
        %v9831 = vadd.f32 0.0, %v9830
        %v9832 = vpop.f32.mrf.mxu0
        %v9833 = vadd.f32 0.0, %v9832
        %9834 = vmatmul.bf16.gmra.mxu0 %v9549
        %v9835 = vpop.f32.mrf.mxu0
        %v9836 = vadd.f32 0.0, %v9835
        %v9837 = vpop.f32.mrf.mxu0
        %v9838 = vadd.f32 0.0, %v9837
        %9839 = vmatmul.bf16.gmra.mxu0 %v9552
        %v9840 = vpop.f32.mrf.mxu0
        %v9841 = vadd.f32 0.0, %v9840
        %v9842 = vpop.f32.mrf.mxu0
        %v9843 = vadd.f32 0.0, %v9842
        %9844 = vmatmul.bf16.gmra.mxu0 %v9555
        %v9845 = vpop.f32.mrf.mxu0
        %v9846 = vadd.f32 0.0, %v9845
        %v9847 = vpop.f32.mrf.mxu0
        %v9848 = vadd.f32 0.0, %v9847
        %9849 = vmatmul.bf16.gmra.mxu0 %v9558
        %v9850 = vpop.f32.mrf.mxu0
        %v9851 = vadd.f32 0.0, %v9850
        %v9852 = vpop.f32.mrf.mxu0
        %v9853 = vadd.f32 0.0, %v9852
        %9854 = vmatmul.bf16.gmra.mxu0 %v9561
        %v9855 = vpop.f32.mrf.mxu0
        %v9856 = vadd.f32 0.0, %v9855
        %v9857 = vpop.f32.mrf.mxu0
        %v9858 = vadd.f32 0.0, %v9857
        %9859 = vmatmul.bf16.gmra.mxu0 %v9564
        %v9860 = vpop.f32.mrf.mxu0
        %v9861 = vadd.f32 0.0, %v9860
        %v9862 = vpop.f32.mrf.mxu0
        %v9863 = vadd.f32 0.0, %v9862
        %9864 = vmatmul.bf16.gmra.mxu0 %v9567
        %v9865 = vpop.f32.mrf.mxu0
        %v9866 = vadd.f32 0.0, %v9865
        %v9867 = vpop.f32.mrf.mxu0
        %v9868 = vadd.f32 0.0, %v9867
        %9869 = vmatmul.bf16.gmra.mxu0 %v9570
        %v9870 = vpop.f32.mrf.mxu0
        %v9871 = vadd.f32 0.0, %v9870
        %v9872 = vpop.f32.mrf.mxu0
        %v9873 = vadd.f32 0.0, %v9872
        %9874 = vmatmul.bf16.gmra.mxu0 %v9573
        %v9875 = vpop.f32.mrf.mxu0
        %v9876 = vadd.f32 0.0, %v9875
        %v9877 = vpop.f32.mrf.mxu0
        %v9878 = vadd.f32 0.0, %v9877
        %9879 = vmatmul.bf16.gmra.mxu0 %v9576
        %v9880 = vpop.f32.mrf.mxu0
        %v9881 = vadd.f32 0.0, %v9880
        %v9882 = vpop.f32.mrf.mxu0
        %v9883 = vadd.f32 0.0, %v9882
        %9884 = vmatmul.bf16.gmra.mxu0 %v9579
        %v9885 = vpop.f32.mrf.mxu0
        %v9886 = vadd.f32 0.0, %v9885
        %v9887 = vpop.f32.mrf.mxu0
        %v9888 = vadd.f32 0.0, %v9887
        %9889 = vmatmul.bf16.gmra.mxu0 %v9582
        %v9890 = vpop.f32.mrf.mxu0
        %v9891 = vadd.f32 0.0, %v9890
        %v9892 = vpop.f32.mrf.mxu0
        %v9893 = vadd.f32 0.0, %v9892
        %9894 = vmatmul.bf16.gmra.mxu0 %v9585
        %v9895 = vpop.f32.mrf.mxu0
        %v9896 = vadd.f32 0.0, %v9895
        %v9897 = vpop.f32.mrf.mxu0
        %v9898 = vadd.f32 0.0, %v9897
        %9899 = vmatmul.bf16.gmra.mxu0 %v9588
        %v9900 = vpop.f32.mrf.mxu0
        %v9901 = vadd.f32 0.0, %v9900
        %v9902 = vpop.f32.mrf.mxu0
        %v9903 = vadd.f32 0.0, %v9902
        %9904 = vmatmul.bf16.gmra.mxu0 %v9591
        %v9905 = vpop.f32.mrf.mxu0
        %v9906 = vadd.f32 0.0, %v9905
        %v9907 = vpop.f32.mrf.mxu0
        %v9908 = vadd.f32 0.0, %v9907
        %9909 = vmatmul.bf16.gmra.mxu0 %v9594
        %v9910 = vpop.f32.mrf.mxu0
        %v9911 = vadd.f32 0.0, %v9910
        %v9912 = vpop.f32.mrf.mxu0
        %v9913 = vadd.f32 0.0, %v9912
        %9914 = vmatmul.bf16.gmra.mxu0 %v9597
        %v9915 = vpop.f32.mrf.mxu0
        %v9916 = vadd.f32 0.0, %v9915
        %v9917 = vpop.f32.mrf.mxu0
        %v9918 = vadd.f32 0.0, %v9917
        %9919 = vmatmul.bf16.gmra.mxu0 %v9600
        %v9920 = vpop.f32.mrf.mxu0
        %v9921 = vadd.f32 0.0, %v9920
        %v9922 = vpop.f32.mrf.mxu0
        %v9923 = vadd.f32 0.0, %v9922
        %9924 = vmatmul.bf16.gmra.mxu0 %v9603
        %v9925 = vpop.f32.mrf.mxu0
        %v9926 = vadd.f32 0.0, %v9925
        %v9927 = vpop.f32.mrf.mxu0
        %v9928 = vadd.f32 0.0, %v9927
        %9929 = vmatmul.bf16.gmra.mxu0 %v9606
        %v9930 = vpop.f32.mrf.mxu0
        %v9931 = vadd.f32 0.0, %v9930
        %v9932 = vpop.f32.mrf.mxu0
        %v9933 = vadd.f32 0.0, %v9932
        %9934 = vmatmul.bf16.gmra.mxu0 %v9609
        %v9935 = vpop.f32.mrf.mxu0
        %v9936 = vadd.f32 0.0, %v9935
        %v9937 = vpop.f32.mrf.mxu0
        %v9938 = vadd.f32 0.0, %v9937
        %9939 = vmatmul.bf16.gmra.mxu0 %v9612
        %v9940 = vpop.f32.mrf.mxu0
        %v9941 = vadd.f32 0.0, %v9940
        %v9942 = vpop.f32.mrf.mxu0
        %v9943 = vadd.f32 0.0, %v9942
        %9944 = vmatmul.bf16.gmra.mxu0 %v9615
        %v9945 = vpop.f32.mrf.mxu0
        %v9946 = vadd.f32 0.0, %v9945
        %v9947 = vpop.f32.mrf.mxu0
        %v9948 = vadd.f32 0.0, %v9947
        %9949 = vmatmul.bf16.gmra.mxu0 %v9618
        %v9950 = vpop.f32.mrf.mxu0
        %v9951 = vadd.f32 0.0, %v9950
        %v9952 = vpop.f32.mrf.mxu0
        %v9953 = vadd.f32 0.0, %v9952
        %9954 = vmatmul.bf16.gmra.mxu0 %v9621
        %v9955 = vpop.f32.mrf.mxu0
        %v9956 = vadd.f32 0.0, %v9955
        %v9957 = vpop.f32.mrf.mxu0
        %v9958 = vadd.f32 0.0, %v9957
        %9959 = vmatmul.bf16.gmra.mxu0 %v9624
        %v9960 = vpop.f32.mrf.mxu0
        %v9961 = vadd.f32 0.0, %v9960
        %v9962 = vpop.f32.mrf.mxu0
        %v9963 = vadd.f32 0.0, %v9962
        %9964 = vmatmul.bf16.gmra.mxu0 %v9627
        %v9965 = vpop.f32.mrf.mxu0
        %v9966 = vadd.f32 0.0, %v9965
        %v9967 = vpop.f32.mrf.mxu0
        %v9968 = vadd.f32 0.0, %v9967
        %9969 = vmatmul.bf16.gmra.mxu0 %v9630
        %v9970 = vpop.f32.mrf.mxu0
        %v9971 = vadd.f32 0.0, %v9970
        %v9972 = vpop.f32.mrf.mxu0
        %v9973 = vadd.f32 0.0, %v9972
        %9974 = vmatmul.bf16.gmra.mxu0 %v9633
        %v9975 = vpop.f32.mrf.mxu0
        %v9976 = vadd.f32 0.0, %v9975
        %v9977 = vpop.f32.mrf.mxu0
        %v9978 = vadd.f32 0.0, %v9977
        %9979 = vmatmul.bf16.gmra.mxu0 %v9636
        %v9980 = vpop.f32.mrf.mxu0
        %v9981 = vadd.f32 0.0, %v9980
        %v9982 = vpop.f32.mrf.mxu0
        %v9983 = vadd.f32 0.0, %v9982
        %9984 = vmatmul.bf16.gmra.mxu0 %v9639
        %v9985 = vpop.f32.mrf.mxu0
        %v9986 = vadd.f32 0.0, %v9985
        %v9987 = vpop.f32.mrf.mxu0
        %v9988 = vadd.f32 0.0, %v9987
        %9989 = vdwg.mxu0
        %v9990 = vadd.f32 %v9142, %v9651
        %v9991 = vadd.f32 %v9143, %v9653
        %v9992 = vadd.f32 %v9144, %v9656
        %v9993 = vadd.f32 %v9145, %v9658
        %v9994 = vadd.f32 %v9146, %v9661
        %v9995 = vadd.f32 %v9147, %v9663
        %v9996 = vadd.f32 %v9148, %v9666
        %v9997 = vadd.f32 %v9149, %v9668
        %v9998 = vadd.f32 %v9150, %v9671
        %v9999 = vadd.f32 %v9151, %v9673
        %v10000 = vadd.f32 %v9152, %v9676
        %v10001 = vadd.f32 %v9153, %v9678
        %v10002 = vadd.f32 %v9154, %v9681
        %v10003 = vadd.f32 %v9155, %v9683
        %v10004 = vadd.f32 %v9156, %v9686
        %v10005 = vadd.f32 %v9157, %v9688
        %v10006 = vadd.f32 %v9158, %v9691
        %v10007 = vadd.f32 %v9159, %v9693
        %v10008 = vadd.f32 %v9160, %v9696
        %v10009 = vadd.f32 %v9161, %v9698
        %v10010 = vadd.f32 %v9162, %v9701
        %v10011 = vadd.f32 %v9163, %v9703
        %v10012 = vadd.f32 %v9164, %v9706
        %v10013 = vadd.f32 %v9165, %v9708
        %v10014 = vadd.f32 %v9166, %v9711
        %v10015 = vadd.f32 %v9167, %v9713
        %v10016 = vadd.f32 %v9168, %v9716
        %v10017 = vadd.f32 %v9169, %v9718
        %v10018 = vadd.f32 %v9170, %v9721
        %v10019 = vadd.f32 %v9171, %v9723
        %v10020 = vadd.f32 %v9172, %v9726
        %v10021 = vadd.f32 %v9173, %v9728
        %v10022 = vadd.f32 %v9174, %v9731
        %v10023 = vadd.f32 %v9175, %v9733
        %v10024 = vadd.f32 %v9176, %v9736
        %v10025 = vadd.f32 %v9177, %v9738
        %v10026 = vadd.f32 %v9178, %v9741
        %v10027 = vadd.f32 %v9179, %v9743
        %v10028 = vadd.f32 %v9180, %v9746
        %v10029 = vadd.f32 %v9181, %v9748
        %v10030 = vadd.f32 %v9182, %v9751
        %v10031 = vadd.f32 %v9183, %v9753
        %v10032 = vadd.f32 %v9184, %v9756
        %v10033 = vadd.f32 %v9185, %v9758
        %v10034 = vadd.f32 %v9186, %v9761
        %v10035 = vadd.f32 %v9187, %v9763
        %v10036 = vadd.f32 %v9188, %v9766
        %v10037 = vadd.f32 %v9189, %v9768
        %v10038 = vadd.f32 %v9190, %v9771
        %v10039 = vadd.f32 %v9191, %v9773
        %v10040 = vadd.f32 %v9192, %v9776
        %v10041 = vadd.f32 %v9193, %v9778
        %v10042 = vadd.f32 %v9194, %v9781
        %v10043 = vadd.f32 %v9195, %v9783
        %v10044 = vadd.f32 %v9196, %v9786
        %v10045 = vadd.f32 %v9197, %v9788
        %v10046 = vadd.f32 %v9198, %v9791
        %v10047 = vadd.f32 %v9199, %v9793
        %v10048 = vadd.f32 %v9200, %v9796
        %v10049 = vadd.f32 %v9201, %v9798
        %v10050 = vadd.f32 %v9202, %v9801
        %v10051 = vadd.f32 %v9203, %v9803
        %v10052 = vadd.f32 %v9204, %v9806
        %v10053 = vadd.f32 %v9205, %v9808
        %v10054 = vadd.f32 %v9206, %v9811
        %v10055 = vadd.f32 %v9207, %v9813
        %v10056 = vadd.f32 %v9208, %v9816
        %v10057 = vadd.f32 %v9209, %v9818
        %v10058 = vadd.f32 %v9210, %v9821
        %v10059 = vadd.f32 %v9211, %v9823
        %v10060 = vadd.f32 %v9212, %v9826
        %v10061 = vadd.f32 %v9213, %v9828
        %v10062 = vadd.f32 %v9214, %v9831
        %v10063 = vadd.f32 %v9215, %v9833
        %v10064 = vadd.f32 %v9216, %v9836
        %v10065 = vadd.f32 %v9217, %v9838
        %v10066 = vadd.f32 %v9218, %v9841
        %v10067 = vadd.f32 %v9219, %v9843
        %v10068 = vadd.f32 %v9220, %v9846
        %v10069 = vadd.f32 %v9221, %v9848
        %v10070 = vadd.f32 %v9222, %v9851
        %v10071 = vadd.f32 %v9223, %v9853
        %v10072 = vadd.f32 %v9224, %v9856
        %v10073 = vadd.f32 %v9225, %v9858
        %v10074 = vadd.f32 %v9226, %v9861
        %v10075 = vadd.f32 %v9227, %v9863
        %v10076 = vadd.f32 %v9228, %v9866
        %v10077 = vadd.f32 %v9229, %v9868
        %v10078 = vadd.f32 %v9230, %v9871
        %v10079 = vadd.f32 %v9231, %v9873
        %v10080 = vadd.f32 %v9232, %v9876
        %v10081 = vadd.f32 %v9233, %v9878
        %v10082 = vadd.f32 %v9234, %v9881
        %v10083 = vadd.f32 %v9235, %v9883
        %v10084 = vadd.f32 %v9236, %v9886
        %v10085 = vadd.f32 %v9237, %v9888
        %v10086 = vadd.f32 %v9238, %v9891
        %v10087 = vadd.f32 %v9239, %v9893
        %v10088 = vadd.f32 %v9240, %v9896
        %v10089 = vadd.f32 %v9241, %v9898
        %v10090 = vadd.f32 %v9242, %v9901
        %v10091 = vadd.f32 %v9243, %v9903
        %v10092 = vadd.f32 %v9244, %v9906
        %v10093 = vadd.f32 %v9245, %v9908
        %v10094 = vadd.f32 %v9246, %v9911
        %v10095 = vadd.f32 %v9247, %v9913
        %v10096 = vadd.f32 %v9248, %v9916
        %v10097 = vadd.f32 %v9249, %v9918
        %v10098 = vadd.f32 %v9250, %v9921
        %v10099 = vadd.f32 %v9251, %v9923
        %v10100 = vadd.f32 %v9252, %v9926
        %v10101 = vadd.f32 %v9253, %v9928
        %v10102 = vadd.f32 %v9254, %v9931
        %v10103 = vadd.f32 %v9255, %v9933
        %v10104 = vadd.f32 %v9256, %v9936
        %v10105 = vadd.f32 %v9257, %v9938
        %v10106 = vadd.f32 %v9258, %v9941
        %v10107 = vadd.f32 %v9259, %v9943
        %v10108 = vadd.f32 %v9260, %v9946
        %v10109 = vadd.f32 %v9261, %v9948
        %v10110 = vadd.f32 %v9262, %v9951
        %v10111 = vadd.f32 %v9263, %v9953
        %v10112 = vadd.f32 %v9264, %v9956
        %v10113 = vadd.f32 %v9265, %v9958
        %v10114 = vadd.f32 %v9266, %v9961
        %v10115 = vadd.f32 %v9267, %v9963
        %v10116 = vadd.f32 %v9268, %v9966
        %v10117 = vadd.f32 %v9269, %v9968
        %v10118 = vadd.f32 %v9270, %v9971
        %v10119 = vadd.f32 %v9271, %v9973
        %v10120 = vadd.f32 %v9272, %v9976
        %v10121 = vadd.f32 %v9273, %v9978
        %v10122 = vadd.f32 %v9274, %v9981
        %v10123 = vadd.f32 %v9275, %v9983
        %v10124 = vadd.f32 %v9276, %v9986
        %v10125 = vadd.f32 %v9277, %v9988
        %v10126 = vld [vmem:[%s2] sm:$0x1]
        %v10128 = vperm.slane %v10126, 0
        %v10130 = vadd.f32 %v9990, %v10128
        %v10131 = vadd.f32 %v9991, %v10128
        %v10132 = vadd.f32 %v9992, %v10128
        %v10133 = vadd.f32 %v9993, %v10128
        %v10134 = vadd.f32 %v9994, %v10128
        %v10135 = vadd.f32 %v9995, %v10128
        %v10136 = vadd.f32 %v9996, %v10128
        %v10137 = vadd.f32 %v9997, %v10128
        %v10138 = vadd.f32 %v9998, %v10128
        %v10139 = vadd.f32 %v9999, %v10128
        %v10140 = vadd.f32 %v10000, %v10128
        %v10141 = vadd.f32 %v10001, %v10128
        %v10142 = vadd.f32 %v10002, %v10128
        %v10143 = vadd.f32 %v10003, %v10128
        %v10144 = vadd.f32 %v10004, %v10128
        %v10145 = vadd.f32 %v10005, %v10128
        %v10146 = vadd.f32 %v10006, %v10128
        %v10147 = vadd.f32 %v10007, %v10128
        %v10148 = vadd.f32 %v10008, %v10128
        %v10149 = vadd.f32 %v10009, %v10128
        %v10150 = vadd.f32 %v10010, %v10128
        %v10151 = vadd.f32 %v10011, %v10128
        %v10152 = vadd.f32 %v10012, %v10128
        %v10153 = vadd.f32 %v10013, %v10128
        %v10154 = vadd.f32 %v10014, %v10128
        %v10155 = vadd.f32 %v10015, %v10128
        %v10156 = vadd.f32 %v10016, %v10128
        %v10157 = vadd.f32 %v10017, %v10128
        %v10158 = vadd.f32 %v10018, %v10128
        %v10159 = vadd.f32 %v10019, %v10128
        %v10160 = vadd.f32 %v10020, %v10128
        %v10161 = vadd.f32 %v10021, %v10128
        %v10162 = vadd.f32 %v10022, %v10128
        %v10163 = vadd.f32 %v10023, %v10128
        %v10164 = vadd.f32 %v10024, %v10128
        %v10165 = vadd.f32 %v10025, %v10128
        %v10166 = vadd.f32 %v10026, %v10128
        %v10167 = vadd.f32 %v10027, %v10128
        %v10168 = vadd.f32 %v10028, %v10128
        %v10169 = vadd.f32 %v10029, %v10128
        %v10170 = vadd.f32 %v10030, %v10128
        %v10171 = vadd.f32 %v10031, %v10128
        %v10172 = vadd.f32 %v10032, %v10128
        %v10173 = vadd.f32 %v10033, %v10128
        %v10174 = vadd.f32 %v10034, %v10128
        %v10175 = vadd.f32 %v10035, %v10128
        %v10176 = vadd.f32 %v10036, %v10128
        %v10177 = vadd.f32 %v10037, %v10128
        %v10178 = vadd.f32 %v10038, %v10128
        %v10179 = vadd.f32 %v10039, %v10128
        %v10180 = vadd.f32 %v10040, %v10128
        %v10181 = vadd.f32 %v10041, %v10128
        %v10182 = vadd.f32 %v10042, %v10128
        %v10183 = vadd.f32 %v10043, %v10128
        %v10184 = vadd.f32 %v10044, %v10128
        %v10185 = vadd.f32 %v10045, %v10128
        %v10186 = vadd.f32 %v10046, %v10128
        %v10187 = vadd.f32 %v10047, %v10128
        %v10188 = vadd.f32 %v10048, %v10128
        %v10189 = vadd.f32 %v10049, %v10128
        %v10190 = vadd.f32 %v10050, %v10128
        %v10191 = vadd.f32 %v10051, %v10128
        %v10192 = vadd.f32 %v10052, %v10128
        %v10193 = vadd.f32 %v10053, %v10128
        %v10194 = vadd.f32 %v10054, %v10128
        %v10195 = vadd.f32 %v10055, %v10128
        %v10196 = vadd.f32 %v10056, %v10128
        %v10197 = vadd.f32 %v10057, %v10128
        %v10198 = vadd.f32 %v10058, %v10128
        %v10199 = vadd.f32 %v10059, %v10128
        %v10200 = vadd.f32 %v10060, %v10128
        %v10201 = vadd.f32 %v10061, %v10128
        %v10202 = vadd.f32 %v10062, %v10128
        %v10203 = vadd.f32 %v10063, %v10128
        %v10204 = vadd.f32 %v10064, %v10128
        %v10205 = vadd.f32 %v10065, %v10128
        %v10206 = vadd.f32 %v10066, %v10128
        %v10207 = vadd.f32 %v10067, %v10128
        %v10208 = vadd.f32 %v10068, %v10128
        %v10209 = vadd.f32 %v10069, %v10128
        %v10210 = vadd.f32 %v10070, %v10128
        %v10211 = vadd.f32 %v10071, %v10128
        %v10212 = vadd.f32 %v10072, %v10128
        %v10213 = vadd.f32 %v10073, %v10128
        %v10214 = vadd.f32 %v10074, %v10128
        %v10215 = vadd.f32 %v10075, %v10128
        %v10216 = vadd.f32 %v10076, %v10128
        %v10217 = vadd.f32 %v10077, %v10128
        %v10218 = vadd.f32 %v10078, %v10128
        %v10219 = vadd.f32 %v10079, %v10128
        %v10220 = vadd.f32 %v10080, %v10128
        %v10221 = vadd.f32 %v10081, %v10128
        %v10222 = vadd.f32 %v10082, %v10128
        %v10223 = vadd.f32 %v10083, %v10128
        %v10224 = vadd.f32 %v10084, %v10128
        %v10225 = vadd.f32 %v10085, %v10128
        %v10226 = vadd.f32 %v10086, %v10128
        %v10227 = vadd.f32 %v10087, %v10128
        %v10228 = vadd.f32 %v10088, %v10128
        %v10229 = vadd.f32 %v10089, %v10128
        %v10230 = vadd.f32 %v10090, %v10128
        %v10231 = vadd.f32 %v10091, %v10128
        %v10232 = vadd.f32 %v10092, %v10128
        %v10233 = vadd.f32 %v10093, %v10128
        %v10234 = vadd.f32 %v10094, %v10128
        %v10235 = vadd.f32 %v10095, %v10128
        %v10236 = vadd.f32 %v10096, %v10128
        %v10237 = vadd.f32 %v10097, %v10128
        %v10238 = vadd.f32 %v10098, %v10128
        %v10239 = vadd.f32 %v10099, %v10128
        %v10240 = vadd.f32 %v10100, %v10128
        %v10241 = vadd.f32 %v10101, %v10128
        %v10242 = vadd.f32 %v10102, %v10128
        %v10243 = vadd.f32 %v10103, %v10128
        %v10244 = vadd.f32 %v10104, %v10128
        %v10245 = vadd.f32 %v10105, %v10128
        %v10246 = vadd.f32 %v10106, %v10128
        %v10247 = vadd.f32 %v10107, %v10128
        %v10248 = vadd.f32 %v10108, %v10128
        %v10249 = vadd.f32 %v10109, %v10128
        %v10250 = vadd.f32 %v10110, %v10128
        %v10251 = vadd.f32 %v10111, %v10128
        %v10252 = vadd.f32 %v10112, %v10128
        %v10253 = vadd.f32 %v10113, %v10128
        %v10254 = vadd.f32 %v10114, %v10128
        %v10255 = vadd.f32 %v10115, %v10128
        %v10256 = vadd.f32 %v10116, %v10128
        %v10257 = vadd.f32 %v10117, %v10128
        %v10258 = vadd.f32 %v10118, %v10128
        %v10259 = vadd.f32 %v10119, %v10128
        %v10260 = vadd.f32 %v10120, %v10128
        %v10261 = vadd.f32 %v10121, %v10128
        %v10262 = vadd.f32 %v10122, %v10128
        %v10263 = vadd.f32 %v10123, %v10128
        %v10264 = vadd.f32 %v10124, %v10128
        %v10265 = vadd.f32 %v10125, %v10128
        %v10266 = vmax.f32 %v10130, 0.0
        %v10267 = vmax.f32 %v10131, 0.0
        %v10268 = vmax.f32 %v10132, 0.0
        %v10269 = vmax.f32 %v10133, 0.0
        %v10270 = vmax.f32 %v10134, 0.0
        %v10271 = vmax.f32 %v10135, 0.0
        %v10272 = vmax.f32 %v10136, 0.0
        %v10273 = vmax.f32 %v10137, 0.0
        %v10274 = vmax.f32 %v10138, 0.0
        %v10275 = vmax.f32 %v10139, 0.0
        %v10276 = vmax.f32 %v10140, 0.0
        %v10277 = vmax.f32 %v10141, 0.0
        %v10278 = vmax.f32 %v10142, 0.0
        %v10279 = vmax.f32 %v10143, 0.0
        %v10280 = vmax.f32 %v10144, 0.0
        %v10281 = vmax.f32 %v10145, 0.0
        %v10282 = vmax.f32 %v10146, 0.0
        %v10283 = vmax.f32 %v10147, 0.0
        %v10284 = vmax.f32 %v10148, 0.0
        %v10285 = vmax.f32 %v10149, 0.0
        %v10286 = vmax.f32 %v10150, 0.0
        %v10287 = vmax.f32 %v10151, 0.0
        %v10288 = vmax.f32 %v10152, 0.0
        %v10289 = vmax.f32 %v10153, 0.0
        %v10290 = vmax.f32 %v10154, 0.0
        %v10291 = vmax.f32 %v10155, 0.0
        %v10292 = vmax.f32 %v10156, 0.0
        %v10293 = vmax.f32 %v10157, 0.0
        %v10294 = vmax.f32 %v10158, 0.0
        %v10295 = vmax.f32 %v10159, 0.0
        %v10296 = vmax.f32 %v10160, 0.0
        %v10297 = vmax.f32 %v10161, 0.0
        %v10298 = vmax.f32 %v10162, 0.0
        %v10299 = vmax.f32 %v10163, 0.0
        %v10300 = vmax.f32 %v10164, 0.0
        %v10301 = vmax.f32 %v10165, 0.0
        %v10302 = vmax.f32 %v10166, 0.0
        %v10303 = vmax.f32 %v10167, 0.0
        %v10304 = vmax.f32 %v10168, 0.0
        %v10305 = vmax.f32 %v10169, 0.0
        %v10306 = vmax.f32 %v10170, 0.0
        %v10307 = vmax.f32 %v10171, 0.0
        %v10308 = vmax.f32 %v10172, 0.0
        %v10309 = vmax.f32 %v10173, 0.0
        %v10310 = vmax.f32 %v10174, 0.0
        %v10311 = vmax.f32 %v10175, 0.0
        %v10312 = vmax.f32 %v10176, 0.0
        %v10313 = vmax.f32 %v10177, 0.0
        %v10314 = vmax.f32 %v10178, 0.0
        %v10315 = vmax.f32 %v10179, 0.0
        %v10316 = vmax.f32 %v10180, 0.0
        %v10317 = vmax.f32 %v10181, 0.0
        %v10318 = vmax.f32 %v10182, 0.0
        %v10319 = vmax.f32 %v10183, 0.0
        %v10320 = vmax.f32 %v10184, 0.0
        %v10321 = vmax.f32 %v10185, 0.0
        %v10322 = vmax.f32 %v10186, 0.0
        %v10323 = vmax.f32 %v10187, 0.0
        %v10324 = vmax.f32 %v10188, 0.0
        %v10325 = vmax.f32 %v10189, 0.0
        %v10326 = vmax.f32 %v10190, 0.0
        %v10327 = vmax.f32 %v10191, 0.0
        %v10328 = vmax.f32 %v10192, 0.0
        %v10329 = vmax.f32 %v10193, 0.0
        %v10330 = vmax.f32 %v10194, 0.0
        %v10331 = vmax.f32 %v10195, 0.0
        %v10332 = vmax.f32 %v10196, 0.0
        %v10333 = vmax.f32 %v10197, 0.0
        %v10334 = vmax.f32 %v10198, 0.0
        %v10335 = vmax.f32 %v10199, 0.0
        %v10336 = vmax.f32 %v10200, 0.0
        %v10337 = vmax.f32 %v10201, 0.0
        %v10338 = vmax.f32 %v10202, 0.0
        %v10339 = vmax.f32 %v10203, 0.0
        %v10340 = vmax.f32 %v10204, 0.0
        %v10341 = vmax.f32 %v10205, 0.0
        %v10342 = vmax.f32 %v10206, 0.0
        %v10343 = vmax.f32 %v10207, 0.0
        %v10344 = vmax.f32 %v10208, 0.0
        %v10345 = vmax.f32 %v10209, 0.0
        %v10346 = vmax.f32 %v10210, 0.0
        %v10347 = vmax.f32 %v10211, 0.0
        %v10348 = vmax.f32 %v10212, 0.0
        %v10349 = vmax.f32 %v10213, 0.0
        %v10350 = vmax.f32 %v10214, 0.0
        %v10351 = vmax.f32 %v10215, 0.0
        %v10352 = vmax.f32 %v10216, 0.0
        %v10353 = vmax.f32 %v10217, 0.0
        %v10354 = vmax.f32 %v10218, 0.0
        %v10355 = vmax.f32 %v10219, 0.0
        %v10356 = vmax.f32 %v10220, 0.0
        %v10357 = vmax.f32 %v10221, 0.0
        %v10358 = vmax.f32 %v10222, 0.0
        %v10359 = vmax.f32 %v10223, 0.0
        %v10360 = vmax.f32 %v10224, 0.0
        %v10361 = vmax.f32 %v10225, 0.0
        %v10362 = vmax.f32 %v10226, 0.0
        %v10363 = vmax.f32 %v10227, 0.0
        %v10364 = vmax.f32 %v10228, 0.0
        %v10365 = vmax.f32 %v10229, 0.0
        %v10366 = vmax.f32 %v10230, 0.0
        %v10367 = vmax.f32 %v10231, 0.0
        %v10368 = vmax.f32 %v10232, 0.0
        %v10369 = vmax.f32 %v10233, 0.0
        %v10370 = vmax.f32 %v10234, 0.0
        %v10371 = vmax.f32 %v10235, 0.0
        %v10372 = vmax.f32 %v10236, 0.0
        %v10373 = vmax.f32 %v10237, 0.0
        %v10374 = vmax.f32 %v10238, 0.0
        %v10375 = vmax.f32 %v10239, 0.0
        %v10376 = vmax.f32 %v10240, 0.0
        %v10377 = vmax.f32 %v10241, 0.0
        %v10378 = vmax.f32 %v10242, 0.0
        %v10379 = vmax.f32 %v10243, 0.0
        %v10380 = vmax.f32 %v10244, 0.0
        %v10381 = vmax.f32 %v10245, 0.0
        %v10382 = vmax.f32 %v10246, 0.0
        %v10383 = vmax.f32 %v10247, 0.0
        %v10384 = vmax.f32 %v10248, 0.0
        %v10385 = vmax.f32 %v10249, 0.0
        %v10386 = vmax.f32 %v10250, 0.0
        %v10387 = vmax.f32 %v10251, 0.0
        %v10388 = vmax.f32 %v10252, 0.0
        %v10389 = vmax.f32 %v10253, 0.0
        %v10390 = vmax.f32 %v10254, 0.0
        %v10391 = vmax.f32 %v10255, 0.0
        %v10392 = vmax.f32 %v10256, 0.0
        %v10393 = vmax.f32 %v10257, 0.0
        %v10394 = vmax.f32 %v10258, 0.0
        %v10395 = vmax.f32 %v10259, 0.0
        %v10396 = vmax.f32 %v10260, 0.0
        %v10397 = vmax.f32 %v10261, 0.0
        %v10398 = vmax.f32 %v10262, 0.0
        %v10399 = vmax.f32 %v10263, 0.0
        %v10400 = vmax.f32 %v10264, 0.0
        %v10401 = vmax.f32 %v10265, 0.0
        %v10402 = vpack.c.bf16 %v10266, %v10266
        %v10403 = vpack.c.bf16 %v10267, %v10267
        %v10404 = vpack.c.bf16 %v10268, %v10268
        %v10405 = vpack.c.bf16 %v10269, %v10269
        %v10406 = vpack.c.bf16 %v10270, %v10270
        %v10407 = vpack.c.bf16 %v10271, %v10271
        %v10408 = vpack.c.bf16 %v10272, %v10272
        %v10409 = vpack.c.bf16 %v10273, %v10273
        %v10410 = vpack.c.bf16 %v10274, %v10274
        %v10411 = vpack.c.bf16 %v10275, %v10275
        %v10412 = vpack.c.bf16 %v10276, %v10276
        %v10413 = vpack.c.bf16 %v10277, %v10277
        %v10414 = vpack.c.bf16 %v10278, %v10278
        %v10415 = vpack.c.bf16 %v10279, %v10279
        %v10416 = vpack.c.bf16 %v10280, %v10280
        %v10417 = vpack.c.bf16 %v10281, %v10281
        %v10418 = vpack.c.bf16 %v10282, %v10282
        %v10419 = vpack.c.bf16 %v10283, %v10283
        %v10420 = vpack.c.bf16 %v10284, %v10284
        %v10421 = vpack.c.bf16 %v10285, %v10285
        %v10422 = vpack.c.bf16 %v10286, %v10286
        %v10423 = vpack.c.bf16 %v10287, %v10287
        %v10424 = vpack.c.bf16 %v10288, %v10288
        %v10425 = vpack.c.bf16 %v10289, %v10289
        %v10426 = vpack.c.bf16 %v10290, %v10290
        %v10427 = vpack.c.bf16 %v10291, %v10291
        %v10428 = vpack.c.bf16 %v10292, %v10292
        %v10429 = vpack.c.bf16 %v10293, %v10293
        %v10430 = vpack.c.bf16 %v10294, %v10294
        %v10431 = vpack.c.bf16 %v10295, %v10295
        %v10432 = vpack.c.bf16 %v10296, %v10296
        %v10433 = vpack.c.bf16 %v10297, %v10297
        %v10434 = vpack.c.bf16 %v10298, %v10298
        %v10435 = vpack.c.bf16 %v10299, %v10299
        %v10436 = vpack.c.bf16 %v10300, %v10300
        %v10437 = vpack.c.bf16 %v10301, %v10301
        %v10438 = vpack.c.bf16 %v10302, %v10302
        %v10439 = vpack.c.bf16 %v10303, %v10303
        %v10440 = vpack.c.bf16 %v10304, %v10304
        %v10441 = vpack.c.bf16 %v10305, %v10305
        %v10442 = vpack.c.bf16 %v10306, %v10306
        %v10443 = vpack.c.bf16 %v10307, %v10307
        %v10444 = vpack.c.bf16 %v10308, %v10308
        %v10445 = vpack.c.bf16 %v10309, %v10309
        %v10446 = vpack.c.bf16 %v10310, %v10310
        %v10447 = vpack.c.bf16 %v10311, %v10311
        %v10448 = vpack.c.bf16 %v10312, %v10312
        %v10449 = vpack.c.bf16 %v10313, %v10313
        %v10450 = vpack.c.bf16 %v10314, %v10314
        %v10451 = vpack.c.bf16 %v10315, %v10315
        %v10452 = vpack.c.bf16 %v10316, %v10316
        %v10453 = vpack.c.bf16 %v10317, %v10317
        %v10454 = vpack.c.bf16 %v10318, %v10318
        %v10455 = vpack.c.bf16 %v10319, %v10319
        %v10456 = vpack.c.bf16 %v10320, %v10320
        %v10457 = vpack.c.bf16 %v10321, %v10321
        %v10458 = vpack.c.bf16 %v10322, %v10322
        %v10459 = vpack.c.bf16 %v10323, %v10323
        %v10460 = vpack.c.bf16 %v10324, %v10324
        %v10461 = vpack.c.bf16 %v10325, %v10325
        %v10462 = vpack.c.bf16 %v10326, %v10326
        %v10463 = vpack.c.bf16 %v10327, %v10327
        %v10464 = vpack.c.bf16 %v10328, %v10328
        %v10465 = vpack.c.bf16 %v10329, %v10329
        %v10466 = vpack.c.bf16 %v10330, %v10330
        %v10467 = vpack.c.bf16 %v10331, %v10331
        %v10468 = vpack.c.bf16 %v10332, %v10332
        %v10469 = vpack.c.bf16 %v10333, %v10333
        %v10470 = vpack.c.bf16 %v10334, %v10334
        %v10471 = vpack.c.bf16 %v10335, %v10335
        %v10472 = vpack.c.bf16 %v10336, %v10336
        %v10473 = vpack.c.bf16 %v10337, %v10337
        %v10474 = vpack.c.bf16 %v10338, %v10338
        %v10475 = vpack.c.bf16 %v10339, %v10339
        %v10476 = vpack.c.bf16 %v10340, %v10340
        %v10477 = vpack.c.bf16 %v10341, %v10341
        %v10478 = vpack.c.bf16 %v10342, %v10342
        %v10479 = vpack.c.bf16 %v10343, %v10343
        %v10480 = vpack.c.bf16 %v10344, %v10344
        %v10481 = vpack.c.bf16 %v10345, %v10345
        %v10482 = vpack.c.bf16 %v10346, %v10346
        %v10483 = vpack.c.bf16 %v10347, %v10347
        %v10484 = vpack.c.bf16 %v10348, %v10348
        %v10485 = vpack.c.bf16 %v10349, %v10349
        %v10486 = vpack.c.bf16 %v10350, %v10350
        %v10487 = vpack.c.bf16 %v10351, %v10351
        %v10488 = vpack.c.bf16 %v10352, %v10352
        %v10489 = vpack.c.bf16 %v10353, %v10353
        %v10490 = vpack.c.bf16 %v10354, %v10354
        %v10491 = vpack.c.bf16 %v10355, %v10355
        %v10492 = vpack.c.bf16 %v10356, %v10356
        %v10493 = vpack.c.bf16 %v10357, %v10357
        %v10494 = vpack.c.bf16 %v10358, %v10358
        %v10495 = vpack.c.bf16 %v10359, %v10359
        %v10496 = vpack.c.bf16 %v10360, %v10360
        %v10497 = vpack.c.bf16 %v10361, %v10361
        %v10498 = vpack.c.bf16 %v10362, %v10362
        %v10499 = vpack.c.bf16 %v10363, %v10363
        %v10500 = vpack.c.bf16 %v10364, %v10364
        %v10501 = vpack.c.bf16 %v10365, %v10365
        %v10502 = vpack.c.bf16 %v10366, %v10366
        %v10503 = vpack.c.bf16 %v10367, %v10367
        %v10504 = vpack.c.bf16 %v10368, %v10368
        %v10505 = vpack.c.bf16 %v10369, %v10369
        %v10506 = vpack.c.bf16 %v10370, %v10370
        %v10507 = vpack.c.bf16 %v10371, %v10371
        %v10508 = vpack.c.bf16 %v10372, %v10372
        %v10509 = vpack.c.bf16 %v10373, %v10373
        %v10510 = vpack.c.bf16 %v10374, %v10374
        %v10511 = vpack.c.bf16 %v10375, %v10375
        %v10512 = vpack.c.bf16 %v10376, %v10376
        %v10513 = vpack.c.bf16 %v10377, %v10377
        %v10514 = vpack.c.bf16 %v10378, %v10378
        %v10515 = vpack.c.bf16 %v10379, %v10379
        %v10516 = vpack.c.bf16 %v10380, %v10380
        %v10517 = vpack.c.bf16 %v10381, %v10381
        %v10518 = vpack.c.bf16 %v10382, %v10382
        %v10519 = vpack.c.bf16 %v10383, %v10383
        %v10520 = vpack.c.bf16 %v10384, %v10384
        %v10521 = vpack.c.bf16 %v10385, %v10385
        %v10522 = vpack.c.bf16 %v10386, %v10386
        %v10523 = vpack.c.bf16 %v10387, %v10387
        %v10524 = vpack.c.bf16 %v10388, %v10388
        %v10525 = vpack.c.bf16 %v10389, %v10389
        %v10526 = vpack.c.bf16 %v10390, %v10390
        %v10527 = vpack.c.bf16 %v10391, %v10391
        %v10528 = vpack.c.bf16 %v10392, %v10392
        %v10529 = vpack.c.bf16 %v10393, %v10393
        %v10530 = vpack.c.bf16 %v10394, %v10394
        %v10531 = vpack.c.bf16 %v10395, %v10395
        %v10532 = vpack.c.bf16 %v10396, %v10396
        %v10533 = vpack.c.bf16 %v10397, %v10397
        %v10534 = vpack.c.bf16 %v10398, %v10398
        %v10535 = vpack.c.bf16 %v10399, %v10399
        %v10536 = vpack.c.bf16 %v10400, %v10400
        %v10537 = vpack.c.bf16 %v10401, %v10401
        %10538 = vst [vmem:[%s164] sm:$0xf] %v10402
        %10539 = vst [vmem:[%s164 + $0x4] sm:$0xf] %v10403
        %10540 = vst [vmem:[%s164 + $0x8] sm:$0xf] %v10404
        %10541 = vst [vmem:[%s164 + $0xc] sm:$0xf] %v10405
        %10542 = vst [vmem:[%s164 + $0x10] sm:$0xf] %v10406
        %10543 = vst [vmem:[%s164 + $0x14] sm:$0xf] %v10407
        %10544 = vst [vmem:[%s164 + $0x18] sm:$0xf] %v10408
        %10545 = vst [vmem:[%s164 + $0x1c] sm:$0xf] %v10409
        %10546 = vst [vmem:[%s164 + $0x20] sm:$0xf] %v10410
        %10547 = vst [vmem:[%s164 + $0x24] sm:$0xf] %v10411
        %10548 = vst [vmem:[%s164 + $0x28] sm:$0xf] %v10412
        %10549 = vst [vmem:[%s164 + $0x2c] sm:$0xf] %v10413
        %10550 = vst [vmem:[%s164 + $0x30] sm:$0xf] %v10414
        %10551 = vst [vmem:[%s164 + $0x34] sm:$0xf] %v10415
        %10552 = vst [vmem:[%s164 + $0x38] sm:$0xf] %v10416
        %10553 = vst [vmem:[%s164 + $0x3c] sm:$0xf] %v10417
        %10554 = vst [vmem:[%s164 + $0x40] sm:$0xf] %v10418
        %10555 = vst [vmem:[%s164 + $0x44] sm:$0xf] %v10419
        %10556 = vst [vmem:[%s164 + $0x48] sm:$0xf] %v10420
        %10557 = vst [vmem:[%s164 + $0x4c] sm:$0xf] %v10421
        %10558 = vst [vmem:[%s164 + $0x50] sm:$0xf] %v10422
        %10559 = vst [vmem:[%s164 + $0x54] sm:$0xf] %v10423
        %10560 = vst [vmem:[%s164 + $0x58] sm:$0xf] %v10424
        %10561 = vst [vmem:[%s164 + $0x5c] sm:$0xf] %v10425
        %10562 = vst [vmem:[%s164 + $0x60] sm:$0xf] %v10426
        %10563 = vst [vmem:[%s164 + $0x64] sm:$0xf] %v10427
        %10564 = vst [vmem:[%s164 + $0x68] sm:$0xf] %v10428
        %10565 = vst [vmem:[%s164 + $0x6c] sm:$0xf] %v10429
        %10566 = vst [vmem:[%s164 + $0x70] sm:$0xf] %v10430
        %10567 = vst [vmem:[%s164 + $0x74] sm:$0xf] %v10431
        %10568 = vst [vmem:[%s164 + $0x78] sm:$0xf] %v10432
        %10569 = vst [vmem:[%s164 + $0x7c] sm:$0xf] %v10433
        %10570 = vst [vmem:[%s164 + $0x80] sm:$0xf] %v10434
        %10571 = vst [vmem:[%s164 + $0x84] sm:$0xf] %v10435
        %10572 = vst [vmem:[%s164 + $0x88] sm:$0xf] %v10436
        %10573 = vst [vmem:[%s164 + $0x8c] sm:$0xf] %v10437
        %10574 = vst [vmem:[%s164 + $0x90] sm:$0xf] %v10438
        %10575 = vst [vmem:[%s164 + $0x94] sm:$0xf] %v10439
        %10576 = vst [vmem:[%s164 + $0x98] sm:$0xf] %v10440
        %10577 = vst [vmem:[%s164 + $0x9c] sm:$0xf] %v10441
        %10578 = vst [vmem:[%s164 + $0xa0] sm:$0xf] %v10442
        %10579 = vst [vmem:[%s164 + $0xa4] sm:$0xf] %v10443
        %10580 = vst [vmem:[%s164 + $0xa8] sm:$0xf] %v10444
        %10581 = vst [vmem:[%s164 + $0xac] sm:$0xf] %v10445
        %10582 = vst [vmem:[%s164 + $0xb0] sm:$0xf] %v10446
        %10583 = vst [vmem:[%s164 + $0xb4] sm:$0xf] %v10447
        %10584 = vst [vmem:[%s164 + $0xb8] sm:$0xf] %v10448
        %10585 = vst [vmem:[%s164 + $0xbc] sm:$0xf] %v10449
        %10586 = vst [vmem:[%s164 + $0xc0] sm:$0xf] %v10450
        %10587 = vst [vmem:[%s164 + $0xc4] sm:$0xf] %v10451
        %10588 = vst [vmem:[%s164 + $0xc8] sm:$0xf] %v10452
        %10589 = vst [vmem:[%s164 + $0xcc] sm:$0xf] %v10453
        %10590 = vst [vmem:[%s164 + $0xd0] sm:$0xf] %v10454
        %10591 = vst [vmem:[%s164 + $0xd4] sm:$0xf] %v10455
        %10592 = vst [vmem:[%s164 + $0xd8] sm:$0xf] %v10456
        %10593 = vst [vmem:[%s164 + $0xdc] sm:$0xf] %v10457
        %10594 = vst [vmem:[%s164 + $0xe0] sm:$0xf] %v10458
        %10595 = vst [vmem:[%s164 + $0xe4] sm:$0xf] %v10459
        %10596 = vst [vmem:[%s164 + $0xe8] sm:$0xf] %v10460
        %10597 = vst [vmem:[%s164 + $0xec] sm:$0xf] %v10461
        %10598 = vst [vmem:[%s164 + $0xf0] sm:$0xf] %v10462
        %10599 = vst [vmem:[%s164 + $0xf4] sm:$0xf] %v10463
        %10600 = vst [vmem:[%s164 + $0xf8] sm:$0xf] %v10464
        %10601 = vst [vmem:[%s164 + $0xfc] sm:$0xf] %v10465
        %10602 = vst [vmem:[%s164 + $0x100] sm:$0xf] %v10466
        %10603 = vst [vmem:[%s164 + $0x104] sm:$0xf] %v10467
        %10604 = vst [vmem:[%s164 + $0x108] sm:$0xf] %v10468
        %10605 = vst [vmem:[%s164 + $0x10c] sm:$0xf] %v10469
        %10606 = vst [vmem:[%s164 + $0x110] sm:$0xf] %v10470
        %10607 = vst [vmem:[%s164 + $0x114] sm:$0xf] %v10471
        %10608 = vst [vmem:[%s164 + $0x118] sm:$0xf] %v10472
        %10609 = vst [vmem:[%s164 + $0x11c] sm:$0xf] %v10473
        %10610 = vst [vmem:[%s164 + $0x120] sm:$0xf] %v10474
        %10611 = vst [vmem:[%s164 + $0x124] sm:$0xf] %v10475
        %10612 = vst [vmem:[%s164 + $0x128] sm:$0xf] %v10476
        %10613 = vst [vmem:[%s164 + $0x12c] sm:$0xf] %v10477
        %10614 = vst [vmem:[%s164 + $0x130] sm:$0xf] %v10478
        %10615 = vst [vmem:[%s164 + $0x134] sm:$0xf] %v10479
        %10616 = vst [vmem:[%s164 + $0x138] sm:$0xf] %v10480
        %10617 = vst [vmem:[%s164 + $0x13c] sm:$0xf] %v10481
        %10618 = vst [vmem:[%s164 + $0x140] sm:$0xf] %v10482
        %10619 = vst [vmem:[%s164 + $0x144] sm:$0xf] %v10483
        %10620 = vst [vmem:[%s164 + $0x148] sm:$0xf] %v10484
        %10621 = vst [vmem:[%s164 + $0x14c] sm:$0xf] %v10485
        %10622 = vst [vmem:[%s164 + $0x150] sm:$0xf] %v10486
        %10623 = vst [vmem:[%s164 + $0x154] sm:$0xf] %v10487
        %10624 = vst [vmem:[%s164 + $0x158] sm:$0xf] %v10488
        %10625 = vst [vmem:[%s164 + $0x15c] sm:$0xf] %v10489
        %10626 = vst [vmem:[%s164 + $0x160] sm:$0xf] %v10490
        %10627 = vst [vmem:[%s164 + $0x164] sm:$0xf] %v10491
        %10628 = vst [vmem:[%s164 + $0x168] sm:$0xf] %v10492
        %10629 = vst [vmem:[%s164 + $0x16c] sm:$0xf] %v10493
        %10630 = vst [vmem:[%s164 + $0x170] sm:$0xf] %v10494
        %10631 = vst [vmem:[%s164 + $0x174] sm:$0xf] %v10495
        %10632 = vst [vmem:[%s164 + $0x178] sm:$0xf] %v10496
        %10633 = vst [vmem:[%s164 + $0x17c] sm:$0xf] %v10497
        %10634 = vst [vmem:[%s164 + $0x180] sm:$0xf] %v10498
        %10635 = vst [vmem:[%s164 + $0x184] sm:$0xf] %v10499
        %10636 = vst [vmem:[%s164 + $0x188] sm:$0xf] %v10500
        %10637 = vst [vmem:[%s164 + $0x18c] sm:$0xf] %v10501
        %10638 = vst [vmem:[%s164 + $0x190] sm:$0xf] %v10502
        %10639 = vst [vmem:[%s164 + $0x194] sm:$0xf] %v10503
        %10640 = vst [vmem:[%s164 + $0x198] sm:$0xf] %v10504
        %10641 = vst [vmem:[%s164 + $0x19c] sm:$0xf] %v10505
        %10642 = vst [vmem:[%s164 + $0x1a0] sm:$0xf] %v10506
        %10643 = vst [vmem:[%s164 + $0x1a4] sm:$0xf] %v10507
        %10644 = vst [vmem:[%s164 + $0x1a8] sm:$0xf] %v10508
        %10645 = vst [vmem:[%s164 + $0x1ac] sm:$0xf] %v10509
        %10646 = vst [vmem:[%s164 + $0x1b0] sm:$0xf] %v10510
        %10647 = vst [vmem:[%s164 + $0x1b4] sm:$0xf] %v10511
        %10648 = vst [vmem:[%s164 + $0x1b8] sm:$0xf] %v10512
        %10649 = vst [vmem:[%s164 + $0x1bc] sm:$0xf] %v10513
        %10650 = vst [vmem:[%s164 + $0x1c0] sm:$0xf] %v10514
        %10651 = vst [vmem:[%s164 + $0x1c4] sm:$0xf] %v10515
        %10652 = vst [vmem:[%s164 + $0x1c8] sm:$0xf] %v10516
        %10653 = vst [vmem:[%s164 + $0x1cc] sm:$0xf] %v10517
        %10654 = vst [vmem:[%s164 + $0x1d0] sm:$0xf] %v10518
        %10655 = vst [vmem:[%s164 + $0x1d4] sm:$0xf] %v10519
        %10656 = vst [vmem:[%s164 + $0x1d8] sm:$0xf] %v10520
        %10657 = vst [vmem:[%s164 + $0x1dc] sm:$0xf] %v10521
        %10658 = vst [vmem:[%s164 + $0x1e0] sm:$0xf] %v10522
        %10659 = vst [vmem:[%s164 + $0x1e4] sm:$0xf] %v10523
        %10660 = vst [vmem:[%s164 + $0x1e8] sm:$0xf] %v10524
        %10661 = vst [vmem:[%s164 + $0x1ec] sm:$0xf] %v10525
        %10662 = vst [vmem:[%s164 + $0x1f0] sm:$0xf] %v10526
        %10663 = vst [vmem:[%s164 + $0x1f4] sm:$0xf] %v10527
        %10664 = vst [vmem:[%s164 + $0x1f8] sm:$0xf] %v10528
        %10665 = vst [vmem:[%s164 + $0x1fc] sm:$0xf] %v10529
        %10666 = vst [vmem:[%s164 + $0x200] sm:$0xf] %v10530
        %10667 = vst [vmem:[%s164 + $0x204] sm:$0xf] %v10531
        %10668 = vst [vmem:[%s164 + $0x208] sm:$0xf] %v10532
        %10669 = vst [vmem:[%s164 + $0x20c] sm:$0xf] %v10533
        %10670 = vst [vmem:[%s164 + $0x210] sm:$0xf] %v10534
        %10671 = vst [vmem:[%s164 + $0x214] sm:$0xf] %v10535
        %10672 = vst [vmem:[%s164 + $0x218] sm:$0xf] %v10536
        %10673 = vst [vmem:[%s164 + $0x21c] sm:$0xf] %v10537
        %s10674 = sand.u32 %s93, 1
        %s10675 = scalar_lea.sflag [#allocation3], %s10674
        %s10676 = sand.u32 %s93, 1
        %s10677 = smul.addr %s10676, 544
        %s10678 = scalar_lea.vmem [#allocation2], %s10677
        // Predicated region
        $region33: #{tpu_custom_call.1} parent=31 // pred_check
          %p10679 = pneg %p103
        $region34: #{tpu_custom_call.1} parent=31 // pred_check_branch
          %10681 = sbr.rel (%p10679) target = $region36
        $region35: #{tpu_custom_call.1} parent=31 // pred_region
          %s10682 = smul.u32 136, %s17
          %10684 = vsyncadd %s10675, 0
          %s10685 = smul.addr %s10682, 4
          %s10686 = scalar_lea.hbm %s3, %s10685
          %s10687 = sshll.u32 %s10678, 4
          %s10688 = int_to_ptr.vmem [resolvable:$true] %s10687
          %s10689 = sshll.u32 %s10686, 4
          %s10690 = int_to_ptr.hbm [resolvable:$true] %s10689
          %10695 = dma.vmem_to_hbm [thread:$0]  %s10688, 8704, %s10690, %s10675, 64, 64, 4
        $region36: #{tpu_custom_call.1} parent=31 // pred_fallthru
          _
      $region32: #{tpu_custom_call.1} parent=5 // pred_fallthru
        _
      %p10696 = scmp.le.s32.totalorder 2, %s12
      // Predicated region
      $region37: #{tpu_custom_call.1} parent=5 // pred_check
        %p10697 = pneg %p10696
      $region38: #{tpu_custom_call.1} parent=5 // pred_check_branch
        %10699 = sbr.rel (%p10697) target = $region40
      $region39: #{tpu_custom_call.1} parent=5 // pred_region
        %s10700 = ssub.s32 %s12, 2
        // Predicated region
        $region41: #{tpu_custom_call.1} parent=39 // pred_check
          %p10701 = pneg %p109
        $region42: #{tpu_custom_call.1} parent=39 // pred_check_branch
          %10703 = sbr.rel (%p10701) target = $region44
        $region43: #{tpu_custom_call.1} parent=39 // pred_region
          %s10704 = sand.u32 %s94, 1
          %s10705 = scalar_lea.sflag [#allocation3], %s10704
          %s10706 = sand.u32 %s94, 1
          %s10707 = smul.addr %s10706, 544
          %s10708 = scalar_lea.vmem [#allocation2], %s10707
          %10710 = dma.done %s10705, 8704
        $region44: #{tpu_custom_call.1} parent=39 // pred_fallthru
          _
      $region40: #{tpu_custom_call.1} parent=5 // pred_fallthru
        _
    $region6: #{tpu_custom_call.1} parent=1 // loop_footer
      %s16 = sadd.s32 1, %s12
    $region7: #{tpu_custom_call.1} parent=1 // loop_footer_branch
      %11 = sbr.rel target = $region3
    $region8: #{tpu_custom_call.1} parent=1 // loop_exit
      _
    %10711 = vsyncpa [#allocation3], 1
    %s10712 = scalar_lea.sflag [#allocation3], 1
    %10713 = vsyncpa %s10712, 1

</llo_original>
